<compile_context>
chip_gen: v7x
topology: tpu7x:2x2x1
jax: 0.10.0
libtpu: 0.0.40
codegen_flags: <defaults>
</compile_context>

<pallas_src>
import functools

import jax
import jax.numpy as jnp
from jax.experimental import pallas as pl
from jax.experimental.pallas import tpu as pltpu


def _round_up(x, m):
    return (x + m - 1) // m * m


def _pick_row_chunk(H, W, max_rows=512):
    """Largest divisor CH of H such that CH * W <= max_rows (at least 1)."""
    best = 1
    for ch in range(1, H + 1):
        if H % ch == 0 and ch * W <= max_rows:
            best = ch
    return best


def _softplus(x):
    # PyTorch nn.Softplus(beta=1, threshold=20): linear above the threshold.
    return jnp.where(x > 20.0, x, jnp.log1p(jnp.exp(jnp.minimum(x, 20.0))))


# ---------------------------------------------------------------------------
# Fused kernel body
# ---------------------------------------------------------------------------
def _make_block_kernel(H, W, C, CH):
    """Kernel for one (H, W) image with C (lane-padded) channels.

    Per grid step (one batch image, all channels):
      x_ref   : (1, H+2, W+2, C) bf16  spatially padded input (also the residual)
      w*_ref  : (9, C, C)        bf16  per-tap weights, tap = dy*3 + dx
      ss*_ref : (2, C)           f32   row0 = BN scale, row1 = BN shift (+ bias)
      o_ref   : (1, H, W, C)     bf16
      stage   : (3, (H+2)*W, C)  bf16  dx-shifted, row-flattened staging slabs
      mid     : (H+2, W+2, C)    bf16  conv1 output with zero halo (conv2 input)
    """
    Hp2, Wp2 = H + 2, W + 2
    m = CH * W
    n_chunks = H // CH

    def kernel(x_ref, w1_ref, ss1_ref, w2_ref, ss2_ref, o_ref, stage_ref, mid_ref):
        # Zero only the halo border of `mid`; the interior is fully overwritten
        # by conv1 below, so no full-buffer clear is needed.
        mid_ref[0] = jnp.zeros((Wp2, C), mid_ref.dtype)
        mid_ref[Hp2 - 1] = jnp.zeros((Wp2, C), mid_ref.dtype)
        mid_ref[:, 0:1, :] = jnp.zeros((Hp2, 1, C), mid_ref.dtype)
        mid_ref[:, Wp2 - 1:Wp2, :] = jnp.zeros((Hp2, 1, C), mid_ref.dtype)

        def restage(load_slab):
            # 3 relayout copies per conv (instead of 9 per-tap slice+reshape):
            # slab dx holds P[:, dx:dx+W, :] flattened to ((H+2)*W, C), so every
            # (chunk, dy) tap below is a contiguous row slice of it.
            for dx in range(3):
                stage_ref[dx] = load_slab(dx)

        def conv_chunks(w_ref, ss_ref, epilogue):
            scale = ss_ref[0:1, :]
            shift = ss_ref[1:2, :]
            # Chunked over output rows: chunk k+1's MXU taps are independent of
            # chunk k's VPU/EUP epilogue (separate VLIW slots), hiding softplus.
            for ci in range(n_chunks):
                r0 = ci * CH
                acc = None
                for dy in range(3):
                    base = (r0 + dy) * W
                    for dx in range(3):
                        lhs = stage_ref[dx, base:base + m, :]
                        contrib = jnp.dot(lhs, w_ref[dy * 3 + dx],
                                          preferred_element_type=jnp.float32)
                        acc = contrib if acc is None else acc + contrib
                epilogue(r0, acc * scale + shift)

        def epi1(r0, pre):
            # Padded channels become softplus(0) ~ 0.693 here; harmless because
            # w2's rows for those input channels are zero and the padded output
            # channels are sliced off on the host.  Keep this invariant if the
            # weight padding scheme ever changes.
            val = _softplus(pre).astype(mid_ref.dtype)
            mid_ref[1 + r0:1 + r0 + CH, 1:1 + W, :] = val.reshape(CH, W, C)

        def epi2(r0, pre):
            res = x_ref[0, 1 + r0:1 + r0 + CH, 1:1 + W, :]
            res = res.reshape(m, C).astype(jnp.float32)
            val = _softplus(pre + res).astype(o_ref.dtype)
            o_ref[0, r0:r0 + CH, :, :] = val.reshape(CH, W, C)

        # conv1 -> bn1 -> softplus   (result stays in VMEM: no HBM round trip)
        restage(lambda dx: x_ref[0, :, dx:dx + W, :].reshape(Hp2 * W, C))
        conv_chunks(w1_ref, ss1_ref, epi1)

        # conv2 -> bn2 -> +residual -> softplus
        restage(lambda dx: mid_ref[:, dx:dx + W, :].reshape(Hp2 * W, C))
        conv_chunks(w2_ref, ss2_ref, epi2)

    return kernel


# ---------------------------------------------------------------------------
# Pallas call wrapper
# ---------------------------------------------------------------------------
def _fused_block_call(xp, w1, ss1, w2, ss2, H, W):
    """xp: (N, H+2, W+2, C) bf16; w*: (9, C, C) bf16; ss*: (2, C) f32."""
    N, Hp2, Wp2, C = xp.shape
    CH = _pick_row_chunk(H, W)
    kernel = _make_block_kernel(H, W, C, CH)

    # Explicit VMEM budget (v7x: 64 MiB physical, 32 MiB scoped default).
    bpe = 2  # bf16
    est = (2 * Hp2 * Wp2 * C * bpe        # double-buffered activation block
           + 2 * 2 * 9 * C * C * bpe      # double-buffered w1 + w2 (DMA'd once)
           + 2 * H * W * C * bpe          # double-buffered output block
           + 3 * Hp2 * W * C * bpe        # staging slabs
           + Hp2 * Wp2 * C * bpe          # conv1 output + halo
           + 2 * CH * W * C * 4           # chunk accumulator temporaries
           + (2 << 20))                   # headroom
    vmem_limit = int(min(max(2 * est, 32 * 1024 * 1024), 64 * 1024 * 1024))

    return pl.pallas_call(
        kernel,
        out_shape=jax.ShapeDtypeStruct((N, H, W, C), jnp.bfloat16),
        grid_spec=pltpu.PrefetchScalarGridSpec(
            num_scalar_prefetch=0,
            # grid over batch only: weights / scales use constant index maps so
            # they are fetched once; only the activation block streams per step.
            grid=(N,),
            in_specs=[
                pl.BlockSpec((1, Hp2, Wp2, C), lambda n: (n, 0, 0, 0)),  # activations
                pl.BlockSpec((9, C, C), lambda n: (0, 0, 0)),            # w1 taps
                pl.BlockSpec((2, C), lambda n: (0, 0)),                  # bn1 scale/shift
                pl.BlockSpec((9, C, C), lambda n: (0, 0, 0)),            # w2 taps
                pl.BlockSpec((2, C), lambda n: (0, 0)),                  # bn2 scale/shift
            ],
            out_specs=pl.BlockSpec((1, H, W, C), lambda n: (n, 0, 0, 0)),
            scratch_shapes=[
                pltpu.VMEM((3, Hp2 * W, C), jnp.bfloat16),  # dx staging slabs
                pltpu.VMEM((Hp2, Wp2, C), jnp.bfloat16),    # conv1 output + halo
            ],
        ),
        compiler_params=pltpu.CompilerParams(
            dimension_semantics=("parallel",),
            vmem_limit_bytes=vmem_limit,
        ),
    )(xp, w1, ss1, w2, ss2)


# ---------------------------------------------------------------------------
# Host-side glue (parameter sampling, folding, padding, layout plumbing)
# ---------------------------------------------------------------------------
def _sample_bbb_conv2d(key, c_in, c_out):
    """One reparameterization draw of a BBB_Conv2d layer (3x3, bias=True)."""
    k1, k2, k3, k4 = jax.random.split(key, 4)
    w_mu = jax.random.normal(k1, (c_out, c_in, 3, 3), jnp.float32) * 0.1
    w_sigma = jnp.log1p(jnp.exp(jnp.full((c_out, c_in, 3, 3), -5.0, jnp.float32)))
    weight = w_mu + jax.random.normal(k2, w_mu.shape, jnp.float32) * w_sigma
    b_mu = jax.random.normal(k3, (c_out,), jnp.float32) * 0.1
    b_sigma = jnp.log1p(jnp.exp(jnp.full((c_out,), -5.0, jnp.float32)))
    bias = b_mu + jax.random.normal(k4, (c_out,), jnp.float32) * b_sigma
    return weight, bias


def _bn_affine(c, eps=1e-5):
    """Eval-mode BatchNorm2d (default params / running stats) -> scale, shift."""
    gamma = jnp.ones((c,), jnp.float32)
    beta = jnp.zeros((c,), jnp.float32)
    running_mean = jnp.zeros((c,), jnp.float32)
    running_var = jnp.ones((c,), jnp.float32)
    scale = gamma / jnp.sqrt(running_var + eps)
    shift = beta - running_mean * scale
    return scale, shift


def _prep_weight(w_oihw, c_pad):
    """(Cout, Cin, 3, 3) -> (9, C_pad, C_pad) bf16, tap order (dy, dx)."""
    co, ci, kh, kw = w_oihw.shape
    w = jnp.transpose(w_oihw, (2, 3, 1, 0)).reshape(kh * kw, ci, co)
    w = jnp.pad(w, ((0, 0), (0, c_pad - ci), (0, c_pad - co)))
    return w.astype(jnp.bfloat16)


def _prep_scale_shift(scale, shift, c_pad):
    ss = jnp.stack([scale, shift])                    # (2, C)
    return jnp.pad(ss, ((0, 0), (0, c_pad - ss.shape[1]))).astype(jnp.float32)


def init_basic_block_params(key, inplanes, planes):
    if inplanes != planes:
        # PyTorch BasicBlock with inplanes != planes requires a downsample branch.
        raise NotImplementedError("identity residual requires inplanes == planes")
    k1, k2 = jax.random.split(key)
    w1, b1 = _sample_bbb_conv2d(k1, inplanes, planes)
    w2, b2 = _sample_bbb_conv2d(k2, planes, planes)
    s1, sh1 = _bn_affine(planes)
    s2, sh2 = _bn_affine(planes)
    # Fold conv bias into BN shift: (dot + b) * s + sh == dot * s + (b * s + sh).
    sh1 = sh1 + s1 * b1
    sh2 = sh2 + s2 * b2
    C = _round_up(planes, 128)
    return dict(
        w1=_prep_weight(w1, C), ss1=_prep_scale_shift(s1, sh1, C),
        w2=_prep_weight(w2, C), ss2=_prep_scale_shift(s2, sh2, C),
    )


def _pad_last(x, c_pad):
    c = x.shape[-1]
    if c == c_pad:
        return x
    return jnp.pad(x, [(0, 0)] * (x.ndim - 1) + [(0, c_pad - c)])


@functools.partial(jax.jit, static_argnames=("stride",))
def basic_block_forward(x_nchw, params, stride=1):
    """BasicBlock forward (downsample=None, activation='softplus'). NCHW in/out."""
    if stride != 1:
        # TODO(synk): stride != 1 requires the downsample residual path.
        raise NotImplementedError("identity residual requires stride == 1")
    # TODO(synk): in a full network, keep activations channel-padded NHWC bf16
    # end-to-end instead of transposing / re-padding around every block.
    x = jnp.transpose(x_nchw, (0, 2, 3, 1))                        # NHWC
    N, H, W, c_real = x.shape
    C = params["w1"].shape[1]
    xp = jnp.pad(_pad_last(x, C).astype(jnp.bfloat16),
                 ((0, 0), (1, 1), (1, 1), (0, 0)))                 # halo + channel pad
    out = _fused_block_call(xp, params["w1"], params["ss1"],
                            params["w2"], params["ss2"], H, W)
    out = out[..., :c_real].astype(jnp.float32)                    # drop channel padding
    return jnp.transpose(out, (0, 3, 1, 2))                        # back to NCHW


def _reference_forward(x_nchw, params):
    """Pure-JAX f32 reference using the same folded parameters."""
    x = jnp.transpose(x_nchw, (0, 2, 3, 1)).astype(jnp.float32)
    C = params["w1"].shape[1]
    xp = _pad_last(x, C)

    def conv_bn(h, w, ss):
        w_hwio = w.astype(jnp.float32).reshape(3, 3, C, C)
        y = jax.lax.conv_general_dilated(
            h, w_hwio, window_strides=(1, 1), padding="SAME",
            dimension_numbers=("NHWC", "HWIO", "NHWC"))
        return y * ss[0] + ss[1]

    h1 = jax.nn.softplus(conv_bn(xp, params["w1"], params["ss1"]))
    h2 = jax.nn.softplus(conv_bn(h1, params["w2"], params["ss2"]) + xp)
    out = h2[..., :x_nchw.shape[1]]
    return jnp.transpose(out, (0, 3, 1, 2))


if __name__ == "__main__":
    key = jax.random.PRNGKey(0)
    k_x, k_p = jax.random.split(key)

    inplanes, planes, stride = 4, 4, 1
    x = jax.random.normal(k_x, (2, inplanes, 16, 16), jnp.float32)   # NCHW, like PyTorch

    params = init_basic_block_params(k_p, inplanes, planes)
    out = basic_block_forward(x, params, stride=stride)
    out = jax.block_until_ready(out)

    assert out.shape == (2, planes, 16, 16)
    assert bool(jnp.all(jnp.isfinite(out)))

    # Loose tolerance: kernel runs bf16 activations/weights with f32 accumulation.
    ref = _reference_forward(x, params)
    max_err = float(jnp.max(jnp.abs(out - ref)))
    assert max_err < 0.1, f"mismatch vs f32 reference: max abs err = {max_err}"

    print("KERNEL_OK")
</pallas_src>

<mosaic_0001>
module attributes {stable_mosaic.version = 11 : i64} {
  func.func @kernel(%arg0: i32, %arg1: memref<1x18x18x128xbf16, #tpu.memory_space<vmem>>, %arg2: memref<9x128x128xbf16, #tpu.memory_space<vmem>>, %arg3: memref<2x128xf32, #tpu.memory_space<vmem>>, %arg4: memref<9x128x128xbf16, #tpu.memory_space<vmem>>, %arg5: memref<2x128xf32, #tpu.memory_space<vmem>>, %arg6: memref<1x16x16x128xbf16, #tpu.memory_space<vmem>>, %arg7: memref<3x288x128xbf16, #tpu.memory_space<vmem>>, %arg8: memref<18x18x128xbf16, #tpu.memory_space<vmem>>) attributes {dimension_semantics = [#tpu.dimension_semantics<parallel>], iteration_bounds = array<i64: 2>, scalar_prefetch = 0 : i64, scratch_operands = 2 : i64, tpu.core_type = #tpu.core_type<tc>, window_params = [{transform_indices = @transform_0, window_bounds = array<i64: 1, 18, 18, 128>}, {pipeline_mode = #tpu.pipeline_mode<synchronous>, transform_indices = @transform_1, window_bounds = array<i64: 9, 128, 128>}, {pipeline_mode = #tpu.pipeline_mode<synchronous>, transform_indices = @transform_2, window_bounds = array<i64: 2, 128>}, {pipeline_mode = #tpu.pipeline_mode<synchronous>, transform_indices = @transform_3, window_bounds = array<i64: 9, 128, 128>}, {pipeline_mode = #tpu.pipeline_mode<synchronous>, transform_indices = @transform_4, window_bounds = array<i64: 2, 128>}, {transform_indices = @transform_5, window_bounds = array<i64: 1, 16, 16, 128>}]} {
    %cst = arith.constant 0.000000e+00 : bf16
    %0 = vector.broadcast %cst : bf16 to vector<18x128xbf16>
    %c0 = arith.constant 0 : index
    %c0_0 = arith.constant 0 : index
    %c0_1 = arith.constant 0 : index
    %1 = vector.load %arg8[%c0, %c0_0, %c0_1] : memref<18x18x128xbf16, #tpu.memory_space<vmem>>, vector<1x18x128xbf16>
    %2 = vector.shape_cast %1 : vector<1x18x128xbf16> to vector<18x128xbf16>
    %3 = vector.shape_cast %0 : vector<18x128xbf16> to vector<1x18x128xbf16>
    tpu.vector_store %arg8[%c0, %c0_0, %c0_1], %3 {strides = array<i32>} : memref<18x18x128xbf16, #tpu.memory_space<vmem>>, vector<1x18x128xbf16>,
    %cst_2 = arith.constant 0.000000e+00 : bf16
    %4 = vector.broadcast %cst_2 : bf16 to vector<18x128xbf16>
    %c17 = arith.constant 17 : index
    %c0_3 = arith.constant 0 : index
    %c0_4 = arith.constant 0 : index
    %5 = vector.load %arg8[%c17, %c0_3, %c0_4] : memref<18x18x128xbf16, #tpu.memory_space<vmem>>, vector<1x18x128xbf16>
    %6 = vector.shape_cast %5 : vector<1x18x128xbf16> to vector<18x128xbf16>
    %7 = vector.shape_cast %4 : vector<18x128xbf16> to vector<1x18x128xbf16>
    tpu.vector_store %arg8[%c17, %c0_3, %c0_4], %7 {strides = array<i32>} : memref<18x18x128xbf16, #tpu.memory_space<vmem>>, vector<1x18x128xbf16>,
    %cst_5 = arith.constant 0.000000e+00 : bf16
    %8 = vector.broadcast %cst_5 : bf16 to vector<18x1x128xbf16>
    %c0_6 = arith.constant 0 : index
    %c0_7 = arith.constant 0 : index
    %c0_8 = arith.constant 0 : index
    %9 = vector.load %arg8[%c0_6, %c0_7, %c0_8] : memref<18x18x128xbf16, #tpu.memory_space<vmem>>, vector<18x1x128xbf16>
    tpu.vector_store %arg8[%c0_6, %c0_7, %c0_8], %8 {strides = array<i32>} : memref<18x18x128xbf16, #tpu.memory_space<vmem>>, vector<18x1x128xbf16>,
    %cst_9 = arith.constant 0.000000e+00 : bf16
    %10 = vector.broadcast %cst_9 : bf16 to vector<18x1x128xbf16>
    %c0_10 = arith.constant 0 : index
    %c17_11 = arith.constant 17 : index
    %c0_12 = arith.constant 0 : index
    %11 = vector.load %arg8[%c0_10, %c17_11, %c0_12] : memref<18x18x128xbf16, #tpu.memory_space<vmem>>, vector<18x1x128xbf16>
    tpu.vector_store %arg8[%c0_10, %c17_11, %c0_12], %10 {strides = array<i32>} : memref<18x18x128xbf16, #tpu.memory_space<vmem>>, vector<18x1x128xbf16>,
    %c0_13 = arith.constant 0 : index
    %c0_14 = arith.constant 0 : index
    %c0_15 = arith.constant 0 : index
    %c0_16 = arith.constant 0 : index
    %12 = vector.load %arg1[%c0_13, %c0_14, %c0_15, %c0_16] : memref<1x18x18x128xbf16, #tpu.memory_space<vmem>>, vector<1x18x16x128xbf16>
    %13 = vector.shape_cast %12 : vector<1x18x16x128xbf16> to vector<18x16x128xbf16>
    %14 = vector.shape_cast %13 : vector<18x16x128xbf16> to vector<288x128xbf16>
    %c0_17 = arith.constant 0 : index
    %c0_18 = arith.constant 0 : index
    %c0_19 = arith.constant 0 : index
    %15 = vector.load %arg7[%c0_17, %c0_18, %c0_19] : memref<3x288x128xbf16, #tpu.memory_space<vmem>>, vector<1x288x128xbf16>
    %16 = vector.shape_cast %15 : vector<1x288x128xbf16> to vector<288x128xbf16>
    %17 = vector.shape_cast %14 : vector<288x128xbf16> to vector<1x288x128xbf16>
    tpu.vector_store %arg7[%c0_17, %c0_18, %c0_19], %17 {strides = array<i32>} : memref<3x288x128xbf16, #tpu.memory_space<vmem>>, vector<1x288x128xbf16>,
    %c0_20 = arith.constant 0 : index
    %c0_21 = arith.constant 0 : index
    %c1 = arith.constant 1 : index
    %c0_22 = arith.constant 0 : index
    %18 = vector.load %arg1[%c0_20, %c0_21, %c1, %c0_22] : memref<1x18x18x128xbf16, #tpu.memory_space<vmem>>, vector<1x18x16x128xbf16>
    %19 = vector.shape_cast %18 : vector<1x18x16x128xbf16> to vector<18x16x128xbf16>
    %20 = vector.shape_cast %19 : vector<18x16x128xbf16> to vector<288x128xbf16>
    %c1_23 = arith.constant 1 : index
    %c0_24 = arith.constant 0 : index
    %c0_25 = arith.constant 0 : index
    %21 = vector.load %arg7[%c1_23, %c0_24, %c0_25] : memref<3x288x128xbf16, #tpu.memory_space<vmem>>, vector<1x288x128xbf16>
    %22 = vector.shape_cast %21 : vector<1x288x128xbf16> to vector<288x128xbf16>
    %23 = vector.shape_cast %20 : vector<288x128xbf16> to vector<1x288x128xbf16>
    tpu.vector_store %arg7[%c1_23, %c0_24, %c0_25], %23 {strides = array<i32>} : memref<3x288x128xbf16, #tpu.memory_space<vmem>>, vector<1x288x128xbf16>,
    %c0_26 = arith.constant 0 : index
    %c0_27 = arith.constant 0 : index
    %c2 = arith.constant 2 : index
    %c0_28 = arith.constant 0 : index
    %24 = vector.load %arg1[%c0_26, %c0_27, %c2, %c0_28] : memref<1x18x18x128xbf16, #tpu.memory_space<vmem>>, vector<1x18x16x128xbf16>
    %25 = vector.shape_cast %24 : vector<1x18x16x128xbf16> to vector<18x16x128xbf16>
    %26 = vector.shape_cast %25 : vector<18x16x128xbf16> to vector<288x128xbf16>
    %c2_29 = arith.constant 2 : index
    %c0_30 = arith.constant 0 : index
    %c0_31 = arith.constant 0 : index
    %27 = vector.load %arg7[%c2_29, %c0_30, %c0_31] : memref<3x288x128xbf16, #tpu.memory_space<vmem>>, vector<1x288x128xbf16>
    %28 = vector.shape_cast %27 : vector<1x288x128xbf16> to vector<288x128xbf16>
    %29 = vector.shape_cast %26 : vector<288x128xbf16> to vector<1x288x128xbf16>
    tpu.vector_store %arg7[%c2_29, %c0_30, %c0_31], %29 {strides = array<i32>} : memref<3x288x128xbf16, #tpu.memory_space<vmem>>, vector<1x288x128xbf16>,
    %c0_32 = arith.constant 0 : index
    %c0_33 = arith.constant 0 : index
    %30 = vector.load %arg3[%c0_32, %c0_33] : memref<2x128xf32, #tpu.memory_space<vmem>>, vector<1x128xf32>
    %c1_34 = arith.constant 1 : index
    %c0_35 = arith.constant 0 : index
    %31 = vector.load %arg3[%c1_34, %c0_35] : memref<2x128xf32, #tpu.memory_space<vmem>>, vector<1x128xf32>
    %c0_36 = arith.constant 0 : index
    %c0_37 = arith.constant 0 : index
    %c0_38 = arith.constant 0 : index
    %32 = vector.load %arg7[%c0_36, %c0_37, %c0_38] : memref<3x288x128xbf16, #tpu.memory_space<vmem>>, vector<1x256x128xbf16>
    %33 = vector.shape_cast %32 : vector<1x256x128xbf16> to vector<256x128xbf16>
    %c0_39 = arith.constant 0 : index
    %c0_40 = arith.constant 0 : index
    %c0_41 = arith.constant 0 : index
    %34 = vector.load %arg2[%c0_39, %c0_40, %c0_41] : memref<9x128x128xbf16, #tpu.memory_space<vmem>>, vector<1x128x128xbf16>
    %35 = vector.shape_cast %34 : vector<1x128x128xbf16> to vector<128x128xbf16>
    %cst_42 = arith.constant dense<0.000000e+00> : vector<256x128xf32>
    %36 = tpu.matmul %33, %35, %cst_42 {dimension_numbers = #tpu.dot_dimension_numbers<[1], [0], [0], [1], [0, 0, 1, 1], [], []>} : vector<256x128xbf16>, vector<128x128xbf16>, vector<256x128xf32> -> vector<256x128xf32>
    %c1_43 = arith.constant 1 : index
    %c0_44 = arith.constant 0 : index
    %c0_45 = arith.constant 0 : index
    %37 = vector.load %arg7[%c1_43, %c0_44, %c0_45] : memref<3x288x128xbf16, #tpu.memory_space<vmem>>, vector<1x256x128xbf16>
    %38 = vector.shape_cast %37 : vector<1x256x128xbf16> to vector<256x128xbf16>
    %c1_46 = arith.constant 1 : index
    %c0_47 = arith.constant 0 : index
    %c0_48 = arith.constant 0 : index
    %39 = vector.load %arg2[%c1_46, %c0_47, %c0_48] : memref<9x128x128xbf16, #tpu.memory_space<vmem>>, vector<1x128x128xbf16>
    %40 = vector.shape_cast %39 : vector<1x128x128xbf16> to vector<128x128xbf16>
    %cst_49 = arith.constant dense<0.000000e+00> : vector<256x128xf32>
    %41 = tpu.matmul %38, %40, %cst_49 {dimension_numbers = #tpu.dot_dimension_numbers<[1], [0], [0], [1], [0, 0, 1, 1], [], []>} : vector<256x128xbf16>, vector<128x128xbf16>, vector<256x128xf32> -> vector<256x128xf32>
    %42 = arith.addf %36, %41 : vector<256x128xf32>
    %c2_50 = arith.constant 2 : index
    %c0_51 = arith.constant 0 : index
    %c0_52 = arith.constant 0 : index
    %43 = vector.load %arg7[%c2_50, %c0_51, %c0_52] : memref<3x288x128xbf16, #tpu.memory_space<vmem>>, vector<1x256x128xbf16>
    %44 = vector.shape_cast %43 : vector<1x256x128xbf16> to vector<256x128xbf16>
    %c2_53 = arith.constant 2 : index
    %c0_54 = arith.constant 0 : index
    %c0_55 = arith.constant 0 : index
    %45 = vector.load %arg2[%c2_53, %c0_54, %c0_55] : memref<9x128x128xbf16, #tpu.memory_space<vmem>>, vector<1x128x128xbf16>
    %46 = vector.shape_cast %45 : vector<1x128x128xbf16> to vector<128x128xbf16>
    %cst_56 = arith.constant dense<0.000000e+00> : vector<256x128xf32>
    %47 = tpu.matmul %44, %46, %cst_56 {dimension_numbers = #tpu.dot_dimension_numbers<[1], [0], [0], [1], [0, 0, 1, 1], [], []>} : vector<256x128xbf16>, vector<128x128xbf16>, vector<256x128xf32> -> vector<256x128xf32>
    %48 = arith.addf %42, %47 : vector<256x128xf32>
    %c0_57 = arith.constant 0 : index
    %c16 = arith.constant 16 : index
    %c0_58 = arith.constant 0 : index
    %49 = vector.load %arg7[%c0_57, %c16, %c0_58] : memref<3x288x128xbf16, #tpu.memory_space<vmem>>, vector<1x256x128xbf16>
    %50 = vector.shape_cast %49 : vector<1x256x128xbf16> to vector<256x128xbf16>
    %c3 = arith.constant 3 : index
    %c0_59 = arith.constant 0 : index
    %c0_60 = arith.constant 0 : index
    %51 = vector.load %arg2[%c3, %c0_59, %c0_60] : memref<9x128x128xbf16, #tpu.memory_space<vmem>>, vector<1x128x128xbf16>
    %52 = vector.shape_cast %51 : vector<1x128x128xbf16> to vector<128x128xbf16>
    %cst_61 = arith.constant dense<0.000000e+00> : vector<256x128xf32>
    %53 = tpu.matmul %50, %52, %cst_61 {dimension_numbers = #tpu.dot_dimension_numbers<[1], [0], [0], [1], [0, 0, 1, 1], [], []>} : vector<256x128xbf16>, vector<128x128xbf16>, vector<256x128xf32> -> vector<256x128xf32>
    %54 = arith.addf %48, %53 : vector<256x128xf32>
    %c1_62 = arith.constant 1 : index
    %c16_63 = arith.constant 16 : index
    %c0_64 = arith.constant 0 : index
    %55 = vector.load %arg7[%c1_62, %c16_63, %c0_64] : memref<3x288x128xbf16, #tpu.memory_space<vmem>>, vector<1x256x128xbf16>
    %56 = vector.shape_cast %55 : vector<1x256x128xbf16> to vector<256x128xbf16>
    %c4 = arith.constant 4 : index
    %c0_65 = arith.constant 0 : index
    %c0_66 = arith.constant 0 : index
    %57 = vector.load %arg2[%c4, %c0_65, %c0_66] : memref<9x128x128xbf16, #tpu.memory_space<vmem>>, vector<1x128x128xbf16>
    %58 = vector.shape_cast %57 : vector<1x128x128xbf16> to vector<128x128xbf16>
    %cst_67 = arith.constant dense<0.000000e+00> : vector<256x128xf32>
    %59 = tpu.matmul %56, %58, %cst_67 {dimension_numbers = #tpu.dot_dimension_numbers<[1], [0], [0], [1], [0, 0, 1, 1], [], []>} : vector<256x128xbf16>, vector<128x128xbf16>, vector<256x128xf32> -> vector<256x128xf32>
    %60 = arith.addf %54, %59 : vector<256x128xf32>
    %c2_68 = arith.constant 2 : index
    %c16_69 = arith.constant 16 : index
    %c0_70 = arith.constant 0 : index
    %61 = vector.load %arg7[%c2_68, %c16_69, %c0_70] : memref<3x288x128xbf16, #tpu.memory_space<vmem>>, vector<1x256x128xbf16>
    %62 = vector.shape_cast %61 : vector<1x256x128xbf16> to vector<256x128xbf16>
    %c5 = arith.constant 5 : index
    %c0_71 = arith.constant 0 : index
    %c0_72 = arith.constant 0 : index
    %63 = vector.load %arg2[%c5, %c0_71, %c0_72] : memref<9x128x128xbf16, #tpu.memory_space<vmem>>, vector<1x128x128xbf16>
    %64 = vector.shape_cast %63 : vector<1x128x128xbf16> to vector<128x128xbf16>
    %cst_73 = arith.constant dense<0.000000e+00> : vector<256x128xf32>
    %65 = tpu.matmul %62, %64, %cst_73 {dimension_numbers = #tpu.dot_dimension_numbers<[1], [0], [0], [1], [0, 0, 1, 1], [], []>} : vector<256x128xbf16>, vector<128x128xbf16>, vector<256x128xf32> -> vector<256x128xf32>
    %66 = arith.addf %60, %65 : vector<256x128xf32>
    %c0_74 = arith.constant 0 : index
    %c32 = arith.constant 32 : index
    %c0_75 = arith.constant 0 : index
    %67 = vector.load %arg7[%c0_74, %c32, %c0_75] : memref<3x288x128xbf16, #tpu.memory_space<vmem>>, vector<1x256x128xbf16>
    %68 = vector.shape_cast %67 : vector<1x256x128xbf16> to vector<256x128xbf16>
    %c6 = arith.constant 6 : index
    %c0_76 = arith.constant 0 : index
    %c0_77 = arith.constant 0 : index
    %69 = vector.load %arg2[%c6, %c0_76, %c0_77] : memref<9x128x128xbf16, #tpu.memory_space<vmem>>, vector<1x128x128xbf16>
    %70 = vector.shape_cast %69 : vector<1x128x128xbf16> to vector<128x128xbf16>
    %cst_78 = arith.constant dense<0.000000e+00> : vector<256x128xf32>
    %71 = tpu.matmul %68, %70, %cst_78 {dimension_numbers = #tpu.dot_dimension_numbers<[1], [0], [0], [1], [0, 0, 1, 1], [], []>} : vector<256x128xbf16>, vector<128x128xbf16>, vector<256x128xf32> -> vector<256x128xf32>
    %72 = arith.addf %66, %71 : vector<256x128xf32>
    %c1_79 = arith.constant 1 : index
    %c32_80 = arith.constant 32 : index
    %c0_81 = arith.constant 0 : index
    %73 = vector.load %arg7[%c1_79, %c32_80, %c0_81] : memref<3x288x128xbf16, #tpu.memory_space<vmem>>, vector<1x256x128xbf16>
    %74 = vector.shape_cast %73 : vector<1x256x128xbf16> to vector<256x128xbf16>
    %c7 = arith.constant 7 : index
    %c0_82 = arith.constant 0 : index
    %c0_83 = arith.constant 0 : index
    %75 = vector.load %arg2[%c7, %c0_82, %c0_83] : memref<9x128x128xbf16, #tpu.memory_space<vmem>>, vector<1x128x128xbf16>
    %76 = vector.shape_cast %75 : vector<1x128x128xbf16> to vector<128x128xbf16>
    %cst_84 = arith.constant dense<0.000000e+00> : vector<256x128xf32>
    %77 = tpu.matmul %74, %76, %cst_84 {dimension_numbers = #tpu.dot_dimension_numbers<[1], [0], [0], [1], [0, 0, 1, 1], [], []>} : vector<256x128xbf16>, vector<128x128xbf16>, vector<256x128xf32> -> vector<256x128xf32>
    %78 = arith.addf %72, %77 : vector<256x128xf32>
    %c2_85 = arith.constant 2 : index
    %c32_86 = arith.constant 32 : index
    %c0_87 = arith.constant 0 : index
    %79 = vector.load %arg7[%c2_85, %c32_86, %c0_87] : memref<3x288x128xbf16, #tpu.memory_space<vmem>>, vector<1x256x128xbf16>
    %80 = vector.shape_cast %79 : vector<1x256x128xbf16> to vector<256x128xbf16>
    %c8 = arith.constant 8 : index
    %c0_88 = arith.constant 0 : index
    %c0_89 = arith.constant 0 : index
    %81 = vector.load %arg2[%c8, %c0_88, %c0_89] : memref<9x128x128xbf16, #tpu.memory_space<vmem>>, vector<1x128x128xbf16>
    %82 = vector.shape_cast %81 : vector<1x128x128xbf16> to vector<128x128xbf16>
    %cst_90 = arith.constant dense<0.000000e+00> : vector<256x128xf32>
    %83 = tpu.matmul %80, %82, %cst_90 {dimension_numbers = #tpu.dot_dimension_numbers<[1], [0], [0], [1], [0, 0, 1, 1], [], []>} : vector<256x128xbf16>, vector<128x128xbf16>, vector<256x128xf32> -> vector<256x128xf32>
    %84 = arith.addf %78, %83 : vector<256x128xf32>
    %85 = vector.broadcast %30 : vector<1x128xf32> to vector<256x128xf32>
    %86 = arith.mulf %84, %85 : vector<256x128xf32>
    %87 = vector.broadcast %31 : vector<1x128xf32> to vector<256x128xf32>
    %88 = arith.addf %86, %87 : vector<256x128xf32>
    %cst_91 = arith.constant 2.000000e+01 : f32
    %89 = vector.broadcast %cst_91 : f32 to vector<256x128xf32>
    %90 = arith.cmpf ogt, %88, %89 : vector<256x128xf32>
    %cst_92 = arith.constant 2.000000e+01 : f32
    %91 = vector.broadcast %cst_92 : f32 to vector<256x128xf32>
    %92 = arith.minimumf %88, %91 : vector<256x128xf32>
    %93 = math.exp %92 : vector<256x128xf32>
    %94 = math.log1p %93 : vector<256x128xf32>
    %95 = arith.select %90, %88, %94 : vector<256x128xi1>, vector<256x128xf32>
    %96 = arith.truncf %95 : vector<256x128xf32> to vector<256x128xbf16>
    %97 = vector.shape_cast %96 : vector<256x128xbf16> to vector<16x16x128xbf16>
    %c1_93 = arith.constant 1 : index
    %c1_94 = arith.constant 1 : index
    %c0_95 = arith.constant 0 : index
    %98 = vector.load %arg8[%c1_93, %c1_94, %c0_95] : memref<18x18x128xbf16, #tpu.memory_space<vmem>>, vector<16x16x128xbf16>
    tpu.vector_store %arg8[%c1_93, %c1_94, %c0_95], %97 {strides = array<i32>} : memref<18x18x128xbf16, #tpu.memory_space<vmem>>, vector<16x16x128xbf16>,
    %c0_96 = arith.constant 0 : index
    %c0_97 = arith.constant 0 : index
    %c0_98 = arith.constant 0 : index
    %99 = vector.load %arg8[%c0_96, %c0_97, %c0_98] : memref<18x18x128xbf16, #tpu.memory_space<vmem>>, vector<18x16x128xbf16>
    %100 = vector.shape_cast %99 : vector<18x16x128xbf16> to vector<288x128xbf16>
    %c0_99 = arith.constant 0 : index
    %c0_100 = arith.constant 0 : index
    %c0_101 = arith.constant 0 : index
    %101 = vector.load %arg7[%c0_99, %c0_100, %c0_101] : memref<3x288x128xbf16, #tpu.memory_space<vmem>>, vector<1x288x128xbf16>
    %102 = vector.shape_cast %101 : vector<1x288x128xbf16> to vector<288x128xbf16>
    %103 = vector.shape_cast %100 : vector<288x128xbf16> to vector<1x288x128xbf16>
    tpu.vector_store %arg7[%c0_99, %c0_100, %c0_101], %103 {strides = array<i32>} : memref<3x288x128xbf16, #tpu.memory_space<vmem>>, vector<1x288x128xbf16>,
    %c0_102 = arith.constant 0 : index
    %c1_103 = arith.constant 1 : index
    %c0_104 = arith.constant 0 : index
    %104 = vector.load %arg8[%c0_102, %c1_103, %c0_104] : memref<18x18x128xbf16, #tpu.memory_space<vmem>>, vector<18x16x128xbf16>
    %105 = vector.shape_cast %104 : vector<18x16x128xbf16> to vector<288x128xbf16>
    %c1_105 = arith.constant 1 : index
    %c0_106 = arith.constant 0 : index
    %c0_107 = arith.constant 0 : index
    %106 = vector.load %arg7[%c1_105, %c0_106, %c0_107] : memref<3x288x128xbf16, #tpu.memory_space<vmem>>, vector<1x288x128xbf16>
    %107 = vector.shape_cast %106 : vector<1x288x128xbf16> to vector<288x128xbf16>
    %108 = vector.shape_cast %105 : vector<288x128xbf16> to vector<1x288x128xbf16>
    tpu.vector_store %arg7[%c1_105, %c0_106, %c0_107], %108 {strides = array<i32>} : memref<3x288x128xbf16, #tpu.memory_space<vmem>>, vector<1x288x128xbf16>,
    %c0_108 = arith.constant 0 : index
    %c2_109 = arith.constant 2 : index
    %c0_110 = arith.constant 0 : index
    %109 = vector.load %arg8[%c0_108, %c2_109, %c0_110] : memref<18x18x128xbf16, #tpu.memory_space<vmem>>, vector<18x16x128xbf16>
    %110 = vector.shape_cast %109 : vector<18x16x128xbf16> to vector<288x128xbf16>
    %c2_111 = arith.constant 2 : index
    %c0_112 = arith.constant 0 : index
    %c0_113 = arith.constant 0 : index
    %111 = vector.load %arg7[%c2_111, %c0_112, %c0_113] : memref<3x288x128xbf16, #tpu.memory_space<vmem>>, vector<1x288x128xbf16>
    %112 = vector.shape_cast %111 : vector<1x288x128xbf16> to vector<288x128xbf16>
    %113 = vector.shape_cast %110 : vector<288x128xbf16> to vector<1x288x128xbf16>
    tpu.vector_store %arg7[%c2_111, %c0_112, %c0_113], %113 {strides = array<i32>} : memref<3x288x128xbf16, #tpu.memory_space<vmem>>, vector<1x288x128xbf16>,
    %c0_114 = arith.constant 0 : index
    %c0_115 = arith.constant 0 : index
    %114 = vector.load %arg5[%c0_114, %c0_115] : memref<2x128xf32, #tpu.memory_space<vmem>>, vector<1x128xf32>
    %c1_116 = arith.constant 1 : index
    %c0_117 = arith.constant 0 : index
    %115 = vector.load %arg5[%c1_116, %c0_117] : memref<2x128xf32, #tpu.memory_space<vmem>>, vector<1x128xf32>
    %c0_118 = arith.constant 0 : index
    %c0_119 = arith.constant 0 : index
    %c0_120 = arith.constant 0 : index
    %116 = vector.load %arg7[%c0_118, %c0_119, %c0_120] : memref<3x288x128xbf16, #tpu.memory_space<vmem>>, vector<1x256x128xbf16>
    %117 = vector.shape_cast %116 : vector<1x256x128xbf16> to vector<256x128xbf16>
    %c0_121 = arith.constant 0 : index
    %c0_122 = arith.constant 0 : index
    %c0_123 = arith.constant 0 : index
    %118 = vector.load %arg4[%c0_121, %c0_122, %c0_123] : memref<9x128x128xbf16, #tpu.memory_space<vmem>>, vector<1x128x128xbf16>
    %119 = vector.shape_cast %118 : vector<1x128x128xbf16> to vector<128x128xbf16>
    %cst_124 = arith.constant dense<0.000000e+00> : vector<256x128xf32>
    %120 = tpu.matmul %117, %119, %cst_124 {dimension_numbers = #tpu.dot_dimension_numbers<[1], [0], [0], [1], [0, 0, 1, 1], [], []>} : vector<256x128xbf16>, vector<128x128xbf16>, vector<256x128xf32> -> vector<256x128xf32>
    %c1_125 = arith.constant 1 : index
    %c0_126 = arith.constant 0 : index
    %c0_127 = arith.constant 0 : index
    %121 = vector.load %arg7[%c1_125, %c0_126, %c0_127] : memref<3x288x128xbf16, #tpu.memory_space<vmem>>, vector<1x256x128xbf16>
    %122 = vector.shape_cast %121 : vector<1x256x128xbf16> to vector<256x128xbf16>
    %c1_128 = arith.constant 1 : index
    %c0_129 = arith.constant 0 : index
    %c0_130 = arith.constant 0 : index
    %123 = vector.load %arg4[%c1_128, %c0_129, %c0_130] : memref<9x128x128xbf16, #tpu.memory_space<vmem>>, vector<1x128x128xbf16>
    %124 = vector.shape_cast %123 : vector<1x128x128xbf16> to vector<128x128xbf16>
    %cst_131 = arith.constant dense<0.000000e+00> : vector<256x128xf32>
    %125 = tpu.matmul %122, %124, %cst_131 {dimension_numbers = #tpu.dot_dimension_numbers<[1], [0], [0], [1], [0, 0, 1, 1], [], []>} : vector<256x128xbf16>, vector<128x128xbf16>, vector<256x128xf32> -> vector<256x128xf32>
    %126 = arith.addf %120, %125 : vector<256x128xf32>
    %c2_132 = arith.constant 2 : index
    %c0_133 = arith.constant 0 : index
    %c0_134 = arith.constant 0 : index
    %127 = vector.load %arg7[%c2_132, %c0_133, %c0_134] : memref<3x288x128xbf16, #tpu.memory_space<vmem>>, vector<1x256x128xbf16>
    %128 = vector.shape_cast %127 : vector<1x256x128xbf16> to vector<256x128xbf16>
    %c2_135 = arith.constant 2 : index
    %c0_136 = arith.constant 0 : index
    %c0_137 = arith.constant 0 : index
    %129 = vector.load %arg4[%c2_135, %c0_136, %c0_137] : memref<9x128x128xbf16, #tpu.memory_space<vmem>>, vector<1x128x128xbf16>
    %130 = vector.shape_cast %129 : vector<1x128x128xbf16> to vector<128x128xbf16>
    %cst_138 = arith.constant dense<0.000000e+00> : vector<256x128xf32>
    %131 = tpu.matmul %128, %130, %cst_138 {dimension_numbers = #tpu.dot_dimension_numbers<[1], [0], [0], [1], [0, 0, 1, 1], [], []>} : vector<256x128xbf16>, vector<128x128xbf16>, vector<256x128xf32> -> vector<256x128xf32>
    %132 = arith.addf %126, %131 : vector<256x128xf32>
    %c0_139 = arith.constant 0 : index
    %c16_140 = arith.constant 16 : index
    %c0_141 = arith.constant 0 : index
    %133 = vector.load %arg7[%c0_139, %c16_140, %c0_141] : memref<3x288x128xbf16, #tpu.memory_space<vmem>>, vector<1x256x128xbf16>
    %134 = vector.shape_cast %133 : vector<1x256x128xbf16> to vector<256x128xbf16>
    %c3_142 = arith.constant 3 : index
    %c0_143 = arith.constant 0 : index
    %c0_144 = arith.constant 0 : index
    %135 = vector.load %arg4[%c3_142, %c0_143, %c0_144] : memref<9x128x128xbf16, #tpu.memory_space<vmem>>, vector<1x128x128xbf16>
    %136 = vector.shape_cast %135 : vector<1x128x128xbf16> to vector<128x128xbf16>
    %cst_145 = arith.constant dense<0.000000e+00> : vector<256x128xf32>
    %137 = tpu.matmul %134, %136, %cst_145 {dimension_numbers = #tpu.dot_dimension_numbers<[1], [0], [0], [1], [0, 0, 1, 1], [], []>} : vector<256x128xbf16>, vector<128x128xbf16>, vector<256x128xf32> -> vector<256x128xf32>
    %138 = arith.addf %132, %137 : vector<256x128xf32>
    %c1_146 = arith.constant 1 : index
    %c16_147 = arith.constant 16 : index
    %c0_148 = arith.constant 0 : index
    %139 = vector.load %arg7[%c1_146, %c16_147, %c0_148] : memref<3x288x128xbf16, #tpu.memory_space<vmem>>, vector<1x256x128xbf16>
    %140 = vector.shape_cast %139 : vector<1x256x128xbf16> to vector<256x128xbf16>
    %c4_149 = arith.constant 4 : index
    %c0_150 = arith.constant 0 : index
    %c0_151 = arith.constant 0 : index
    %141 = vector.load %arg4[%c4_149, %c0_150, %c0_151] : memref<9x128x128xbf16, #tpu.memory_space<vmem>>, vector<1x128x128xbf16>
    %142 = vector.shape_cast %141 : vector<1x128x128xbf16> to vector<128x128xbf16>
    %cst_152 = arith.constant dense<0.000000e+00> : vector<256x128xf32>
    %143 = tpu.matmul %140, %142, %cst_152 {dimension_numbers = #tpu.dot_dimension_numbers<[1], [0], [0], [1], [0, 0, 1, 1], [], []>} : vector<256x128xbf16>, vector<128x128xbf16>, vector<256x128xf32> -> vector<256x128xf32>
    %144 = arith.addf %138, %143 : vector<256x128xf32>
    %c2_153 = arith.constant 2 : index
    %c16_154 = arith.constant 16 : index
    %c0_155 = arith.constant 0 : index
    %145 = vector.load %arg7[%c2_153, %c16_154, %c0_155] : memref<3x288x128xbf16, #tpu.memory_space<vmem>>, vector<1x256x128xbf16>
    %146 = vector.shape_cast %145 : vector<1x256x128xbf16> to vector<256x128xbf16>
    %c5_156 = arith.constant 5 : index
    %c0_157 = arith.constant 0 : index
    %c0_158 = arith.constant 0 : index
    %147 = vector.load %arg4[%c5_156, %c0_157, %c0_158] : memref<9x128x128xbf16, #tpu.memory_space<vmem>>, vector<1x128x128xbf16>
    %148 = vector.shape_cast %147 : vector<1x128x128xbf16> to vector<128x128xbf16>
    %cst_159 = arith.constant dense<0.000000e+00> : vector<256x128xf32>
    %149 = tpu.matmul %146, %148, %cst_159 {dimension_numbers = #tpu.dot_dimension_numbers<[1], [0], [0], [1], [0, 0, 1, 1], [], []>} : vector<256x128xbf16>, vector<128x128xbf16>, vector<256x128xf32> -> vector<256x128xf32>
    %150 = arith.addf %144, %149 : vector<256x128xf32>
    %c0_160 = arith.constant 0 : index
    %c32_161 = arith.constant 32 : index
    %c0_162 = arith.constant 0 : index
    %151 = vector.load %arg7[%c0_160, %c32_161, %c0_162] : memref<3x288x128xbf16, #tpu.memory_space<vmem>>, vector<1x256x128xbf16>
    %152 = vector.shape_cast %151 : vector<1x256x128xbf16> to vector<256x128xbf16>
    %c6_163 = arith.constant 6 : index
    %c0_164 = arith.constant 0 : index
    %c0_165 = arith.constant 0 : index
    %153 = vector.load %arg4[%c6_163, %c0_164, %c0_165] : memref<9x128x128xbf16, #tpu.memory_space<vmem>>, vector<1x128x128xbf16>
    %154 = vector.shape_cast %153 : vector<1x128x128xbf16> to vector<128x128xbf16>
    %cst_166 = arith.constant dense<0.000000e+00> : vector<256x128xf32>
    %155 = tpu.matmul %152, %154, %cst_166 {dimension_numbers = #tpu.dot_dimension_numbers<[1], [0], [0], [1], [0, 0, 1, 1], [], []>} : vector<256x128xbf16>, vector<128x128xbf16>, vector<256x128xf32> -> vector<256x128xf32>
    %156 = arith.addf %150, %155 : vector<256x128xf32>
    %c1_167 = arith.constant 1 : index
    %c32_168 = arith.constant 32 : index
    %c0_169 = arith.constant 0 : index
    %157 = vector.load %arg7[%c1_167, %c32_168, %c0_169] : memref<3x288x128xbf16, #tpu.memory_space<vmem>>, vector<1x256x128xbf16>
    %158 = vector.shape_cast %157 : vector<1x256x128xbf16> to vector<256x128xbf16>
    %c7_170 = arith.constant 7 : index
    %c0_171 = arith.constant 0 : index
    %c0_172 = arith.constant 0 : index
    %159 = vector.load %arg4[%c7_170, %c0_171, %c0_172] : memref<9x128x128xbf16, #tpu.memory_space<vmem>>, vector<1x128x128xbf16>
    %160 = vector.shape_cast %159 : vector<1x128x128xbf16> to vector<128x128xbf16>
    %cst_173 = arith.constant dense<0.000000e+00> : vector<256x128xf32>
    %161 = tpu.matmul %158, %160, %cst_173 {dimension_numbers = #tpu.dot_dimension_numbers<[1], [0], [0], [1], [0, 0, 1, 1], [], []>} : vector<256x128xbf16>, vector<128x128xbf16>, vector<256x128xf32> -> vector<256x128xf32>
    %162 = arith.addf %156, %161 : vector<256x128xf32>
    %c2_174 = arith.constant 2 : index
    %c32_175 = arith.constant 32 : index
    %c0_176 = arith.constant 0 : index
    %163 = vector.load %arg7[%c2_174, %c32_175, %c0_176] : memref<3x288x128xbf16, #tpu.memory_space<vmem>>, vector<1x256x128xbf16>
    %164 = vector.shape_cast %163 : vector<1x256x128xbf16> to vector<256x128xbf16>
    %c8_177 = arith.constant 8 : index
    %c0_178 = arith.constant 0 : index
    %c0_179 = arith.constant 0 : index
    %165 = vector.load %arg4[%c8_177, %c0_178, %c0_179] : memref<9x128x128xbf16, #tpu.memory_space<vmem>>, vector<1x128x128xbf16>
    %166 = vector.shape_cast %165 : vector<1x128x128xbf16> to vector<128x128xbf16>
    %cst_180 = arith.constant dense<0.000000e+00> : vector<256x128xf32>
    %167 = tpu.matmul %164, %166, %cst_180 {dimension_numbers = #tpu.dot_dimension_numbers<[1], [0], [0], [1], [0, 0, 1, 1], [], []>} : vector<256x128xbf16>, vector<128x128xbf16>, vector<256x128xf32> -> vector<256x128xf32>
    %168 = arith.addf %162, %167 : vector<256x128xf32>
    %169 = vector.broadcast %114 : vector<1x128xf32> to vector<256x128xf32>
    %170 = arith.mulf %168, %169 : vector<256x128xf32>
    %171 = vector.broadcast %115 : vector<1x128xf32> to vector<256x128xf32>
    %172 = arith.addf %170, %171 : vector<256x128xf32>
    %c0_181 = arith.constant 0 : index
    %c1_182 = arith.constant 1 : index
    %c1_183 = arith.constant 1 : index
    %c0_184 = arith.constant 0 : index
    %173 = vector.load %arg1[%c0_181, %c1_182, %c1_183, %c0_184] : memref<1x18x18x128xbf16, #tpu.memory_space<vmem>>, vector<1x16x16x128xbf16>
    %174 = vector.shape_cast %173 : vector<1x16x16x128xbf16> to vector<16x16x128xbf16>
    %175 = vector.shape_cast %174 : vector<16x16x128xbf16> to vector<256x128xbf16>
    %176 = arith.extf %175 : vector<256x128xbf16> to vector<256x128xf32>
    %177 = arith.addf %172, %176 : vector<256x128xf32>
    %cst_185 = arith.constant 2.000000e+01 : f32
    %178 = vector.broadcast %cst_185 : f32 to vector<256x128xf32>
    %179 = arith.cmpf ogt, %177, %178 : vector<256x128xf32>
    %cst_186 = arith.constant 2.000000e+01 : f32
    %180 = vector.broadcast %cst_186 : f32 to vector<256x128xf32>
    %181 = arith.minimumf %177, %180 : vector<256x128xf32>
    %182 = math.exp %181 : vector<256x128xf32>
    %183 = math.log1p %182 : vector<256x128xf32>
    %184 = arith.select %179, %177, %183 : vector<256x128xi1>, vector<256x128xf32>
    %185 = arith.truncf %184 : vector<256x128xf32> to vector<256x128xbf16>
    %186 = vector.shape_cast %185 : vector<256x128xbf16> to vector<16x16x128xbf16>
    %c0_187 = arith.constant 0 : index
    %c0_188 = arith.constant 0 : index
    %c0_189 = arith.constant 0 : index
    %c0_190 = arith.constant 0 : index
    %187 = vector.load %arg6[%c0_187, %c0_188, %c0_189, %c0_190] : memref<1x16x16x128xbf16, #tpu.memory_space<vmem>>, vector<1x16x16x128xbf16>
    %188 = vector.shape_cast %187 : vector<1x16x16x128xbf16> to vector<16x16x128xbf16>
    %189 = vector.shape_cast %186 : vector<16x16x128xbf16> to vector<1x16x16x128xbf16>
    tpu.vector_store %arg6[%c0_187, %c0_188, %c0_189, %c0_190], %189 {strides = array<i32>} : memref<1x16x16x128xbf16, #tpu.memory_space<vmem>>, vector<1x16x16x128xbf16>,
    return
  }
  func.func @transform_0(%arg0: i32) -> (i32, i32, i32, i32) {
    %c0_i32 = arith.constant 0 : i32
    %c0_i32_0 = arith.constant 0 : i32
    %c0_i32_1 = arith.constant 0 : i32
    %c0_i32_2 = arith.constant 0 : i32
    return %arg0, %c0_i32, %c0_i32_0, %c0_i32_1 : i32, i32, i32, i32
  }
  func.func @transform_1(%arg0: i32) -> (i32, i32, i32) {
    %c0_i32 = arith.constant 0 : i32
    %c0_i32_0 = arith.constant 0 : i32
    %c0_i32_1 = arith.constant 0 : i32
    %c0_i32_2 = arith.constant 0 : i32
    return %c0_i32, %c0_i32_0, %c0_i32_1 : i32, i32, i32
  }
  func.func @transform_2(%arg0: i32) -> (i32, i32) {
    %c0_i32 = arith.constant 0 : i32
    %c0_i32_0 = arith.constant 0 : i32
    %c0_i32_1 = arith.constant 0 : i32
    return %c0_i32, %c0_i32_0 : i32, i32
  }
  func.func @transform_3(%arg0: i32) -> (i32, i32, i32) {
    %c0_i32 = arith.constant 0 : i32
    %c0_i32_0 = arith.constant 0 : i32
    %c0_i32_1 = arith.constant 0 : i32
    %c0_i32_2 = arith.constant 0 : i32
    return %c0_i32, %c0_i32_0, %c0_i32_1 : i32, i32, i32
  }
  func.func @transform_4(%arg0: i32) -> (i32, i32) {
    %c0_i32 = arith.constant 0 : i32
    %c0_i32_0 = arith.constant 0 : i32
    %c0_i32_1 = arith.constant 0 : i32
    return %c0_i32, %c0_i32_0 : i32, i32
  }
  func.func @transform_5(%arg0: i32) -> (i32, i32, i32, i32) {
    %c0_i32 = arith.constant 0 : i32
    %c0_i32_0 = arith.constant 0 : i32
    %c0_i32_1 = arith.constant 0 : i32
    %c0_i32_2 = arith.constant 0 : i32
    return %arg0, %c0_i32, %c0_i32_0, %c0_i32_1 : i32, i32, i32, i32
  }
}

</mosaic_0001>

<llo_original>
// kernel: basic_block_forward.1
$region0: #{basic_block_forward.1}
  #allocation0 [shape = 'u32[]', space=smem, size = 0x4, offset = 0x4, fixed_abs, tag = 'smem constant byte address 0x4 - core index']
  #allocation1 [shape = 'u32[144,128]{1,0:T(1,128)}', space=vmem, size = 0x12000, scoped, tag = 'internal scratch']
  #allocation2 [shape = 'bf16[3,288,128]{2,1,0:T(16,128)(2,1)}', space=vmem, size = 0x36000, scoped, tag = 'scratch operand']
  #allocation3 [shape = 'bf16[18,18,128]{2,1,0:T(8,128)(2,1)}', space=vmem, size = 0x1b000, scoped, tag = 'scratch operand']
  %s0 = inlined_call_operand.vmem [shape: bf16[2,18,18,128], index: 0, kind: input, shape index: {}]
  %s1 = inlined_call_operand.vmem [shape: bf16[9,128,128], index: 1, kind: input, shape index: {}]
  %s2 = inlined_call_operand.vmem [shape: f32[2,128], index: 2, kind: input, shape index: {}]
  %s3 = inlined_call_operand.vmem [shape: bf16[9,128,128], index: 3, kind: input, shape index: {}]
  %s4 = inlined_call_operand.vmem [shape: f32[2,128], index: 4, kind: input, shape index: {}]
  %s5 = inlined_call_operand.vmem [shape: bf16[2,16,16,128], index: 5, kind: output, shape index: {}]
  %s6 = sld [smem:[#allocation0]]
  $region53: #{basic_block_forward.1} parent=0
    _
  %s8 = ssub.s32 1, %s6
  %s9 = scalar_select 0, %s8, %s6
  loop: start=0, step=1, limit=4
  $region2: #{basic_block_forward.1} parent=0 // loop_pre_header
    _
  $region3: #{basic_block_forward.1} parent=0 // loop_header
    %s11 = sphi 0, %s15
    %p12 = scmp.ge.s32.totalorder %s11, 4
    %s21 = sphi 0, %s23
    %s24 = sphi 0, %s21
    %s25 = sphi 0, %s24
    %s41 = sphi 0, %s25
    %s45 = sphi 0, %s45
    %s47 = sphi 0, %s45
    %s48 = sphi 0, %s47
    %s62 = sphi 0, %s48
    %s66 = sphi 0, %s66
    %s68 = sphi 0, %s66
    %s69 = sphi 0, %s68
    %s83 = sphi 0, %s69
    %s87 = sphi 0, %s87
    %s89 = sphi 0, %s87
    %s90 = sphi 0, %s89
    %s104 = sphi 0, %s90
    %s108 = sphi 0, %s108
    %s110 = sphi 0, %s108
    %s111 = sphi 0, %s110
    %s125 = sphi 0, %s111
    %s131 = sphi 0, %s133
    %s134 = sphi 0, %s131
    %s135 = sphi 0, %s134
    %s151 = sphi 0, %s135
  $region4: #{basic_block_forward.1} parent=0 // loop_header_branch
    %14 = sbr.rel (%p12) target = $region8
  $region5: #{basic_block_forward.1} parent=0 // loop_body
    %s16 = ssub.s32 %s11, 1
    %s17 = ssub.s32 %s11, 2
    %s18 = sadd.s32 %s11, 1
    %s19 = ssub.s32 %s11, %s18
    %p20 = scmp.eq.s32.totalorder %s19, 0
    %s22 = sadd.s32 %s21, 1
    %s23 = scalar_select %p20, %s21, %s22
    %p26 = pneg %p20
    %p27 = scmp.eq.s32.totalorder %s11, 1
    %p28 = por %p26, %p27
    %p29 = scmp.ne.s32.totalorder %s21, %s24
    %p30 = scmp.eq.s32.totalorder %s11, 0
    %p31 = por %p29, %p30
    %p32 = scmp.ne.s32.totalorder %s21, %s24
    %p33 = scmp.eq.s32.totalorder %s16, 1
    %p34 = por %p32, %p33
    %p35 = scmp.ne.s32.totalorder %s24, %s25
    %p36 = scmp.eq.s32.totalorder %s16, 0
    %p37 = por %p35, %p36
    %p38 = scmp.ne.s32.totalorder %s24, %s25
    %p39 = scmp.eq.s32.totalorder %s17, 1
    %p40 = por %p38, %p39
    %p42 = scmp.ne.s32.totalorder %s25, %s41
    %p43 = scmp.eq.s32.totalorder %s17, 0
    %p44 = por %p42, %p43
    %s46 = sadd.s32 %s45, 1
    %p49 = scmp.eq.s32.totalorder %s11, 1
    %p50 = scmp.ne.s32.totalorder %s45, %s47
    %p51 = scmp.eq.s32.totalorder %s11, 0
    %p52 = por %p50, %p51
    %p53 = scmp.ne.s32.totalorder %s45, %s47
    %p54 = scmp.eq.s32.totalorder %s16, 1
    %p55 = por %p53, %p54
    %p56 = scmp.ne.s32.totalorder %s47, %s48
    %p57 = scmp.eq.s32.totalorder %s16, 0
    %p58 = por %p56, %p57
    %p59 = scmp.ne.s32.totalorder %s47, %s48
    %p60 = scmp.eq.s32.totalorder %s17, 1
    %p61 = por %p59, %p60
    %p63 = scmp.ne.s32.totalorder %s48, %s62
    %p64 = scmp.eq.s32.totalorder %s17, 0
    %p65 = por %p63, %p64
    %s67 = sadd.s32 %s66, 1
    %p70 = scmp.eq.s32.totalorder %s11, 1
    %p71 = scmp.ne.s32.totalorder %s66, %s68
    %p72 = scmp.eq.s32.totalorder %s11, 0
    %p73 = por %p71, %p72
    %p74 = scmp.ne.s32.totalorder %s66, %s68
    %p75 = scmp.eq.s32.totalorder %s16, 1
    %p76 = por %p74, %p75
    %p77 = scmp.ne.s32.totalorder %s68, %s69
    %p78 = scmp.eq.s32.totalorder %s16, 0
    %p79 = por %p77, %p78
    %p80 = scmp.ne.s32.totalorder %s68, %s69
    %p81 = scmp.eq.s32.totalorder %s17, 1
    %p82 = por %p80, %p81
    %p84 = scmp.ne.s32.totalorder %s69, %s83
    %p85 = scmp.eq.s32.totalorder %s17, 0
    %p86 = por %p84, %p85
    %s88 = sadd.s32 %s87, 1
    %p91 = scmp.eq.s32.totalorder %s11, 1
    %p92 = scmp.ne.s32.totalorder %s87, %s89
    %p93 = scmp.eq.s32.totalorder %s11, 0
    %p94 = por %p92, %p93
    %p95 = scmp.ne.s32.totalorder %s87, %s89
    %p96 = scmp.eq.s32.totalorder %s16, 1
    %p97 = por %p95, %p96
    %p98 = scmp.ne.s32.totalorder %s89, %s90
    %p99 = scmp.eq.s32.totalorder %s16, 0
    %p100 = por %p98, %p99
    %p101 = scmp.ne.s32.totalorder %s89, %s90
    %p102 = scmp.eq.s32.totalorder %s17, 1
    %p103 = por %p101, %p102
    %p105 = scmp.ne.s32.totalorder %s90, %s104
    %p106 = scmp.eq.s32.totalorder %s17, 0
    %p107 = por %p105, %p106
    %s109 = sadd.s32 %s108, 1
    %p112 = scmp.eq.s32.totalorder %s11, 1
    %p113 = scmp.ne.s32.totalorder %s108, %s110
    %p114 = scmp.eq.s32.totalorder %s11, 0
    %p115 = por %p113, %p114
    %p116 = scmp.ne.s32.totalorder %s108, %s110
    %p117 = scmp.eq.s32.totalorder %s16, 1
    %p118 = por %p116, %p117
    %p119 = scmp.ne.s32.totalorder %s110, %s111
    %p120 = scmp.eq.s32.totalorder %s16, 0
    %p121 = por %p119, %p120
    %p122 = scmp.ne.s32.totalorder %s110, %s111
    %p123 = scmp.eq.s32.totalorder %s17, 1
    %p124 = por %p122, %p123
    %p126 = scmp.ne.s32.totalorder %s111, %s125
    %p127 = scmp.eq.s32.totalorder %s17, 0
    %p128 = por %p126, %p127
    %s129 = ssub.s32 %s11, %s18
    %p130 = scmp.eq.s32.totalorder %s129, 0
    %s132 = sadd.s32 %s131, 1
    %s133 = scalar_select %p130, %s131, %s132
    %p136 = pneg %p130
    %p137 = scmp.eq.s32.totalorder %s11, 1
    %p138 = por %p136, %p137
    %p139 = scmp.ne.s32.totalorder %s131, %s134
    %p140 = scmp.eq.s32.totalorder %s11, 0
    %p141 = por %p139, %p140
    %p142 = scmp.ne.s32.totalorder %s131, %s134
    %p143 = scmp.eq.s32.totalorder %s16, 1
    %p144 = por %p142, %p143
    %p145 = scmp.ne.s32.totalorder %s134, %s135
    %p146 = scmp.eq.s32.totalorder %s16, 0
    %p147 = por %p145, %p146
    %p148 = scmp.ne.s32.totalorder %s134, %s135
    %p149 = scmp.eq.s32.totalorder %s17, 1
    %p150 = por %p148, %p149
    %p152 = scmp.ne.s32.totalorder %s135, %s151
    %p153 = scmp.eq.s32.totalorder %s17, 0
    %p154 = por %p152, %p153
    %p155 = scmp.le.s32.totalorder 1, %s11
    %p156 = scmp.lt.s32.totalorder %s11, 3
    %p157 = pnand %p155, %p156
    %p158 = pneg %p157
    // Predicated region
    $region9: #{basic_block_forward.1} parent=5 // pred_check
      _
    $region10: #{basic_block_forward.1} parent=5 // pred_check_branch
      %160 = sbr.rel (%p157) target = $region12
    $region11: #{basic_block_forward.1} parent=5 // pred_region
      %s161 = ssub.s32 %s11, 1
      // Predicated region
      $region13: #{basic_block_forward.1} parent=11 // pred_check
        %p162 = pneg %p58
      $region14: #{basic_block_forward.1} parent=11 // pred_check_branch
        %164 = sbr.rel (%p162) target = $region16
      $region15: #{basic_block_forward.1} parent=11 // pred_region
        _
      $region16: #{basic_block_forward.1} parent=11 // pred_fallthru
        _
      // Predicated region
      $region17: #{basic_block_forward.1} parent=11 // pred_check
        %p165 = pneg %p79
      $region18: #{basic_block_forward.1} parent=11 // pred_check_branch
        %167 = sbr.rel (%p165) target = $region20
      $region19: #{basic_block_forward.1} parent=11 // pred_region
        _
      $region20: #{basic_block_forward.1} parent=11 // pred_fallthru
        _
      // Predicated region
      $region21: #{basic_block_forward.1} parent=11 // pred_check
        %p168 = pneg %p100
      $region22: #{basic_block_forward.1} parent=11 // pred_check_branch
        %170 = sbr.rel (%p168) target = $region24
      $region23: #{basic_block_forward.1} parent=11 // pred_region
        _
      $region24: #{basic_block_forward.1} parent=11 // pred_fallthru
        _
      // Predicated region
      $region25: #{basic_block_forward.1} parent=11 // pred_check
        %p171 = pneg %p121
      $region26: #{basic_block_forward.1} parent=11 // pred_check_branch
        %173 = sbr.rel (%p171) target = $region28
      $region27: #{basic_block_forward.1} parent=11 // pred_region
        _
      $region28: #{basic_block_forward.1} parent=11 // pred_fallthru
        _
    $region12: #{basic_block_forward.1} parent=5 // pred_fallthru
      _
    %p174 = scmp.lt.s32.totalorder %s11, 2
    // Predicated region
    $region29: #{basic_block_forward.1} parent=5 // pred_check
      %p175 = pneg %p174
    $region30: #{basic_block_forward.1} parent=5 // pred_check_branch
      %177 = sbr.rel (%p175) target = $region32
    $region31: #{basic_block_forward.1} parent=5 // pred_region
      // Predicated region
      $region33: #{basic_block_forward.1} parent=31 // pred_check
        %p178 = pneg %p31
      $region34: #{basic_block_forward.1} parent=31 // pred_check_branch
        %180 = sbr.rel (%p178) target = $region36
      $region35: #{basic_block_forward.1} parent=31 // pred_region
        %p181 = scmp.lt.s32.totalorder %s11, 1
        %s182 = scalar_select %p181, %s11, 1
        %s183 = smul.addr %s182, 54
        %s184 = smul.addr %s183, 4
        %s185 = scalar_lea.vmem %s0, %s184
      $region36: #{basic_block_forward.1} parent=31 // pred_fallthru
        _
    $region32: #{basic_block_forward.1} parent=5 // pred_fallthru
      _
    %p186 = scmp.le.s32.totalorder 1, %s11
    %p187 = scmp.lt.s32.totalorder %s11, 3
    %p188 = pnand %p186, %p187
    %p189 = pneg %p188
    // Predicated region
    $region37: #{basic_block_forward.1} parent=5 // pred_check
      _
    $region38: #{basic_block_forward.1} parent=5 // pred_check_branch
      %191 = sbr.rel (%p188) target = $region40
    $region39: #{basic_block_forward.1} parent=5 // pred_region
      %s192 = ssub.s32 %s11, 1
      %p193 = scmp.lt.s32.totalorder %s16, 1
      %s194 = scalar_select %p193, %s16, 1
      %s195 = smul.addr %s194, 54
      %s196 = smul.addr %s195, 4
      %s197 = scalar_lea.vmem %s0, %s196
      %p198 = pneg %p37
      %p199 = pneg %p34
      %p200 = pneg %p58
      %p201 = pneg %p55
      %p202 = pneg %p79
      %p203 = pneg %p76
      %p204 = pneg %p100
      %p205 = pneg %p97
      %p206 = pneg %p121
      %p207 = pneg %p118
      %p208 = pneg %p147
      %p209 = pneg %p144
      %p210 = scmp.lt.s32.totalorder %s16, 1
      %s211 = scalar_select %p210, %s16, 1
      %s212 = smul.addr %s211, 32
      %s213 = smul.addr %s212, 4
      %s214 = scalar_lea.vmem %s5, %s213
      %p215 = scmp.lt.s32.totalorder %s16, 1
      %s216 = scalar_select %p215, %s16, 1
      %s217 = smul.addr %s216, 54
      %s218 = smul.addr %s217, 4
      %s219 = scalar_lea.vmem %s0, %s218
      %p220 = scmp.lt.s32.totalorder %s16, 1
      %s221 = scalar_select %p220, %s16, 1
      %s222 = smul.addr %s221, 32
      %s223 = smul.addr %s222, 4
      %s224 = scalar_lea.vmem %s5, %s223
      %226 = vst [vmem:[#allocation3] sm:$0xf] 0
      %227 = vst [vmem:[#allocation3 + $0x4] sm:$0xf] 0
      %228 = vst [vmem:[#allocation3 + $0x8] sm:$0x1] 0
      %s229 = scalar_lea.vmem [#allocation3], 204
      %230 = vst [vmem:[%s229] sm:$0xf] 0
      %231 = vst [vmem:[%s229 + $0x4] sm:$0xf] 0
      %232 = vst [vmem:[%s229 + $0x8] sm:$0x1] 0
      %vm233 = vcmask 1040384
      %vm234 = vsmask.f32 256
      %vm235 = vmand %vm233, %vm234
      %v236 = vld [vmem:[#allocation3] sm:$0x1]
      %v237 = vsel %vm235, 0, %v236
      %238 = vst [vmem:[#allocation3] sm:$0x1] %v237
      %v239 = vld [vmem:[#allocation3 + $0xc] sm:$0x1]
      %v240 = vsel %vm235, 0, %v239
      %241 = vst [vmem:[#allocation3 + $0xc] sm:$0x1] %v240
      %v242 = vld [vmem:[#allocation3 + $0x18] sm:$0x1]
      %v243 = vsel %vm235, 0, %v242
      %244 = vst [vmem:[#allocation3 + $0x18] sm:$0x1] %v243
      %v245 = vld [vmem:[#allocation3 + $0x24] sm:$0x1]
      %v246 = vsel %vm235, 0, %v245
      %247 = vst [vmem:[#allocation3 + $0x24] sm:$0x1] %v246
      %v248 = vld [vmem:[#allocation3 + $0x30] sm:$0x1]
      %v249 = vsel %vm235, 0, %v248
      %250 = vst [vmem:[#allocation3 + $0x30] sm:$0x1] %v249
      %v251 = vld [vmem:[#allocation3 + $0x3c] sm:$0x1]
      %v252 = vsel %vm235, 0, %v251
      %253 = vst [vmem:[#allocation3 + $0x3c] sm:$0x1] %v252
      %v254 = vld [vmem:[#allocation3 + $0x48] sm:$0x1]
      %v255 = vsel %vm235, 0, %v254
      %256 = vst [vmem:[#allocation3 + $0x48] sm:$0x1] %v255
      %v257 = vld [vmem:[#allocation3 + $0x54] sm:$0x1]
      %v258 = vsel %vm235, 0, %v257
      %259 = vst [vmem:[#allocation3 + $0x54] sm:$0x1] %v258
      %v260 = vld [vmem:[#allocation3 + $0x60] sm:$0x1]
      %v261 = vsel %vm235, 0, %v260
      %262 = vst [vmem:[#allocation3 + $0x60] sm:$0x1] %v261
      %v263 = vld [vmem:[#allocation3 + $0x6c] sm:$0x1]
      %v264 = vsel %vm235, 0, %v263
      %265 = vst [vmem:[#allocation3 + $0x6c] sm:$0x1] %v264
      %v266 = vld [vmem:[#allocation3 + $0x78] sm:$0x1]
      %v267 = vsel %vm235, 0, %v266
      %268 = vst [vmem:[#allocation3 + $0x78] sm:$0x1] %v267
      %v269 = vld [vmem:[#allocation3 + $0x84] sm:$0x1]
      %v270 = vsel %vm235, 0, %v269
      %271 = vst [vmem:[#allocation3 + $0x84] sm:$0x1] %v270
      %v272 = vld [vmem:[#allocation3 + $0x90] sm:$0x1]
      %v273 = vsel %vm235, 0, %v272
      %274 = vst [vmem:[#allocation3 + $0x90] sm:$0x1] %v273
      %v275 = vld [vmem:[#allocation3 + $0x9c] sm:$0x1]
      %v276 = vsel %vm235, 0, %v275
      %277 = vst [vmem:[#allocation3 + $0x9c] sm:$0x1] %v276
      %v278 = vld [vmem:[#allocation3 + $0xa8] sm:$0x1]
      %v279 = vsel %vm235, 0, %v278
      %280 = vst [vmem:[#allocation3 + $0xa8] sm:$0x1] %v279
      %v281 = vld [vmem:[#allocation3 + $0xb4] sm:$0x1]
      %v282 = vsel %vm235, 0, %v281
      %283 = vst [vmem:[#allocation3 + $0xb4] sm:$0x1] %v282
      %v284 = vld [vmem:[#allocation3 + $0xc0] sm:$0x1]
      %v285 = vsel %vm235, 0, %v284
      %286 = vst [vmem:[#allocation3 + $0xc0] sm:$0x1] %v285
      %v287 = vld [vmem:[#allocation3 + $0xcc] sm:$0x1]
      %v288 = vsel %vm235, 0, %v287
      %289 = vst [vmem:[#allocation3 + $0xcc] sm:$0x1] %v288
      %vm290 = vsmask.f32 7938
      %vm291 = vmand %vm233, %vm290
      %v292 = vld [vmem:[#allocation3 + $0x8] sm:$0x1]
      %v293 = vsel %vm291, 0, %v292
      %294 = vst [vmem:[#allocation3 + $0x8] sm:$0x1] %v293
      %v295 = vld [vmem:[#allocation3 + $0x14] sm:$0x1]
      %v296 = vsel %vm291, 0, %v295
      %297 = vst [vmem:[#allocation3 + $0x14] sm:$0x1] %v296
      %v298 = vld [vmem:[#allocation3 + $0x20] sm:$0x1]
      %v299 = vsel %vm291, 0, %v298
      %300 = vst [vmem:[#allocation3 + $0x20] sm:$0x1] %v299
      %v301 = vld [vmem:[#allocation3 + $0x2c] sm:$0x1]
      %v302 = vsel %vm291, 0, %v301
      %303 = vst [vmem:[#allocation3 + $0x2c] sm:$0x1] %v302
      %v304 = vld [vmem:[#allocation3 + $0x38] sm:$0x1]
      %v305 = vsel %vm291, 0, %v304
      %306 = vst [vmem:[#allocation3 + $0x38] sm:$0x1] %v305
      %v307 = vld [vmem:[#allocation3 + $0x44] sm:$0x1]
      %v308 = vsel %vm291, 0, %v307
      %309 = vst [vmem:[#allocation3 + $0x44] sm:$0x1] %v308
      %v310 = vld [vmem:[#allocation3 + $0x50] sm:$0x1]
      %v311 = vsel %vm291, 0, %v310
      %312 = vst [vmem:[#allocation3 + $0x50] sm:$0x1] %v311
      %v313 = vld [vmem:[#allocation3 + $0x5c] sm:$0x1]
      %v314 = vsel %vm291, 0, %v313
      %315 = vst [vmem:[#allocation3 + $0x5c] sm:$0x1] %v314
      %v316 = vld [vmem:[#allocation3 + $0x68] sm:$0x1]
      %v317 = vsel %vm291, 0, %v316
      %318 = vst [vmem:[#allocation3 + $0x68] sm:$0x1] %v317
      %v319 = vld [vmem:[#allocation3 + $0x74] sm:$0x1]
      %v320 = vsel %vm291, 0, %v319
      %321 = vst [vmem:[#allocation3 + $0x74] sm:$0x1] %v320
      %v322 = vld [vmem:[#allocation3 + $0x80] sm:$0x1]
      %v323 = vsel %vm291, 0, %v322
      %324 = vst [vmem:[#allocation3 + $0x80] sm:$0x1] %v323
      %v325 = vld [vmem:[#allocation3 + $0x8c] sm:$0x1]
      %v326 = vsel %vm291, 0, %v325
      %327 = vst [vmem:[#allocation3 + $0x8c] sm:$0x1] %v326
      %v328 = vld [vmem:[#allocation3 + $0x98] sm:$0x1]
      %v329 = vsel %vm291, 0, %v328
      %330 = vst [vmem:[#allocation3 + $0x98] sm:$0x1] %v329
      %v331 = vld [vmem:[#allocation3 + $0xa4] sm:$0x1]
      %v332 = vsel %vm291, 0, %v331
      %333 = vst [vmem:[#allocation3 + $0xa4] sm:$0x1] %v332
      %v334 = vld [vmem:[#allocation3 + $0xb0] sm:$0x1]
      %v335 = vsel %vm291, 0, %v334
      %336 = vst [vmem:[#allocation3 + $0xb0] sm:$0x1] %v335
      %v337 = vld [vmem:[#allocation3 + $0xbc] sm:$0x1]
      %v338 = vsel %vm291, 0, %v337
      %339 = vst [vmem:[#allocation3 + $0xbc] sm:$0x1] %v338
      %v340 = vld [vmem:[#allocation3 + $0xc8] sm:$0x1]
      %v341 = vsel %vm291, 0, %v340
      %342 = vst [vmem:[#allocation3 + $0xc8] sm:$0x1] %v341
      %v343 = vld [vmem:[#allocation3 + $0xd4] sm:$0x1]
      %v344 = vsel %vm291, 0, %v343
      %345 = vst [vmem:[#allocation3 + $0xd4] sm:$0x1] %v344
      %v346 = vld [vmem:[%s219] sm:$0xf]
      %v347 = vld [vmem:[%s219 + $0x4] sm:$0xf]
      %v348 = vld [vmem:[%s219 + $0xc] sm:$0xf]
      %v349 = vld [vmem:[%s219 + $0x10] sm:$0xf]
      %v350 = vld [vmem:[%s219 + $0x18] sm:$0xf]
      %v351 = vld [vmem:[%s219 + $0x1c] sm:$0xf]
      %v352 = vld [vmem:[%s219 + $0x24] sm:$0xf]
      %v353 = vld [vmem:[%s219 + $0x28] sm:$0xf]
      %v354 = vld [vmem:[%s219 + $0x30] sm:$0xf]
      %v355 = vld [vmem:[%s219 + $0x34] sm:$0xf]
      %v356 = vld [vmem:[%s219 + $0x3c] sm:$0xf]
      %v357 = vld [vmem:[%s219 + $0x40] sm:$0xf]
      %v358 = vld [vmem:[%s219 + $0x48] sm:$0xf]
      %v359 = vld [vmem:[%s219 + $0x4c] sm:$0xf]
      %v360 = vld [vmem:[%s219 + $0x54] sm:$0xf]
      %v361 = vld [vmem:[%s219 + $0x58] sm:$0xf]
      %v362 = vld [vmem:[%s219 + $0x60] sm:$0xf]
      %v363 = vld [vmem:[%s219 + $0x64] sm:$0xf]
      %v364 = vld [vmem:[%s219 + $0x6c] sm:$0xf]
      %v365 = vld [vmem:[%s219 + $0x70] sm:$0xf]
      %v366 = vld [vmem:[%s219 + $0x78] sm:$0xf]
      %v367 = vld [vmem:[%s219 + $0x7c] sm:$0xf]
      %v368 = vld [vmem:[%s219 + $0x84] sm:$0xf]
      %v369 = vld [vmem:[%s219 + $0x88] sm:$0xf]
      %v370 = vld [vmem:[%s219 + $0x90] sm:$0xf]
      %v371 = vld [vmem:[%s219 + $0x94] sm:$0xf]
      %v372 = vld [vmem:[%s219 + $0x9c] sm:$0xf]
      %v373 = vld [vmem:[%s219 + $0xa0] sm:$0xf]
      %v374 = vld [vmem:[%s219 + $0xa8] sm:$0xf]
      %v375 = vld [vmem:[%s219 + $0xac] sm:$0xf]
      %v376 = vld [vmem:[%s219 + $0xb4] sm:$0xf]
      %v377 = vld [vmem:[%s219 + $0xb8] sm:$0xf]
      %v378 = vld [vmem:[%s219 + $0xc0] sm:$0xf]
      %v379 = vld [vmem:[%s219 + $0xc4] sm:$0xf]
      %v380 = vld [vmem:[%s219 + $0xcc] sm:$0xf]
      %v381 = vld [vmem:[%s219 + $0xd0] sm:$0xf]
      %v418 = vunpack.c.l.b16 %v346
      %v419 = vunpack.c.l.b16 %v347
      %v420 = vunpack.c.l.b16 %v348
      %v421 = vunpack.c.l.b16 %v349
      %v422 = vunpack.c.l.b16 %v350
      %v423 = vunpack.c.l.b16 %v351
      %v424 = vunpack.c.l.b16 %v352
      %v425 = vunpack.c.l.b16 %v353
      %v426 = vunpack.c.l.b16 %v354
      %v427 = vunpack.c.l.b16 %v355
      %v428 = vunpack.c.l.b16 %v356
      %v429 = vunpack.c.l.b16 %v357
      %v430 = vunpack.c.l.b16 %v358
      %v431 = vunpack.c.l.b16 %v359
      %v432 = vunpack.c.l.b16 %v360
      %v433 = vunpack.c.l.b16 %v361
      %v434 = vunpack.c.l.b16 %v362
      %v435 = vunpack.c.l.b16 %v363
      %v436 = vunpack.c.l.b16 %v364
      %v437 = vunpack.c.l.b16 %v365
      %v438 = vunpack.c.l.b16 %v366
      %v439 = vunpack.c.l.b16 %v367
      %v440 = vunpack.c.l.b16 %v368
      %v441 = vunpack.c.l.b16 %v369
      %v442 = vunpack.c.l.b16 %v370
      %v443 = vunpack.c.l.b16 %v371
      %v444 = vunpack.c.l.b16 %v372
      %v445 = vunpack.c.l.b16 %v373
      %v446 = vunpack.c.l.b16 %v374
      %v447 = vunpack.c.l.b16 %v375
      %v448 = vunpack.c.l.b16 %v376
      %v449 = vunpack.c.l.b16 %v377
      %v450 = vunpack.c.l.b16 %v378
      %v451 = vunpack.c.l.b16 %v379
      %v452 = vunpack.c.l.b16 %v380
      %v453 = vunpack.c.l.b16 %v381
      %v454 = vpack.c.b16 %v419, %v418
      %v455 = vpack.c.b16 %v421, %v420
      %v456 = vpack.c.b16 %v423, %v422
      %v457 = vpack.c.b16 %v425, %v424
      %v458 = vpack.c.b16 %v427, %v426
      %v459 = vpack.c.b16 %v429, %v428
      %v460 = vpack.c.b16 %v431, %v430
      %v461 = vpack.c.b16 %v433, %v432
      %v462 = vpack.c.b16 %v435, %v434
      %v463 = vpack.c.b16 %v437, %v436
      %v464 = vpack.c.b16 %v439, %v438
      %v465 = vpack.c.b16 %v441, %v440
      %v466 = vpack.c.b16 %v443, %v442
      %v467 = vpack.c.b16 %v445, %v444
      %v468 = vpack.c.b16 %v447, %v446
      %v469 = vpack.c.b16 %v449, %v448
      %v470 = vpack.c.b16 %v451, %v450
      %v471 = vpack.c.b16 %v453, %v452
      %490 = vst [vmem:[#allocation2] sm:$0xff] %v454
      %491 = vst [vmem:[#allocation2 + $0x8] sm:$0xff] %v455
      %492 = vst [vmem:[#allocation2 + $0x10] sm:$0xff] %v456
      %493 = vst [vmem:[#allocation2 + $0x18] sm:$0xff] %v457
      %494 = vst [vmem:[#allocation2 + $0x20] sm:$0xff] %v458
      %495 = vst [vmem:[#allocation2 + $0x28] sm:$0xff] %v459
      %496 = vst [vmem:[#allocation2 + $0x30] sm:$0xff] %v460
      %497 = vst [vmem:[#allocation2 + $0x38] sm:$0xff] %v461
      %498 = vst [vmem:[#allocation2 + $0x40] sm:$0xff] %v462
      %499 = vst [vmem:[#allocation2 + $0x48] sm:$0xff] %v463
      %500 = vst [vmem:[#allocation2 + $0x50] sm:$0xff] %v464
      %501 = vst [vmem:[#allocation2 + $0x58] sm:$0xff] %v465
      %502 = vst [vmem:[#allocation2 + $0x60] sm:$0xff] %v466
      %503 = vst [vmem:[#allocation2 + $0x68] sm:$0xff] %v467
      %504 = vst [vmem:[#allocation2 + $0x70] sm:$0xff] %v468
      %505 = vst [vmem:[#allocation2 + $0x78] sm:$0xff] %v469
      %506 = vst [vmem:[#allocation2 + $0x80] sm:$0xff] %v470
      %507 = vst [vmem:[#allocation2 + $0x88] sm:$0xff] %v471
      %v508 = vld [vmem:[%s219] sm:$0xf]
      %v509 = vld [vmem:[%s219 + $0x4] sm:$0xf]
      %v510 = vld [vmem:[%s219 + $0x8] sm:$0x1]
      %v511 = vld [vmem:[%s219 + $0xc] sm:$0xf]
      %v512 = vld [vmem:[%s219 + $0x10] sm:$0xf]
      %v513 = vld [vmem:[%s219 + $0x14] sm:$0x1]
      %v514 = vld [vmem:[%s219 + $0x18] sm:$0xf]
      %v515 = vld [vmem:[%s219 + $0x1c] sm:$0xf]
      %v516 = vld [vmem:[%s219 + $0x20] sm:$0x1]
      %v517 = vld [vmem:[%s219 + $0x24] sm:$0xf]
      %v518 = vld [vmem:[%s219 + $0x28] sm:$0xf]
      %v519 = vld [vmem:[%s219 + $0x2c] sm:$0x1]
      %v520 = vld [vmem:[%s219 + $0x30] sm:$0xf]
      %v521 = vld [vmem:[%s219 + $0x34] sm:$0xf]
      %v522 = vld [vmem:[%s219 + $0x38] sm:$0x1]
      %v523 = vld [vmem:[%s219 + $0x3c] sm:$0xf]
      %v524 = vld [vmem:[%s219 + $0x40] sm:$0xf]
      %v525 = vld [vmem:[%s219 + $0x44] sm:$0x1]
      %v526 = vld [vmem:[%s219 + $0x48] sm:$0xf]
      %v527 = vld [vmem:[%s219 + $0x4c] sm:$0xf]
      %v528 = vld [vmem:[%s219 + $0x50] sm:$0x1]
      %v529 = vld [vmem:[%s219 + $0x54] sm:$0xf]
      %v530 = vld [vmem:[%s219 + $0x58] sm:$0xf]
      %v531 = vld [vmem:[%s219 + $0x5c] sm:$0x1]
      %v532 = vld [vmem:[%s219 + $0x60] sm:$0xf]
      %v533 = vld [vmem:[%s219 + $0x64] sm:$0xf]
      %v534 = vld [vmem:[%s219 + $0x68] sm:$0x1]
      %v535 = vld [vmem:[%s219 + $0x6c] sm:$0xf]
      %v536 = vld [vmem:[%s219 + $0x70] sm:$0xf]
      %v537 = vld [vmem:[%s219 + $0x74] sm:$0x1]
      %v538 = vld [vmem:[%s219 + $0x78] sm:$0xf]
      %v539 = vld [vmem:[%s219 + $0x7c] sm:$0xf]
      %v540 = vld [vmem:[%s219 + $0x80] sm:$0x1]
      %v541 = vld [vmem:[%s219 + $0x84] sm:$0xf]
      %v542 = vld [vmem:[%s219 + $0x88] sm:$0xf]
      %v543 = vld [vmem:[%s219 + $0x8c] sm:$0x1]
      %v544 = vld [vmem:[%s219 + $0x90] sm:$0xf]
      %v545 = vld [vmem:[%s219 + $0x94] sm:$0xf]
      %v546 = vld [vmem:[%s219 + $0x98] sm:$0x1]
      %v547 = vld [vmem:[%s219 + $0x9c] sm:$0xf]
      %v548 = vld [vmem:[%s219 + $0xa0] sm:$0xf]
      %v549 = vld [vmem:[%s219 + $0xa4] sm:$0x1]
      %v550 = vld [vmem:[%s219 + $0xa8] sm:$0xf]
      %v551 = vld [vmem:[%s219 + $0xac] sm:$0xf]
      %v552 = vld [vmem:[%s219 + $0xb0] sm:$0x1]
      %v553 = vld [vmem:[%s219 + $0xb4] sm:$0xf]
      %v554 = vld [vmem:[%s219 + $0xb8] sm:$0xf]
      %v555 = vld [vmem:[%s219 + $0xbc] sm:$0x1]
      %v556 = vld [vmem:[%s219 + $0xc0] sm:$0xf]
      %v557 = vld [vmem:[%s219 + $0xc4] sm:$0xf]
      %v558 = vld [vmem:[%s219 + $0xc8] sm:$0x1]
      %v559 = vld [vmem:[%s219 + $0xcc] sm:$0xf]
      %v560 = vld [vmem:[%s219 + $0xd0] sm:$0xf]
      %v561 = vld [vmem:[%s219 + $0xd4] sm:$0x1]
      %vm562 = vsmask.f32 3328
      %vm563 = vsmask.f32 7440
      %vm564 = vmor %vm562, %vm563
      %v566 = vshrl.u32 %v508, 16
      %v568 = vrot.slane %v566, 4
      %v569 = vshll.u32 %v508, 16
      %v571 = vrot.slane %v569, 5
      %v572 = vor.u32 %v568, %v571
      %v573 = vrot.slane %v572, 4
      %v575 = vshll.u32 %v509, 16
      %v577 = vrot.slane %v575, 5
      %v578 = vsel %vm564, %v573, %v577
      %v579 = vshrl.u32 %v509, 16
      %v581 = vrot.slane %v579, 4
      %v582 = vor.u32 %v581, %v577
      %v583 = vrot.slane %v582, 4
      %v585 = vshll.u32 %v510, 16
      %v587 = vrot.slane %v585, 5
      %v588 = vsel %vm564, %v583, %v587
      %v590 = vshrl.u32 %v511, 16
      %v592 = vrot.slane %v590, 4
      %v593 = vshll.u32 %v511, 16
      %v595 = vrot.slane %v593, 5
      %v596 = vor.u32 %v592, %v595
      %v597 = vrot.slane %v596, 4
      %v599 = vshll.u32 %v512, 16
      %v601 = vrot.slane %v599, 5
      %v602 = vsel %vm564, %v597, %v601
      %v603 = vshrl.u32 %v512, 16
      %v605 = vrot.slane %v603, 4
      %v606 = vor.u32 %v605, %v601
      %v607 = vrot.slane %v606, 4
      %v609 = vshll.u32 %v513, 16
      %v611 = vrot.slane %v609, 5
      %v612 = vsel %vm564, %v607, %v611
      %v614 = vshrl.u32 %v514, 16
      %v616 = vrot.slane %v614, 4
      %v617 = vshll.u32 %v514, 16
      %v619 = vrot.slane %v617, 5
      %v620 = vor.u32 %v616, %v619
      %v621 = vrot.slane %v620, 4
      %v623 = vshll.u32 %v515, 16
      %v625 = vrot.slane %v623, 5
      %v626 = vsel %vm564, %v621, %v625
      %v627 = vshrl.u32 %v515, 16
      %v629 = vrot.slane %v627, 4
      %v630 = vor.u32 %v629, %v625
      %v631 = vrot.slane %v630, 4
      %v633 = vshll.u32 %v516, 16
      %v635 = vrot.slane %v633, 5
      %v636 = vsel %vm564, %v631, %v635
      %v638 = vshrl.u32 %v517, 16
      %v640 = vrot.slane %v638, 4
      %v641 = vshll.u32 %v517, 16
      %v643 = vrot.slane %v641, 5
      %v644 = vor.u32 %v640, %v643
      %v645 = vrot.slane %v644, 4
      %v647 = vshll.u32 %v518, 16
      %v649 = vrot.slane %v647, 5
      %v650 = vsel %vm564, %v645, %v649
      %v651 = vshrl.u32 %v518, 16
      %v653 = vrot.slane %v651, 4
      %v654 = vor.u32 %v653, %v649
      %v655 = vrot.slane %v654, 4
      %v657 = vshll.u32 %v519, 16
      %v659 = vrot.slane %v657, 5
      %v660 = vsel %vm564, %v655, %v659
      %v662 = vshrl.u32 %v520, 16
      %v664 = vrot.slane %v662, 4
      %v665 = vshll.u32 %v520, 16
      %v667 = vrot.slane %v665, 5
      %v668 = vor.u32 %v664, %v667
      %v669 = vrot.slane %v668, 4
      %v671 = vshll.u32 %v521, 16
      %v673 = vrot.slane %v671, 5
      %v674 = vsel %vm564, %v669, %v673
      %v675 = vshrl.u32 %v521, 16
      %v677 = vrot.slane %v675, 4
      %v678 = vor.u32 %v677, %v673
      %v679 = vrot.slane %v678, 4
      %v681 = vshll.u32 %v522, 16
      %v683 = vrot.slane %v681, 5
      %v684 = vsel %vm564, %v679, %v683
      %v686 = vshrl.u32 %v523, 16
      %v688 = vrot.slane %v686, 4
      %v689 = vshll.u32 %v523, 16
      %v691 = vrot.slane %v689, 5
      %v692 = vor.u32 %v688, %v691
      %v693 = vrot.slane %v692, 4
      %v695 = vshll.u32 %v524, 16
      %v697 = vrot.slane %v695, 5
      %v698 = vsel %vm564, %v693, %v697
      %v699 = vshrl.u32 %v524, 16
      %v701 = vrot.slane %v699, 4
      %v702 = vor.u32 %v701, %v697
      %v703 = vrot.slane %v702, 4
      %v705 = vshll.u32 %v525, 16
      %v707 = vrot.slane %v705, 5
      %v708 = vsel %vm564, %v703, %v707
      %v710 = vshrl.u32 %v526, 16
      %v712 = vrot.slane %v710, 4
      %v713 = vshll.u32 %v526, 16
      %v715 = vrot.slane %v713, 5
      %v716 = vor.u32 %v712, %v715
      %v717 = vrot.slane %v716, 4
      %v719 = vshll.u32 %v527, 16
      %v721 = vrot.slane %v719, 5
      %v722 = vsel %vm564, %v717, %v721
      %v723 = vshrl.u32 %v527, 16
      %v725 = vrot.slane %v723, 4
      %v726 = vor.u32 %v725, %v721
      %v727 = vrot.slane %v726, 4
      %v729 = vshll.u32 %v528, 16
      %v731 = vrot.slane %v729, 5
      %v732 = vsel %vm564, %v727, %v731
      %v734 = vshrl.u32 %v529, 16
      %v736 = vrot.slane %v734, 4
      %v737 = vshll.u32 %v529, 16
      %v739 = vrot.slane %v737, 5
      %v740 = vor.u32 %v736, %v739
      %v741 = vrot.slane %v740, 4
      %v743 = vshll.u32 %v530, 16
      %v745 = vrot.slane %v743, 5
      %v746 = vsel %vm564, %v741, %v745
      %v747 = vshrl.u32 %v530, 16
      %v749 = vrot.slane %v747, 4
      %v750 = vor.u32 %v749, %v745
      %v751 = vrot.slane %v750, 4
      %v753 = vshll.u32 %v531, 16
      %v755 = vrot.slane %v753, 5
      %v756 = vsel %vm564, %v751, %v755
      %v758 = vshrl.u32 %v532, 16
      %v760 = vrot.slane %v758, 4
      %v761 = vshll.u32 %v532, 16
      %v763 = vrot.slane %v761, 5
      %v764 = vor.u32 %v760, %v763
      %v765 = vrot.slane %v764, 4
      %v767 = vshll.u32 %v533, 16
      %v769 = vrot.slane %v767, 5
      %v770 = vsel %vm564, %v765, %v769
      %v771 = vshrl.u32 %v533, 16
      %v773 = vrot.slane %v771, 4
      %v774 = vor.u32 %v773, %v769
      %v775 = vrot.slane %v774, 4
      %v777 = vshll.u32 %v534, 16
      %v779 = vrot.slane %v777, 5
      %v780 = vsel %vm564, %v775, %v779
      %v782 = vshrl.u32 %v535, 16
      %v784 = vrot.slane %v782, 4
      %v785 = vshll.u32 %v535, 16
      %v787 = vrot.slane %v785, 5
      %v788 = vor.u32 %v784, %v787
      %v789 = vrot.slane %v788, 4
      %v791 = vshll.u32 %v536, 16
      %v793 = vrot.slane %v791, 5
      %v794 = vsel %vm564, %v789, %v793
      %v795 = vshrl.u32 %v536, 16
      %v797 = vrot.slane %v795, 4
      %v798 = vor.u32 %v797, %v793
      %v799 = vrot.slane %v798, 4
      %v801 = vshll.u32 %v537, 16
      %v803 = vrot.slane %v801, 5
      %v804 = vsel %vm564, %v799, %v803
      %v806 = vshrl.u32 %v538, 16
      %v808 = vrot.slane %v806, 4
      %v809 = vshll.u32 %v538, 16
      %v811 = vrot.slane %v809, 5
      %v812 = vor.u32 %v808, %v811
      %v813 = vrot.slane %v812, 4
      %v815 = vshll.u32 %v539, 16
      %v817 = vrot.slane %v815, 5
      %v818 = vsel %vm564, %v813, %v817
      %v819 = vshrl.u32 %v539, 16
      %v821 = vrot.slane %v819, 4
      %v822 = vor.u32 %v821, %v817
      %v823 = vrot.slane %v822, 4
      %v825 = vshll.u32 %v540, 16
      %v827 = vrot.slane %v825, 5
      %v828 = vsel %vm564, %v823, %v827
      %v830 = vshrl.u32 %v541, 16
      %v832 = vrot.slane %v830, 4
      %v833 = vshll.u32 %v541, 16
      %v835 = vrot.slane %v833, 5
      %v836 = vor.u32 %v832, %v835
      %v837 = vrot.slane %v836, 4
      %v839 = vshll.u32 %v542, 16
      %v841 = vrot.slane %v839, 5
      %v842 = vsel %vm564, %v837, %v841
      %v843 = vshrl.u32 %v542, 16
      %v845 = vrot.slane %v843, 4
      %v846 = vor.u32 %v845, %v841
      %v847 = vrot.slane %v846, 4
      %v849 = vshll.u32 %v543, 16
      %v851 = vrot.slane %v849, 5
      %v852 = vsel %vm564, %v847, %v851
      %v854 = vshrl.u32 %v544, 16
      %v856 = vrot.slane %v854, 4
      %v857 = vshll.u32 %v544, 16
      %v859 = vrot.slane %v857, 5
      %v860 = vor.u32 %v856, %v859
      %v861 = vrot.slane %v860, 4
      %v863 = vshll.u32 %v545, 16
      %v865 = vrot.slane %v863, 5
      %v866 = vsel %vm564, %v861, %v865
      %v867 = vshrl.u32 %v545, 16
      %v869 = vrot.slane %v867, 4
      %v870 = vor.u32 %v869, %v865
      %v871 = vrot.slane %v870, 4
      %v873 = vshll.u32 %v546, 16
      %v875 = vrot.slane %v873, 5
      %v876 = vsel %vm564, %v871, %v875
      %v878 = vshrl.u32 %v547, 16
      %v880 = vrot.slane %v878, 4
      %v881 = vshll.u32 %v547, 16
      %v883 = vrot.slane %v881, 5
      %v884 = vor.u32 %v880, %v883
      %v885 = vrot.slane %v884, 4
      %v887 = vshll.u32 %v548, 16
      %v889 = vrot.slane %v887, 5
      %v890 = vsel %vm564, %v885, %v889
      %v891 = vshrl.u32 %v548, 16
      %v893 = vrot.slane %v891, 4
      %v894 = vor.u32 %v893, %v889
      %v895 = vrot.slane %v894, 4
      %v897 = vshll.u32 %v549, 16
      %v899 = vrot.slane %v897, 5
      %v900 = vsel %vm564, %v895, %v899
      %v902 = vshrl.u32 %v550, 16
      %v904 = vrot.slane %v902, 4
      %v905 = vshll.u32 %v550, 16
      %v907 = vrot.slane %v905, 5
      %v908 = vor.u32 %v904, %v907
      %v909 = vrot.slane %v908, 4
      %v911 = vshll.u32 %v551, 16
      %v913 = vrot.slane %v911, 5
      %v914 = vsel %vm564, %v909, %v913
      %v915 = vshrl.u32 %v551, 16
      %v917 = vrot.slane %v915, 4
      %v918 = vor.u32 %v917, %v913
      %v919 = vrot.slane %v918, 4
      %v921 = vshll.u32 %v552, 16
      %v923 = vrot.slane %v921, 5
      %v924 = vsel %vm564, %v919, %v923
      %v926 = vshrl.u32 %v553, 16
      %v928 = vrot.slane %v926, 4
      %v929 = vshll.u32 %v553, 16
      %v931 = vrot.slane %v929, 5
      %v932 = vor.u32 %v928, %v931
      %v933 = vrot.slane %v932, 4
      %v935 = vshll.u32 %v554, 16
      %v937 = vrot.slane %v935, 5
      %v938 = vsel %vm564, %v933, %v937
      %v939 = vshrl.u32 %v554, 16
      %v941 = vrot.slane %v939, 4
      %v942 = vor.u32 %v941, %v937
      %v943 = vrot.slane %v942, 4
      %v945 = vshll.u32 %v555, 16
      %v947 = vrot.slane %v945, 5
      %v948 = vsel %vm564, %v943, %v947
      %v950 = vshrl.u32 %v556, 16
      %v952 = vrot.slane %v950, 4
      %v953 = vshll.u32 %v556, 16
      %v955 = vrot.slane %v953, 5
      %v956 = vor.u32 %v952, %v955
      %v957 = vrot.slane %v956, 4
      %v959 = vshll.u32 %v557, 16
      %v961 = vrot.slane %v959, 5
      %v962 = vsel %vm564, %v957, %v961
      %v963 = vshrl.u32 %v557, 16
      %v965 = vrot.slane %v963, 4
      %v966 = vor.u32 %v965, %v961
      %v967 = vrot.slane %v966, 4
      %v969 = vshll.u32 %v558, 16
      %v971 = vrot.slane %v969, 5
      %v972 = vsel %vm564, %v967, %v971
      %v974 = vshrl.u32 %v559, 16
      %v976 = vrot.slane %v974, 4
      %v977 = vshll.u32 %v559, 16
      %v979 = vrot.slane %v977, 5
      %v980 = vor.u32 %v976, %v979
      %v981 = vrot.slane %v980, 4
      %v983 = vshll.u32 %v560, 16
      %v985 = vrot.slane %v983, 5
      %v986 = vsel %vm564, %v981, %v985
      %v987 = vshrl.u32 %v560, 16
      %v989 = vrot.slane %v987, 4
      %v990 = vor.u32 %v989, %v985
      %v991 = vrot.slane %v990, 4
      %v993 = vshll.u32 %v561, 16
      %v995 = vrot.slane %v993, 5
      %v996 = vsel %vm564, %v991, %v995
      %v997 = vunpack.c.l.b16 %v578
      %v998 = vunpack.c.l.b16 %v588
      %v999 = vunpack.c.l.b16 %v602
      %v1000 = vunpack.c.l.b16 %v612
      %v1001 = vunpack.c.l.b16 %v626
      %v1002 = vunpack.c.l.b16 %v636
      %v1003 = vunpack.c.l.b16 %v650
      %v1004 = vunpack.c.l.b16 %v660
      %v1005 = vunpack.c.l.b16 %v674
      %v1006 = vunpack.c.l.b16 %v684
      %v1007 = vunpack.c.l.b16 %v698
      %v1008 = vunpack.c.l.b16 %v708
      %v1009 = vunpack.c.l.b16 %v722
      %v1010 = vunpack.c.l.b16 %v732
      %v1011 = vunpack.c.l.b16 %v746
      %v1012 = vunpack.c.l.b16 %v756
      %v1013 = vunpack.c.l.b16 %v770
      %v1014 = vunpack.c.l.b16 %v780
      %v1015 = vunpack.c.l.b16 %v794
      %v1016 = vunpack.c.l.b16 %v804
      %v1017 = vunpack.c.l.b16 %v818
      %v1018 = vunpack.c.l.b16 %v828
      %v1019 = vunpack.c.l.b16 %v842
      %v1020 = vunpack.c.l.b16 %v852
      %v1021 = vunpack.c.l.b16 %v866
      %v1022 = vunpack.c.l.b16 %v876
      %v1023 = vunpack.c.l.b16 %v890
      %v1024 = vunpack.c.l.b16 %v900
      %v1025 = vunpack.c.l.b16 %v914
      %v1026 = vunpack.c.l.b16 %v924
      %v1027 = vunpack.c.l.b16 %v938
      %v1028 = vunpack.c.l.b16 %v948
      %v1029 = vunpack.c.l.b16 %v962
      %v1030 = vunpack.c.l.b16 %v972
      %v1031 = vunpack.c.l.b16 %v986
      %v1032 = vunpack.c.l.b16 %v996
      %v1033 = vpack.c.b16 %v998, %v997
      %v1034 = vpack.c.b16 %v1000, %v999
      %v1035 = vpack.c.b16 %v1002, %v1001
      %v1036 = vpack.c.b16 %v1004, %v1003
      %v1037 = vpack.c.b16 %v1006, %v1005
      %v1038 = vpack.c.b16 %v1008, %v1007
      %v1039 = vpack.c.b16 %v1010, %v1009
      %v1040 = vpack.c.b16 %v1012, %v1011
      %v1041 = vpack.c.b16 %v1014, %v1013
      %v1042 = vpack.c.b16 %v1016, %v1015
      %v1043 = vpack.c.b16 %v1018, %v1017
      %v1044 = vpack.c.b16 %v1020, %v1019
      %v1045 = vpack.c.b16 %v1022, %v1021
      %v1046 = vpack.c.b16 %v1024, %v1023
      %v1047 = vpack.c.b16 %v1026, %v1025
      %v1048 = vpack.c.b16 %v1028, %v1027
      %v1049 = vpack.c.b16 %v1030, %v1029
      %v1050 = vpack.c.b16 %v1032, %v1031
      %s1069 = scalar_lea.vmem [#allocation2], 144
      %1070 = vst [vmem:[%s1069] sm:$0xff] %v1033
      %1071 = vst [vmem:[%s1069 + $0x8] sm:$0xff] %v1034
      %1072 = vst [vmem:[%s1069 + $0x10] sm:$0xff] %v1035
      %1073 = vst [vmem:[%s1069 + $0x18] sm:$0xff] %v1036
      %1074 = vst [vmem:[%s1069 + $0x20] sm:$0xff] %v1037
      %1075 = vst [vmem:[%s1069 + $0x28] sm:$0xff] %v1038
      %1076 = vst [vmem:[%s1069 + $0x30] sm:$0xff] %v1039
      %1077 = vst [vmem:[%s1069 + $0x38] sm:$0xff] %v1040
      %1078 = vst [vmem:[%s1069 + $0x40] sm:$0xff] %v1041
      %1079 = vst [vmem:[%s1069 + $0x48] sm:$0xff] %v1042
      %1080 = vst [vmem:[%s1069 + $0x50] sm:$0xff] %v1043
      %1081 = vst [vmem:[%s1069 + $0x58] sm:$0xff] %v1044
      %1082 = vst [vmem:[%s1069 + $0x60] sm:$0xff] %v1045
      %1083 = vst [vmem:[%s1069 + $0x68] sm:$0xff] %v1046
      %1084 = vst [vmem:[%s1069 + $0x70] sm:$0xff] %v1047
      %1085 = vst [vmem:[%s1069 + $0x78] sm:$0xff] %v1048
      %1086 = vst [vmem:[%s1069 + $0x80] sm:$0xff] %v1049
      %1087 = vst [vmem:[%s1069 + $0x88] sm:$0xff] %v1050
      %v1088 = vld [vmem:[%s219] sm:$0xe]
      %v1089 = vld [vmem:[%s219 + $0x4] sm:$0xf]
      %v1090 = vld [vmem:[%s219 + $0x8] sm:$0x1]
      %v1091 = vld [vmem:[%s219 + $0xc] sm:$0xe]
      %v1092 = vld [vmem:[%s219 + $0x10] sm:$0xf]
      %v1093 = vld [vmem:[%s219 + $0x14] sm:$0x1]
      %v1094 = vld [vmem:[%s219 + $0x18] sm:$0xe]
      %v1095 = vld [vmem:[%s219 + $0x1c] sm:$0xf]
      %v1096 = vld [vmem:[%s219 + $0x20] sm:$0x1]
      %v1097 = vld [vmem:[%s219 + $0x24] sm:$0xe]
      %v1098 = vld [vmem:[%s219 + $0x28] sm:$0xf]
      %v1099 = vld [vmem:[%s219 + $0x2c] sm:$0x1]
      %v1100 = vld [vmem:[%s219 + $0x30] sm:$0xe]
      %v1101 = vld [vmem:[%s219 + $0x34] sm:$0xf]
      %v1102 = vld [vmem:[%s219 + $0x38] sm:$0x1]
      %v1103 = vld [vmem:[%s219 + $0x3c] sm:$0xe]
      %v1104 = vld [vmem:[%s219 + $0x40] sm:$0xf]
      %v1105 = vld [vmem:[%s219 + $0x44] sm:$0x1]
      %v1106 = vld [vmem:[%s219 + $0x48] sm:$0xe]
      %v1107 = vld [vmem:[%s219 + $0x4c] sm:$0xf]
      %v1108 = vld [vmem:[%s219 + $0x50] sm:$0x1]
      %v1109 = vld [vmem:[%s219 + $0x54] sm:$0xe]
      %v1110 = vld [vmem:[%s219 + $0x58] sm:$0xf]
      %v1111 = vld [vmem:[%s219 + $0x5c] sm:$0x1]
      %v1112 = vld [vmem:[%s219 + $0x60] sm:$0xe]
      %v1113 = vld [vmem:[%s219 + $0x64] sm:$0xf]
      %v1114 = vld [vmem:[%s219 + $0x68] sm:$0x1]
      %v1115 = vld [vmem:[%s219 + $0x6c] sm:$0xe]
      %v1116 = vld [vmem:[%s219 + $0x70] sm:$0xf]
      %v1117 = vld [vmem:[%s219 + $0x74] sm:$0x1]
      %v1118 = vld [vmem:[%s219 + $0x78] sm:$0xe]
      %v1119 = vld [vmem:[%s219 + $0x7c] sm:$0xf]
      %v1120 = vld [vmem:[%s219 + $0x80] sm:$0x1]
      %v1121 = vld [vmem:[%s219 + $0x84] sm:$0xe]
      %v1122 = vld [vmem:[%s219 + $0x88] sm:$0xf]
      %v1123 = vld [vmem:[%s219 + $0x8c] sm:$0x1]
      %v1124 = vld [vmem:[%s219 + $0x90] sm:$0xe]
      %v1125 = vld [vmem:[%s219 + $0x94] sm:$0xf]
      %v1126 = vld [vmem:[%s219 + $0x98] sm:$0x1]
      %v1127 = vld [vmem:[%s219 + $0x9c] sm:$0xe]
      %v1128 = vld [vmem:[%s219 + $0xa0] sm:$0xf]
      %v1129 = vld [vmem:[%s219 + $0xa4] sm:$0x1]
      %v1130 = vld [vmem:[%s219 + $0xa8] sm:$0xe]
      %v1131 = vld [vmem:[%s219 + $0xac] sm:$0xf]
      %v1132 = vld [vmem:[%s219 + $0xb0] sm:$0x1]
      %v1133 = vld [vmem:[%s219 + $0xb4] sm:$0xe]
      %v1134 = vld [vmem:[%s219 + $0xb8] sm:$0xf]
      %v1135 = vld [vmem:[%s219 + $0xbc] sm:$0x1]
      %v1136 = vld [vmem:[%s219 + $0xc0] sm:$0xe]
      %v1137 = vld [vmem:[%s219 + $0xc4] sm:$0xf]
      %v1138 = vld [vmem:[%s219 + $0xc8] sm:$0x1]
      %v1139 = vld [vmem:[%s219 + $0xcc] sm:$0xe]
      %v1140 = vld [vmem:[%s219 + $0xd0] sm:$0xf]
      %v1141 = vld [vmem:[%s219 + $0xd4] sm:$0x1]
      %vm1196 = vcmask 1042432
      %vm1197 = vcmask 1046532
      %vm1198 = vmor %vm1196, %vm1197
      %v1199 = vrot.slane %v1088, 5
      %v1200 = vrot.slane %v1199, 4
      %v1201 = vrot.slane %v1089, 5
      %v1202 = vsel %vm1198, %v1200, %v1201
      %v1203 = vrot.slane %v1201, 4
      %v1204 = vrot.slane %v1090, 5
      %v1205 = vsel %vm1198, %v1203, %v1204
      %v1206 = vrot.slane %v1091, 5
      %v1207 = vrot.slane %v1206, 4
      %v1208 = vrot.slane %v1092, 5
      %v1209 = vsel %vm1198, %v1207, %v1208
      %v1210 = vrot.slane %v1208, 4
      %v1211 = vrot.slane %v1093, 5
      %v1212 = vsel %vm1198, %v1210, %v1211
      %v1213 = vrot.slane %v1094, 5
      %v1214 = vrot.slane %v1213, 4
      %v1215 = vrot.slane %v1095, 5
      %v1216 = vsel %vm1198, %v1214, %v1215
      %v1217 = vrot.slane %v1215, 4
      %v1218 = vrot.slane %v1096, 5
      %v1219 = vsel %vm1198, %v1217, %v1218
      %v1220 = vrot.slane %v1097, 5
      %v1221 = vrot.slane %v1220, 4
      %v1222 = vrot.slane %v1098, 5
      %v1223 = vsel %vm1198, %v1221, %v1222
      %v1224 = vrot.slane %v1222, 4
      %v1225 = vrot.slane %v1099, 5
      %v1226 = vsel %vm1198, %v1224, %v1225
      %v1227 = vrot.slane %v1100, 5
      %v1228 = vrot.slane %v1227, 4
      %v1229 = vrot.slane %v1101, 5
      %v1230 = vsel %vm1198, %v1228, %v1229
      %v1231 = vrot.slane %v1229, 4
      %v1232 = vrot.slane %v1102, 5
      %v1233 = vsel %vm1198, %v1231, %v1232
      %v1234 = vrot.slane %v1103, 5
      %v1235 = vrot.slane %v1234, 4
      %v1236 = vrot.slane %v1104, 5
      %v1237 = vsel %vm1198, %v1235, %v1236
      %v1238 = vrot.slane %v1236, 4
      %v1239 = vrot.slane %v1105, 5
      %v1240 = vsel %vm1198, %v1238, %v1239
      %v1241 = vrot.slane %v1106, 5
      %v1242 = vrot.slane %v1241, 4
      %v1243 = vrot.slane %v1107, 5
      %v1244 = vsel %vm1198, %v1242, %v1243
      %v1245 = vrot.slane %v1243, 4
      %v1246 = vrot.slane %v1108, 5
      %v1247 = vsel %vm1198, %v1245, %v1246
      %v1248 = vrot.slane %v1109, 5
      %v1249 = vrot.slane %v1248, 4
      %v1250 = vrot.slane %v1110, 5
      %v1251 = vsel %vm1198, %v1249, %v1250
      %v1252 = vrot.slane %v1250, 4
      %v1253 = vrot.slane %v1111, 5
      %v1254 = vsel %vm1198, %v1252, %v1253
      %v1255 = vrot.slane %v1112, 5
      %v1256 = vrot.slane %v1255, 4
      %v1257 = vrot.slane %v1113, 5
      %v1258 = vsel %vm1198, %v1256, %v1257
      %v1259 = vrot.slane %v1257, 4
      %v1260 = vrot.slane %v1114, 5
      %v1261 = vsel %vm1198, %v1259, %v1260
      %v1262 = vrot.slane %v1115, 5
      %v1263 = vrot.slane %v1262, 4
      %v1264 = vrot.slane %v1116, 5
      %v1265 = vsel %vm1198, %v1263, %v1264
      %v1266 = vrot.slane %v1264, 4
      %v1267 = vrot.slane %v1117, 5
      %v1268 = vsel %vm1198, %v1266, %v1267
      %v1269 = vrot.slane %v1118, 5
      %v1270 = vrot.slane %v1269, 4
      %v1271 = vrot.slane %v1119, 5
      %v1272 = vsel %vm1198, %v1270, %v1271
      %v1273 = vrot.slane %v1271, 4
      %v1274 = vrot.slane %v1120, 5
      %v1275 = vsel %vm1198, %v1273, %v1274
      %v1276 = vrot.slane %v1121, 5
      %v1277 = vrot.slane %v1276, 4
      %v1278 = vrot.slane %v1122, 5
      %v1279 = vsel %vm1198, %v1277, %v1278
      %v1280 = vrot.slane %v1278, 4
      %v1281 = vrot.slane %v1123, 5
      %v1282 = vsel %vm1198, %v1280, %v1281
      %v1283 = vrot.slane %v1124, 5
      %v1284 = vrot.slane %v1283, 4
      %v1285 = vrot.slane %v1125, 5
      %v1286 = vsel %vm1198, %v1284, %v1285
      %v1287 = vrot.slane %v1285, 4
      %v1288 = vrot.slane %v1126, 5
      %v1289 = vsel %vm1198, %v1287, %v1288
      %v1290 = vrot.slane %v1127, 5
      %v1291 = vrot.slane %v1290, 4
      %v1292 = vrot.slane %v1128, 5
      %v1293 = vsel %vm1198, %v1291, %v1292
      %v1294 = vrot.slane %v1292, 4
      %v1295 = vrot.slane %v1129, 5
      %v1296 = vsel %vm1198, %v1294, %v1295
      %v1297 = vrot.slane %v1130, 5
      %v1298 = vrot.slane %v1297, 4
      %v1299 = vrot.slane %v1131, 5
      %v1300 = vsel %vm1198, %v1298, %v1299
      %v1301 = vrot.slane %v1299, 4
      %v1302 = vrot.slane %v1132, 5
      %v1303 = vsel %vm1198, %v1301, %v1302
      %v1304 = vrot.slane %v1133, 5
      %v1305 = vrot.slane %v1304, 4
      %v1306 = vrot.slane %v1134, 5
      %v1307 = vsel %vm1198, %v1305, %v1306
      %v1308 = vrot.slane %v1306, 4
      %v1309 = vrot.slane %v1135, 5
      %v1310 = vsel %vm1198, %v1308, %v1309
      %v1311 = vrot.slane %v1136, 5
      %v1312 = vrot.slane %v1311, 4
      %v1313 = vrot.slane %v1137, 5
      %v1314 = vsel %vm1198, %v1312, %v1313
      %v1315 = vrot.slane %v1313, 4
      %v1316 = vrot.slane %v1138, 5
      %v1317 = vsel %vm1198, %v1315, %v1316
      %v1318 = vrot.slane %v1139, 5
      %v1319 = vrot.slane %v1318, 4
      %v1320 = vrot.slane %v1140, 5
      %v1321 = vsel %vm1198, %v1319, %v1320
      %v1322 = vrot.slane %v1320, 4
      %v1323 = vrot.slane %v1141, 5
      %v1324 = vsel %vm1198, %v1322, %v1323
      %v1325 = vunpack.c.l.b16 %v1202
      %v1326 = vunpack.c.l.b16 %v1205
      %v1327 = vunpack.c.l.b16 %v1209
      %v1328 = vunpack.c.l.b16 %v1212
      %v1329 = vunpack.c.l.b16 %v1216
      %v1330 = vunpack.c.l.b16 %v1219
      %v1331 = vunpack.c.l.b16 %v1223
      %v1332 = vunpack.c.l.b16 %v1226
      %v1333 = vunpack.c.l.b16 %v1230
      %v1334 = vunpack.c.l.b16 %v1233
      %v1335 = vunpack.c.l.b16 %v1237
      %v1336 = vunpack.c.l.b16 %v1240
      %v1337 = vunpack.c.l.b16 %v1244
      %v1338 = vunpack.c.l.b16 %v1247
      %v1339 = vunpack.c.l.b16 %v1251
      %v1340 = vunpack.c.l.b16 %v1254
      %v1341 = vunpack.c.l.b16 %v1258
      %v1342 = vunpack.c.l.b16 %v1261
      %v1343 = vunpack.c.l.b16 %v1265
      %v1344 = vunpack.c.l.b16 %v1268
      %v1345 = vunpack.c.l.b16 %v1272
      %v1346 = vunpack.c.l.b16 %v1275
      %v1347 = vunpack.c.l.b16 %v1279
      %v1348 = vunpack.c.l.b16 %v1282
      %v1349 = vunpack.c.l.b16 %v1286
      %v1350 = vunpack.c.l.b16 %v1289
      %v1351 = vunpack.c.l.b16 %v1293
      %v1352 = vunpack.c.l.b16 %v1296
      %v1353 = vunpack.c.l.b16 %v1300
      %v1354 = vunpack.c.l.b16 %v1303
      %v1355 = vunpack.c.l.b16 %v1307
      %v1356 = vunpack.c.l.b16 %v1310
      %v1357 = vunpack.c.l.b16 %v1314
      %v1358 = vunpack.c.l.b16 %v1317
      %v1359 = vunpack.c.l.b16 %v1321
      %v1360 = vunpack.c.l.b16 %v1324
      %v1361 = vpack.c.b16 %v1326, %v1325
      %v1362 = vpack.c.b16 %v1328, %v1327
      %v1363 = vpack.c.b16 %v1330, %v1329
      %v1364 = vpack.c.b16 %v1332, %v1331
      %v1365 = vpack.c.b16 %v1334, %v1333
      %v1366 = vpack.c.b16 %v1336, %v1335
      %v1367 = vpack.c.b16 %v1338, %v1337
      %v1368 = vpack.c.b16 %v1340, %v1339
      %v1369 = vpack.c.b16 %v1342, %v1341
      %v1370 = vpack.c.b16 %v1344, %v1343
      %v1371 = vpack.c.b16 %v1346, %v1345
      %v1372 = vpack.c.b16 %v1348, %v1347
      %v1373 = vpack.c.b16 %v1350, %v1349
      %v1374 = vpack.c.b16 %v1352, %v1351
      %v1375 = vpack.c.b16 %v1354, %v1353
      %v1376 = vpack.c.b16 %v1356, %v1355
      %v1377 = vpack.c.b16 %v1358, %v1357
      %v1378 = vpack.c.b16 %v1360, %v1359
      %s1397 = scalar_lea.vmem [#allocation2], 288
      %1398 = vst [vmem:[%s1397] sm:$0xff] %v1361
      %1399 = vst [vmem:[%s1397 + $0x8] sm:$0xff] %v1362
      %1400 = vst [vmem:[%s1397 + $0x10] sm:$0xff] %v1363
      %1401 = vst [vmem:[%s1397 + $0x18] sm:$0xff] %v1364
      %1402 = vst [vmem:[%s1397 + $0x20] sm:$0xff] %v1365
      %1403 = vst [vmem:[%s1397 + $0x28] sm:$0xff] %v1366
      %1404 = vst [vmem:[%s1397 + $0x30] sm:$0xff] %v1367
      %1405 = vst [vmem:[%s1397 + $0x38] sm:$0xff] %v1368
      %1406 = vst [vmem:[%s1397 + $0x40] sm:$0xff] %v1369
      %1407 = vst [vmem:[%s1397 + $0x48] sm:$0xff] %v1370
      %1408 = vst [vmem:[%s1397 + $0x50] sm:$0xff] %v1371
      %1409 = vst [vmem:[%s1397 + $0x58] sm:$0xff] %v1372
      %1410 = vst [vmem:[%s1397 + $0x60] sm:$0xff] %v1373
      %1411 = vst [vmem:[%s1397 + $0x68] sm:$0xff] %v1374
      %1412 = vst [vmem:[%s1397 + $0x70] sm:$0xff] %v1375
      %1413 = vst [vmem:[%s1397 + $0x78] sm:$0xff] %v1376
      %1414 = vst [vmem:[%s1397 + $0x80] sm:$0xff] %v1377
      %1415 = vst [vmem:[%s1397 + $0x88] sm:$0xff] %v1378
      %v1416 = vld [vmem:[%s2] sm:$0x1]
      %v1417 = vld [vmem:[%s2 + $0x1] sm:$0x1]
      %v1418 = vld [vmem:[#allocation2] sm:$0xff]
      %v1419 = vld [vmem:[#allocation2 + $0x8] sm:$0xff]
      %v1420 = vld [vmem:[#allocation2 + $0x10] sm:$0xff]
      %v1421 = vld [vmem:[#allocation2 + $0x18] sm:$0xff]
      %v1422 = vld [vmem:[#allocation2 + $0x20] sm:$0xff]
      %v1423 = vld [vmem:[#allocation2 + $0x28] sm:$0xff]
      %v1424 = vld [vmem:[#allocation2 + $0x30] sm:$0xff]
      %v1425 = vld [vmem:[#allocation2 + $0x38] sm:$0xff]
      %v1426 = vld [vmem:[#allocation2 + $0x40] sm:$0xff]
      %v1427 = vld [vmem:[#allocation2 + $0x48] sm:$0xff]
      %v1428 = vld [vmem:[#allocation2 + $0x50] sm:$0xff]
      %v1429 = vld [vmem:[#allocation2 + $0x58] sm:$0xff]
      %v1430 = vld [vmem:[#allocation2 + $0x60] sm:$0xff]
      %v1431 = vld [vmem:[#allocation2 + $0x68] sm:$0xff]
      %v1432 = vld [vmem:[#allocation2 + $0x70] sm:$0xff]
      %v1433 = vld [vmem:[#allocation2 + $0x78] sm:$0xff]
      %v1434 = vld [vmem:[%s1] sm:$0xf]
      %v1435 = vld [vmem:[%s1 + $0x4] sm:$0xf]
      %v1436 = vld [vmem:[%s1 + $0x8] sm:$0xf]
      %v1437 = vld [vmem:[%s1 + $0xc] sm:$0xf]
      %v1438 = vld [vmem:[%s1 + $0x10] sm:$0xf]
      %v1439 = vld [vmem:[%s1 + $0x14] sm:$0xf]
      %v1440 = vld [vmem:[%s1 + $0x18] sm:$0xf]
      %v1441 = vld [vmem:[%s1 + $0x1c] sm:$0xf]
      %v1442 = vld [vmem:[%s1 + $0x20] sm:$0xf]
      %v1443 = vld [vmem:[%s1 + $0x24] sm:$0xf]
      %v1444 = vld [vmem:[%s1 + $0x28] sm:$0xf]
      %v1445 = vld [vmem:[%s1 + $0x2c] sm:$0xf]
      %v1446 = vld [vmem:[%s1 + $0x30] sm:$0xf]
      %v1447 = vld [vmem:[%s1 + $0x34] sm:$0xf]
      %v1448 = vld [vmem:[%s1 + $0x38] sm:$0xf]
      %v1449 = vld [vmem:[%s1 + $0x3c] sm:$0xf]
      %v1450 = vld [vmem:[%s1069] sm:$0xff]
      %v1451 = vld [vmem:[%s1069 + $0x8] sm:$0xff]
      %v1452 = vld [vmem:[%s1069 + $0x10] sm:$0xff]
      %v1453 = vld [vmem:[%s1069 + $0x18] sm:$0xff]
      %v1454 = vld [vmem:[%s1069 + $0x20] sm:$0xff]
      %v1455 = vld [vmem:[%s1069 + $0x28] sm:$0xff]
      %v1456 = vld [vmem:[%s1069 + $0x30] sm:$0xff]
      %v1457 = vld [vmem:[%s1069 + $0x38] sm:$0xff]
      %v1458 = vld [vmem:[%s1069 + $0x40] sm:$0xff]
      %v1459 = vld [vmem:[%s1069 + $0x48] sm:$0xff]
      %v1460 = vld [vmem:[%s1069 + $0x50] sm:$0xff]
      %v1461 = vld [vmem:[%s1069 + $0x58] sm:$0xff]
      %v1462 = vld [vmem:[%s1069 + $0x60] sm:$0xff]
      %v1463 = vld [vmem:[%s1069 + $0x68] sm:$0xff]
      %v1464 = vld [vmem:[%s1069 + $0x70] sm:$0xff]
      %v1465 = vld [vmem:[%s1069 + $0x78] sm:$0xff]
      %s1466 = scalar_lea.vmem %s1, 64
      %v1467 = vld [vmem:[%s1466] sm:$0xf]
      %v1468 = vld [vmem:[%s1466 + $0x4] sm:$0xf]
      %v1469 = vld [vmem:[%s1466 + $0x8] sm:$0xf]
      %v1470 = vld [vmem:[%s1466 + $0xc] sm:$0xf]
      %v1471 = vld [vmem:[%s1466 + $0x10] sm:$0xf]
      %v1472 = vld [vmem:[%s1466 + $0x14] sm:$0xf]
      %v1473 = vld [vmem:[%s1466 + $0x18] sm:$0xf]
      %v1474 = vld [vmem:[%s1466 + $0x1c] sm:$0xf]
      %v1475 = vld [vmem:[%s1466 + $0x20] sm:$0xf]
      %v1476 = vld [vmem:[%s1466 + $0x24] sm:$0xf]
      %v1477 = vld [vmem:[%s1466 + $0x28] sm:$0xf]
      %v1478 = vld [vmem:[%s1466 + $0x2c] sm:$0xf]
      %v1479 = vld [vmem:[%s1466 + $0x30] sm:$0xf]
      %v1480 = vld [vmem:[%s1466 + $0x34] sm:$0xf]
      %v1481 = vld [vmem:[%s1466 + $0x38] sm:$0xf]
      %v1482 = vld [vmem:[%s1466 + $0x3c] sm:$0xf]
      %v1499 = vunpack.c.l.b16 %v1467
      %v1500 = vunpack.c.l.b16 %v1468
      %v1501 = vunpack.c.l.b16 %v1469
      %v1502 = vunpack.c.l.b16 %v1470
      %v1503 = vunpack.c.l.b16 %v1471
      %v1504 = vunpack.c.l.b16 %v1472
      %v1505 = vunpack.c.l.b16 %v1473
      %v1506 = vunpack.c.l.b16 %v1474
      %v1507 = vunpack.c.l.b16 %v1475
      %v1508 = vunpack.c.l.b16 %v1476
      %v1509 = vunpack.c.l.b16 %v1477
      %v1510 = vunpack.c.l.b16 %v1478
      %v1511 = vunpack.c.l.b16 %v1479
      %v1512 = vunpack.c.l.b16 %v1480
      %v1513 = vunpack.c.l.b16 %v1481
      %v1514 = vunpack.c.l.b16 %v1482
      %v1515 = vpack.c.b16 %v1500, %v1499
      %v1516 = vpack.c.b16 %v1502, %v1501
      %v1517 = vpack.c.b16 %v1504, %v1503
      %v1518 = vpack.c.b16 %v1506, %v1505
      %v1519 = vpack.c.b16 %v1508, %v1507
      %v1520 = vpack.c.b16 %v1510, %v1509
      %v1521 = vpack.c.b16 %v1512, %v1511
      %v1522 = vpack.c.b16 %v1514, %v1513
      %1531 = vmatprep.subr.bf16.mxu0 0
      %1532 = vmatpush1.bf16.msra.mxu0 %v1515
      %1533 = vmatprep.subr.bf16.mxu0 0
      %1534 = vmatpush1.bf16.msra.mxu0 %v1516
      %1535 = vmatprep.subr.bf16.mxu0 0
      %1536 = vmatpush1.bf16.msra.mxu0 %v1517
      %1537 = vmatprep.subr.bf16.mxu0 0
      %1538 = vmatpush1.bf16.msra.mxu0 %v1518
      %1539 = vmatprep.subr.bf16.mxu0 0
      %1540 = vmatpush1.bf16.msra.mxu0 %v1519
      %1541 = vmatprep.subr.bf16.mxu0 0
      %1542 = vmatpush1.bf16.msra.mxu0 %v1520
      %1543 = vmatprep.subr.bf16.mxu0 0
      %1544 = vmatpush1.bf16.msra.mxu0 %v1521
      %1545 = vmatprep.subr.bf16.mxu0 0
      %1546 = vmatpush1.bf16.msra.mxu0 %v1522
      %1547 = vmatprep.subr.bf16.mxu0 0
      %1548 = vmatpush1.bf16.msra.mxu0 0
      %1549 = vmatprep.subr.bf16.mxu0 0
      %1550 = vmatpush1.bf16.msra.mxu0 0
      %1551 = vmatprep.subr.bf16.mxu0 0
      %1552 = vmatpush1.bf16.msra.mxu0 0
      %1553 = vmatprep.subr.bf16.mxu0 0
      %1554 = vmatpush1.bf16.msra.mxu0 0
      %1555 = vmatprep.subr.bf16.mxu0 0
      %1556 = vmatpush1.bf16.msra.mxu0 0
      %1557 = vmatprep.subr.bf16.mxu0 0
      %1558 = vmatpush1.bf16.msra.mxu0 0
      %1559 = vmatprep.subr.bf16.mxu0 0
      %1560 = vmatpush1.bf16.msra.mxu0 0
      %1561 = vmatprep.subr.bf16.mxu0 0
      %1562 = vmatpush1.bf16.msra.mxu0 0
      %1563 = vmatprep.mubr.bf16.mxu0 0
      %1564 = vmatmul.mubr.bf16.gmra.mrb[0].mxu0 %v1450
      %v1565 = vpop.f32.mrb[0].mxu0
      %v1566 = vadd.f32 0.0, %v1565
      %v1567 = vpop.f32.mrb[0].mxu0
      %v1568 = vpop.f32.mrb[0].mxu0
      %v1569 = vadd.f32 0.0, %v1568
      %v1570 = vpop.f32.mrb[0].mxu0
      %1571 = vmatprep.mubr.bf16.mxu0 0
      %1572 = vmatmul.mubr.bf16.gmra.mrb[0].mxu0 %v1451
      %v1573 = vpop.f32.mrb[0].mxu0
      %v1574 = vadd.f32 0.0, %v1573
      %v1575 = vpop.f32.mrb[0].mxu0
      %v1576 = vpop.f32.mrb[0].mxu0
      %v1577 = vadd.f32 0.0, %v1576
      %v1578 = vpop.f32.mrb[0].mxu0
      %1579 = vmatprep.mubr.bf16.mxu0 0
      %1580 = vmatmul.mubr.bf16.gmra.mrb[0].mxu0 %v1452
      %v1581 = vpop.f32.mrb[0].mxu0
      %v1582 = vadd.f32 0.0, %v1581
      %v1583 = vpop.f32.mrb[0].mxu0
      %v1584 = vpop.f32.mrb[0].mxu0
      %v1585 = vadd.f32 0.0, %v1584
      %v1586 = vpop.f32.mrb[0].mxu0
      %1587 = vmatprep.mubr.bf16.mxu0 0
      %1588 = vmatmul.mubr.bf16.gmra.mrb[0].mxu0 %v1453
      %v1589 = vpop.f32.mrb[0].mxu0
      %v1590 = vadd.f32 0.0, %v1589
      %v1591 = vpop.f32.mrb[0].mxu0
      %v1592 = vpop.f32.mrb[0].mxu0
      %v1593 = vadd.f32 0.0, %v1592
      %v1594 = vpop.f32.mrb[0].mxu0
      %1595 = vmatprep.mubr.bf16.mxu0 0
      %1596 = vmatmul.mubr.bf16.gmra.mrb[0].mxu0 %v1454
      %v1597 = vpop.f32.mrb[0].mxu0
      %v1598 = vadd.f32 0.0, %v1597
      %v1599 = vpop.f32.mrb[0].mxu0
      %v1600 = vpop.f32.mrb[0].mxu0
      %v1601 = vadd.f32 0.0, %v1600
      %v1602 = vpop.f32.mrb[0].mxu0
      %1603 = vmatprep.mubr.bf16.mxu0 0
      %1604 = vmatmul.mubr.bf16.gmra.mrb[0].mxu0 %v1455
      %v1605 = vpop.f32.mrb[0].mxu0
      %v1606 = vadd.f32 0.0, %v1605
      %v1607 = vpop.f32.mrb[0].mxu0
      %v1608 = vpop.f32.mrb[0].mxu0
      %v1609 = vadd.f32 0.0, %v1608
      %v1610 = vpop.f32.mrb[0].mxu0
      %1611 = vmatprep.mubr.bf16.mxu0 0
      %1612 = vmatmul.mubr.bf16.gmra.mrb[0].mxu0 %v1456
      %v1613 = vpop.f32.mrb[0].mxu0
      %v1614 = vadd.f32 0.0, %v1613
      %v1615 = vpop.f32.mrb[0].mxu0
      %v1616 = vpop.f32.mrb[0].mxu0
      %v1617 = vadd.f32 0.0, %v1616
      %v1618 = vpop.f32.mrb[0].mxu0
      %1619 = vmatprep.mubr.bf16.mxu0 0
      %1620 = vmatmul.mubr.bf16.gmra.mrb[0].mxu0 %v1457
      %v1621 = vpop.f32.mrb[0].mxu0
      %v1622 = vadd.f32 0.0, %v1621
      %v1623 = vpop.f32.mrb[0].mxu0
      %v1624 = vpop.f32.mrb[0].mxu0
      %v1625 = vadd.f32 0.0, %v1624
      %v1626 = vpop.f32.mrb[0].mxu0
      %1627 = vmatprep.mubr.bf16.mxu0 0
      %1628 = vmatmul.mubr.bf16.gmra.mrb[0].mxu0 %v1458
      %v1629 = vpop.f32.mrb[0].mxu0
      %v1630 = vadd.f32 0.0, %v1629
      %v1631 = vpop.f32.mrb[0].mxu0
      %v1632 = vpop.f32.mrb[0].mxu0
      %v1633 = vadd.f32 0.0, %v1632
      %v1634 = vpop.f32.mrb[0].mxu0
      %1635 = vmatprep.mubr.bf16.mxu0 0
      %1636 = vmatmul.mubr.bf16.gmra.mrb[0].mxu0 %v1459
      %v1637 = vpop.f32.mrb[0].mxu0
      %v1638 = vadd.f32 0.0, %v1637
      %v1639 = vpop.f32.mrb[0].mxu0
      %v1640 = vpop.f32.mrb[0].mxu0
      %v1641 = vadd.f32 0.0, %v1640
      %v1642 = vpop.f32.mrb[0].mxu0
      %1643 = vmatprep.mubr.bf16.mxu0 0
      %1644 = vmatmul.mubr.bf16.gmra.mrb[0].mxu0 %v1460
      %v1645 = vpop.f32.mrb[0].mxu0
      %v1646 = vadd.f32 0.0, %v1645
      %v1647 = vpop.f32.mrb[0].mxu0
      %v1648 = vpop.f32.mrb[0].mxu0
      %v1649 = vadd.f32 0.0, %v1648
      %v1650 = vpop.f32.mrb[0].mxu0
      %1651 = vmatprep.mubr.bf16.mxu0 0
      %1652 = vmatmul.mubr.bf16.gmra.mrb[0].mxu0 %v1461
      %v1653 = vpop.f32.mrb[0].mxu0
      %v1654 = vadd.f32 0.0, %v1653
      %v1655 = vpop.f32.mrb[0].mxu0
      %v1656 = vpop.f32.mrb[0].mxu0
      %v1657 = vadd.f32 0.0, %v1656
      %v1658 = vpop.f32.mrb[0].mxu0
      %1659 = vmatprep.mubr.bf16.mxu0 0
      %1660 = vmatmul.mubr.bf16.gmra.mrb[0].mxu0 %v1462
      %v1661 = vpop.f32.mrb[0].mxu0
      %v1662 = vadd.f32 0.0, %v1661
      %v1663 = vpop.f32.mrb[0].mxu0
      %v1664 = vpop.f32.mrb[0].mxu0
      %v1665 = vadd.f32 0.0, %v1664
      %v1666 = vpop.f32.mrb[0].mxu0
      %1667 = vmatprep.mubr.bf16.mxu0 0
      %1668 = vmatmul.mubr.bf16.gmra.mrb[0].mxu0 %v1463
      %v1669 = vpop.f32.mrb[0].mxu0
      %v1670 = vadd.f32 0.0, %v1669
      %v1671 = vpop.f32.mrb[0].mxu0
      %v1672 = vpop.f32.mrb[0].mxu0
      %v1673 = vadd.f32 0.0, %v1672
      %v1674 = vpop.f32.mrb[0].mxu0
      %1675 = vmatprep.mubr.bf16.mxu0 0
      %1676 = vmatmul.mubr.bf16.gmra.mrb[0].mxu0 %v1464
      %v1677 = vpop.f32.mrb[0].mxu0
      %v1678 = vadd.f32 0.0, %v1677
      %v1679 = vpop.f32.mrb[0].mxu0
      %v1680 = vpop.f32.mrb[0].mxu0
      %v1681 = vadd.f32 0.0, %v1680
      %v1682 = vpop.f32.mrb[0].mxu0
      %1683 = vmatprep.mubr.bf16.mxu0 0
      %1684 = vmatmul.mubr.bf16.gmra.mrb[0].mxu0 %v1465
      %v1685 = vpop.f32.mrb[0].mxu0
      %v1686 = vadd.f32 0.0, %v1685
      %v1687 = vpop.f32.mrb[0].mxu0
      %v1688 = vpop.f32.mrb[0].mxu0
      %v1689 = vadd.f32 0.0, %v1688
      %v1690 = vpop.f32.mrb[0].mxu0
      %1691 = vdwg.mxu0
      %v1708 = vunpack.c.l.b16 %v1434
      %v1709 = vunpack.c.l.b16 %v1435
      %v1710 = vunpack.c.l.b16 %v1436
      %v1711 = vunpack.c.l.b16 %v1437
      %v1712 = vunpack.c.l.b16 %v1438
      %v1713 = vunpack.c.l.b16 %v1439
      %v1714 = vunpack.c.l.b16 %v1440
      %v1715 = vunpack.c.l.b16 %v1441
      %v1716 = vunpack.c.l.b16 %v1442
      %v1717 = vunpack.c.l.b16 %v1443
      %v1718 = vunpack.c.l.b16 %v1444
      %v1719 = vunpack.c.l.b16 %v1445
      %v1720 = vunpack.c.l.b16 %v1446
      %v1721 = vunpack.c.l.b16 %v1447
      %v1722 = vunpack.c.l.b16 %v1448
      %v1723 = vunpack.c.l.b16 %v1449
      %v1724 = vpack.c.b16 %v1709, %v1708
      %v1725 = vpack.c.b16 %v1711, %v1710
      %v1726 = vpack.c.b16 %v1713, %v1712
      %v1727 = vpack.c.b16 %v1715, %v1714
      %v1728 = vpack.c.b16 %v1717, %v1716
      %v1729 = vpack.c.b16 %v1719, %v1718
      %v1730 = vpack.c.b16 %v1721, %v1720
      %v1731 = vpack.c.b16 %v1723, %v1722
      %1740 = vmatprep.subr.bf16.mxu0 0
      %1741 = vmatpush1.bf16.msra.mxu0 %v1724
      %1742 = vmatprep.subr.bf16.mxu0 0
      %1743 = vmatpush1.bf16.msra.mxu0 %v1725
      %1744 = vmatprep.subr.bf16.mxu0 0
      %1745 = vmatpush1.bf16.msra.mxu0 %v1726
      %1746 = vmatprep.subr.bf16.mxu0 0
      %1747 = vmatpush1.bf16.msra.mxu0 %v1727
      %1748 = vmatprep.subr.bf16.mxu0 0
      %1749 = vmatpush1.bf16.msra.mxu0 %v1728
      %1750 = vmatprep.subr.bf16.mxu0 0
      %1751 = vmatpush1.bf16.msra.mxu0 %v1729
      %1752 = vmatprep.subr.bf16.mxu0 0
      %1753 = vmatpush1.bf16.msra.mxu0 %v1730
      %1754 = vmatprep.subr.bf16.mxu0 0
      %1755 = vmatpush1.bf16.msra.mxu0 %v1731
      %1756 = vmatprep.subr.bf16.mxu0 0
      %1757 = vmatpush1.bf16.msra.mxu0 0
      %1758 = vmatprep.subr.bf16.mxu0 0
      %1759 = vmatpush1.bf16.msra.mxu0 0
      %1760 = vmatprep.subr.bf16.mxu0 0
      %1761 = vmatpush1.bf16.msra.mxu0 0
      %1762 = vmatprep.subr.bf16.mxu0 0
      %1763 = vmatpush1.bf16.msra.mxu0 0
      %1764 = vmatprep.subr.bf16.mxu0 0
      %1765 = vmatpush1.bf16.msra.mxu0 0
      %1766 = vmatprep.subr.bf16.mxu0 0
      %1767 = vmatpush1.bf16.msra.mxu0 0
      %1768 = vmatprep.subr.bf16.mxu0 0
      %1769 = vmatpush1.bf16.msra.mxu0 0
      %1770 = vmatprep.subr.bf16.mxu0 0
      %1771 = vmatpush1.bf16.msra.mxu0 0
      %1772 = vmatprep.mubr.bf16.mxu0 0
      %1773 = vmatmul.mubr.bf16.gmra.mrb[0].mxu0 %v1418
      %v1774 = vpop.f32.mrb[0].mxu0
      %v1775 = vadd.f32 %v1566, %v1774
      %v1776 = vpop.f32.mrb[0].mxu0
      %v1777 = vpop.f32.mrb[0].mxu0
      %v1778 = vadd.f32 %v1569, %v1777
      %v1779 = vpop.f32.mrb[0].mxu0
      %1780 = vmatprep.mubr.bf16.mxu0 0
      %1781 = vmatmul.mubr.bf16.gmra.mrb[0].mxu0 %v1419
      %v1782 = vpop.f32.mrb[0].mxu0
      %v1783 = vadd.f32 %v1574, %v1782
      %v1784 = vpop.f32.mrb[0].mxu0
      %v1785 = vpop.f32.mrb[0].mxu0
      %v1786 = vadd.f32 %v1577, %v1785
      %v1787 = vpop.f32.mrb[0].mxu0
      %1788 = vmatprep.mubr.bf16.mxu0 0
      %1789 = vmatmul.mubr.bf16.gmra.mrb[0].mxu0 %v1420
      %v1790 = vpop.f32.mrb[0].mxu0
      %v1791 = vadd.f32 %v1582, %v1790
      %v1792 = vpop.f32.mrb[0].mxu0
      %v1793 = vpop.f32.mrb[0].mxu0
      %v1794 = vadd.f32 %v1585, %v1793
      %v1795 = vpop.f32.mrb[0].mxu0
      %1796 = vmatprep.mubr.bf16.mxu0 0
      %1797 = vmatmul.mubr.bf16.gmra.mrb[0].mxu0 %v1421
      %v1798 = vpop.f32.mrb[0].mxu0
      %v1799 = vadd.f32 %v1590, %v1798
      %v1800 = vpop.f32.mrb[0].mxu0
      %v1801 = vpop.f32.mrb[0].mxu0
      %v1802 = vadd.f32 %v1593, %v1801
      %v1803 = vpop.f32.mrb[0].mxu0
      %1804 = vmatprep.mubr.bf16.mxu0 0
      %1805 = vmatmul.mubr.bf16.gmra.mrb[0].mxu0 %v1422
      %v1806 = vpop.f32.mrb[0].mxu0
      %v1807 = vadd.f32 %v1598, %v1806
      %v1808 = vpop.f32.mrb[0].mxu0
      %v1809 = vpop.f32.mrb[0].mxu0
      %v1810 = vadd.f32 %v1601, %v1809
      %v1811 = vpop.f32.mrb[0].mxu0
      %1812 = vmatprep.mubr.bf16.mxu0 0
      %1813 = vmatmul.mubr.bf16.gmra.mrb[0].mxu0 %v1423
      %v1814 = vpop.f32.mrb[0].mxu0
      %v1815 = vadd.f32 %v1606, %v1814
      %v1816 = vpop.f32.mrb[0].mxu0
      %v1817 = vpop.f32.mrb[0].mxu0
      %v1818 = vadd.f32 %v1609, %v1817
      %v1819 = vpop.f32.mrb[0].mxu0
      %1820 = vmatprep.mubr.bf16.mxu0 0
      %1821 = vmatmul.mubr.bf16.gmra.mrb[0].mxu0 %v1424
      %v1822 = vpop.f32.mrb[0].mxu0
      %v1823 = vadd.f32 %v1614, %v1822
      %v1824 = vpop.f32.mrb[0].mxu0
      %v1825 = vpop.f32.mrb[0].mxu0
      %v1826 = vadd.f32 %v1617, %v1825
      %v1827 = vpop.f32.mrb[0].mxu0
      %1828 = vmatprep.mubr.bf16.mxu0 0
      %1829 = vmatmul.mubr.bf16.gmra.mrb[0].mxu0 %v1425
      %v1830 = vpop.f32.mrb[0].mxu0
      %v1831 = vadd.f32 %v1622, %v1830
      %v1832 = vpop.f32.mrb[0].mxu0
      %v1833 = vpop.f32.mrb[0].mxu0
      %v1834 = vadd.f32 %v1625, %v1833
      %v1835 = vpop.f32.mrb[0].mxu0
      %1836 = vmatprep.mubr.bf16.mxu0 0
      %1837 = vmatmul.mubr.bf16.gmra.mrb[0].mxu0 %v1426
      %v1838 = vpop.f32.mrb[0].mxu0
      %v1839 = vadd.f32 %v1630, %v1838
      %v1840 = vpop.f32.mrb[0].mxu0
      %v1841 = vpop.f32.mrb[0].mxu0
      %v1842 = vadd.f32 %v1633, %v1841
      %v1843 = vpop.f32.mrb[0].mxu0
      %1844 = vmatprep.mubr.bf16.mxu0 0
      %1845 = vmatmul.mubr.bf16.gmra.mrb[0].mxu0 %v1427
      %v1846 = vpop.f32.mrb[0].mxu0
      %v1847 = vadd.f32 %v1638, %v1846
      %v1848 = vpop.f32.mrb[0].mxu0
      %v1849 = vpop.f32.mrb[0].mxu0
      %v1850 = vadd.f32 %v1641, %v1849
      %v1851 = vpop.f32.mrb[0].mxu0
      %1852 = vmatprep.mubr.bf16.mxu0 0
      %1853 = vmatmul.mubr.bf16.gmra.mrb[0].mxu0 %v1428
      %v1854 = vpop.f32.mrb[0].mxu0
      %v1855 = vadd.f32 %v1646, %v1854
      %v1856 = vpop.f32.mrb[0].mxu0
      %v1857 = vpop.f32.mrb[0].mxu0
      %v1858 = vadd.f32 %v1649, %v1857
      %v1859 = vpop.f32.mrb[0].mxu0
      %1860 = vmatprep.mubr.bf16.mxu0 0
      %1861 = vmatmul.mubr.bf16.gmra.mrb[0].mxu0 %v1429
      %v1862 = vpop.f32.mrb[0].mxu0
      %v1863 = vadd.f32 %v1654, %v1862
      %v1864 = vpop.f32.mrb[0].mxu0
      %v1865 = vpop.f32.mrb[0].mxu0
      %v1866 = vadd.f32 %v1657, %v1865
      %v1867 = vpop.f32.mrb[0].mxu0
      %1868 = vmatprep.mubr.bf16.mxu0 0
      %1869 = vmatmul.mubr.bf16.gmra.mrb[0].mxu0 %v1430
      %v1870 = vpop.f32.mrb[0].mxu0
      %v1871 = vadd.f32 %v1662, %v1870
      %v1872 = vpop.f32.mrb[0].mxu0
      %v1873 = vpop.f32.mrb[0].mxu0
      %v1874 = vadd.f32 %v1665, %v1873
      %v1875 = vpop.f32.mrb[0].mxu0
      %1876 = vmatprep.mubr.bf16.mxu0 0
      %1877 = vmatmul.mubr.bf16.gmra.mrb[0].mxu0 %v1431
      %v1878 = vpop.f32.mrb[0].mxu0
      %v1879 = vadd.f32 %v1670, %v1878
      %v1880 = vpop.f32.mrb[0].mxu0
      %v1881 = vpop.f32.mrb[0].mxu0
      %v1882 = vadd.f32 %v1673, %v1881
      %v1883 = vpop.f32.mrb[0].mxu0
      %1884 = vmatprep.mubr.bf16.mxu0 0
      %1885 = vmatmul.mubr.bf16.gmra.mrb[0].mxu0 %v1432
      %v1886 = vpop.f32.mrb[0].mxu0
      %v1887 = vadd.f32 %v1678, %v1886
      %v1888 = vpop.f32.mrb[0].mxu0
      %v1889 = vpop.f32.mrb[0].mxu0
      %v1890 = vadd.f32 %v1681, %v1889
      %v1891 = vpop.f32.mrb[0].mxu0
      %1892 = vmatprep.mubr.bf16.mxu0 0
      %1893 = vmatmul.mubr.bf16.gmra.mrb[0].mxu0 %v1433
      %v1894 = vpop.f32.mrb[0].mxu0
      %v1895 = vadd.f32 %v1686, %v1894
      %v1896 = vpop.f32.mrb[0].mxu0
      %v1897 = vpop.f32.mrb[0].mxu0
      %v1898 = vadd.f32 %v1689, %v1897
      %v1899 = vpop.f32.mrb[0].mxu0
      %1900 = vdwg.mxu0
      %v1901 = vld [vmem:[%s1397] sm:$0xff]
      %v1902 = vld [vmem:[%s1397 + $0x8] sm:$0xff]
      %v1903 = vld [vmem:[%s1397 + $0x10] sm:$0xff]
      %v1904 = vld [vmem:[%s1397 + $0x18] sm:$0xff]
      %v1905 = vld [vmem:[%s1397 + $0x20] sm:$0xff]
      %v1906 = vld [vmem:[%s1397 + $0x28] sm:$0xff]
      %v1907 = vld [vmem:[%s1397 + $0x30] sm:$0xff]
      %v1908 = vld [vmem:[%s1397 + $0x38] sm:$0xff]
      %v1909 = vld [vmem:[%s1397 + $0x40] sm:$0xff]
      %v1910 = vld [vmem:[%s1397 + $0x48] sm:$0xff]
      %v1911 = vld [vmem:[%s1397 + $0x50] sm:$0xff]
      %v1912 = vld [vmem:[%s1397 + $0x58] sm:$0xff]
      %v1913 = vld [vmem:[%s1397 + $0x60] sm:$0xff]
      %v1914 = vld [vmem:[%s1397 + $0x68] sm:$0xff]
      %v1915 = vld [vmem:[%s1397 + $0x70] sm:$0xff]
      %v1916 = vld [vmem:[%s1397 + $0x78] sm:$0xff]
      %s1917 = scalar_lea.vmem %s1, 128
      %v1918 = vld [vmem:[%s1917] sm:$0xf]
      %v1919 = vld [vmem:[%s1917 + $0x4] sm:$0xf]
      %v1920 = vld [vmem:[%s1917 + $0x8] sm:$0xf]
      %v1921 = vld [vmem:[%s1917 + $0xc] sm:$0xf]
      %v1922 = vld [vmem:[%s1917 + $0x10] sm:$0xf]
      %v1923 = vld [vmem:[%s1917 + $0x14] sm:$0xf]
      %v1924 = vld [vmem:[%s1917 + $0x18] sm:$0xf]
      %v1925 = vld [vmem:[%s1917 + $0x1c] sm:$0xf]
      %v1926 = vld [vmem:[%s1917 + $0x20] sm:$0xf]
      %v1927 = vld [vmem:[%s1917 + $0x24] sm:$0xf]
      %v1928 = vld [vmem:[%s1917 + $0x28] sm:$0xf]
      %v1929 = vld [vmem:[%s1917 + $0x2c] sm:$0xf]
      %v1930 = vld [vmem:[%s1917 + $0x30] sm:$0xf]
      %v1931 = vld [vmem:[%s1917 + $0x34] sm:$0xf]
      %v1932 = vld [vmem:[%s1917 + $0x38] sm:$0xf]
      %v1933 = vld [vmem:[%s1917 + $0x3c] sm:$0xf]
      %v1950 = vunpack.c.l.b16 %v1918
      %v1951 = vunpack.c.l.b16 %v1919
      %v1952 = vunpack.c.l.b16 %v1920
      %v1953 = vunpack.c.l.b16 %v1921
      %v1954 = vunpack.c.l.b16 %v1922
      %v1955 = vunpack.c.l.b16 %v1923
      %v1956 = vunpack.c.l.b16 %v1924
      %v1957 = vunpack.c.l.b16 %v1925
      %v1958 = vunpack.c.l.b16 %v1926
      %v1959 = vunpack.c.l.b16 %v1927
      %v1960 = vunpack.c.l.b16 %v1928
      %v1961 = vunpack.c.l.b16 %v1929
      %v1962 = vunpack.c.l.b16 %v1930
      %v1963 = vunpack.c.l.b16 %v1931
      %v1964 = vunpack.c.l.b16 %v1932
      %v1965 = vunpack.c.l.b16 %v1933
      %v1966 = vpack.c.b16 %v1951, %v1950
      %v1967 = vpack.c.b16 %v1953, %v1952
      %v1968 = vpack.c.b16 %v1955, %v1954
      %v1969 = vpack.c.b16 %v1957, %v1956
      %v1970 = vpack.c.b16 %v1959, %v1958
      %v1971 = vpack.c.b16 %v1961, %v1960
      %v1972 = vpack.c.b16 %v1963, %v1962
      %v1973 = vpack.c.b16 %v1965, %v1964
      %1982 = vmatprep.subr.bf16.mxu0 0
      %1983 = vmatpush1.bf16.msra.mxu0 %v1966
      %1984 = vmatprep.subr.bf16.mxu0 0
      %1985 = vmatpush1.bf16.msra.mxu0 %v1967
      %1986 = vmatprep.subr.bf16.mxu0 0
      %1987 = vmatpush1.bf16.msra.mxu0 %v1968
      %1988 = vmatprep.subr.bf16.mxu0 0
      %1989 = vmatpush1.bf16.msra.mxu0 %v1969
      %1990 = vmatprep.subr.bf16.mxu0 0
      %1991 = vmatpush1.bf16.msra.mxu0 %v1970
      %1992 = vmatprep.subr.bf16.mxu0 0
      %1993 = vmatpush1.bf16.msra.mxu0 %v1971
      %1994 = vmatprep.subr.bf16.mxu0 0
      %1995 = vmatpush1.bf16.msra.mxu0 %v1972
      %1996 = vmatprep.subr.bf16.mxu0 0
      %1997 = vmatpush1.bf16.msra.mxu0 %v1973
      %1998 = vmatprep.subr.bf16.mxu0 0
      %1999 = vmatpush1.bf16.msra.mxu0 0
      %2000 = vmatprep.subr.bf16.mxu0 0
      %2001 = vmatpush1.bf16.msra.mxu0 0
      %2002 = vmatprep.subr.bf16.mxu0 0
      %2003 = vmatpush1.bf16.msra.mxu0 0
      %2004 = vmatprep.subr.bf16.mxu0 0
      %2005 = vmatpush1.bf16.msra.mxu0 0
      %2006 = vmatprep.subr.bf16.mxu0 0
      %2007 = vmatpush1.bf16.msra.mxu0 0
      %2008 = vmatprep.subr.bf16.mxu0 0
      %2009 = vmatpush1.bf16.msra.mxu0 0
      %2010 = vmatprep.subr.bf16.mxu0 0
      %2011 = vmatpush1.bf16.msra.mxu0 0
      %2012 = vmatprep.subr.bf16.mxu0 0
      %2013 = vmatpush1.bf16.msra.mxu0 0
      %2014 = vmatprep.mubr.bf16.mxu0 0
      %2015 = vmatmul.mubr.bf16.gmra.mrb[0].mxu0 %v1901
      %v2016 = vpop.f32.mrb[0].mxu0
      %v2017 = vadd.f32 0.0, %v2016
      %v2018 = vpop.f32.mrb[0].mxu0
      %v2019 = vpop.f32.mrb[0].mxu0
      %v2020 = vadd.f32 0.0, %v2019
      %v2021 = vpop.f32.mrb[0].mxu0
      %2022 = vmatprep.mubr.bf16.mxu0 0
      %2023 = vmatmul.mubr.bf16.gmra.mrb[0].mxu0 %v1902
      %v2024 = vpop.f32.mrb[0].mxu0
      %v2025 = vadd.f32 0.0, %v2024
      %v2026 = vpop.f32.mrb[0].mxu0
      %v2027 = vpop.f32.mrb[0].mxu0
      %v2028 = vadd.f32 0.0, %v2027
      %v2029 = vpop.f32.mrb[0].mxu0
      %2030 = vmatprep.mubr.bf16.mxu0 0
      %2031 = vmatmul.mubr.bf16.gmra.mrb[0].mxu0 %v1903
      %v2032 = vpop.f32.mrb[0].mxu0
      %v2033 = vadd.f32 0.0, %v2032
      %v2034 = vpop.f32.mrb[0].mxu0
      %v2035 = vpop.f32.mrb[0].mxu0
      %v2036 = vadd.f32 0.0, %v2035
      %v2037 = vpop.f32.mrb[0].mxu0
      %2038 = vmatprep.mubr.bf16.mxu0 0
      %2039 = vmatmul.mubr.bf16.gmra.mrb[0].mxu0 %v1904
      %v2040 = vpop.f32.mrb[0].mxu0
      %v2041 = vadd.f32 0.0, %v2040
      %v2042 = vpop.f32.mrb[0].mxu0
      %v2043 = vpop.f32.mrb[0].mxu0
      %v2044 = vadd.f32 0.0, %v2043
      %v2045 = vpop.f32.mrb[0].mxu0
      %2046 = vmatprep.mubr.bf16.mxu0 0
      %2047 = vmatmul.mubr.bf16.gmra.mrb[0].mxu0 %v1905
      %v2048 = vpop.f32.mrb[0].mxu0
      %v2049 = vadd.f32 0.0, %v2048
      %v2050 = vpop.f32.mrb[0].mxu0
      %v2051 = vpop.f32.mrb[0].mxu0
      %v2052 = vadd.f32 0.0, %v2051
      %v2053 = vpop.f32.mrb[0].mxu0
      %2054 = vmatprep.mubr.bf16.mxu0 0
      %2055 = vmatmul.mubr.bf16.gmra.mrb[0].mxu0 %v1906
      %v2056 = vpop.f32.mrb[0].mxu0
      %v2057 = vadd.f32 0.0, %v2056
      %v2058 = vpop.f32.mrb[0].mxu0
      %v2059 = vpop.f32.mrb[0].mxu0
      %v2060 = vadd.f32 0.0, %v2059
      %v2061 = vpop.f32.mrb[0].mxu0
      %2062 = vmatprep.mubr.bf16.mxu0 0
      %2063 = vmatmul.mubr.bf16.gmra.mrb[0].mxu0 %v1907
      %v2064 = vpop.f32.mrb[0].mxu0
      %v2065 = vadd.f32 0.0, %v2064
      %v2066 = vpop.f32.mrb[0].mxu0
      %v2067 = vpop.f32.mrb[0].mxu0
      %v2068 = vadd.f32 0.0, %v2067
      %v2069 = vpop.f32.mrb[0].mxu0
      %2070 = vmatprep.mubr.bf16.mxu0 0
      %2071 = vmatmul.mubr.bf16.gmra.mrb[0].mxu0 %v1908
      %v2072 = vpop.f32.mrb[0].mxu0
      %v2073 = vadd.f32 0.0, %v2072
      %v2074 = vpop.f32.mrb[0].mxu0
      %v2075 = vpop.f32.mrb[0].mxu0
      %v2076 = vadd.f32 0.0, %v2075
      %v2077 = vpop.f32.mrb[0].mxu0
      %2078 = vmatprep.mubr.bf16.mxu0 0
      %2079 = vmatmul.mubr.bf16.gmra.mrb[0].mxu0 %v1909
      %v2080 = vpop.f32.mrb[0].mxu0
      %v2081 = vadd.f32 0.0, %v2080
      %v2082 = vpop.f32.mrb[0].mxu0
      %v2083 = vpop.f32.mrb[0].mxu0
      %v2084 = vadd.f32 0.0, %v2083
      %v2085 = vpop.f32.mrb[0].mxu0
      %2086 = vmatprep.mubr.bf16.mxu0 0
      %2087 = vmatmul.mubr.bf16.gmra.mrb[0].mxu0 %v1910
      %v2088 = vpop.f32.mrb[0].mxu0
      %v2089 = vadd.f32 0.0, %v2088
      %v2090 = vpop.f32.mrb[0].mxu0
      %v2091 = vpop.f32.mrb[0].mxu0
      %v2092 = vadd.f32 0.0, %v2091
      %v2093 = vpop.f32.mrb[0].mxu0
      %2094 = vmatprep.mubr.bf16.mxu0 0
      %2095 = vmatmul.mubr.bf16.gmra.mrb[0].mxu0 %v1911
      %v2096 = vpop.f32.mrb[0].mxu0
      %v2097 = vadd.f32 0.0, %v2096
      %v2098 = vpop.f32.mrb[0].mxu0
      %v2099 = vpop.f32.mrb[0].mxu0
      %v2100 = vadd.f32 0.0, %v2099
      %v2101 = vpop.f32.mrb[0].mxu0
      %2102 = vmatprep.mubr.bf16.mxu0 0
      %2103 = vmatmul.mubr.bf16.gmra.mrb[0].mxu0 %v1912
      %v2104 = vpop.f32.mrb[0].mxu0
      %v2105 = vadd.f32 0.0, %v2104
      %v2106 = vpop.f32.mrb[0].mxu0
      %v2107 = vpop.f32.mrb[0].mxu0
      %v2108 = vadd.f32 0.0, %v2107
      %v2109 = vpop.f32.mrb[0].mxu0
      %2110 = vmatprep.mubr.bf16.mxu0 0
      %2111 = vmatmul.mubr.bf16.gmra.mrb[0].mxu0 %v1913
      %v2112 = vpop.f32.mrb[0].mxu0
      %v2113 = vadd.f32 0.0, %v2112
      %v2114 = vpop.f32.mrb[0].mxu0
      %v2115 = vpop.f32.mrb[0].mxu0
      %v2116 = vadd.f32 0.0, %v2115
      %v2117 = vpop.f32.mrb[0].mxu0
      %2118 = vmatprep.mubr.bf16.mxu0 0
      %2119 = vmatmul.mubr.bf16.gmra.mrb[0].mxu0 %v1914
      %v2120 = vpop.f32.mrb[0].mxu0
      %v2121 = vadd.f32 0.0, %v2120
      %v2122 = vpop.f32.mrb[0].mxu0
      %v2123 = vpop.f32.mrb[0].mxu0
      %v2124 = vadd.f32 0.0, %v2123
      %v2125 = vpop.f32.mrb[0].mxu0
      %2126 = vmatprep.mubr.bf16.mxu0 0
      %2127 = vmatmul.mubr.bf16.gmra.mrb[0].mxu0 %v1915
      %v2128 = vpop.f32.mrb[0].mxu0
      %v2129 = vadd.f32 0.0, %v2128
      %v2130 = vpop.f32.mrb[0].mxu0
      %v2131 = vpop.f32.mrb[0].mxu0
      %v2132 = vadd.f32 0.0, %v2131
      %v2133 = vpop.f32.mrb[0].mxu0
      %2134 = vmatprep.mubr.bf16.mxu0 0
      %2135 = vmatmul.mubr.bf16.gmra.mrb[0].mxu0 %v1916
      %v2136 = vpop.f32.mrb[0].mxu0
      %v2137 = vadd.f32 0.0, %v2136
      %v2138 = vpop.f32.mrb[0].mxu0
      %v2139 = vpop.f32.mrb[0].mxu0
      %v2140 = vadd.f32 0.0, %v2139
      %v2141 = vpop.f32.mrb[0].mxu0
      %2142 = vdwg.mxu0
      %v2143 = vadd.f32 %v1775, %v2017
      %v2144 = vadd.f32 %v1778, %v2020
      %v2145 = vadd.f32 %v1783, %v2025
      %v2146 = vadd.f32 %v1786, %v2028
      %v2147 = vadd.f32 %v1791, %v2033
      %v2148 = vadd.f32 %v1794, %v2036
      %v2149 = vadd.f32 %v1799, %v2041
      %v2150 = vadd.f32 %v1802, %v2044
      %v2151 = vadd.f32 %v1807, %v2049
      %v2152 = vadd.f32 %v1810, %v2052
      %v2153 = vadd.f32 %v1815, %v2057
      %v2154 = vadd.f32 %v1818, %v2060
      %v2155 = vadd.f32 %v1823, %v2065
      %v2156 = vadd.f32 %v1826, %v2068
      %v2157 = vadd.f32 %v1831, %v2073
      %v2158 = vadd.f32 %v1834, %v2076
      %v2159 = vadd.f32 %v1839, %v2081
      %v2160 = vadd.f32 %v1842, %v2084
      %v2161 = vadd.f32 %v1847, %v2089
      %v2162 = vadd.f32 %v1850, %v2092
      %v2163 = vadd.f32 %v1855, %v2097
      %v2164 = vadd.f32 %v1858, %v2100
      %v2165 = vadd.f32 %v1863, %v2105
      %v2166 = vadd.f32 %v1866, %v2108
      %v2167 = vadd.f32 %v1871, %v2113
      %v2168 = vadd.f32 %v1874, %v2116
      %v2169 = vadd.f32 %v1879, %v2121
      %v2170 = vadd.f32 %v1882, %v2124
      %v2171 = vadd.f32 %v1887, %v2129
      %v2172 = vadd.f32 %v1890, %v2132
      %v2173 = vadd.f32 %v1895, %v2137
      %v2174 = vadd.f32 %v1898, %v2140
      %v2175 = vld [vmem:[#allocation2 + $0x8] sm:$0xff]
      %v2176 = vld [vmem:[#allocation2 + $0x10] sm:$0xff]
      %v2177 = vld [vmem:[#allocation2 + $0x18] sm:$0xff]
      %v2178 = vld [vmem:[#allocation2 + $0x20] sm:$0xff]
      %v2179 = vld [vmem:[#allocation2 + $0x28] sm:$0xff]
      %v2180 = vld [vmem:[#allocation2 + $0x30] sm:$0xff]
      %v2181 = vld [vmem:[#allocation2 + $0x38] sm:$0xff]
      %v2182 = vld [vmem:[#allocation2 + $0x40] sm:$0xff]
      %v2183 = vld [vmem:[#allocation2 + $0x48] sm:$0xff]
      %v2184 = vld [vmem:[#allocation2 + $0x50] sm:$0xff]
      %v2185 = vld [vmem:[#allocation2 + $0x58] sm:$0xff]
      %v2186 = vld [vmem:[#allocation2 + $0x60] sm:$0xff]
      %v2187 = vld [vmem:[#allocation2 + $0x68] sm:$0xff]
      %v2188 = vld [vmem:[#allocation2 + $0x70] sm:$0xff]
      %v2189 = vld [vmem:[#allocation2 + $0x78] sm:$0xff]
      %v2190 = vld [vmem:[#allocation2 + $0x80] sm:$0xff]
      %s2191 = scalar_lea.vmem %s1, 192
      %v2192 = vld [vmem:[%s2191] sm:$0xf]
      %v2193 = vld [vmem:[%s2191 + $0x4] sm:$0xf]
      %v2194 = vld [vmem:[%s2191 + $0x8] sm:$0xf]
      %v2195 = vld [vmem:[%s2191 + $0xc] sm:$0xf]
      %v2196 = vld [vmem:[%s2191 + $0x10] sm:$0xf]
      %v2197 = vld [vmem:[%s2191 + $0x14] sm:$0xf]
      %v2198 = vld [vmem:[%s2191 + $0x18] sm:$0xf]
      %v2199 = vld [vmem:[%s2191 + $0x1c] sm:$0xf]
      %v2200 = vld [vmem:[%s2191 + $0x20] sm:$0xf]
      %v2201 = vld [vmem:[%s2191 + $0x24] sm:$0xf]
      %v2202 = vld [vmem:[%s2191 + $0x28] sm:$0xf]
      %v2203 = vld [vmem:[%s2191 + $0x2c] sm:$0xf]
      %v2204 = vld [vmem:[%s2191 + $0x30] sm:$0xf]
      %v2205 = vld [vmem:[%s2191 + $0x34] sm:$0xf]
      %v2206 = vld [vmem:[%s2191 + $0x38] sm:$0xf]
      %v2207 = vld [vmem:[%s2191 + $0x3c] sm:$0xf]
      %v2224 = vunpack.c.l.b16 %v2192
      %v2225 = vunpack.c.l.b16 %v2193
      %v2226 = vunpack.c.l.b16 %v2194
      %v2227 = vunpack.c.l.b16 %v2195
      %v2228 = vunpack.c.l.b16 %v2196
      %v2229 = vunpack.c.l.b16 %v2197
      %v2230 = vunpack.c.l.b16 %v2198
      %v2231 = vunpack.c.l.b16 %v2199
      %v2232 = vunpack.c.l.b16 %v2200
      %v2233 = vunpack.c.l.b16 %v2201
      %v2234 = vunpack.c.l.b16 %v2202
      %v2235 = vunpack.c.l.b16 %v2203
      %v2236 = vunpack.c.l.b16 %v2204
      %v2237 = vunpack.c.l.b16 %v2205
      %v2238 = vunpack.c.l.b16 %v2206
      %v2239 = vunpack.c.l.b16 %v2207
      %v2240 = vpack.c.b16 %v2225, %v2224
      %v2241 = vpack.c.b16 %v2227, %v2226
      %v2242 = vpack.c.b16 %v2229, %v2228
      %v2243 = vpack.c.b16 %v2231, %v2230
      %v2244 = vpack.c.b16 %v2233, %v2232
      %v2245 = vpack.c.b16 %v2235, %v2234
      %v2246 = vpack.c.b16 %v2237, %v2236
      %v2247 = vpack.c.b16 %v2239, %v2238
      %2256 = vmatprep.subr.bf16.mxu0 0
      %2257 = vmatpush1.bf16.msra.mxu0 %v2240
      %2258 = vmatprep.subr.bf16.mxu0 0
      %2259 = vmatpush1.bf16.msra.mxu0 %v2241
      %2260 = vmatprep.subr.bf16.mxu0 0
      %2261 = vmatpush1.bf16.msra.mxu0 %v2242
      %2262 = vmatprep.subr.bf16.mxu0 0
      %2263 = vmatpush1.bf16.msra.mxu0 %v2243
      %2264 = vmatprep.subr.bf16.mxu0 0
      %2265 = vmatpush1.bf16.msra.mxu0 %v2244
      %2266 = vmatprep.subr.bf16.mxu0 0
      %2267 = vmatpush1.bf16.msra.mxu0 %v2245
      %2268 = vmatprep.subr.bf16.mxu0 0
      %2269 = vmatpush1.bf16.msra.mxu0 %v2246
      %2270 = vmatprep.subr.bf16.mxu0 0
      %2271 = vmatpush1.bf16.msra.mxu0 %v2247
      %2272 = vmatprep.subr.bf16.mxu0 0
      %2273 = vmatpush1.bf16.msra.mxu0 0
      %2274 = vmatprep.subr.bf16.mxu0 0
      %2275 = vmatpush1.bf16.msra.mxu0 0
      %2276 = vmatprep.subr.bf16.mxu0 0
      %2277 = vmatpush1.bf16.msra.mxu0 0
      %2278 = vmatprep.subr.bf16.mxu0 0
      %2279 = vmatpush1.bf16.msra.mxu0 0
      %2280 = vmatprep.subr.bf16.mxu0 0
      %2281 = vmatpush1.bf16.msra.mxu0 0
      %2282 = vmatprep.subr.bf16.mxu0 0
      %2283 = vmatpush1.bf16.msra.mxu0 0
      %2284 = vmatprep.subr.bf16.mxu0 0
      %2285 = vmatpush1.bf16.msra.mxu0 0
      %2286 = vmatprep.subr.bf16.mxu0 0
      %2287 = vmatpush1.bf16.msra.mxu0 0
      %2288 = vmatprep.mubr.bf16.mxu0 0
      %2289 = vmatmul.mubr.bf16.gmra.mrb[0].mxu0 %v2175
      %v2290 = vpop.f32.mrb[0].mxu0
      %v2291 = vadd.f32 0.0, %v2290
      %v2292 = vpop.f32.mrb[0].mxu0
      %v2293 = vpop.f32.mrb[0].mxu0
      %v2294 = vadd.f32 0.0, %v2293
      %v2295 = vpop.f32.mrb[0].mxu0
      %2296 = vmatprep.mubr.bf16.mxu0 0
      %2297 = vmatmul.mubr.bf16.gmra.mrb[0].mxu0 %v2176
      %v2298 = vpop.f32.mrb[0].mxu0
      %v2299 = vadd.f32 0.0, %v2298
      %v2300 = vpop.f32.mrb[0].mxu0
      %v2301 = vpop.f32.mrb[0].mxu0
      %v2302 = vadd.f32 0.0, %v2301
      %v2303 = vpop.f32.mrb[0].mxu0
      %2304 = vmatprep.mubr.bf16.mxu0 0
      %2305 = vmatmul.mubr.bf16.gmra.mrb[0].mxu0 %v2177
      %v2306 = vpop.f32.mrb[0].mxu0
      %v2307 = vadd.f32 0.0, %v2306
      %v2308 = vpop.f32.mrb[0].mxu0
      %v2309 = vpop.f32.mrb[0].mxu0
      %v2310 = vadd.f32 0.0, %v2309
      %v2311 = vpop.f32.mrb[0].mxu0
      %2312 = vmatprep.mubr.bf16.mxu0 0
      %2313 = vmatmul.mubr.bf16.gmra.mrb[0].mxu0 %v2178
      %v2314 = vpop.f32.mrb[0].mxu0
      %v2315 = vadd.f32 0.0, %v2314
      %v2316 = vpop.f32.mrb[0].mxu0
      %v2317 = vpop.f32.mrb[0].mxu0
      %v2318 = vadd.f32 0.0, %v2317
      %v2319 = vpop.f32.mrb[0].mxu0
      %2320 = vmatprep.mubr.bf16.mxu0 0
      %2321 = vmatmul.mubr.bf16.gmra.mrb[0].mxu0 %v2179
      %v2322 = vpop.f32.mrb[0].mxu0
      %v2323 = vadd.f32 0.0, %v2322
      %v2324 = vpop.f32.mrb[0].mxu0
      %v2325 = vpop.f32.mrb[0].mxu0
      %v2326 = vadd.f32 0.0, %v2325
      %v2327 = vpop.f32.mrb[0].mxu0
      %2328 = vmatprep.mubr.bf16.mxu0 0
      %2329 = vmatmul.mubr.bf16.gmra.mrb[0].mxu0 %v2180
      %v2330 = vpop.f32.mrb[0].mxu0
      %v2331 = vadd.f32 0.0, %v2330
      %v2332 = vpop.f32.mrb[0].mxu0
      %v2333 = vpop.f32.mrb[0].mxu0
      %v2334 = vadd.f32 0.0, %v2333
      %v2335 = vpop.f32.mrb[0].mxu0
      %2336 = vmatprep.mubr.bf16.mxu0 0
      %2337 = vmatmul.mubr.bf16.gmra.mrb[0].mxu0 %v2181
      %v2338 = vpop.f32.mrb[0].mxu0
      %v2339 = vadd.f32 0.0, %v2338
      %v2340 = vpop.f32.mrb[0].mxu0
      %v2341 = vpop.f32.mrb[0].mxu0
      %v2342 = vadd.f32 0.0, %v2341
      %v2343 = vpop.f32.mrb[0].mxu0
      %2344 = vmatprep.mubr.bf16.mxu0 0
      %2345 = vmatmul.mubr.bf16.gmra.mrb[0].mxu0 %v2182
      %v2346 = vpop.f32.mrb[0].mxu0
      %v2347 = vadd.f32 0.0, %v2346
      %v2348 = vpop.f32.mrb[0].mxu0
      %v2349 = vpop.f32.mrb[0].mxu0
      %v2350 = vadd.f32 0.0, %v2349
      %v2351 = vpop.f32.mrb[0].mxu0
      %2352 = vmatprep.mubr.bf16.mxu0 0
      %2353 = vmatmul.mubr.bf16.gmra.mrb[0].mxu0 %v2183
      %v2354 = vpop.f32.mrb[0].mxu0
      %v2355 = vadd.f32 0.0, %v2354
      %v2356 = vpop.f32.mrb[0].mxu0
      %v2357 = vpop.f32.mrb[0].mxu0
      %v2358 = vadd.f32 0.0, %v2357
      %v2359 = vpop.f32.mrb[0].mxu0
      %2360 = vmatprep.mubr.bf16.mxu0 0
      %2361 = vmatmul.mubr.bf16.gmra.mrb[0].mxu0 %v2184
      %v2362 = vpop.f32.mrb[0].mxu0
      %v2363 = vadd.f32 0.0, %v2362
      %v2364 = vpop.f32.mrb[0].mxu0
      %v2365 = vpop.f32.mrb[0].mxu0
      %v2366 = vadd.f32 0.0, %v2365
      %v2367 = vpop.f32.mrb[0].mxu0
      %2368 = vmatprep.mubr.bf16.mxu0 0
      %2369 = vmatmul.mubr.bf16.gmra.mrb[0].mxu0 %v2185
      %v2370 = vpop.f32.mrb[0].mxu0
      %v2371 = vadd.f32 0.0, %v2370
      %v2372 = vpop.f32.mrb[0].mxu0
      %v2373 = vpop.f32.mrb[0].mxu0
      %v2374 = vadd.f32 0.0, %v2373
      %v2375 = vpop.f32.mrb[0].mxu0
      %2376 = vmatprep.mubr.bf16.mxu0 0
      %2377 = vmatmul.mubr.bf16.gmra.mrb[0].mxu0 %v2186
      %v2378 = vpop.f32.mrb[0].mxu0
      %v2379 = vadd.f32 0.0, %v2378
      %v2380 = vpop.f32.mrb[0].mxu0
      %v2381 = vpop.f32.mrb[0].mxu0
      %v2382 = vadd.f32 0.0, %v2381
      %v2383 = vpop.f32.mrb[0].mxu0
      %2384 = vmatprep.mubr.bf16.mxu0 0
      %2385 = vmatmul.mubr.bf16.gmra.mrb[0].mxu0 %v2187
      %v2386 = vpop.f32.mrb[0].mxu0
      %v2387 = vadd.f32 0.0, %v2386
      %v2388 = vpop.f32.mrb[0].mxu0
      %v2389 = vpop.f32.mrb[0].mxu0
      %v2390 = vadd.f32 0.0, %v2389
      %v2391 = vpop.f32.mrb[0].mxu0
      %2392 = vmatprep.mubr.bf16.mxu0 0
      %2393 = vmatmul.mubr.bf16.gmra.mrb[0].mxu0 %v2188
      %v2394 = vpop.f32.mrb[0].mxu0
      %v2395 = vadd.f32 0.0, %v2394
      %v2396 = vpop.f32.mrb[0].mxu0
      %v2397 = vpop.f32.mrb[0].mxu0
      %v2398 = vadd.f32 0.0, %v2397
      %v2399 = vpop.f32.mrb[0].mxu0
      %2400 = vmatprep.mubr.bf16.mxu0 0
      %2401 = vmatmul.mubr.bf16.gmra.mrb[0].mxu0 %v2189
      %v2402 = vpop.f32.mrb[0].mxu0
      %v2403 = vadd.f32 0.0, %v2402
      %v2404 = vpop.f32.mrb[0].mxu0
      %v2405 = vpop.f32.mrb[0].mxu0
      %v2406 = vadd.f32 0.0, %v2405
      %v2407 = vpop.f32.mrb[0].mxu0
      %2408 = vmatprep.mubr.bf16.mxu0 0
      %2409 = vmatmul.mubr.bf16.gmra.mrb[0].mxu0 %v2190
      %v2410 = vpop.f32.mrb[0].mxu0
      %v2411 = vadd.f32 0.0, %v2410
      %v2412 = vpop.f32.mrb[0].mxu0
      %v2413 = vpop.f32.mrb[0].mxu0
      %v2414 = vadd.f32 0.0, %v2413
      %v2415 = vpop.f32.mrb[0].mxu0
      %2416 = vdwg.mxu0
      %v2417 = vadd.f32 %v2143, %v2291
      %v2418 = vadd.f32 %v2144, %v2294
      %v2419 = vadd.f32 %v2145, %v2299
      %v2420 = vadd.f32 %v2146, %v2302
      %v2421 = vadd.f32 %v2147, %v2307
      %v2422 = vadd.f32 %v2148, %v2310
      %v2423 = vadd.f32 %v2149, %v2315
      %v2424 = vadd.f32 %v2150, %v2318
      %v2425 = vadd.f32 %v2151, %v2323
      %v2426 = vadd.f32 %v2152, %v2326
      %v2427 = vadd.f32 %v2153, %v2331
      %v2428 = vadd.f32 %v2154, %v2334
      %v2429 = vadd.f32 %v2155, %v2339
      %v2430 = vadd.f32 %v2156, %v2342
      %v2431 = vadd.f32 %v2157, %v2347
      %v2432 = vadd.f32 %v2158, %v2350
      %v2433 = vadd.f32 %v2159, %v2355
      %v2434 = vadd.f32 %v2160, %v2358
      %v2435 = vadd.f32 %v2161, %v2363
      %v2436 = vadd.f32 %v2162, %v2366
      %v2437 = vadd.f32 %v2163, %v2371
      %v2438 = vadd.f32 %v2164, %v2374
      %v2439 = vadd.f32 %v2165, %v2379
      %v2440 = vadd.f32 %v2166, %v2382
      %v2441 = vadd.f32 %v2167, %v2387
      %v2442 = vadd.f32 %v2168, %v2390
      %v2443 = vadd.f32 %v2169, %v2395
      %v2444 = vadd.f32 %v2170, %v2398
      %v2445 = vadd.f32 %v2171, %v2403
      %v2446 = vadd.f32 %v2172, %v2406
      %v2447 = vadd.f32 %v2173, %v2411
      %v2448 = vadd.f32 %v2174, %v2414
      %v2449 = vld [vmem:[%s1069 + $0x8] sm:$0xff]
      %v2450 = vld [vmem:[%s1069 + $0x10] sm:$0xff]
      %v2451 = vld [vmem:[%s1069 + $0x18] sm:$0xff]
      %v2452 = vld [vmem:[%s1069 + $0x20] sm:$0xff]
      %v2453 = vld [vmem:[%s1069 + $0x28] sm:$0xff]
      %v2454 = vld [vmem:[%s1069 + $0x30] sm:$0xff]
      %v2455 = vld [vmem:[%s1069 + $0x38] sm:$0xff]
      %v2456 = vld [vmem:[%s1069 + $0x40] sm:$0xff]
      %v2457 = vld [vmem:[%s1069 + $0x48] sm:$0xff]
      %v2458 = vld [vmem:[%s1069 + $0x50] sm:$0xff]
      %v2459 = vld [vmem:[%s1069 + $0x58] sm:$0xff]
      %v2460 = vld [vmem:[%s1069 + $0x60] sm:$0xff]
      %v2461 = vld [vmem:[%s1069 + $0x68] sm:$0xff]
      %v2462 = vld [vmem:[%s1069 + $0x70] sm:$0xff]
      %v2463 = vld [vmem:[%s1069 + $0x78] sm:$0xff]
      %v2464 = vld [vmem:[%s1069 + $0x80] sm:$0xff]
      %s2465 = scalar_lea.vmem %s1, 256
      %v2466 = vld [vmem:[%s2465] sm:$0xf]
      %v2467 = vld [vmem:[%s2465 + $0x4] sm:$0xf]
      %v2468 = vld [vmem:[%s2465 + $0x8] sm:$0xf]
      %v2469 = vld [vmem:[%s2465 + $0xc] sm:$0xf]
      %v2470 = vld [vmem:[%s2465 + $0x10] sm:$0xf]
      %v2471 = vld [vmem:[%s2465 + $0x14] sm:$0xf]
      %v2472 = vld [vmem:[%s2465 + $0x18] sm:$0xf]
      %v2473 = vld [vmem:[%s2465 + $0x1c] sm:$0xf]
      %v2474 = vld [vmem:[%s2465 + $0x20] sm:$0xf]
      %v2475 = vld [vmem:[%s2465 + $0x24] sm:$0xf]
      %v2476 = vld [vmem:[%s2465 + $0x28] sm:$0xf]
      %v2477 = vld [vmem:[%s2465 + $0x2c] sm:$0xf]
      %v2478 = vld [vmem:[%s2465 + $0x30] sm:$0xf]
      %v2479 = vld [vmem:[%s2465 + $0x34] sm:$0xf]
      %v2480 = vld [vmem:[%s2465 + $0x38] sm:$0xf]
      %v2481 = vld [vmem:[%s2465 + $0x3c] sm:$0xf]
      %v2498 = vunpack.c.l.b16 %v2466
      %v2499 = vunpack.c.l.b16 %v2467
      %v2500 = vunpack.c.l.b16 %v2468
      %v2501 = vunpack.c.l.b16 %v2469
      %v2502 = vunpack.c.l.b16 %v2470
      %v2503 = vunpack.c.l.b16 %v2471
      %v2504 = vunpack.c.l.b16 %v2472
      %v2505 = vunpack.c.l.b16 %v2473
      %v2506 = vunpack.c.l.b16 %v2474
      %v2507 = vunpack.c.l.b16 %v2475
      %v2508 = vunpack.c.l.b16 %v2476
      %v2509 = vunpack.c.l.b16 %v2477
      %v2510 = vunpack.c.l.b16 %v2478
      %v2511 = vunpack.c.l.b16 %v2479
      %v2512 = vunpack.c.l.b16 %v2480
      %v2513 = vunpack.c.l.b16 %v2481
      %v2514 = vpack.c.b16 %v2499, %v2498
      %v2515 = vpack.c.b16 %v2501, %v2500
      %v2516 = vpack.c.b16 %v2503, %v2502
      %v2517 = vpack.c.b16 %v2505, %v2504
      %v2518 = vpack.c.b16 %v2507, %v2506
      %v2519 = vpack.c.b16 %v2509, %v2508
      %v2520 = vpack.c.b16 %v2511, %v2510
      %v2521 = vpack.c.b16 %v2513, %v2512
      %2530 = vmatprep.subr.bf16.mxu0 0
      %2531 = vmatpush1.bf16.msra.mxu0 %v2514
      %2532 = vmatprep.subr.bf16.mxu0 0
      %2533 = vmatpush1.bf16.msra.mxu0 %v2515
      %2534 = vmatprep.subr.bf16.mxu0 0
      %2535 = vmatpush1.bf16.msra.mxu0 %v2516
      %2536 = vmatprep.subr.bf16.mxu0 0
      %2537 = vmatpush1.bf16.msra.mxu0 %v2517
      %2538 = vmatprep.subr.bf16.mxu0 0
      %2539 = vmatpush1.bf16.msra.mxu0 %v2518
      %2540 = vmatprep.subr.bf16.mxu0 0
      %2541 = vmatpush1.bf16.msra.mxu0 %v2519
      %2542 = vmatprep.subr.bf16.mxu0 0
      %2543 = vmatpush1.bf16.msra.mxu0 %v2520
      %2544 = vmatprep.subr.bf16.mxu0 0
      %2545 = vmatpush1.bf16.msra.mxu0 %v2521
      %2546 = vmatprep.subr.bf16.mxu0 0
      %2547 = vmatpush1.bf16.msra.mxu0 0
      %2548 = vmatprep.subr.bf16.mxu0 0
      %2549 = vmatpush1.bf16.msra.mxu0 0
      %2550 = vmatprep.subr.bf16.mxu0 0
      %2551 = vmatpush1.bf16.msra.mxu0 0
      %2552 = vmatprep.subr.bf16.mxu0 0
      %2553 = vmatpush1.bf16.msra.mxu0 0
      %2554 = vmatprep.subr.bf16.mxu0 0
      %2555 = vmatpush1.bf16.msra.mxu0 0
      %2556 = vmatprep.subr.bf16.mxu0 0
      %2557 = vmatpush1.bf16.msra.mxu0 0
      %2558 = vmatprep.subr.bf16.mxu0 0
      %2559 = vmatpush1.bf16.msra.mxu0 0
      %2560 = vmatprep.subr.bf16.mxu0 0
      %2561 = vmatpush1.bf16.msra.mxu0 0
      %2562 = vmatprep.mubr.bf16.mxu0 0
      %2563 = vmatmul.mubr.bf16.gmra.mrb[0].mxu0 %v2449
      %v2564 = vpop.f32.mrb[0].mxu0
      %v2565 = vadd.f32 0.0, %v2564
      %v2566 = vpop.f32.mrb[0].mxu0
      %v2567 = vpop.f32.mrb[0].mxu0
      %v2568 = vadd.f32 0.0, %v2567
      %v2569 = vpop.f32.mrb[0].mxu0
      %2570 = vmatprep.mubr.bf16.mxu0 0
      %2571 = vmatmul.mubr.bf16.gmra.mrb[0].mxu0 %v2450
      %v2572 = vpop.f32.mrb[0].mxu0
      %v2573 = vadd.f32 0.0, %v2572
      %v2574 = vpop.f32.mrb[0].mxu0
      %v2575 = vpop.f32.mrb[0].mxu0
      %v2576 = vadd.f32 0.0, %v2575
      %v2577 = vpop.f32.mrb[0].mxu0
      %2578 = vmatprep.mubr.bf16.mxu0 0
      %2579 = vmatmul.mubr.bf16.gmra.mrb[0].mxu0 %v2451
      %v2580 = vpop.f32.mrb[0].mxu0
      %v2581 = vadd.f32 0.0, %v2580
      %v2582 = vpop.f32.mrb[0].mxu0
      %v2583 = vpop.f32.mrb[0].mxu0
      %v2584 = vadd.f32 0.0, %v2583
      %v2585 = vpop.f32.mrb[0].mxu0
      %2586 = vmatprep.mubr.bf16.mxu0 0
      %2587 = vmatmul.mubr.bf16.gmra.mrb[0].mxu0 %v2452
      %v2588 = vpop.f32.mrb[0].mxu0
      %v2589 = vadd.f32 0.0, %v2588
      %v2590 = vpop.f32.mrb[0].mxu0
      %v2591 = vpop.f32.mrb[0].mxu0
      %v2592 = vadd.f32 0.0, %v2591
      %v2593 = vpop.f32.mrb[0].mxu0
      %2594 = vmatprep.mubr.bf16.mxu0 0
      %2595 = vmatmul.mubr.bf16.gmra.mrb[0].mxu0 %v2453
      %v2596 = vpop.f32.mrb[0].mxu0
      %v2597 = vadd.f32 0.0, %v2596
      %v2598 = vpop.f32.mrb[0].mxu0
      %v2599 = vpop.f32.mrb[0].mxu0
      %v2600 = vadd.f32 0.0, %v2599
      %v2601 = vpop.f32.mrb[0].mxu0
      %2602 = vmatprep.mubr.bf16.mxu0 0
      %2603 = vmatmul.mubr.bf16.gmra.mrb[0].mxu0 %v2454
      %v2604 = vpop.f32.mrb[0].mxu0
      %v2605 = vadd.f32 0.0, %v2604
      %v2606 = vpop.f32.mrb[0].mxu0
      %v2607 = vpop.f32.mrb[0].mxu0
      %v2608 = vadd.f32 0.0, %v2607
      %v2609 = vpop.f32.mrb[0].mxu0
      %2610 = vmatprep.mubr.bf16.mxu0 0
      %2611 = vmatmul.mubr.bf16.gmra.mrb[0].mxu0 %v2455
      %v2612 = vpop.f32.mrb[0].mxu0
      %v2613 = vadd.f32 0.0, %v2612
      %v2614 = vpop.f32.mrb[0].mxu0
      %v2615 = vpop.f32.mrb[0].mxu0
      %v2616 = vadd.f32 0.0, %v2615
      %v2617 = vpop.f32.mrb[0].mxu0
      %2618 = vmatprep.mubr.bf16.mxu0 0
      %2619 = vmatmul.mubr.bf16.gmra.mrb[0].mxu0 %v2456
      %v2620 = vpop.f32.mrb[0].mxu0
      %v2621 = vadd.f32 0.0, %v2620
      %v2622 = vpop.f32.mrb[0].mxu0
      %v2623 = vpop.f32.mrb[0].mxu0
      %v2624 = vadd.f32 0.0, %v2623
      %v2625 = vpop.f32.mrb[0].mxu0
      %2626 = vmatprep.mubr.bf16.mxu0 0
      %2627 = vmatmul.mubr.bf16.gmra.mrb[0].mxu0 %v2457
      %v2628 = vpop.f32.mrb[0].mxu0
      %v2629 = vadd.f32 0.0, %v2628
      %v2630 = vpop.f32.mrb[0].mxu0
      %v2631 = vpop.f32.mrb[0].mxu0
      %v2632 = vadd.f32 0.0, %v2631
      %v2633 = vpop.f32.mrb[0].mxu0
      %2634 = vmatprep.mubr.bf16.mxu0 0
      %2635 = vmatmul.mubr.bf16.gmra.mrb[0].mxu0 %v2458
      %v2636 = vpop.f32.mrb[0].mxu0
      %v2637 = vadd.f32 0.0, %v2636
      %v2638 = vpop.f32.mrb[0].mxu0
      %v2639 = vpop.f32.mrb[0].mxu0
      %v2640 = vadd.f32 0.0, %v2639
      %v2641 = vpop.f32.mrb[0].mxu0
      %2642 = vmatprep.mubr.bf16.mxu0 0
      %2643 = vmatmul.mubr.bf16.gmra.mrb[0].mxu0 %v2459
      %v2644 = vpop.f32.mrb[0].mxu0
      %v2645 = vadd.f32 0.0, %v2644
      %v2646 = vpop.f32.mrb[0].mxu0
      %v2647 = vpop.f32.mrb[0].mxu0
      %v2648 = vadd.f32 0.0, %v2647
      %v2649 = vpop.f32.mrb[0].mxu0
      %2650 = vmatprep.mubr.bf16.mxu0 0
      %2651 = vmatmul.mubr.bf16.gmra.mrb[0].mxu0 %v2460
      %v2652 = vpop.f32.mrb[0].mxu0
      %v2653 = vadd.f32 0.0, %v2652
      %v2654 = vpop.f32.mrb[0].mxu0
      %v2655 = vpop.f32.mrb[0].mxu0
      %v2656 = vadd.f32 0.0, %v2655
      %v2657 = vpop.f32.mrb[0].mxu0
      %2658 = vmatprep.mubr.bf16.mxu0 0
      %2659 = vmatmul.mubr.bf16.gmra.mrb[0].mxu0 %v2461
      %v2660 = vpop.f32.mrb[0].mxu0
      %v2661 = vadd.f32 0.0, %v2660
      %v2662 = vpop.f32.mrb[0].mxu0
      %v2663 = vpop.f32.mrb[0].mxu0
      %v2664 = vadd.f32 0.0, %v2663
      %v2665 = vpop.f32.mrb[0].mxu0
      %2666 = vmatprep.mubr.bf16.mxu0 0
      %2667 = vmatmul.mubr.bf16.gmra.mrb[0].mxu0 %v2462
      %v2668 = vpop.f32.mrb[0].mxu0
      %v2669 = vadd.f32 0.0, %v2668
      %v2670 = vpop.f32.mrb[0].mxu0
      %v2671 = vpop.f32.mrb[0].mxu0
      %v2672 = vadd.f32 0.0, %v2671
      %v2673 = vpop.f32.mrb[0].mxu0
      %2674 = vmatprep.mubr.bf16.mxu0 0
      %2675 = vmatmul.mubr.bf16.gmra.mrb[0].mxu0 %v2463
      %v2676 = vpop.f32.mrb[0].mxu0
      %v2677 = vadd.f32 0.0, %v2676
      %v2678 = vpop.f32.mrb[0].mxu0
      %v2679 = vpop.f32.mrb[0].mxu0
      %v2680 = vadd.f32 0.0, %v2679
      %v2681 = vpop.f32.mrb[0].mxu0
      %2682 = vmatprep.mubr.bf16.mxu0 0
      %2683 = vmatmul.mubr.bf16.gmra.mrb[0].mxu0 %v2464
      %v2684 = vpop.f32.mrb[0].mxu0
      %v2685 = vadd.f32 0.0, %v2684
      %v2686 = vpop.f32.mrb[0].mxu0
      %v2687 = vpop.f32.mrb[0].mxu0
      %v2688 = vadd.f32 0.0, %v2687
      %v2689 = vpop.f32.mrb[0].mxu0
      %2690 = vdwg.mxu0
      %v2691 = vadd.f32 %v2417, %v2565
      %v2692 = vadd.f32 %v2418, %v2568
      %v2693 = vadd.f32 %v2419, %v2573
      %v2694 = vadd.f32 %v2420, %v2576
      %v2695 = vadd.f32 %v2421, %v2581
      %v2696 = vadd.f32 %v2422, %v2584
      %v2697 = vadd.f32 %v2423, %v2589
      %v2698 = vadd.f32 %v2424, %v2592
      %v2699 = vadd.f32 %v2425, %v2597
      %v2700 = vadd.f32 %v2426, %v2600
      %v2701 = vadd.f32 %v2427, %v2605
      %v2702 = vadd.f32 %v2428, %v2608
      %v2703 = vadd.f32 %v2429, %v2613
      %v2704 = vadd.f32 %v2430, %v2616
      %v2705 = vadd.f32 %v2431, %v2621
      %v2706 = vadd.f32 %v2432, %v2624
      %v2707 = vadd.f32 %v2433, %v2629
      %v2708 = vadd.f32 %v2434, %v2632
      %v2709 = vadd.f32 %v2435, %v2637
      %v2710 = vadd.f32 %v2436, %v2640
      %v2711 = vadd.f32 %v2437, %v2645
      %v2712 = vadd.f32 %v2438, %v2648
      %v2713 = vadd.f32 %v2439, %v2653
      %v2714 = vadd.f32 %v2440, %v2656
      %v2715 = vadd.f32 %v2441, %v2661
      %v2716 = vadd.f32 %v2442, %v2664
      %v2717 = vadd.f32 %v2443, %v2669
      %v2718 = vadd.f32 %v2444, %v2672
      %v2719 = vadd.f32 %v2445, %v2677
      %v2720 = vadd.f32 %v2446, %v2680
      %v2721 = vadd.f32 %v2447, %v2685
      %v2722 = vadd.f32 %v2448, %v2688
      %v2723 = vld [vmem:[%s1397 + $0x8] sm:$0xff]
      %v2724 = vld [vmem:[%s1397 + $0x10] sm:$0xff]
      %v2725 = vld [vmem:[%s1397 + $0x18] sm:$0xff]
      %v2726 = vld [vmem:[%s1397 + $0x20] sm:$0xff]
      %v2727 = vld [vmem:[%s1397 + $0x28] sm:$0xff]
      %v2728 = vld [vmem:[%s1397 + $0x30] sm:$0xff]
      %v2729 = vld [vmem:[%s1397 + $0x38] sm:$0xff]
      %v2730 = vld [vmem:[%s1397 + $0x40] sm:$0xff]
      %v2731 = vld [vmem:[%s1397 + $0x48] sm:$0xff]
      %v2732 = vld [vmem:[%s1397 + $0x50] sm:$0xff]
      %v2733 = vld [vmem:[%s1397 + $0x58] sm:$0xff]
      %v2734 = vld [vmem:[%s1397 + $0x60] sm:$0xff]
      %v2735 = vld [vmem:[%s1397 + $0x68] sm:$0xff]
      %v2736 = vld [vmem:[%s1397 + $0x70] sm:$0xff]
      %v2737 = vld [vmem:[%s1397 + $0x78] sm:$0xff]
      %v2738 = vld [vmem:[%s1397 + $0x80] sm:$0xff]
      %s2739 = scalar_lea.vmem %s1, 320
      %v2740 = vld [vmem:[%s2739] sm:$0xf]
      %v2741 = vld [vmem:[%s2739 + $0x4] sm:$0xf]
      %v2742 = vld [vmem:[%s2739 + $0x8] sm:$0xf]
      %v2743 = vld [vmem:[%s2739 + $0xc] sm:$0xf]
      %v2744 = vld [vmem:[%s2739 + $0x10] sm:$0xf]
      %v2745 = vld [vmem:[%s2739 + $0x14] sm:$0xf]
      %v2746 = vld [vmem:[%s2739 + $0x18] sm:$0xf]
      %v2747 = vld [vmem:[%s2739 + $0x1c] sm:$0xf]
      %v2748 = vld [vmem:[%s2739 + $0x20] sm:$0xf]
      %v2749 = vld [vmem:[%s2739 + $0x24] sm:$0xf]
      %v2750 = vld [vmem:[%s2739 + $0x28] sm:$0xf]
      %v2751 = vld [vmem:[%s2739 + $0x2c] sm:$0xf]
      %v2752 = vld [vmem:[%s2739 + $0x30] sm:$0xf]
      %v2753 = vld [vmem:[%s2739 + $0x34] sm:$0xf]
      %v2754 = vld [vmem:[%s2739 + $0x38] sm:$0xf]
      %v2755 = vld [vmem:[%s2739 + $0x3c] sm:$0xf]
      %v2772 = vunpack.c.l.b16 %v2740
      %v2773 = vunpack.c.l.b16 %v2741
      %v2774 = vunpack.c.l.b16 %v2742
      %v2775 = vunpack.c.l.b16 %v2743
      %v2776 = vunpack.c.l.b16 %v2744
      %v2777 = vunpack.c.l.b16 %v2745
      %v2778 = vunpack.c.l.b16 %v2746
      %v2779 = vunpack.c.l.b16 %v2747
      %v2780 = vunpack.c.l.b16 %v2748
      %v2781 = vunpack.c.l.b16 %v2749
      %v2782 = vunpack.c.l.b16 %v2750
      %v2783 = vunpack.c.l.b16 %v2751
      %v2784 = vunpack.c.l.b16 %v2752
      %v2785 = vunpack.c.l.b16 %v2753
      %v2786 = vunpack.c.l.b16 %v2754
      %v2787 = vunpack.c.l.b16 %v2755
      %v2788 = vpack.c.b16 %v2773, %v2772
      %v2789 = vpack.c.b16 %v2775, %v2774
      %v2790 = vpack.c.b16 %v2777, %v2776
      %v2791 = vpack.c.b16 %v2779, %v2778
      %v2792 = vpack.c.b16 %v2781, %v2780
      %v2793 = vpack.c.b16 %v2783, %v2782
      %v2794 = vpack.c.b16 %v2785, %v2784
      %v2795 = vpack.c.b16 %v2787, %v2786
      %2804 = vmatprep.subr.bf16.mxu0 0
      %2805 = vmatpush1.bf16.msra.mxu0 %v2788
      %2806 = vmatprep.subr.bf16.mxu0 0
      %2807 = vmatpush1.bf16.msra.mxu0 %v2789
      %2808 = vmatprep.subr.bf16.mxu0 0
      %2809 = vmatpush1.bf16.msra.mxu0 %v2790
      %2810 = vmatprep.subr.bf16.mxu0 0
      %2811 = vmatpush1.bf16.msra.mxu0 %v2791
      %2812 = vmatprep.subr.bf16.mxu0 0
      %2813 = vmatpush1.bf16.msra.mxu0 %v2792
      %2814 = vmatprep.subr.bf16.mxu0 0
      %2815 = vmatpush1.bf16.msra.mxu0 %v2793
      %2816 = vmatprep.subr.bf16.mxu0 0
      %2817 = vmatpush1.bf16.msra.mxu0 %v2794
      %2818 = vmatprep.subr.bf16.mxu0 0
      %2819 = vmatpush1.bf16.msra.mxu0 %v2795
      %2820 = vmatprep.subr.bf16.mxu0 0
      %2821 = vmatpush1.bf16.msra.mxu0 0
      %2822 = vmatprep.subr.bf16.mxu0 0
      %2823 = vmatpush1.bf16.msra.mxu0 0
      %2824 = vmatprep.subr.bf16.mxu0 0
      %2825 = vmatpush1.bf16.msra.mxu0 0
      %2826 = vmatprep.subr.bf16.mxu0 0
      %2827 = vmatpush1.bf16.msra.mxu0 0
      %2828 = vmatprep.subr.bf16.mxu0 0
      %2829 = vmatpush1.bf16.msra.mxu0 0
      %2830 = vmatprep.subr.bf16.mxu0 0
      %2831 = vmatpush1.bf16.msra.mxu0 0
      %2832 = vmatprep.subr.bf16.mxu0 0
      %2833 = vmatpush1.bf16.msra.mxu0 0
      %2834 = vmatprep.subr.bf16.mxu0 0
      %2835 = vmatpush1.bf16.msra.mxu0 0
      %2836 = vmatprep.mubr.bf16.mxu0 0
      %2837 = vmatmul.mubr.bf16.gmra.mrb[0].mxu0 %v2723
      %v2838 = vpop.f32.mrb[0].mxu0
      %v2839 = vadd.f32 0.0, %v2838
      %v2840 = vpop.f32.mrb[0].mxu0
      %v2841 = vpop.f32.mrb[0].mxu0
      %v2842 = vadd.f32 0.0, %v2841
      %v2843 = vpop.f32.mrb[0].mxu0
      %2844 = vmatprep.mubr.bf16.mxu0 0
      %2845 = vmatmul.mubr.bf16.gmra.mrb[0].mxu0 %v2724
      %v2846 = vpop.f32.mrb[0].mxu0
      %v2847 = vadd.f32 0.0, %v2846
      %v2848 = vpop.f32.mrb[0].mxu0
      %v2849 = vpop.f32.mrb[0].mxu0
      %v2850 = vadd.f32 0.0, %v2849
      %v2851 = vpop.f32.mrb[0].mxu0
      %2852 = vmatprep.mubr.bf16.mxu0 0
      %2853 = vmatmul.mubr.bf16.gmra.mrb[0].mxu0 %v2725
      %v2854 = vpop.f32.mrb[0].mxu0
      %v2855 = vadd.f32 0.0, %v2854
      %v2856 = vpop.f32.mrb[0].mxu0
      %v2857 = vpop.f32.mrb[0].mxu0
      %v2858 = vadd.f32 0.0, %v2857
      %v2859 = vpop.f32.mrb[0].mxu0
      %2860 = vmatprep.mubr.bf16.mxu0 0
      %2861 = vmatmul.mubr.bf16.gmra.mrb[0].mxu0 %v2726
      %v2862 = vpop.f32.mrb[0].mxu0
      %v2863 = vadd.f32 0.0, %v2862
      %v2864 = vpop.f32.mrb[0].mxu0
      %v2865 = vpop.f32.mrb[0].mxu0
      %v2866 = vadd.f32 0.0, %v2865
      %v2867 = vpop.f32.mrb[0].mxu0
      %2868 = vmatprep.mubr.bf16.mxu0 0
      %2869 = vmatmul.mubr.bf16.gmra.mrb[0].mxu0 %v2727
      %v2870 = vpop.f32.mrb[0].mxu0
      %v2871 = vadd.f32 0.0, %v2870
      %v2872 = vpop.f32.mrb[0].mxu0
      %v2873 = vpop.f32.mrb[0].mxu0
      %v2874 = vadd.f32 0.0, %v2873
      %v2875 = vpop.f32.mrb[0].mxu0
      %2876 = vmatprep.mubr.bf16.mxu0 0
      %2877 = vmatmul.mubr.bf16.gmra.mrb[0].mxu0 %v2728
      %v2878 = vpop.f32.mrb[0].mxu0
      %v2879 = vadd.f32 0.0, %v2878
      %v2880 = vpop.f32.mrb[0].mxu0
      %v2881 = vpop.f32.mrb[0].mxu0
      %v2882 = vadd.f32 0.0, %v2881
      %v2883 = vpop.f32.mrb[0].mxu0
      %2884 = vmatprep.mubr.bf16.mxu0 0
      %2885 = vmatmul.mubr.bf16.gmra.mrb[0].mxu0 %v2729
      %v2886 = vpop.f32.mrb[0].mxu0
      %v2887 = vadd.f32 0.0, %v2886
      %v2888 = vpop.f32.mrb[0].mxu0
      %v2889 = vpop.f32.mrb[0].mxu0
      %v2890 = vadd.f32 0.0, %v2889
      %v2891 = vpop.f32.mrb[0].mxu0
      %2892 = vmatprep.mubr.bf16.mxu0 0
      %2893 = vmatmul.mubr.bf16.gmra.mrb[0].mxu0 %v2730
      %v2894 = vpop.f32.mrb[0].mxu0
      %v2895 = vadd.f32 0.0, %v2894
      %v2896 = vpop.f32.mrb[0].mxu0
      %v2897 = vpop.f32.mrb[0].mxu0
      %v2898 = vadd.f32 0.0, %v2897
      %v2899 = vpop.f32.mrb[0].mxu0
      %2900 = vmatprep.mubr.bf16.mxu0 0
      %2901 = vmatmul.mubr.bf16.gmra.mrb[0].mxu0 %v2731
      %v2902 = vpop.f32.mrb[0].mxu0
      %v2903 = vadd.f32 0.0, %v2902
      %v2904 = vpop.f32.mrb[0].mxu0
      %v2905 = vpop.f32.mrb[0].mxu0
      %v2906 = vadd.f32 0.0, %v2905
      %v2907 = vpop.f32.mrb[0].mxu0
      %2908 = vmatprep.mubr.bf16.mxu0 0
      %2909 = vmatmul.mubr.bf16.gmra.mrb[0].mxu0 %v2732
      %v2910 = vpop.f32.mrb[0].mxu0
      %v2911 = vadd.f32 0.0, %v2910
      %v2912 = vpop.f32.mrb[0].mxu0
      %v2913 = vpop.f32.mrb[0].mxu0
      %v2914 = vadd.f32 0.0, %v2913
      %v2915 = vpop.f32.mrb[0].mxu0
      %2916 = vmatprep.mubr.bf16.mxu0 0
      %2917 = vmatmul.mubr.bf16.gmra.mrb[0].mxu0 %v2733
      %v2918 = vpop.f32.mrb[0].mxu0
      %v2919 = vadd.f32 0.0, %v2918
      %v2920 = vpop.f32.mrb[0].mxu0
      %v2921 = vpop.f32.mrb[0].mxu0
      %v2922 = vadd.f32 0.0, %v2921
      %v2923 = vpop.f32.mrb[0].mxu0
      %2924 = vmatprep.mubr.bf16.mxu0 0
      %2925 = vmatmul.mubr.bf16.gmra.mrb[0].mxu0 %v2734
      %v2926 = vpop.f32.mrb[0].mxu0
      %v2927 = vadd.f32 0.0, %v2926
      %v2928 = vpop.f32.mrb[0].mxu0
      %v2929 = vpop.f32.mrb[0].mxu0
      %v2930 = vadd.f32 0.0, %v2929
      %v2931 = vpop.f32.mrb[0].mxu0
      %2932 = vmatprep.mubr.bf16.mxu0 0
      %2933 = vmatmul.mubr.bf16.gmra.mrb[0].mxu0 %v2735
      %v2934 = vpop.f32.mrb[0].mxu0
      %v2935 = vadd.f32 0.0, %v2934
      %v2936 = vpop.f32.mrb[0].mxu0
      %v2937 = vpop.f32.mrb[0].mxu0
      %v2938 = vadd.f32 0.0, %v2937
      %v2939 = vpop.f32.mrb[0].mxu0
      %2940 = vmatprep.mubr.bf16.mxu0 0
      %2941 = vmatmul.mubr.bf16.gmra.mrb[0].mxu0 %v2736
      %v2942 = vpop.f32.mrb[0].mxu0
      %v2943 = vadd.f32 0.0, %v2942
      %v2944 = vpop.f32.mrb[0].mxu0
      %v2945 = vpop.f32.mrb[0].mxu0
      %v2946 = vadd.f32 0.0, %v2945
      %v2947 = vpop.f32.mrb[0].mxu0
      %2948 = vmatprep.mubr.bf16.mxu0 0
      %2949 = vmatmul.mubr.bf16.gmra.mrb[0].mxu0 %v2737
      %v2950 = vpop.f32.mrb[0].mxu0
      %v2951 = vadd.f32 0.0, %v2950
      %v2952 = vpop.f32.mrb[0].mxu0
      %v2953 = vpop.f32.mrb[0].mxu0
      %v2954 = vadd.f32 0.0, %v2953
      %v2955 = vpop.f32.mrb[0].mxu0
      %2956 = vmatprep.mubr.bf16.mxu0 0
      %2957 = vmatmul.mubr.bf16.gmra.mrb[0].mxu0 %v2738
      %v2958 = vpop.f32.mrb[0].mxu0
      %v2959 = vadd.f32 0.0, %v2958
      %v2960 = vpop.f32.mrb[0].mxu0
      %v2961 = vpop.f32.mrb[0].mxu0
      %v2962 = vadd.f32 0.0, %v2961
      %v2963 = vpop.f32.mrb[0].mxu0
      %2964 = vdwg.mxu0
      %v2965 = vadd.f32 %v2691, %v2839
      %v2966 = vadd.f32 %v2692, %v2842
      %v2967 = vadd.f32 %v2693, %v2847
      %v2968 = vadd.f32 %v2694, %v2850
      %v2969 = vadd.f32 %v2695, %v2855
      %v2970 = vadd.f32 %v2696, %v2858
      %v2971 = vadd.f32 %v2697, %v2863
      %v2972 = vadd.f32 %v2698, %v2866
      %v2973 = vadd.f32 %v2699, %v2871
      %v2974 = vadd.f32 %v2700, %v2874
      %v2975 = vadd.f32 %v2701, %v2879
      %v2976 = vadd.f32 %v2702, %v2882
      %v2977 = vadd.f32 %v2703, %v2887
      %v2978 = vadd.f32 %v2704, %v2890
      %v2979 = vadd.f32 %v2705, %v2895
      %v2980 = vadd.f32 %v2706, %v2898
      %v2981 = vadd.f32 %v2707, %v2903
      %v2982 = vadd.f32 %v2708, %v2906
      %v2983 = vadd.f32 %v2709, %v2911
      %v2984 = vadd.f32 %v2710, %v2914
      %v2985 = vadd.f32 %v2711, %v2919
      %v2986 = vadd.f32 %v2712, %v2922
      %v2987 = vadd.f32 %v2713, %v2927
      %v2988 = vadd.f32 %v2714, %v2930
      %v2989 = vadd.f32 %v2715, %v2935
      %v2990 = vadd.f32 %v2716, %v2938
      %v2991 = vadd.f32 %v2717, %v2943
      %v2992 = vadd.f32 %v2718, %v2946
      %v2993 = vadd.f32 %v2719, %v2951
      %v2994 = vadd.f32 %v2720, %v2954
      %v2995 = vadd.f32 %v2721, %v2959
      %v2996 = vadd.f32 %v2722, %v2962
      %v2997 = vld [vmem:[#allocation2 + $0x10] sm:$0xff]
      %v2998 = vld [vmem:[#allocation2 + $0x18] sm:$0xff]
      %v2999 = vld [vmem:[#allocation2 + $0x20] sm:$0xff]
      %v3000 = vld [vmem:[#allocation2 + $0x28] sm:$0xff]
      %v3001 = vld [vmem:[#allocation2 + $0x30] sm:$0xff]
      %v3002 = vld [vmem:[#allocation2 + $0x38] sm:$0xff]
      %v3003 = vld [vmem:[#allocation2 + $0x40] sm:$0xff]
      %v3004 = vld [vmem:[#allocation2 + $0x48] sm:$0xff]
      %v3005 = vld [vmem:[#allocation2 + $0x50] sm:$0xff]
      %v3006 = vld [vmem:[#allocation2 + $0x58] sm:$0xff]
      %v3007 = vld [vmem:[#allocation2 + $0x60] sm:$0xff]
      %v3008 = vld [vmem:[#allocation2 + $0x68] sm:$0xff]
      %v3009 = vld [vmem:[#allocation2 + $0x70] sm:$0xff]
      %v3010 = vld [vmem:[#allocation2 + $0x78] sm:$0xff]
      %v3011 = vld [vmem:[#allocation2 + $0x80] sm:$0xff]
      %v3012 = vld [vmem:[#allocation2 + $0x88] sm:$0xff]
      %s3013 = scalar_lea.vmem %s1, 384
      %v3014 = vld [vmem:[%s3013] sm:$0xf]
      %v3015 = vld [vmem:[%s3013 + $0x4] sm:$0xf]
      %v3016 = vld [vmem:[%s3013 + $0x8] sm:$0xf]
      %v3017 = vld [vmem:[%s3013 + $0xc] sm:$0xf]
      %v3018 = vld [vmem:[%s3013 + $0x10] sm:$0xf]
      %v3019 = vld [vmem:[%s3013 + $0x14] sm:$0xf]
      %v3020 = vld [vmem:[%s3013 + $0x18] sm:$0xf]
      %v3021 = vld [vmem:[%s3013 + $0x1c] sm:$0xf]
      %v3022 = vld [vmem:[%s3013 + $0x20] sm:$0xf]
      %v3023 = vld [vmem:[%s3013 + $0x24] sm:$0xf]
      %v3024 = vld [vmem:[%s3013 + $0x28] sm:$0xf]
      %v3025 = vld [vmem:[%s3013 + $0x2c] sm:$0xf]
      %v3026 = vld [vmem:[%s3013 + $0x30] sm:$0xf]
      %v3027 = vld [vmem:[%s3013 + $0x34] sm:$0xf]
      %v3028 = vld [vmem:[%s3013 + $0x38] sm:$0xf]
      %v3029 = vld [vmem:[%s3013 + $0x3c] sm:$0xf]
      %v3046 = vunpack.c.l.b16 %v3014
      %v3047 = vunpack.c.l.b16 %v3015
      %v3048 = vunpack.c.l.b16 %v3016
      %v3049 = vunpack.c.l.b16 %v3017
      %v3050 = vunpack.c.l.b16 %v3018
      %v3051 = vunpack.c.l.b16 %v3019
      %v3052 = vunpack.c.l.b16 %v3020
      %v3053 = vunpack.c.l.b16 %v3021
      %v3054 = vunpack.c.l.b16 %v3022
      %v3055 = vunpack.c.l.b16 %v3023
      %v3056 = vunpack.c.l.b16 %v3024
      %v3057 = vunpack.c.l.b16 %v3025
      %v3058 = vunpack.c.l.b16 %v3026
      %v3059 = vunpack.c.l.b16 %v3027
      %v3060 = vunpack.c.l.b16 %v3028
      %v3061 = vunpack.c.l.b16 %v3029
      %v3062 = vpack.c.b16 %v3047, %v3046
      %v3063 = vpack.c.b16 %v3049, %v3048
      %v3064 = vpack.c.b16 %v3051, %v3050
      %v3065 = vpack.c.b16 %v3053, %v3052
      %v3066 = vpack.c.b16 %v3055, %v3054
      %v3067 = vpack.c.b16 %v3057, %v3056
      %v3068 = vpack.c.b16 %v3059, %v3058
      %v3069 = vpack.c.b16 %v3061, %v3060
      %3078 = vmatprep.subr.bf16.mxu0 0
      %3079 = vmatpush1.bf16.msra.mxu0 %v3062
      %3080 = vmatprep.subr.bf16.mxu0 0
      %3081 = vmatpush1.bf16.msra.mxu0 %v3063
      %3082 = vmatprep.subr.bf16.mxu0 0
      %3083 = vmatpush1.bf16.msra.mxu0 %v3064
      %3084 = vmatprep.subr.bf16.mxu0 0
      %3085 = vmatpush1.bf16.msra.mxu0 %v3065
      %3086 = vmatprep.subr.bf16.mxu0 0
      %3087 = vmatpush1.bf16.msra.mxu0 %v3066
      %3088 = vmatprep.subr.bf16.mxu0 0
      %3089 = vmatpush1.bf16.msra.mxu0 %v3067
      %3090 = vmatprep.subr.bf16.mxu0 0
      %3091 = vmatpush1.bf16.msra.mxu0 %v3068
      %3092 = vmatprep.subr.bf16.mxu0 0
      %3093 = vmatpush1.bf16.msra.mxu0 %v3069
      %3094 = vmatprep.subr.bf16.mxu0 0
      %3095 = vmatpush1.bf16.msra.mxu0 0
      %3096 = vmatprep.subr.bf16.mxu0 0
      %3097 = vmatpush1.bf16.msra.mxu0 0
      %3098 = vmatprep.subr.bf16.mxu0 0
      %3099 = vmatpush1.bf16.msra.mxu0 0
      %3100 = vmatprep.subr.bf16.mxu0 0
      %3101 = vmatpush1.bf16.msra.mxu0 0
      %3102 = vmatprep.subr.bf16.mxu0 0
      %3103 = vmatpush1.bf16.msra.mxu0 0
      %3104 = vmatprep.subr.bf16.mxu0 0
      %3105 = vmatpush1.bf16.msra.mxu0 0
      %3106 = vmatprep.subr.bf16.mxu0 0
      %3107 = vmatpush1.bf16.msra.mxu0 0
      %3108 = vmatprep.subr.bf16.mxu0 0
      %3109 = vmatpush1.bf16.msra.mxu0 0
      %3110 = vmatprep.mubr.bf16.mxu0 0
      %3111 = vmatmul.mubr.bf16.gmra.mrb[0].mxu0 %v2997
      %v3112 = vpop.f32.mrb[0].mxu0
      %v3113 = vadd.f32 0.0, %v3112
      %v3114 = vpop.f32.mrb[0].mxu0
      %v3115 = vpop.f32.mrb[0].mxu0
      %v3116 = vadd.f32 0.0, %v3115
      %v3117 = vpop.f32.mrb[0].mxu0
      %3118 = vmatprep.mubr.bf16.mxu0 0
      %3119 = vmatmul.mubr.bf16.gmra.mrb[0].mxu0 %v2998
      %v3120 = vpop.f32.mrb[0].mxu0
      %v3121 = vadd.f32 0.0, %v3120
      %v3122 = vpop.f32.mrb[0].mxu0
      %v3123 = vpop.f32.mrb[0].mxu0
      %v3124 = vadd.f32 0.0, %v3123
      %v3125 = vpop.f32.mrb[0].mxu0
      %3126 = vmatprep.mubr.bf16.mxu0 0
      %3127 = vmatmul.mubr.bf16.gmra.mrb[0].mxu0 %v2999
      %v3128 = vpop.f32.mrb[0].mxu0
      %v3129 = vadd.f32 0.0, %v3128
      %v3130 = vpop.f32.mrb[0].mxu0
      %v3131 = vpop.f32.mrb[0].mxu0
      %v3132 = vadd.f32 0.0, %v3131
      %v3133 = vpop.f32.mrb[0].mxu0
      %3134 = vmatprep.mubr.bf16.mxu0 0
      %3135 = vmatmul.mubr.bf16.gmra.mrb[0].mxu0 %v3000
      %v3136 = vpop.f32.mrb[0].mxu0
      %v3137 = vadd.f32 0.0, %v3136
      %v3138 = vpop.f32.mrb[0].mxu0
      %v3139 = vpop.f32.mrb[0].mxu0
      %v3140 = vadd.f32 0.0, %v3139
      %v3141 = vpop.f32.mrb[0].mxu0
      %3142 = vmatprep.mubr.bf16.mxu0 0
      %3143 = vmatmul.mubr.bf16.gmra.mrb[0].mxu0 %v3001
      %v3144 = vpop.f32.mrb[0].mxu0
      %v3145 = vadd.f32 0.0, %v3144
      %v3146 = vpop.f32.mrb[0].mxu0
      %v3147 = vpop.f32.mrb[0].mxu0
      %v3148 = vadd.f32 0.0, %v3147
      %v3149 = vpop.f32.mrb[0].mxu0
      %3150 = vmatprep.mubr.bf16.mxu0 0
      %3151 = vmatmul.mubr.bf16.gmra.mrb[0].mxu0 %v3002
      %v3152 = vpop.f32.mrb[0].mxu0
      %v3153 = vadd.f32 0.0, %v3152
      %v3154 = vpop.f32.mrb[0].mxu0
      %v3155 = vpop.f32.mrb[0].mxu0
      %v3156 = vadd.f32 0.0, %v3155
      %v3157 = vpop.f32.mrb[0].mxu0
      %3158 = vmatprep.mubr.bf16.mxu0 0
      %3159 = vmatmul.mubr.bf16.gmra.mrb[0].mxu0 %v3003
      %v3160 = vpop.f32.mrb[0].mxu0
      %v3161 = vadd.f32 0.0, %v3160
      %v3162 = vpop.f32.mrb[0].mxu0
      %v3163 = vpop.f32.mrb[0].mxu0
      %v3164 = vadd.f32 0.0, %v3163
      %v3165 = vpop.f32.mrb[0].mxu0
      %3166 = vmatprep.mubr.bf16.mxu0 0
      %3167 = vmatmul.mubr.bf16.gmra.mrb[0].mxu0 %v3004
      %v3168 = vpop.f32.mrb[0].mxu0
      %v3169 = vadd.f32 0.0, %v3168
      %v3170 = vpop.f32.mrb[0].mxu0
      %v3171 = vpop.f32.mrb[0].mxu0
      %v3172 = vadd.f32 0.0, %v3171
      %v3173 = vpop.f32.mrb[0].mxu0
      %3174 = vmatprep.mubr.bf16.mxu0 0
      %3175 = vmatmul.mubr.bf16.gmra.mrb[0].mxu0 %v3005
      %v3176 = vpop.f32.mrb[0].mxu0
      %v3177 = vadd.f32 0.0, %v3176
      %v3178 = vpop.f32.mrb[0].mxu0
      %v3179 = vpop.f32.mrb[0].mxu0
      %v3180 = vadd.f32 0.0, %v3179
      %v3181 = vpop.f32.mrb[0].mxu0
      %3182 = vmatprep.mubr.bf16.mxu0 0
      %3183 = vmatmul.mubr.bf16.gmra.mrb[0].mxu0 %v3006
      %v3184 = vpop.f32.mrb[0].mxu0
      %v3185 = vadd.f32 0.0, %v3184
      %v3186 = vpop.f32.mrb[0].mxu0
      %v3187 = vpop.f32.mrb[0].mxu0
      %v3188 = vadd.f32 0.0, %v3187
      %v3189 = vpop.f32.mrb[0].mxu0
      %3190 = vmatprep.mubr.bf16.mxu0 0
      %3191 = vmatmul.mubr.bf16.gmra.mrb[0].mxu0 %v3007
      %v3192 = vpop.f32.mrb[0].mxu0
      %v3193 = vadd.f32 0.0, %v3192
      %v3194 = vpop.f32.mrb[0].mxu0
      %v3195 = vpop.f32.mrb[0].mxu0
      %v3196 = vadd.f32 0.0, %v3195
      %v3197 = vpop.f32.mrb[0].mxu0
      %3198 = vmatprep.mubr.bf16.mxu0 0
      %3199 = vmatmul.mubr.bf16.gmra.mrb[0].mxu0 %v3008
      %v3200 = vpop.f32.mrb[0].mxu0
      %v3201 = vadd.f32 0.0, %v3200
      %v3202 = vpop.f32.mrb[0].mxu0
      %v3203 = vpop.f32.mrb[0].mxu0
      %v3204 = vadd.f32 0.0, %v3203
      %v3205 = vpop.f32.mrb[0].mxu0
      %3206 = vmatprep.mubr.bf16.mxu0 0
      %3207 = vmatmul.mubr.bf16.gmra.mrb[0].mxu0 %v3009
      %v3208 = vpop.f32.mrb[0].mxu0
      %v3209 = vadd.f32 0.0, %v3208
      %v3210 = vpop.f32.mrb[0].mxu0
      %v3211 = vpop.f32.mrb[0].mxu0
      %v3212 = vadd.f32 0.0, %v3211
      %v3213 = vpop.f32.mrb[0].mxu0
      %3214 = vmatprep.mubr.bf16.mxu0 0
      %3215 = vmatmul.mubr.bf16.gmra.mrb[0].mxu0 %v3010
      %v3216 = vpop.f32.mrb[0].mxu0
      %v3217 = vadd.f32 0.0, %v3216
      %v3218 = vpop.f32.mrb[0].mxu0
      %v3219 = vpop.f32.mrb[0].mxu0
      %v3220 = vadd.f32 0.0, %v3219
      %v3221 = vpop.f32.mrb[0].mxu0
      %3222 = vmatprep.mubr.bf16.mxu0 0
      %3223 = vmatmul.mubr.bf16.gmra.mrb[0].mxu0 %v3011
      %v3224 = vpop.f32.mrb[0].mxu0
      %v3225 = vadd.f32 0.0, %v3224
      %v3226 = vpop.f32.mrb[0].mxu0
      %v3227 = vpop.f32.mrb[0].mxu0
      %v3228 = vadd.f32 0.0, %v3227
      %v3229 = vpop.f32.mrb[0].mxu0
      %3230 = vmatprep.mubr.bf16.mxu0 0
      %3231 = vmatmul.mubr.bf16.gmra.mrb[0].mxu0 %v3012
      %v3232 = vpop.f32.mrb[0].mxu0
      %v3233 = vadd.f32 0.0, %v3232
      %v3234 = vpop.f32.mrb[0].mxu0
      %v3235 = vpop.f32.mrb[0].mxu0
      %v3236 = vadd.f32 0.0, %v3235
      %v3237 = vpop.f32.mrb[0].mxu0
      %3238 = vdwg.mxu0
      %v3239 = vadd.f32 %v2965, %v3113
      %v3240 = vadd.f32 %v2966, %v3116
      %v3241 = vadd.f32 %v2967, %v3121
      %v3242 = vadd.f32 %v2968, %v3124
      %v3243 = vadd.f32 %v2969, %v3129
      %v3244 = vadd.f32 %v2970, %v3132
      %v3245 = vadd.f32 %v2971, %v3137
      %v3246 = vadd.f32 %v2972, %v3140
      %v3247 = vadd.f32 %v2973, %v3145
      %v3248 = vadd.f32 %v2974, %v3148
      %v3249 = vadd.f32 %v2975, %v3153
      %v3250 = vadd.f32 %v2976, %v3156
      %v3251 = vadd.f32 %v2977, %v3161
      %v3252 = vadd.f32 %v2978, %v3164
      %v3253 = vadd.f32 %v2979, %v3169
      %v3254 = vadd.f32 %v2980, %v3172
      %v3255 = vadd.f32 %v2981, %v3177
      %v3256 = vadd.f32 %v2982, %v3180
      %v3257 = vadd.f32 %v2983, %v3185
      %v3258 = vadd.f32 %v2984, %v3188
      %v3259 = vadd.f32 %v2985, %v3193
      %v3260 = vadd.f32 %v2986, %v3196
      %v3261 = vadd.f32 %v2987, %v3201
      %v3262 = vadd.f32 %v2988, %v3204
      %v3263 = vadd.f32 %v2989, %v3209
      %v3264 = vadd.f32 %v2990, %v3212
      %v3265 = vadd.f32 %v2991, %v3217
      %v3266 = vadd.f32 %v2992, %v3220
      %v3267 = vadd.f32 %v2993, %v3225
      %v3268 = vadd.f32 %v2994, %v3228
      %v3269 = vadd.f32 %v2995, %v3233
      %v3270 = vadd.f32 %v2996, %v3236
      %v3271 = vld [vmem:[%s1069 + $0x10] sm:$0xff]
      %v3272 = vld [vmem:[%s1069 + $0x18] sm:$0xff]
      %v3273 = vld [vmem:[%s1069 + $0x20] sm:$0xff]
      %v3274 = vld [vmem:[%s1069 + $0x28] sm:$0xff]
      %v3275 = vld [vmem:[%s1069 + $0x30] sm:$0xff]
      %v3276 = vld [vmem:[%s1069 + $0x38] sm:$0xff]
      %v3277 = vld [vmem:[%s1069 + $0x40] sm:$0xff]
      %v3278 = vld [vmem:[%s1069 + $0x48] sm:$0xff]
      %v3279 = vld [vmem:[%s1069 + $0x50] sm:$0xff]
      %v3280 = vld [vmem:[%s1069 + $0x58] sm:$0xff]
      %v3281 = vld [vmem:[%s1069 + $0x60] sm:$0xff]
      %v3282 = vld [vmem:[%s1069 + $0x68] sm:$0xff]
      %v3283 = vld [vmem:[%s1069 + $0x70] sm:$0xff]
      %v3284 = vld [vmem:[%s1069 + $0x78] sm:$0xff]
      %v3285 = vld [vmem:[%s1069 + $0x80] sm:$0xff]
      %v3286 = vld [vmem:[%s1069 + $0x88] sm:$0xff]
      %s3287 = scalar_lea.vmem %s1, 448
      %v3288 = vld [vmem:[%s3287] sm:$0xf]
      %v3289 = vld [vmem:[%s3287 + $0x4] sm:$0xf]
      %v3290 = vld [vmem:[%s3287 + $0x8] sm:$0xf]
      %v3291 = vld [vmem:[%s3287 + $0xc] sm:$0xf]
      %v3292 = vld [vmem:[%s3287 + $0x10] sm:$0xf]
      %v3293 = vld [vmem:[%s3287 + $0x14] sm:$0xf]
      %v3294 = vld [vmem:[%s3287 + $0x18] sm:$0xf]
      %v3295 = vld [vmem:[%s3287 + $0x1c] sm:$0xf]
      %v3296 = vld [vmem:[%s3287 + $0x20] sm:$0xf]
      %v3297 = vld [vmem:[%s3287 + $0x24] sm:$0xf]
      %v3298 = vld [vmem:[%s3287 + $0x28] sm:$0xf]
      %v3299 = vld [vmem:[%s3287 + $0x2c] sm:$0xf]
      %v3300 = vld [vmem:[%s3287 + $0x30] sm:$0xf]
      %v3301 = vld [vmem:[%s3287 + $0x34] sm:$0xf]
      %v3302 = vld [vmem:[%s3287 + $0x38] sm:$0xf]
      %v3303 = vld [vmem:[%s3287 + $0x3c] sm:$0xf]
      %v3320 = vunpack.c.l.b16 %v3288
      %v3321 = vunpack.c.l.b16 %v3289
      %v3322 = vunpack.c.l.b16 %v3290
      %v3323 = vunpack.c.l.b16 %v3291
      %v3324 = vunpack.c.l.b16 %v3292
      %v3325 = vunpack.c.l.b16 %v3293
      %v3326 = vunpack.c.l.b16 %v3294
      %v3327 = vunpack.c.l.b16 %v3295
      %v3328 = vunpack.c.l.b16 %v3296
      %v3329 = vunpack.c.l.b16 %v3297
      %v3330 = vunpack.c.l.b16 %v3298
      %v3331 = vunpack.c.l.b16 %v3299
      %v3332 = vunpack.c.l.b16 %v3300
      %v3333 = vunpack.c.l.b16 %v3301
      %v3334 = vunpack.c.l.b16 %v3302
      %v3335 = vunpack.c.l.b16 %v3303
      %v3336 = vpack.c.b16 %v3321, %v3320
      %v3337 = vpack.c.b16 %v3323, %v3322
      %v3338 = vpack.c.b16 %v3325, %v3324
      %v3339 = vpack.c.b16 %v3327, %v3326
      %v3340 = vpack.c.b16 %v3329, %v3328
      %v3341 = vpack.c.b16 %v3331, %v3330
      %v3342 = vpack.c.b16 %v3333, %v3332
      %v3343 = vpack.c.b16 %v3335, %v3334
      %3352 = vmatprep.subr.bf16.mxu0 0
      %3353 = vmatpush1.bf16.msra.mxu0 %v3336
      %3354 = vmatprep.subr.bf16.mxu0 0
      %3355 = vmatpush1.bf16.msra.mxu0 %v3337
      %3356 = vmatprep.subr.bf16.mxu0 0
      %3357 = vmatpush1.bf16.msra.mxu0 %v3338
      %3358 = vmatprep.subr.bf16.mxu0 0
      %3359 = vmatpush1.bf16.msra.mxu0 %v3339
      %3360 = vmatprep.subr.bf16.mxu0 0
      %3361 = vmatpush1.bf16.msra.mxu0 %v3340
      %3362 = vmatprep.subr.bf16.mxu0 0
      %3363 = vmatpush1.bf16.msra.mxu0 %v3341
      %3364 = vmatprep.subr.bf16.mxu0 0
      %3365 = vmatpush1.bf16.msra.mxu0 %v3342
      %3366 = vmatprep.subr.bf16.mxu0 0
      %3367 = vmatpush1.bf16.msra.mxu0 %v3343
      %3368 = vmatprep.subr.bf16.mxu0 0
      %3369 = vmatpush1.bf16.msra.mxu0 0
      %3370 = vmatprep.subr.bf16.mxu0 0
      %3371 = vmatpush1.bf16.msra.mxu0 0
      %3372 = vmatprep.subr.bf16.mxu0 0
      %3373 = vmatpush1.bf16.msra.mxu0 0
      %3374 = vmatprep.subr.bf16.mxu0 0
      %3375 = vmatpush1.bf16.msra.mxu0 0
      %3376 = vmatprep.subr.bf16.mxu0 0
      %3377 = vmatpush1.bf16.msra.mxu0 0
      %3378 = vmatprep.subr.bf16.mxu0 0
      %3379 = vmatpush1.bf16.msra.mxu0 0
      %3380 = vmatprep.subr.bf16.mxu0 0
      %3381 = vmatpush1.bf16.msra.mxu0 0
      %3382 = vmatprep.subr.bf16.mxu0 0
      %3383 = vmatpush1.bf16.msra.mxu0 0
      %3384 = vmatprep.mubr.bf16.mxu0 0
      %3385 = vmatmul.mubr.bf16.gmra.mrb[0].mxu0 %v3271
      %v3386 = vpop.f32.mrb[0].mxu0
      %v3387 = vadd.f32 0.0, %v3386
      %v3388 = vpop.f32.mrb[0].mxu0
      %v3389 = vpop.f32.mrb[0].mxu0
      %v3390 = vadd.f32 0.0, %v3389
      %v3391 = vpop.f32.mrb[0].mxu0
      %3392 = vmatprep.mubr.bf16.mxu0 0
      %3393 = vmatmul.mubr.bf16.gmra.mrb[0].mxu0 %v3272
      %v3394 = vpop.f32.mrb[0].mxu0
      %v3395 = vadd.f32 0.0, %v3394
      %v3396 = vpop.f32.mrb[0].mxu0
      %v3397 = vpop.f32.mrb[0].mxu0
      %v3398 = vadd.f32 0.0, %v3397
      %v3399 = vpop.f32.mrb[0].mxu0
      %3400 = vmatprep.mubr.bf16.mxu0 0
      %3401 = vmatmul.mubr.bf16.gmra.mrb[0].mxu0 %v3273
      %v3402 = vpop.f32.mrb[0].mxu0
      %v3403 = vadd.f32 0.0, %v3402
      %v3404 = vpop.f32.mrb[0].mxu0
      %v3405 = vpop.f32.mrb[0].mxu0
      %v3406 = vadd.f32 0.0, %v3405
      %v3407 = vpop.f32.mrb[0].mxu0
      %3408 = vmatprep.mubr.bf16.mxu0 0
      %3409 = vmatmul.mubr.bf16.gmra.mrb[0].mxu0 %v3274
      %v3410 = vpop.f32.mrb[0].mxu0
      %v3411 = vadd.f32 0.0, %v3410
      %v3412 = vpop.f32.mrb[0].mxu0
      %v3413 = vpop.f32.mrb[0].mxu0
      %v3414 = vadd.f32 0.0, %v3413
      %v3415 = vpop.f32.mrb[0].mxu0
      %3416 = vmatprep.mubr.bf16.mxu0 0
      %3417 = vmatmul.mubr.bf16.gmra.mrb[0].mxu0 %v3275
      %v3418 = vpop.f32.mrb[0].mxu0
      %v3419 = vadd.f32 0.0, %v3418
      %v3420 = vpop.f32.mrb[0].mxu0
      %v3421 = vpop.f32.mrb[0].mxu0
      %v3422 = vadd.f32 0.0, %v3421
      %v3423 = vpop.f32.mrb[0].mxu0
      %3424 = vmatprep.mubr.bf16.mxu0 0
      %3425 = vmatmul.mubr.bf16.gmra.mrb[0].mxu0 %v3276
      %v3426 = vpop.f32.mrb[0].mxu0
      %v3427 = vadd.f32 0.0, %v3426
      %v3428 = vpop.f32.mrb[0].mxu0
      %v3429 = vpop.f32.mrb[0].mxu0
      %v3430 = vadd.f32 0.0, %v3429
      %v3431 = vpop.f32.mrb[0].mxu0
      %3432 = vmatprep.mubr.bf16.mxu0 0
      %3433 = vmatmul.mubr.bf16.gmra.mrb[0].mxu0 %v3277
      %v3434 = vpop.f32.mrb[0].mxu0
      %v3435 = vadd.f32 0.0, %v3434
      %v3436 = vpop.f32.mrb[0].mxu0
      %v3437 = vpop.f32.mrb[0].mxu0
      %v3438 = vadd.f32 0.0, %v3437
      %v3439 = vpop.f32.mrb[0].mxu0
      %3440 = vmatprep.mubr.bf16.mxu0 0
      %3441 = vmatmul.mubr.bf16.gmra.mrb[0].mxu0 %v3278
      %v3442 = vpop.f32.mrb[0].mxu0
      %v3443 = vadd.f32 0.0, %v3442
      %v3444 = vpop.f32.mrb[0].mxu0
      %v3445 = vpop.f32.mrb[0].mxu0
      %v3446 = vadd.f32 0.0, %v3445
      %v3447 = vpop.f32.mrb[0].mxu0
      %3448 = vmatprep.mubr.bf16.mxu0 0
      %3449 = vmatmul.mubr.bf16.gmra.mrb[0].mxu0 %v3279
      %v3450 = vpop.f32.mrb[0].mxu0
      %v3451 = vadd.f32 0.0, %v3450
      %v3452 = vpop.f32.mrb[0].mxu0
      %v3453 = vpop.f32.mrb[0].mxu0
      %v3454 = vadd.f32 0.0, %v3453
      %v3455 = vpop.f32.mrb[0].mxu0
      %3456 = vmatprep.mubr.bf16.mxu0 0
      %3457 = vmatmul.mubr.bf16.gmra.mrb[0].mxu0 %v3280
      %v3458 = vpop.f32.mrb[0].mxu0
      %v3459 = vadd.f32 0.0, %v3458
      %v3460 = vpop.f32.mrb[0].mxu0
      %v3461 = vpop.f32.mrb[0].mxu0
      %v3462 = vadd.f32 0.0, %v3461
      %v3463 = vpop.f32.mrb[0].mxu0
      %3464 = vmatprep.mubr.bf16.mxu0 0
      %3465 = vmatmul.mubr.bf16.gmra.mrb[0].mxu0 %v3281
      %v3466 = vpop.f32.mrb[0].mxu0
      %v3467 = vadd.f32 0.0, %v3466
      %v3468 = vpop.f32.mrb[0].mxu0
      %v3469 = vpop.f32.mrb[0].mxu0
      %v3470 = vadd.f32 0.0, %v3469
      %v3471 = vpop.f32.mrb[0].mxu0
      %3472 = vmatprep.mubr.bf16.mxu0 0
      %3473 = vmatmul.mubr.bf16.gmra.mrb[0].mxu0 %v3282
      %v3474 = vpop.f32.mrb[0].mxu0
      %v3475 = vadd.f32 0.0, %v3474
      %v3476 = vpop.f32.mrb[0].mxu0
      %v3477 = vpop.f32.mrb[0].mxu0
      %v3478 = vadd.f32 0.0, %v3477
      %v3479 = vpop.f32.mrb[0].mxu0
      %3480 = vmatprep.mubr.bf16.mxu0 0
      %3481 = vmatmul.mubr.bf16.gmra.mrb[0].mxu0 %v3283
      %v3482 = vpop.f32.mrb[0].mxu0
      %v3483 = vadd.f32 0.0, %v3482
      %v3484 = vpop.f32.mrb[0].mxu0
      %v3485 = vpop.f32.mrb[0].mxu0
      %v3486 = vadd.f32 0.0, %v3485
      %v3487 = vpop.f32.mrb[0].mxu0
      %3488 = vmatprep.mubr.bf16.mxu0 0
      %3489 = vmatmul.mubr.bf16.gmra.mrb[0].mxu0 %v3284
      %v3490 = vpop.f32.mrb[0].mxu0
      %v3491 = vadd.f32 0.0, %v3490
      %v3492 = vpop.f32.mrb[0].mxu0
      %v3493 = vpop.f32.mrb[0].mxu0
      %v3494 = vadd.f32 0.0, %v3493
      %v3495 = vpop.f32.mrb[0].mxu0
      %3496 = vmatprep.mubr.bf16.mxu0 0
      %3497 = vmatmul.mubr.bf16.gmra.mrb[0].mxu0 %v3285
      %v3498 = vpop.f32.mrb[0].mxu0
      %v3499 = vadd.f32 0.0, %v3498
      %v3500 = vpop.f32.mrb[0].mxu0
      %v3501 = vpop.f32.mrb[0].mxu0
      %v3502 = vadd.f32 0.0, %v3501
      %v3503 = vpop.f32.mrb[0].mxu0
      %3504 = vmatprep.mubr.bf16.mxu0 0
      %3505 = vmatmul.mubr.bf16.gmra.mrb[0].mxu0 %v3286
      %v3506 = vpop.f32.mrb[0].mxu0
      %v3507 = vadd.f32 0.0, %v3506
      %v3508 = vpop.f32.mrb[0].mxu0
      %v3509 = vpop.f32.mrb[0].mxu0
      %v3510 = vadd.f32 0.0, %v3509
      %v3511 = vpop.f32.mrb[0].mxu0
      %3512 = vdwg.mxu0
      %v3513 = vadd.f32 %v3239, %v3387
      %v3514 = vadd.f32 %v3240, %v3390
      %v3515 = vadd.f32 %v3241, %v3395
      %v3516 = vadd.f32 %v3242, %v3398
      %v3517 = vadd.f32 %v3243, %v3403
      %v3518 = vadd.f32 %v3244, %v3406
      %v3519 = vadd.f32 %v3245, %v3411
      %v3520 = vadd.f32 %v3246, %v3414
      %v3521 = vadd.f32 %v3247, %v3419
      %v3522 = vadd.f32 %v3248, %v3422
      %v3523 = vadd.f32 %v3249, %v3427
      %v3524 = vadd.f32 %v3250, %v3430
      %v3525 = vadd.f32 %v3251, %v3435
      %v3526 = vadd.f32 %v3252, %v3438
      %v3527 = vadd.f32 %v3253, %v3443
      %v3528 = vadd.f32 %v3254, %v3446
      %v3529 = vadd.f32 %v3255, %v3451
      %v3530 = vadd.f32 %v3256, %v3454
      %v3531 = vadd.f32 %v3257, %v3459
      %v3532 = vadd.f32 %v3258, %v3462
      %v3533 = vadd.f32 %v3259, %v3467
      %v3534 = vadd.f32 %v3260, %v3470
      %v3535 = vadd.f32 %v3261, %v3475
      %v3536 = vadd.f32 %v3262, %v3478
      %v3537 = vadd.f32 %v3263, %v3483
      %v3538 = vadd.f32 %v3264, %v3486
      %v3539 = vadd.f32 %v3265, %v3491
      %v3540 = vadd.f32 %v3266, %v3494
      %v3541 = vadd.f32 %v3267, %v3499
      %v3542 = vadd.f32 %v3268, %v3502
      %v3543 = vadd.f32 %v3269, %v3507
      %v3544 = vadd.f32 %v3270, %v3510
      %v3545 = vld [vmem:[%s1397 + $0x10] sm:$0xff]
      %v3546 = vld [vmem:[%s1397 + $0x18] sm:$0xff]
      %v3547 = vld [vmem:[%s1397 + $0x20] sm:$0xff]
      %v3548 = vld [vmem:[%s1397 + $0x28] sm:$0xff]
      %v3549 = vld [vmem:[%s1397 + $0x30] sm:$0xff]
      %v3550 = vld [vmem:[%s1397 + $0x38] sm:$0xff]
      %v3551 = vld [vmem:[%s1397 + $0x40] sm:$0xff]
      %v3552 = vld [vmem:[%s1397 + $0x48] sm:$0xff]
      %v3553 = vld [vmem:[%s1397 + $0x50] sm:$0xff]
      %v3554 = vld [vmem:[%s1397 + $0x58] sm:$0xff]
      %v3555 = vld [vmem:[%s1397 + $0x60] sm:$0xff]
      %v3556 = vld [vmem:[%s1397 + $0x68] sm:$0xff]
      %v3557 = vld [vmem:[%s1397 + $0x70] sm:$0xff]
      %v3558 = vld [vmem:[%s1397 + $0x78] sm:$0xff]
      %v3559 = vld [vmem:[%s1397 + $0x80] sm:$0xff]
      %v3560 = vld [vmem:[%s1397 + $0x88] sm:$0xff]
      %s3561 = scalar_lea.vmem %s1, 512
      %v3562 = vld [vmem:[%s3561] sm:$0xf]
      %v3563 = vld [vmem:[%s3561 + $0x4] sm:$0xf]
      %v3564 = vld [vmem:[%s3561 + $0x8] sm:$0xf]
      %v3565 = vld [vmem:[%s3561 + $0xc] sm:$0xf]
      %v3566 = vld [vmem:[%s3561 + $0x10] sm:$0xf]
      %v3567 = vld [vmem:[%s3561 + $0x14] sm:$0xf]
      %v3568 = vld [vmem:[%s3561 + $0x18] sm:$0xf]
      %v3569 = vld [vmem:[%s3561 + $0x1c] sm:$0xf]
      %v3570 = vld [vmem:[%s3561 + $0x20] sm:$0xf]
      %v3571 = vld [vmem:[%s3561 + $0x24] sm:$0xf]
      %v3572 = vld [vmem:[%s3561 + $0x28] sm:$0xf]
      %v3573 = vld [vmem:[%s3561 + $0x2c] sm:$0xf]
      %v3574 = vld [vmem:[%s3561 + $0x30] sm:$0xf]
      %v3575 = vld [vmem:[%s3561 + $0x34] sm:$0xf]
      %v3576 = vld [vmem:[%s3561 + $0x38] sm:$0xf]
      %v3577 = vld [vmem:[%s3561 + $0x3c] sm:$0xf]
      %v3594 = vunpack.c.l.b16 %v3562
      %v3595 = vunpack.c.l.b16 %v3563
      %v3596 = vunpack.c.l.b16 %v3564
      %v3597 = vunpack.c.l.b16 %v3565
      %v3598 = vunpack.c.l.b16 %v3566
      %v3599 = vunpack.c.l.b16 %v3567
      %v3600 = vunpack.c.l.b16 %v3568
      %v3601 = vunpack.c.l.b16 %v3569
      %v3602 = vunpack.c.l.b16 %v3570
      %v3603 = vunpack.c.l.b16 %v3571
      %v3604 = vunpack.c.l.b16 %v3572
      %v3605 = vunpack.c.l.b16 %v3573
      %v3606 = vunpack.c.l.b16 %v3574
      %v3607 = vunpack.c.l.b16 %v3575
      %v3608 = vunpack.c.l.b16 %v3576
      %v3609 = vunpack.c.l.b16 %v3577
      %v3610 = vpack.c.b16 %v3595, %v3594
      %v3611 = vpack.c.b16 %v3597, %v3596
      %v3612 = vpack.c.b16 %v3599, %v3598
      %v3613 = vpack.c.b16 %v3601, %v3600
      %v3614 = vpack.c.b16 %v3603, %v3602
      %v3615 = vpack.c.b16 %v3605, %v3604
      %v3616 = vpack.c.b16 %v3607, %v3606
      %v3617 = vpack.c.b16 %v3609, %v3608
      %3626 = vmatprep.subr.bf16.mxu0 0
      %3627 = vmatpush1.bf16.msra.mxu0 %v3610
      %3628 = vmatprep.subr.bf16.mxu0 0
      %3629 = vmatpush1.bf16.msra.mxu0 %v3611
      %3630 = vmatprep.subr.bf16.mxu0 0
      %3631 = vmatpush1.bf16.msra.mxu0 %v3612
      %3632 = vmatprep.subr.bf16.mxu0 0
      %3633 = vmatpush1.bf16.msra.mxu0 %v3613
      %3634 = vmatprep.subr.bf16.mxu0 0
      %3635 = vmatpush1.bf16.msra.mxu0 %v3614
      %3636 = vmatprep.subr.bf16.mxu0 0
      %3637 = vmatpush1.bf16.msra.mxu0 %v3615
      %3638 = vmatprep.subr.bf16.mxu0 0
      %3639 = vmatpush1.bf16.msra.mxu0 %v3616
      %3640 = vmatprep.subr.bf16.mxu0 0
      %3641 = vmatpush1.bf16.msra.mxu0 %v3617
      %3642 = vmatprep.subr.bf16.mxu0 0
      %3643 = vmatpush1.bf16.msra.mxu0 0
      %3644 = vmatprep.subr.bf16.mxu0 0
      %3645 = vmatpush1.bf16.msra.mxu0 0
      %3646 = vmatprep.subr.bf16.mxu0 0
      %3647 = vmatpush1.bf16.msra.mxu0 0
      %3648 = vmatprep.subr.bf16.mxu0 0
      %3649 = vmatpush1.bf16.msra.mxu0 0
      %3650 = vmatprep.subr.bf16.mxu0 0
      %3651 = vmatpush1.bf16.msra.mxu0 0
      %3652 = vmatprep.subr.bf16.mxu0 0
      %3653 = vmatpush1.bf16.msra.mxu0 0
      %3654 = vmatprep.subr.bf16.mxu0 0
      %3655 = vmatpush1.bf16.msra.mxu0 0
      %3656 = vmatprep.subr.bf16.mxu0 0
      %3657 = vmatpush1.bf16.msra.mxu0 0
      %3658 = vmatprep.mubr.bf16.mxu0 0
      %3659 = vmatmul.mubr.bf16.gmra.mrb[0].mxu0 %v3545
      %v3660 = vpop.f32.mrb[0].mxu0
      %v3661 = vadd.f32 0.0, %v3660
      %v3662 = vpop.f32.mrb[0].mxu0
      %v3663 = vpop.f32.mrb[0].mxu0
      %v3664 = vadd.f32 0.0, %v3663
      %v3665 = vpop.f32.mrb[0].mxu0
      %3666 = vmatprep.mubr.bf16.mxu0 0
      %3667 = vmatmul.mubr.bf16.gmra.mrb[0].mxu0 %v3546
      %v3668 = vpop.f32.mrb[0].mxu0
      %v3669 = vadd.f32 0.0, %v3668
      %v3670 = vpop.f32.mrb[0].mxu0
      %v3671 = vpop.f32.mrb[0].mxu0
      %v3672 = vadd.f32 0.0, %v3671
      %v3673 = vpop.f32.mrb[0].mxu0
      %3674 = vmatprep.mubr.bf16.mxu0 0
      %3675 = vmatmul.mubr.bf16.gmra.mrb[0].mxu0 %v3547
      %v3676 = vpop.f32.mrb[0].mxu0
      %v3677 = vadd.f32 0.0, %v3676
      %v3678 = vpop.f32.mrb[0].mxu0
      %v3679 = vpop.f32.mrb[0].mxu0
      %v3680 = vadd.f32 0.0, %v3679
      %v3681 = vpop.f32.mrb[0].mxu0
      %3682 = vmatprep.mubr.bf16.mxu0 0
      %3683 = vmatmul.mubr.bf16.gmra.mrb[0].mxu0 %v3548
      %v3684 = vpop.f32.mrb[0].mxu0
      %v3685 = vadd.f32 0.0, %v3684
      %v3686 = vpop.f32.mrb[0].mxu0
      %v3687 = vpop.f32.mrb[0].mxu0
      %v3688 = vadd.f32 0.0, %v3687
      %v3689 = vpop.f32.mrb[0].mxu0
      %3690 = vmatprep.mubr.bf16.mxu0 0
      %3691 = vmatmul.mubr.bf16.gmra.mrb[0].mxu0 %v3549
      %v3692 = vpop.f32.mrb[0].mxu0
      %v3693 = vadd.f32 0.0, %v3692
      %v3694 = vpop.f32.mrb[0].mxu0
      %v3695 = vpop.f32.mrb[0].mxu0
      %v3696 = vadd.f32 0.0, %v3695
      %v3697 = vpop.f32.mrb[0].mxu0
      %3698 = vmatprep.mubr.bf16.mxu0 0
      %3699 = vmatmul.mubr.bf16.gmra.mrb[0].mxu0 %v3550
      %v3700 = vpop.f32.mrb[0].mxu0
      %v3701 = vadd.f32 0.0, %v3700
      %v3702 = vpop.f32.mrb[0].mxu0
      %v3703 = vpop.f32.mrb[0].mxu0
      %v3704 = vadd.f32 0.0, %v3703
      %v3705 = vpop.f32.mrb[0].mxu0
      %3706 = vmatprep.mubr.bf16.mxu0 0
      %3707 = vmatmul.mubr.bf16.gmra.mrb[0].mxu0 %v3551
      %v3708 = vpop.f32.mrb[0].mxu0
      %v3709 = vadd.f32 0.0, %v3708
      %v3710 = vpop.f32.mrb[0].mxu0
      %v3711 = vpop.f32.mrb[0].mxu0
      %v3712 = vadd.f32 0.0, %v3711
      %v3713 = vpop.f32.mrb[0].mxu0
      %3714 = vmatprep.mubr.bf16.mxu0 0
      %3715 = vmatmul.mubr.bf16.gmra.mrb[0].mxu0 %v3552
      %v3716 = vpop.f32.mrb[0].mxu0
      %v3717 = vadd.f32 0.0, %v3716
      %v3718 = vpop.f32.mrb[0].mxu0
      %v3719 = vpop.f32.mrb[0].mxu0
      %v3720 = vadd.f32 0.0, %v3719
      %v3721 = vpop.f32.mrb[0].mxu0
      %3722 = vmatprep.mubr.bf16.mxu0 0
      %3723 = vmatmul.mubr.bf16.gmra.mrb[0].mxu0 %v3553
      %v3724 = vpop.f32.mrb[0].mxu0
      %v3725 = vadd.f32 0.0, %v3724
      %v3726 = vpop.f32.mrb[0].mxu0
      %v3727 = vpop.f32.mrb[0].mxu0
      %v3728 = vadd.f32 0.0, %v3727
      %v3729 = vpop.f32.mrb[0].mxu0
      %3730 = vmatprep.mubr.bf16.mxu0 0
      %3731 = vmatmul.mubr.bf16.gmra.mrb[0].mxu0 %v3554
      %v3732 = vpop.f32.mrb[0].mxu0
      %v3733 = vadd.f32 0.0, %v3732
      %v3734 = vpop.f32.mrb[0].mxu0
      %v3735 = vpop.f32.mrb[0].mxu0
      %v3736 = vadd.f32 0.0, %v3735
      %v3737 = vpop.f32.mrb[0].mxu0
      %3738 = vmatprep.mubr.bf16.mxu0 0
      %3739 = vmatmul.mubr.bf16.gmra.mrb[0].mxu0 %v3555
      %v3740 = vpop.f32.mrb[0].mxu0
      %v3741 = vadd.f32 0.0, %v3740
      %v3742 = vpop.f32.mrb[0].mxu0
      %v3743 = vpop.f32.mrb[0].mxu0
      %v3744 = vadd.f32 0.0, %v3743
      %v3745 = vpop.f32.mrb[0].mxu0
      %3746 = vmatprep.mubr.bf16.mxu0 0
      %3747 = vmatmul.mubr.bf16.gmra.mrb[0].mxu0 %v3556
      %v3748 = vpop.f32.mrb[0].mxu0
      %v3749 = vadd.f32 0.0, %v3748
      %v3750 = vpop.f32.mrb[0].mxu0
      %v3751 = vpop.f32.mrb[0].mxu0
      %v3752 = vadd.f32 0.0, %v3751
      %v3753 = vpop.f32.mrb[0].mxu0
      %3754 = vmatprep.mubr.bf16.mxu0 0
      %3755 = vmatmul.mubr.bf16.gmra.mrb[0].mxu0 %v3557
      %v3756 = vpop.f32.mrb[0].mxu0
      %v3757 = vadd.f32 0.0, %v3756
      %v3758 = vpop.f32.mrb[0].mxu0
      %v3759 = vpop.f32.mrb[0].mxu0
      %v3760 = vadd.f32 0.0, %v3759
      %v3761 = vpop.f32.mrb[0].mxu0
      %3762 = vmatprep.mubr.bf16.mxu0 0
      %3763 = vmatmul.mubr.bf16.gmra.mrb[0].mxu0 %v3558
      %v3764 = vpop.f32.mrb[0].mxu0
      %v3765 = vadd.f32 0.0, %v3764
      %v3766 = vpop.f32.mrb[0].mxu0
      %v3767 = vpop.f32.mrb[0].mxu0
      %v3768 = vadd.f32 0.0, %v3767
      %v3769 = vpop.f32.mrb[0].mxu0
      %3770 = vmatprep.mubr.bf16.mxu0 0
      %3771 = vmatmul.mubr.bf16.gmra.mrb[0].mxu0 %v3559
      %v3772 = vpop.f32.mrb[0].mxu0
      %v3773 = vadd.f32 0.0, %v3772
      %v3774 = vpop.f32.mrb[0].mxu0
      %v3775 = vpop.f32.mrb[0].mxu0
      %v3776 = vadd.f32 0.0, %v3775
      %v3777 = vpop.f32.mrb[0].mxu0
      %3778 = vmatprep.mubr.bf16.mxu0 0
      %3779 = vmatmul.mubr.bf16.gmra.mrb[0].mxu0 %v3560
      %v3780 = vpop.f32.mrb[0].mxu0
      %v3781 = vadd.f32 0.0, %v3780
      %v3782 = vpop.f32.mrb[0].mxu0
      %v3783 = vpop.f32.mrb[0].mxu0
      %v3784 = vadd.f32 0.0, %v3783
      %v3785 = vpop.f32.mrb[0].mxu0
      %3786 = vdwg.mxu0
      %v3787 = vadd.f32 %v3513, %v3661
      %v3788 = vadd.f32 %v3514, %v3664
      %v3789 = vadd.f32 %v3515, %v3669
      %v3790 = vadd.f32 %v3516, %v3672
      %v3791 = vadd.f32 %v3517, %v3677
      %v3792 = vadd.f32 %v3518, %v3680
      %v3793 = vadd.f32 %v3519, %v3685
      %v3794 = vadd.f32 %v3520, %v3688
      %v3795 = vadd.f32 %v3521, %v3693
      %v3796 = vadd.f32 %v3522, %v3696
      %v3797 = vadd.f32 %v3523, %v3701
      %v3798 = vadd.f32 %v3524, %v3704
      %v3799 = vadd.f32 %v3525, %v3709
      %v3800 = vadd.f32 %v3526, %v3712
      %v3801 = vadd.f32 %v3527, %v3717
      %v3802 = vadd.f32 %v3528, %v3720
      %v3803 = vadd.f32 %v3529, %v3725
      %v3804 = vadd.f32 %v3530, %v3728
      %v3805 = vadd.f32 %v3531, %v3733
      %v3806 = vadd.f32 %v3532, %v3736
      %v3807 = vadd.f32 %v3533, %v3741
      %v3808 = vadd.f32 %v3534, %v3744
      %v3809 = vadd.f32 %v3535, %v3749
      %v3810 = vadd.f32 %v3536, %v3752
      %v3811 = vadd.f32 %v3537, %v3757
      %v3812 = vadd.f32 %v3538, %v3760
      %v3813 = vadd.f32 %v3539, %v3765
      %v3814 = vadd.f32 %v3540, %v3768
      %v3815 = vadd.f32 %v3541, %v3773
      %v3816 = vadd.f32 %v3542, %v3776
      %v3817 = vadd.f32 %v3543, %v3781
      %v3818 = vadd.f32 %v3544, %v3784
      %v3819 = vlaneseq
      %v3820 = vshrl.u32 %v3819, 7
      %v3821 = vsub.s32 0, %v3820
      %v3822 = vrot.slane %v1416, %v3821
      %v3823 = vmul.f32 %v3787, %v3822
      %v3824 = vmul.f32 %v3788, %v3822
      %v3825 = vmul.f32 %v3789, %v3822
      %v3826 = vmul.f32 %v3790, %v3822
      %v3827 = vmul.f32 %v3791, %v3822
      %v3828 = vmul.f32 %v3792, %v3822
      %v3829 = vmul.f32 %v3793, %v3822
      %v3830 = vmul.f32 %v3794, %v3822
      %v3831 = vmul.f32 %v3795, %v3822
      %v3832 = vmul.f32 %v3796, %v3822
      %v3833 = vmul.f32 %v3797, %v3822
      %v3834 = vmul.f32 %v3798, %v3822
      %v3835 = vmul.f32 %v3799, %v3822
      %v3836 = vmul.f32 %v3800, %v3822
      %v3837 = vmul.f32 %v3801, %v3822
      %v3838 = vmul.f32 %v3802, %v3822
      %v3839 = vmul.f32 %v3803, %v3822
      %v3840 = vmul.f32 %v3804, %v3822
      %v3841 = vmul.f32 %v3805, %v3822
      %v3842 = vmul.f32 %v3806, %v3822
      %v3843 = vmul.f32 %v3807, %v3822
      %v3844 = vmul.f32 %v3808, %v3822
      %v3845 = vmul.f32 %v3809, %v3822
      %v3846 = vmul.f32 %v3810, %v3822
      %v3847 = vmul.f32 %v3811, %v3822
      %v3848 = vmul.f32 %v3812, %v3822
      %v3849 = vmul.f32 %v3813, %v3822
      %v3850 = vmul.f32 %v3814, %v3822
      %v3851 = vmul.f32 %v3815, %v3822
      %v3852 = vmul.f32 %v3816, %v3822
      %v3853 = vmul.f32 %v3817, %v3822
      %v3854 = vmul.f32 %v3818, %v3822
      %v3855 = vlaneseq
      %v3856 = vshrl.u32 %v3855, 7
      %v3857 = vsub.s32 0, %v3856
      %v3858 = vrot.slane %v1417, %v3857
      %v3859 = vadd.f32 %v3823, %v3858
      %v3860 = vadd.f32 %v3824, %v3858
      %v3861 = vadd.f32 %v3825, %v3858
      %v3862 = vadd.f32 %v3826, %v3858
      %v3863 = vadd.f32 %v3827, %v3858
      %v3864 = vadd.f32 %v3828, %v3858
      %v3865 = vadd.f32 %v3829, %v3858
      %v3866 = vadd.f32 %v3830, %v3858
      %v3867 = vadd.f32 %v3831, %v3858
      %v3868 = vadd.f32 %v3832, %v3858
      %v3869 = vadd.f32 %v3833, %v3858
      %v3870 = vadd.f32 %v3834, %v3858
      %v3871 = vadd.f32 %v3835, %v3858
      %v3872 = vadd.f32 %v3836, %v3858
      %v3873 = vadd.f32 %v3837, %v3858
      %v3874 = vadd.f32 %v3838, %v3858
      %v3875 = vadd.f32 %v3839, %v3858
      %v3876 = vadd.f32 %v3840, %v3858
      %v3877 = vadd.f32 %v3841, %v3858
      %v3878 = vadd.f32 %v3842, %v3858
      %v3879 = vadd.f32 %v3843, %v3858
      %v3880 = vadd.f32 %v3844, %v3858
      %v3881 = vadd.f32 %v3845, %v3858
      %v3882 = vadd.f32 %v3846, %v3858
      %v3883 = vadd.f32 %v3847, %v3858
      %v3884 = vadd.f32 %v3848, %v3858
      %v3885 = vadd.f32 %v3849, %v3858
      %v3886 = vadd.f32 %v3850, %v3858
      %v3887 = vadd.f32 %v3851, %v3858
      %v3888 = vadd.f32 %v3852, %v3858
      %v3889 = vadd.f32 %v3853, %v3858
      %v3890 = vadd.f32 %v3854, %v3858
      %vm3891 = vcmp.gt.f32.partialorder %v3859, 20.0
      %vm3892 = vcmp.gt.f32.partialorder %v3860, 20.0
      %vm3893 = vcmp.gt.f32.partialorder %v3861, 20.0
      %vm3894 = vcmp.gt.f32.partialorder %v3862, 20.0
      %vm3895 = vcmp.gt.f32.partialorder %v3863, 20.0
      %vm3896 = vcmp.gt.f32.partialorder %v3864, 20.0
      %vm3897 = vcmp.gt.f32.partialorder %v3865, 20.0
      %vm3898 = vcmp.gt.f32.partialorder %v3866, 20.0
      %vm3899 = vcmp.gt.f32.partialorder %v3867, 20.0
      %vm3900 = vcmp.gt.f32.partialorder %v3868, 20.0
      %vm3901 = vcmp.gt.f32.partialorder %v3869, 20.0
      %vm3902 = vcmp.gt.f32.partialorder %v3870, 20.0
      %vm3903 = vcmp.gt.f32.partialorder %v3871, 20.0
      %vm3904 = vcmp.gt.f32.partialorder %v3872, 20.0
      %vm3905 = vcmp.gt.f32.partialorder %v3873, 20.0
      %vm3906 = vcmp.gt.f32.partialorder %v3874, 20.0
      %vm3907 = vcmp.gt.f32.partialorder %v3875, 20.0
      %vm3908 = vcmp.gt.f32.partialorder %v3876, 20.0
      %vm3909 = vcmp.gt.f32.partialorder %v3877, 20.0
      %vm3910 = vcmp.gt.f32.partialorder %v3878, 20.0
      %vm3911 = vcmp.gt.f32.partialorder %v3879, 20.0
      %vm3912 = vcmp.gt.f32.partialorder %v3880, 20.0
      %vm3913 = vcmp.gt.f32.partialorder %v3881, 20.0
      %vm3914 = vcmp.gt.f32.partialorder %v3882, 20.0
      %vm3915 = vcmp.gt.f32.partialorder %v3883, 20.0
      %vm3916 = vcmp.gt.f32.partialorder %v3884, 20.0
      %vm3917 = vcmp.gt.f32.partialorder %v3885, 20.0
      %vm3918 = vcmp.gt.f32.partialorder %v3886, 20.0
      %vm3919 = vcmp.gt.f32.partialorder %v3887, 20.0
      %vm3920 = vcmp.gt.f32.partialorder %v3888, 20.0
      %vm3921 = vcmp.gt.f32.partialorder %v3889, 20.0
      %vm3922 = vcmp.gt.f32.partialorder %v3890, 20.0
      %v3923 = vmin.f32 %v3859, 20.0
      %v3924 = vmin.f32 %v3860, 20.0
      %v3925 = vmin.f32 %v3861, 20.0
      %v3926 = vmin.f32 %v3862, 20.0
      %v3927 = vmin.f32 %v3863, 20.0
      %v3928 = vmin.f32 %v3864, 20.0
      %v3929 = vmin.f32 %v3865, 20.0
      %v3930 = vmin.f32 %v3866, 20.0
      %v3931 = vmin.f32 %v3867, 20.0
      %v3932 = vmin.f32 %v3868, 20.0
      %v3933 = vmin.f32 %v3869, 20.0
      %v3934 = vmin.f32 %v3870, 20.0
      %v3935 = vmin.f32 %v3871, 20.0
      %v3936 = vmin.f32 %v3872, 20.0
      %v3937 = vmin.f32 %v3873, 20.0
      %v3938 = vmin.f32 %v3874, 20.0
      %v3939 = vmin.f32 %v3875, 20.0
      %v3940 = vmin.f32 %v3876, 20.0
      %v3941 = vmin.f32 %v3877, 20.0
      %v3942 = vmin.f32 %v3878, 20.0
      %v3943 = vmin.f32 %v3879, 20.0
      %v3944 = vmin.f32 %v3880, 20.0
      %v3945 = vmin.f32 %v3881, 20.0
      %v3946 = vmin.f32 %v3882, 20.0
      %v3947 = vmin.f32 %v3883, 20.0
      %v3948 = vmin.f32 %v3884, 20.0
      %v3949 = vmin.f32 %v3885, 20.0
      %v3950 = vmin.f32 %v3886, 20.0
      %v3951 = vmin.f32 %v3887, 20.0
      %v3952 = vmin.f32 %v3888, 20.0
      %v3953 = vmin.f32 %v3889, 20.0
      %v3954 = vmin.f32 %v3890, 20.0
      %v3955 = vmul.f32 %v3923, 1.442695
      %v3956 = vpow.pop %v3955
      %v3957 = vmul.f32 %v3924, 1.442695
      %v3958 = vpow.pop %v3957
      %v3959 = vmul.f32 %v3925, 1.442695
      %v3960 = vpow.pop %v3959
      %v3961 = vmul.f32 %v3926, 1.442695
      %v3962 = vpow.pop %v3961
      %v3963 = vmul.f32 %v3927, 1.442695
      %v3964 = vpow.pop %v3963
      %v3965 = vmul.f32 %v3928, 1.442695
      %v3966 = vpow.pop %v3965
      %v3967 = vmul.f32 %v3929, 1.442695
      %v3968 = vpow.pop %v3967
      %v3969 = vmul.f32 %v3930, 1.442695
      %v3970 = vpow.pop %v3969
      %v3971 = vmul.f32 %v3931, 1.442695
      %v3972 = vpow.pop %v3971
      %v3973 = vmul.f32 %v3932, 1.442695
      %v3974 = vpow.pop %v3973
      %v3975 = vmul.f32 %v3933, 1.442695
      %v3976 = vpow.pop %v3975
      %v3977 = vmul.f32 %v3934, 1.442695
      %v3978 = vpow.pop %v3977
      %v3979 = vmul.f32 %v3935, 1.442695
      %v3980 = vpow.pop %v3979
      %v3981 = vmul.f32 %v3936, 1.442695
      %v3982 = vpow.pop %v3981
      %v3983 = vmul.f32 %v3937, 1.442695
      %v3984 = vpow.pop %v3983
      %v3985 = vmul.f32 %v3938, 1.442695
      %v3986 = vpow.pop %v3985
      %v3987 = vmul.f32 %v3939, 1.442695
      %v3988 = vpow.pop %v3987
      %v3989 = vmul.f32 %v3940, 1.442695
      %v3990 = vpow.pop %v3989
      %v3991 = vmul.f32 %v3941, 1.442695
      %v3992 = vpow.pop %v3991
      %v3993 = vmul.f32 %v3942, 1.442695
      %v3994 = vpow.pop %v3993
      %v3995 = vmul.f32 %v3943, 1.442695
      %v3996 = vpow.pop %v3995
      %v3997 = vmul.f32 %v3944, 1.442695
      %v3998 = vpow.pop %v3997
      %v3999 = vmul.f32 %v3945, 1.442695
      %v4000 = vpow.pop %v3999
      %v4001 = vmul.f32 %v3946, 1.442695
      %v4002 = vpow.pop %v4001
      %v4003 = vmul.f32 %v3947, 1.442695
      %v4004 = vpow.pop %v4003
      %v4005 = vmul.f32 %v3948, 1.442695
      %v4006 = vpow.pop %v4005
      %v4007 = vmul.f32 %v3949, 1.442695
      %v4008 = vpow.pop %v4007
      %v4009 = vmul.f32 %v3950, 1.442695
      %v4010 = vpow.pop %v4009
      %v4011 = vmul.f32 %v3951, 1.442695
      %v4012 = vpow.pop %v4011
      %v4013 = vmul.f32 %v3952, 1.442695
      %v4014 = vpow.pop %v4013
      %v4015 = vmul.f32 %v3953, 1.442695
      %v4016 = vpow.pop %v4015
      %v4017 = vmul.f32 %v3954, 1.442695
      %v4018 = vpow.pop %v4017
      %v4019 = vadd.f32 %v3956, 1.0
      %v4020 = vlog2.pop %v4019
      %v4021 = vmul.f32 %v4020, 0.6931472
      %v4022 = vmul.f32 -0.5, %v3956
      %v4023 = vadd.f32 %v4022, 1.0
      %v4024 = vmul.f32 %v4023, %v3956
      %v4025 = vand.u32 2147483647, %v3956
      %vm4026 = vcmp.lt.f32.partialorder %v4025, 0.0004427343
      %v4027 = vsel %vm4026, %v4024, %v4021
      %v4028 = vadd.f32 %v3958, 1.0
      %v4029 = vlog2.pop %v4028
      %v4030 = vmul.f32 %v4029, 0.6931472
      %v4031 = vmul.f32 -0.5, %v3958
      %v4032 = vadd.f32 %v4031, 1.0
      %v4033 = vmul.f32 %v4032, %v3958
      %v4034 = vand.u32 2147483647, %v3958
      %vm4035 = vcmp.lt.f32.partialorder %v4034, 0.0004427343
      %v4036 = vsel %vm4035, %v4033, %v4030
      %v4037 = vadd.f32 %v3960, 1.0
      %v4038 = vlog2.pop %v4037
      %v4039 = vmul.f32 %v4038, 0.6931472
      %v4040 = vmul.f32 -0.5, %v3960
      %v4041 = vadd.f32 %v4040, 1.0
      %v4042 = vmul.f32 %v4041, %v3960
      %v4043 = vand.u32 2147483647, %v3960
      %vm4044 = vcmp.lt.f32.partialorder %v4043, 0.0004427343
      %v4045 = vsel %vm4044, %v4042, %v4039
      %v4046 = vadd.f32 %v3962, 1.0
      %v4047 = vlog2.pop %v4046
      %v4048 = vmul.f32 %v4047, 0.6931472
      %v4049 = vmul.f32 -0.5, %v3962
      %v4050 = vadd.f32 %v4049, 1.0
      %v4051 = vmul.f32 %v4050, %v3962
      %v4052 = vand.u32 2147483647, %v3962
      %vm4053 = vcmp.lt.f32.partialorder %v4052, 0.0004427343
      %v4054 = vsel %vm4053, %v4051, %v4048
      %v4055 = vadd.f32 %v3964, 1.0
      %v4056 = vlog2.pop %v4055
      %v4057 = vmul.f32 %v4056, 0.6931472
      %v4058 = vmul.f32 -0.5, %v3964
      %v4059 = vadd.f32 %v4058, 1.0
      %v4060 = vmul.f32 %v4059, %v3964
      %v4061 = vand.u32 2147483647, %v3964
      %vm4062 = vcmp.lt.f32.partialorder %v4061, 0.0004427343
      %v4063 = vsel %vm4062, %v4060, %v4057
      %v4064 = vadd.f32 %v3966, 1.0
      %v4065 = vlog2.pop %v4064
      %v4066 = vmul.f32 %v4065, 0.6931472
      %v4067 = vmul.f32 -0.5, %v3966
      %v4068 = vadd.f32 %v4067, 1.0
      %v4069 = vmul.f32 %v4068, %v3966
      %v4070 = vand.u32 2147483647, %v3966
      %vm4071 = vcmp.lt.f32.partialorder %v4070, 0.0004427343
      %v4072 = vsel %vm4071, %v4069, %v4066
      %v4073 = vadd.f32 %v3968, 1.0
      %v4074 = vlog2.pop %v4073
      %v4075 = vmul.f32 %v4074, 0.6931472
      %v4076 = vmul.f32 -0.5, %v3968
      %v4077 = vadd.f32 %v4076, 1.0
      %v4078 = vmul.f32 %v4077, %v3968
      %v4079 = vand.u32 2147483647, %v3968
      %vm4080 = vcmp.lt.f32.partialorder %v4079, 0.0004427343
      %v4081 = vsel %vm4080, %v4078, %v4075
      %v4082 = vadd.f32 %v3970, 1.0
      %v4083 = vlog2.pop %v4082
      %v4084 = vmul.f32 %v4083, 0.6931472
      %v4085 = vmul.f32 -0.5, %v3970
      %v4086 = vadd.f32 %v4085, 1.0
      %v4087 = vmul.f32 %v4086, %v3970
      %v4088 = vand.u32 2147483647, %v3970
      %vm4089 = vcmp.lt.f32.partialorder %v4088, 0.0004427343
      %v4090 = vsel %vm4089, %v4087, %v4084
      %v4091 = vadd.f32 %v3972, 1.0
      %v4092 = vlog2.pop %v4091
      %v4093 = vmul.f32 %v4092, 0.6931472
      %v4094 = vmul.f32 -0.5, %v3972
      %v4095 = vadd.f32 %v4094, 1.0
      %v4096 = vmul.f32 %v4095, %v3972
      %v4097 = vand.u32 2147483647, %v3972
      %vm4098 = vcmp.lt.f32.partialorder %v4097, 0.0004427343
      %v4099 = vsel %vm4098, %v4096, %v4093
      %v4100 = vadd.f32 %v3974, 1.0
      %v4101 = vlog2.pop %v4100
      %v4102 = vmul.f32 %v4101, 0.6931472
      %v4103 = vmul.f32 -0.5, %v3974
      %v4104 = vadd.f32 %v4103, 1.0
      %v4105 = vmul.f32 %v4104, %v3974
      %v4106 = vand.u32 2147483647, %v3974
      %vm4107 = vcmp.lt.f32.partialorder %v4106, 0.0004427343
      %v4108 = vsel %vm4107, %v4105, %v4102
      %v4109 = vadd.f32 %v3976, 1.0
      %v4110 = vlog2.pop %v4109
      %v4111 = vmul.f32 %v4110, 0.6931472
      %v4112 = vmul.f32 -0.5, %v3976
      %v4113 = vadd.f32 %v4112, 1.0
      %v4114 = vmul.f32 %v4113, %v3976
      %v4115 = vand.u32 2147483647, %v3976
      %vm4116 = vcmp.lt.f32.partialorder %v4115, 0.0004427343
      %v4117 = vsel %vm4116, %v4114, %v4111
      %v4118 = vadd.f32 %v3978, 1.0
      %v4119 = vlog2.pop %v4118
      %v4120 = vmul.f32 %v4119, 0.6931472
      %v4121 = vmul.f32 -0.5, %v3978
      %v4122 = vadd.f32 %v4121, 1.0
      %v4123 = vmul.f32 %v4122, %v3978
      %v4124 = vand.u32 2147483647, %v3978
      %vm4125 = vcmp.lt.f32.partialorder %v4124, 0.0004427343
      %v4126 = vsel %vm4125, %v4123, %v4120
      %v4127 = vadd.f32 %v3980, 1.0
      %v4128 = vlog2.pop %v4127
      %v4129 = vmul.f32 %v4128, 0.6931472
      %v4130 = vmul.f32 -0.5, %v3980
      %v4131 = vadd.f32 %v4130, 1.0
      %v4132 = vmul.f32 %v4131, %v3980
      %v4133 = vand.u32 2147483647, %v3980
      %vm4134 = vcmp.lt.f32.partialorder %v4133, 0.0004427343
      %v4135 = vsel %vm4134, %v4132, %v4129
      %v4136 = vadd.f32 %v3982, 1.0
      %v4137 = vlog2.pop %v4136
      %v4138 = vmul.f32 %v4137, 0.6931472
      %v4139 = vmul.f32 -0.5, %v3982
      %v4140 = vadd.f32 %v4139, 1.0
      %v4141 = vmul.f32 %v4140, %v3982
      %v4142 = vand.u32 2147483647, %v3982
      %vm4143 = vcmp.lt.f32.partialorder %v4142, 0.0004427343
      %v4144 = vsel %vm4143, %v4141, %v4138
      %v4145 = vadd.f32 %v3984, 1.0
      %v4146 = vlog2.pop %v4145
      %v4147 = vmul.f32 %v4146, 0.6931472
      %v4148 = vmul.f32 -0.5, %v3984
      %v4149 = vadd.f32 %v4148, 1.0
      %v4150 = vmul.f32 %v4149, %v3984
      %v4151 = vand.u32 2147483647, %v3984
      %vm4152 = vcmp.lt.f32.partialorder %v4151, 0.0004427343
      %v4153 = vsel %vm4152, %v4150, %v4147
      %v4154 = vadd.f32 %v3986, 1.0
      %v4155 = vlog2.pop %v4154
      %v4156 = vmul.f32 %v4155, 0.6931472
      %v4157 = vmul.f32 -0.5, %v3986
      %v4158 = vadd.f32 %v4157, 1.0
      %v4159 = vmul.f32 %v4158, %v3986
      %v4160 = vand.u32 2147483647, %v3986
      %vm4161 = vcmp.lt.f32.partialorder %v4160, 0.0004427343
      %v4162 = vsel %vm4161, %v4159, %v4156
      %v4163 = vadd.f32 %v3988, 1.0
      %v4164 = vlog2.pop %v4163
      %v4165 = vmul.f32 %v4164, 0.6931472
      %v4166 = vmul.f32 -0.5, %v3988
      %v4167 = vadd.f32 %v4166, 1.0
      %v4168 = vmul.f32 %v4167, %v3988
      %v4169 = vand.u32 2147483647, %v3988
      %vm4170 = vcmp.lt.f32.partialorder %v4169, 0.0004427343
      %v4171 = vsel %vm4170, %v4168, %v4165
      %v4172 = vadd.f32 %v3990, 1.0
      %v4173 = vlog2.pop %v4172
      %v4174 = vmul.f32 %v4173, 0.6931472
      %v4175 = vmul.f32 -0.5, %v3990
      %v4176 = vadd.f32 %v4175, 1.0
      %v4177 = vmul.f32 %v4176, %v3990
      %v4178 = vand.u32 2147483647, %v3990
      %vm4179 = vcmp.lt.f32.partialorder %v4178, 0.0004427343
      %v4180 = vsel %vm4179, %v4177, %v4174
      %v4181 = vadd.f32 %v3992, 1.0
      %v4182 = vlog2.pop %v4181
      %v4183 = vmul.f32 %v4182, 0.6931472
      %v4184 = vmul.f32 -0.5, %v3992
      %v4185 = vadd.f32 %v4184, 1.0
      %v4186 = vmul.f32 %v4185, %v3992
      %v4187 = vand.u32 2147483647, %v3992
      %vm4188 = vcmp.lt.f32.partialorder %v4187, 0.0004427343
      %v4189 = vsel %vm4188, %v4186, %v4183
      %v4190 = vadd.f32 %v3994, 1.0
      %v4191 = vlog2.pop %v4190
      %v4192 = vmul.f32 %v4191, 0.6931472
      %v4193 = vmul.f32 -0.5, %v3994
      %v4194 = vadd.f32 %v4193, 1.0
      %v4195 = vmul.f32 %v4194, %v3994
      %v4196 = vand.u32 2147483647, %v3994
      %vm4197 = vcmp.lt.f32.partialorder %v4196, 0.0004427343
      %v4198 = vsel %vm4197, %v4195, %v4192
      %v4199 = vadd.f32 %v3996, 1.0
      %v4200 = vlog2.pop %v4199
      %v4201 = vmul.f32 %v4200, 0.6931472
      %v4202 = vmul.f32 -0.5, %v3996
      %v4203 = vadd.f32 %v4202, 1.0
      %v4204 = vmul.f32 %v4203, %v3996
      %v4205 = vand.u32 2147483647, %v3996
      %vm4206 = vcmp.lt.f32.partialorder %v4205, 0.0004427343
      %v4207 = vsel %vm4206, %v4204, %v4201
      %v4208 = vadd.f32 %v3998, 1.0
      %v4209 = vlog2.pop %v4208
      %v4210 = vmul.f32 %v4209, 0.6931472
      %v4211 = vmul.f32 -0.5, %v3998
      %v4212 = vadd.f32 %v4211, 1.0
      %v4213 = vmul.f32 %v4212, %v3998
      %v4214 = vand.u32 2147483647, %v3998
      %vm4215 = vcmp.lt.f32.partialorder %v4214, 0.0004427343
      %v4216 = vsel %vm4215, %v4213, %v4210
      %v4217 = vadd.f32 %v4000, 1.0
      %v4218 = vlog2.pop %v4217
      %v4219 = vmul.f32 %v4218, 0.6931472
      %v4220 = vmul.f32 -0.5, %v4000
      %v4221 = vadd.f32 %v4220, 1.0
      %v4222 = vmul.f32 %v4221, %v4000
      %v4223 = vand.u32 2147483647, %v4000
      %vm4224 = vcmp.lt.f32.partialorder %v4223, 0.0004427343
      %v4225 = vsel %vm4224, %v4222, %v4219
      %v4226 = vadd.f32 %v4002, 1.0
      %v4227 = vlog2.pop %v4226
      %v4228 = vmul.f32 %v4227, 0.6931472
      %v4229 = vmul.f32 -0.5, %v4002
      %v4230 = vadd.f32 %v4229, 1.0
      %v4231 = vmul.f32 %v4230, %v4002
      %v4232 = vand.u32 2147483647, %v4002
      %vm4233 = vcmp.lt.f32.partialorder %v4232, 0.0004427343
      %v4234 = vsel %vm4233, %v4231, %v4228
      %v4235 = vadd.f32 %v4004, 1.0
      %v4236 = vlog2.pop %v4235
      %v4237 = vmul.f32 %v4236, 0.6931472
      %v4238 = vmul.f32 -0.5, %v4004
      %v4239 = vadd.f32 %v4238, 1.0
      %v4240 = vmul.f32 %v4239, %v4004
      %v4241 = vand.u32 2147483647, %v4004
      %vm4242 = vcmp.lt.f32.partialorder %v4241, 0.0004427343
      %v4243 = vsel %vm4242, %v4240, %v4237
      %v4244 = vadd.f32 %v4006, 1.0
      %v4245 = vlog2.pop %v4244
      %v4246 = vmul.f32 %v4245, 0.6931472
      %v4247 = vmul.f32 -0.5, %v4006
      %v4248 = vadd.f32 %v4247, 1.0
      %v4249 = vmul.f32 %v4248, %v4006
      %v4250 = vand.u32 2147483647, %v4006
      %vm4251 = vcmp.lt.f32.partialorder %v4250, 0.0004427343
      %v4252 = vsel %vm4251, %v4249, %v4246
      %v4253 = vadd.f32 %v4008, 1.0
      %v4254 = vlog2.pop %v4253
      %v4255 = vmul.f32 %v4254, 0.6931472
      %v4256 = vmul.f32 -0.5, %v4008
      %v4257 = vadd.f32 %v4256, 1.0
      %v4258 = vmul.f32 %v4257, %v4008
      %v4259 = vand.u32 2147483647, %v4008
      %vm4260 = vcmp.lt.f32.partialorder %v4259, 0.0004427343
      %v4261 = vsel %vm4260, %v4258, %v4255
      %v4262 = vadd.f32 %v4010, 1.0
      %v4263 = vlog2.pop %v4262
      %v4264 = vmul.f32 %v4263, 0.6931472
      %v4265 = vmul.f32 -0.5, %v4010
      %v4266 = vadd.f32 %v4265, 1.0
      %v4267 = vmul.f32 %v4266, %v4010
      %v4268 = vand.u32 2147483647, %v4010
      %vm4269 = vcmp.lt.f32.partialorder %v4268, 0.0004427343
      %v4270 = vsel %vm4269, %v4267, %v4264
      %v4271 = vadd.f32 %v4012, 1.0
      %v4272 = vlog2.pop %v4271
      %v4273 = vmul.f32 %v4272, 0.6931472
      %v4274 = vmul.f32 -0.5, %v4012
      %v4275 = vadd.f32 %v4274, 1.0
      %v4276 = vmul.f32 %v4275, %v4012
      %v4277 = vand.u32 2147483647, %v4012
      %vm4278 = vcmp.lt.f32.partialorder %v4277, 0.0004427343
      %v4279 = vsel %vm4278, %v4276, %v4273
      %v4280 = vadd.f32 %v4014, 1.0
      %v4281 = vlog2.pop %v4280
      %v4282 = vmul.f32 %v4281, 0.6931472
      %v4283 = vmul.f32 -0.5, %v4014
      %v4284 = vadd.f32 %v4283, 1.0
      %v4285 = vmul.f32 %v4284, %v4014
      %v4286 = vand.u32 2147483647, %v4014
      %vm4287 = vcmp.lt.f32.partialorder %v4286, 0.0004427343
      %v4288 = vsel %vm4287, %v4285, %v4282
      %v4289 = vadd.f32 %v4016, 1.0
      %v4290 = vlog2.pop %v4289
      %v4291 = vmul.f32 %v4290, 0.6931472
      %v4292 = vmul.f32 -0.5, %v4016
      %v4293 = vadd.f32 %v4292, 1.0
      %v4294 = vmul.f32 %v4293, %v4016
      %v4295 = vand.u32 2147483647, %v4016
      %vm4296 = vcmp.lt.f32.partialorder %v4295, 0.0004427343
      %v4297 = vsel %vm4296, %v4294, %v4291
      %v4298 = vadd.f32 %v4018, 1.0
      %v4299 = vlog2.pop %v4298
      %v4300 = vmul.f32 %v4299, 0.6931472
      %v4301 = vmul.f32 -0.5, %v4018
      %v4302 = vadd.f32 %v4301, 1.0
      %v4303 = vmul.f32 %v4302, %v4018
      %v4304 = vand.u32 2147483647, %v4018
      %vm4305 = vcmp.lt.f32.partialorder %v4304, 0.0004427343
      %v4306 = vsel %vm4305, %v4303, %v4300
      %v4307 = vsel %vm3891, %v3859, %v4027
      %v4308 = vsel %vm3892, %v3860, %v4036
      %v4309 = vsel %vm3893, %v3861, %v4045
      %v4310 = vsel %vm3894, %v3862, %v4054
      %v4311 = vsel %vm3895, %v3863, %v4063
      %v4312 = vsel %vm3896, %v3864, %v4072
      %v4313 = vsel %vm3897, %v3865, %v4081
      %v4314 = vsel %vm3898, %v3866, %v4090
      %v4315 = vsel %vm3899, %v3867, %v4099
      %v4316 = vsel %vm3900, %v3868, %v4108
      %v4317 = vsel %vm3901, %v3869, %v4117
      %v4318 = vsel %vm3902, %v3870, %v4126
      %v4319 = vsel %vm3903, %v3871, %v4135
      %v4320 = vsel %vm3904, %v3872, %v4144
      %v4321 = vsel %vm3905, %v3873, %v4153
      %v4322 = vsel %vm3906, %v3874, %v4162
      %v4323 = vsel %vm3907, %v3875, %v4171
      %v4324 = vsel %vm3908, %v3876, %v4180
      %v4325 = vsel %vm3909, %v3877, %v4189
      %v4326 = vsel %vm3910, %v3878, %v4198
      %v4327 = vsel %vm3911, %v3879, %v4207
      %v4328 = vsel %vm3912, %v3880, %v4216
      %v4329 = vsel %vm3913, %v3881, %v4225
      %v4330 = vsel %vm3914, %v3882, %v4234
      %v4331 = vsel %vm3915, %v3883, %v4243
      %v4332 = vsel %vm3916, %v3884, %v4252
      %v4333 = vsel %vm3917, %v3885, %v4261
      %v4334 = vsel %vm3918, %v3886, %v4270
      %v4335 = vsel %vm3919, %v3887, %v4279
      %v4336 = vsel %vm3920, %v3888, %v4288
      %v4337 = vsel %vm3921, %v3889, %v4297
      %v4338 = vsel %vm3922, %v3890, %v4306
      %v4339 = vpack.c.bf16 %v4308, %v4307
      %v4340 = vpack.c.bf16 %v4310, %v4309
      %v4341 = vpack.c.bf16 %v4312, %v4311
      %v4342 = vpack.c.bf16 %v4314, %v4313
      %v4343 = vpack.c.bf16 %v4316, %v4315
      %v4344 = vpack.c.bf16 %v4318, %v4317
      %v4345 = vpack.c.bf16 %v4320, %v4319
      %v4346 = vpack.c.bf16 %v4322, %v4321
      %v4347 = vpack.c.bf16 %v4324, %v4323
      %v4348 = vpack.c.bf16 %v4326, %v4325
      %v4349 = vpack.c.bf16 %v4328, %v4327
      %v4350 = vpack.c.bf16 %v4330, %v4329
      %v4351 = vpack.c.bf16 %v4332, %v4331
      %v4352 = vpack.c.bf16 %v4334, %v4333
      %v4353 = vpack.c.bf16 %v4336, %v4335
      %v4354 = vpack.c.bf16 %v4338, %v4337
      %v4371 = vunpack.c.l.b16 %v4339
      %v4372 = vunpack.c.h.b16 %v4339
      %v4373 = vunpack.c.l.b16 %v4340
      %v4374 = vunpack.c.h.b16 %v4340
      %v4375 = vunpack.c.l.b16 %v4341
      %v4376 = vunpack.c.h.b16 %v4341
      %v4377 = vunpack.c.l.b16 %v4342
      %v4378 = vunpack.c.h.b16 %v4342
      %v4379 = vunpack.c.l.b16 %v4343
      %v4380 = vunpack.c.h.b16 %v4343
      %v4381 = vunpack.c.l.b16 %v4344
      %v4382 = vunpack.c.h.b16 %v4344
      %v4383 = vunpack.c.l.b16 %v4345
      %v4384 = vunpack.c.h.b16 %v4345
      %v4385 = vunpack.c.l.b16 %v4346
      %v4386 = vunpack.c.h.b16 %v4346
      %v4387 = vunpack.c.l.b16 %v4347
      %v4388 = vunpack.c.h.b16 %v4347
      %v4389 = vunpack.c.l.b16 %v4348
      %v4390 = vunpack.c.h.b16 %v4348
      %v4391 = vunpack.c.l.b16 %v4349
      %v4392 = vunpack.c.h.b16 %v4349
      %v4393 = vunpack.c.l.b16 %v4350
      %v4394 = vunpack.c.h.b16 %v4350
      %v4395 = vunpack.c.l.b16 %v4351
      %v4396 = vunpack.c.h.b16 %v4351
      %v4397 = vunpack.c.l.b16 %v4352
      %v4398 = vunpack.c.h.b16 %v4352
      %v4399 = vunpack.c.l.b16 %v4353
      %v4400 = vunpack.c.h.b16 %v4353
      %v4401 = vunpack.c.l.b16 %v4354
      %v4402 = vunpack.c.h.b16 %v4354
      %v4403 = vpack.c.b16 %v4371, %v4371
      %v4404 = vpack.c.b16 %v4372, %v4372
      %v4405 = vpack.c.b16 %v4373, %v4373
      %v4406 = vpack.c.b16 %v4374, %v4374
      %v4407 = vpack.c.b16 %v4375, %v4375
      %v4408 = vpack.c.b16 %v4376, %v4376
      %v4409 = vpack.c.b16 %v4377, %v4377
      %v4410 = vpack.c.b16 %v4378, %v4378
      %v4411 = vpack.c.b16 %v4379, %v4379
      %v4412 = vpack.c.b16 %v4380, %v4380
      %v4413 = vpack.c.b16 %v4381, %v4381
      %v4414 = vpack.c.b16 %v4382, %v4382
      %v4415 = vpack.c.b16 %v4383, %v4383
      %v4416 = vpack.c.b16 %v4384, %v4384
      %v4417 = vpack.c.b16 %v4385, %v4385
      %v4418 = vpack.c.b16 %v4386, %v4386
      %v4419 = vpack.c.b16 %v4387, %v4387
      %v4420 = vpack.c.b16 %v4388, %v4388
      %v4421 = vpack.c.b16 %v4389, %v4389
      %v4422 = vpack.c.b16 %v4390, %v4390
      %v4423 = vpack.c.b16 %v4391, %v4391
      %v4424 = vpack.c.b16 %v4392, %v4392
      %v4425 = vpack.c.b16 %v4393, %v4393
      %v4426 = vpack.c.b16 %v4394, %v4394
      %v4427 = vpack.c.b16 %v4395, %v4395
      %v4428 = vpack.c.b16 %v4396, %v4396
      %v4429 = vpack.c.b16 %v4397, %v4397
      %v4430 = vpack.c.b16 %v4398, %v4398
      %v4431 = vpack.c.b16 %v4399, %v4399
      %v4432 = vpack.c.b16 %v4400, %v4400
      %v4433 = vpack.c.b16 %v4401, %v4401
      %v4434 = vpack.c.b16 %v4402, %v4402
      %vm4435 = vsmask.f32 4368
      %vm4436 = vmor %vm234, %vm4435
      %v4438 = vshrl.u32 %v4403, 16
      %v4440 = vrot.slane %v4438, 7
      %v4441 = vshll.u32 %v4403, 16
      %v4443 = vor.u32 %v4440, %v4441
      %v4444 = vrot.slane %v4440, 4
      %v4446 = vshrl.u32 %v4404, 16
      %v4448 = vrot.slane %v4446, 7
      %v4449 = vshll.u32 %v4404, 16
      %v4451 = vor.u32 %v4448, %v4449
      %v4452 = vsel %vm4436, %v4444, %v4451
      %v4453 = vrot.slane %v4448, 4
      %v4455 = vshrl.u32 %v4405, 16
      %v4457 = vrot.slane %v4455, 7
      %v4458 = vshll.u32 %v4405, 16
      %v4460 = vor.u32 %v4457, %v4458
      %v4461 = vrot.slane %v4457, 4
      %v4463 = vshrl.u32 %v4406, 16
      %v4465 = vrot.slane %v4463, 7
      %v4466 = vshll.u32 %v4406, 16
      %v4468 = vor.u32 %v4465, %v4466
      %v4469 = vsel %vm4436, %v4461, %v4468
      %v4470 = vrot.slane %v4465, 4
      %v4472 = vshrl.u32 %v4407, 16
      %v4474 = vrot.slane %v4472, 7
      %v4475 = vshll.u32 %v4407, 16
      %v4477 = vor.u32 %v4474, %v4475
      %v4478 = vrot.slane %v4474, 4
      %v4480 = vshrl.u32 %v4408, 16
      %v4482 = vrot.slane %v4480, 7
      %v4483 = vshll.u32 %v4408, 16
      %v4485 = vor.u32 %v4482, %v4483
      %v4486 = vsel %vm4436, %v4478, %v4485
      %v4487 = vrot.slane %v4482, 4
      %v4489 = vshrl.u32 %v4409, 16
      %v4491 = vrot.slane %v4489, 7
      %v4492 = vshll.u32 %v4409, 16
      %v4494 = vor.u32 %v4491, %v4492
      %v4495 = vrot.slane %v4491, 4
      %v4497 = vshrl.u32 %v4410, 16
      %v4499 = vrot.slane %v4497, 7
      %v4500 = vshll.u32 %v4410, 16
      %v4502 = vor.u32 %v4499, %v4500
      %v4503 = vsel %vm4436, %v4495, %v4502
      %v4504 = vrot.slane %v4499, 4
      %v4506 = vshrl.u32 %v4411, 16
      %v4508 = vrot.slane %v4506, 7
      %v4509 = vshll.u32 %v4411, 16
      %v4511 = vor.u32 %v4508, %v4509
      %v4512 = vrot.slane %v4508, 4
      %v4514 = vshrl.u32 %v4412, 16
      %v4516 = vrot.slane %v4514, 7
      %v4517 = vshll.u32 %v4412, 16
      %v4519 = vor.u32 %v4516, %v4517
      %v4520 = vsel %vm4436, %v4512, %v4519
      %v4521 = vrot.slane %v4516, 4
      %v4523 = vshrl.u32 %v4413, 16
      %v4525 = vrot.slane %v4523, 7
      %v4526 = vshll.u32 %v4413, 16
      %v4528 = vor.u32 %v4525, %v4526
      %v4529 = vrot.slane %v4525, 4
      %v4531 = vshrl.u32 %v4414, 16
      %v4533 = vrot.slane %v4531, 7
      %v4534 = vshll.u32 %v4414, 16
      %v4536 = vor.u32 %v4533, %v4534
      %v4537 = vsel %vm4436, %v4529, %v4536
      %v4538 = vrot.slane %v4533, 4
      %v4540 = vshrl.u32 %v4415, 16
      %v4542 = vrot.slane %v4540, 7
      %v4543 = vshll.u32 %v4415, 16
      %v4545 = vor.u32 %v4542, %v4543
      %v4546 = vrot.slane %v4542, 4
      %v4548 = vshrl.u32 %v4416, 16
      %v4550 = vrot.slane %v4548, 7
      %v4551 = vshll.u32 %v4416, 16
      %v4553 = vor.u32 %v4550, %v4551
      %v4554 = vsel %vm4436, %v4546, %v4553
      %v4555 = vrot.slane %v4550, 4
      %v4557 = vshrl.u32 %v4417, 16
      %v4559 = vrot.slane %v4557, 7
      %v4560 = vshll.u32 %v4417, 16
      %v4562 = vor.u32 %v4559, %v4560
      %v4563 = vrot.slane %v4559, 4
      %v4565 = vshrl.u32 %v4418, 16
      %v4567 = vrot.slane %v4565, 7
      %v4568 = vshll.u32 %v4418, 16
      %v4570 = vor.u32 %v4567, %v4568
      %v4571 = vsel %vm4436, %v4563, %v4570
      %v4572 = vrot.slane %v4567, 4
      %v4574 = vshrl.u32 %v4419, 16
      %v4576 = vrot.slane %v4574, 7
      %v4577 = vshll.u32 %v4419, 16
      %v4579 = vor.u32 %v4576, %v4577
      %v4580 = vrot.slane %v4576, 4
      %v4582 = vshrl.u32 %v4420, 16
      %v4584 = vrot.slane %v4582, 7
      %v4585 = vshll.u32 %v4420, 16
      %v4587 = vor.u32 %v4584, %v4585
      %v4588 = vsel %vm4436, %v4580, %v4587
      %v4589 = vrot.slane %v4584, 4
      %v4591 = vshrl.u32 %v4421, 16
      %v4593 = vrot.slane %v4591, 7
      %v4594 = vshll.u32 %v4421, 16
      %v4596 = vor.u32 %v4593, %v4594
      %v4597 = vrot.slane %v4593, 4
      %v4599 = vshrl.u32 %v4422, 16
      %v4601 = vrot.slane %v4599, 7
      %v4602 = vshll.u32 %v4422, 16
      %v4604 = vor.u32 %v4601, %v4602
      %v4605 = vsel %vm4436, %v4597, %v4604
      %v4606 = vrot.slane %v4601, 4
      %v4608 = vshrl.u32 %v4423, 16
      %v4610 = vrot.slane %v4608, 7
      %v4611 = vshll.u32 %v4423, 16
      %v4613 = vor.u32 %v4610, %v4611
      %v4614 = vrot.slane %v4610, 4
      %v4616 = vshrl.u32 %v4424, 16
      %v4618 = vrot.slane %v4616, 7
      %v4619 = vshll.u32 %v4424, 16
      %v4621 = vor.u32 %v4618, %v4619
      %v4622 = vsel %vm4436, %v4614, %v4621
      %v4623 = vrot.slane %v4618, 4
      %v4625 = vshrl.u32 %v4425, 16
      %v4627 = vrot.slane %v4625, 7
      %v4628 = vshll.u32 %v4425, 16
      %v4630 = vor.u32 %v4627, %v4628
      %v4631 = vrot.slane %v4627, 4
      %v4633 = vshrl.u32 %v4426, 16
      %v4635 = vrot.slane %v4633, 7
      %v4636 = vshll.u32 %v4426, 16
      %v4638 = vor.u32 %v4635, %v4636
      %v4639 = vsel %vm4436, %v4631, %v4638
      %v4640 = vrot.slane %v4635, 4
      %v4642 = vshrl.u32 %v4427, 16
      %v4644 = vrot.slane %v4642, 7
      %v4645 = vshll.u32 %v4427, 16
      %v4647 = vor.u32 %v4644, %v4645
      %v4648 = vrot.slane %v4644, 4
      %v4650 = vshrl.u32 %v4428, 16
      %v4652 = vrot.slane %v4650, 7
      %v4653 = vshll.u32 %v4428, 16
      %v4655 = vor.u32 %v4652, %v4653
      %v4656 = vsel %vm4436, %v4648, %v4655
      %v4657 = vrot.slane %v4652, 4
      %v4659 = vshrl.u32 %v4429, 16
      %v4661 = vrot.slane %v4659, 7
      %v4662 = vshll.u32 %v4429, 16
      %v4664 = vor.u32 %v4661, %v4662
      %v4665 = vrot.slane %v4661, 4
      %v4667 = vshrl.u32 %v4430, 16
      %v4669 = vrot.slane %v4667, 7
      %v4670 = vshll.u32 %v4430, 16
      %v4672 = vor.u32 %v4669, %v4670
      %v4673 = vsel %vm4436, %v4665, %v4672
      %v4674 = vrot.slane %v4669, 4
      %v4676 = vshrl.u32 %v4431, 16
      %v4678 = vrot.slane %v4676, 7
      %v4679 = vshll.u32 %v4431, 16
      %v4681 = vor.u32 %v4678, %v4679
      %v4682 = vrot.slane %v4678, 4
      %v4684 = vshrl.u32 %v4432, 16
      %v4686 = vrot.slane %v4684, 7
      %v4687 = vshll.u32 %v4432, 16
      %v4689 = vor.u32 %v4686, %v4687
      %v4690 = vsel %vm4436, %v4682, %v4689
      %v4691 = vrot.slane %v4686, 4
      %v4693 = vshrl.u32 %v4433, 16
      %v4695 = vrot.slane %v4693, 7
      %v4696 = vshll.u32 %v4433, 16
      %v4698 = vor.u32 %v4695, %v4696
      %v4699 = vrot.slane %v4695, 4
      %v4701 = vshrl.u32 %v4434, 16
      %v4703 = vrot.slane %v4701, 7
      %v4704 = vshll.u32 %v4434, 16
      %v4706 = vor.u32 %v4703, %v4704
      %v4707 = vsel %vm4436, %v4699, %v4706
      %v4708 = vrot.slane %v4703, 4
      %s4757 = scalar_lea.vmem [#allocation3], 12
      %vm4758 = vcmask 1043456
      %vm4759 = vmand %vm4758, %vm290
      %v4760 = vld [vmem:[%s4757] sm:$0xf]
      %v4761 = vsel %vm4759, %v4443, %v4760
      %4762 = vst [vmem:[%s4757] sm:$0xf] %v4761
      %4763 = vst [vmem:[%s4757 + $0x4] sm:$0xf] %v4452
      %v4764 = vld [vmem:[%s4757 + $0x8] sm:$0x1]
      %v4765 = vsel %vm235, %v4453, %v4764
      %4766 = vst [vmem:[%s4757 + $0x8] sm:$0x1] %v4765
      %v4767 = vld [vmem:[%s4757 + $0xc] sm:$0xf]
      %v4768 = vsel %vm4759, %v4460, %v4767
      %4769 = vst [vmem:[%s4757 + $0xc] sm:$0xf] %v4768
      %4770 = vst [vmem:[%s4757 + $0x10] sm:$0xf] %v4469
      %v4771 = vld [vmem:[%s4757 + $0x14] sm:$0x1]
      %v4772 = vsel %vm235, %v4470, %v4771
      %4773 = vst [vmem:[%s4757 + $0x14] sm:$0x1] %v4772
      %v4774 = vld [vmem:[%s4757 + $0x18] sm:$0xf]
      %v4775 = vsel %vm4759, %v4477, %v4774
      %4776 = vst [vmem:[%s4757 + $0x18] sm:$0xf] %v4775
      %4777 = vst [vmem:[%s4757 + $0x1c] sm:$0xf] %v4486
      %v4778 = vld [vmem:[%s4757 + $0x20] sm:$0x1]
      %v4779 = vsel %vm235, %v4487, %v4778
      %4780 = vst [vmem:[%s4757 + $0x20] sm:$0x1] %v4779
      %v4781 = vld [vmem:[%s4757 + $0x24] sm:$0xf]
      %v4782 = vsel %vm4759, %v4494, %v4781
      %4783 = vst [vmem:[%s4757 + $0x24] sm:$0xf] %v4782
      %4784 = vst [vmem:[%s4757 + $0x28] sm:$0xf] %v4503
      %v4785 = vld [vmem:[%s4757 + $0x2c] sm:$0x1]
      %v4786 = vsel %vm235, %v4504, %v4785
      %4787 = vst [vmem:[%s4757 + $0x2c] sm:$0x1] %v4786
      %v4788 = vld [vmem:[%s4757 + $0x30] sm:$0xf]
      %v4789 = vsel %vm4759, %v4511, %v4788
      %4790 = vst [vmem:[%s4757 + $0x30] sm:$0xf] %v4789
      %4791 = vst [vmem:[%s4757 + $0x34] sm:$0xf] %v4520
      %v4792 = vld [vmem:[%s4757 + $0x38] sm:$0x1]
      %v4793 = vsel %vm235, %v4521, %v4792
      %4794 = vst [vmem:[%s4757 + $0x38] sm:$0x1] %v4793
      %v4795 = vld [vmem:[%s4757 + $0x3c] sm:$0xf]
      %v4796 = vsel %vm4759, %v4528, %v4795
      %4797 = vst [vmem:[%s4757 + $0x3c] sm:$0xf] %v4796
      %4798 = vst [vmem:[%s4757 + $0x40] sm:$0xf] %v4537
      %v4799 = vld [vmem:[%s4757 + $0x44] sm:$0x1]
      %v4800 = vsel %vm235, %v4538, %v4799
      %4801 = vst [vmem:[%s4757 + $0x44] sm:$0x1] %v4800
      %v4802 = vld [vmem:[%s4757 + $0x48] sm:$0xf]
      %v4803 = vsel %vm4759, %v4545, %v4802
      %4804 = vst [vmem:[%s4757 + $0x48] sm:$0xf] %v4803
      %4805 = vst [vmem:[%s4757 + $0x4c] sm:$0xf] %v4554
      %v4806 = vld [vmem:[%s4757 + $0x50] sm:$0x1]
      %v4807 = vsel %vm235, %v4555, %v4806
      %4808 = vst [vmem:[%s4757 + $0x50] sm:$0x1] %v4807
      %v4809 = vld [vmem:[%s4757 + $0x54] sm:$0xf]
      %v4810 = vsel %vm4759, %v4562, %v4809
      %4811 = vst [vmem:[%s4757 + $0x54] sm:$0xf] %v4810
      %4812 = vst [vmem:[%s4757 + $0x58] sm:$0xf] %v4571
      %v4813 = vld [vmem:[%s4757 + $0x5c] sm:$0x1]
      %v4814 = vsel %vm235, %v4572, %v4813
      %4815 = vst [vmem:[%s4757 + $0x5c] sm:$0x1] %v4814
      %v4816 = vld [vmem:[%s4757 + $0x60] sm:$0xf]
      %v4817 = vsel %vm4759, %v4579, %v4816
      %4818 = vst [vmem:[%s4757 + $0x60] sm:$0xf] %v4817
      %4819 = vst [vmem:[%s4757 + $0x64] sm:$0xf] %v4588
      %v4820 = vld [vmem:[%s4757 + $0x68] sm:$0x1]
      %v4821 = vsel %vm235, %v4589, %v4820
      %4822 = vst [vmem:[%s4757 + $0x68] sm:$0x1] %v4821
      %v4823 = vld [vmem:[%s4757 + $0x6c] sm:$0xf]
      %v4824 = vsel %vm4759, %v4596, %v4823
      %4825 = vst [vmem:[%s4757 + $0x6c] sm:$0xf] %v4824
      %4826 = vst [vmem:[%s4757 + $0x70] sm:$0xf] %v4605
      %v4827 = vld [vmem:[%s4757 + $0x74] sm:$0x1]
      %v4828 = vsel %vm235, %v4606, %v4827
      %4829 = vst [vmem:[%s4757 + $0x74] sm:$0x1] %v4828
      %v4830 = vld [vmem:[%s4757 + $0x78] sm:$0xf]
      %v4831 = vsel %vm4759, %v4613, %v4830
      %4832 = vst [vmem:[%s4757 + $0x78] sm:$0xf] %v4831
      %4833 = vst [vmem:[%s4757 + $0x7c] sm:$0xf] %v4622
      %v4834 = vld [vmem:[%s4757 + $0x80] sm:$0x1]
      %v4835 = vsel %vm235, %v4623, %v4834
      %4836 = vst [vmem:[%s4757 + $0x80] sm:$0x1] %v4835
      %v4837 = vld [vmem:[%s4757 + $0x84] sm:$0xf]
      %v4838 = vsel %vm4759, %v4630, %v4837
      %4839 = vst [vmem:[%s4757 + $0x84] sm:$0xf] %v4838
      %4840 = vst [vmem:[%s4757 + $0x88] sm:$0xf] %v4639
      %v4841 = vld [vmem:[%s4757 + $0x8c] sm:$0x1]
      %v4842 = vsel %vm235, %v4640, %v4841
      %4843 = vst [vmem:[%s4757 + $0x8c] sm:$0x1] %v4842
      %v4844 = vld [vmem:[%s4757 + $0x90] sm:$0xf]
      %v4845 = vsel %vm4759, %v4647, %v4844
      %4846 = vst [vmem:[%s4757 + $0x90] sm:$0xf] %v4845
      %4847 = vst [vmem:[%s4757 + $0x94] sm:$0xf] %v4656
      %v4848 = vld [vmem:[%s4757 + $0x98] sm:$0x1]
      %v4849 = vsel %vm235, %v4657, %v4848
      %4850 = vst [vmem:[%s4757 + $0x98] sm:$0x1] %v4849
      %v4851 = vld [vmem:[%s4757 + $0x9c] sm:$0xf]
      %v4852 = vsel %vm4759, %v4664, %v4851
      %4853 = vst [vmem:[%s4757 + $0x9c] sm:$0xf] %v4852
      %4854 = vst [vmem:[%s4757 + $0xa0] sm:$0xf] %v4673
      %v4855 = vld [vmem:[%s4757 + $0xa4] sm:$0x1]
      %v4856 = vsel %vm235, %v4674, %v4855
      %4857 = vst [vmem:[%s4757 + $0xa4] sm:$0x1] %v4856
      %v4858 = vld [vmem:[%s4757 + $0xa8] sm:$0xf]
      %v4859 = vsel %vm4759, %v4681, %v4858
      %4860 = vst [vmem:[%s4757 + $0xa8] sm:$0xf] %v4859
      %4861 = vst [vmem:[%s4757 + $0xac] sm:$0xf] %v4690
      %v4862 = vld [vmem:[%s4757 + $0xb0] sm:$0x1]
      %v4863 = vsel %vm235, %v4691, %v4862
      %4864 = vst [vmem:[%s4757 + $0xb0] sm:$0x1] %v4863
      %v4865 = vld [vmem:[%s4757 + $0xb4] sm:$0xf]
      %v4866 = vsel %vm4759, %v4698, %v4865
      %4867 = vst [vmem:[%s4757 + $0xb4] sm:$0xf] %v4866
      %4868 = vst [vmem:[%s4757 + $0xb8] sm:$0xf] %v4707
      %v4869 = vld [vmem:[%s4757 + $0xbc] sm:$0x1]
      %v4870 = vsel %vm235, %v4708, %v4869
      %4871 = vst [vmem:[%s4757 + $0xbc] sm:$0x1] %v4870
      %v4872 = vld [vmem:[#allocation3] sm:$0xf]
      %v4873 = vld [vmem:[#allocation3 + $0x4] sm:$0xf]
      %v4874 = vld [vmem:[#allocation3 + $0xc] sm:$0xf]
      %v4875 = vld [vmem:[#allocation3 + $0x10] sm:$0xf]
      %v4876 = vld [vmem:[#allocation3 + $0x18] sm:$0xf]
      %v4877 = vld [vmem:[#allocation3 + $0x1c] sm:$0xf]
      %v4878 = vld [vmem:[#allocation3 + $0x24] sm:$0xf]
      %v4879 = vld [vmem:[#allocation3 + $0x28] sm:$0xf]
      %v4880 = vld [vmem:[#allocation3 + $0x30] sm:$0xf]
      %v4881 = vld [vmem:[#allocation3 + $0x34] sm:$0xf]
      %v4882 = vld [vmem:[#allocation3 + $0x3c] sm:$0xf]
      %v4883 = vld [vmem:[#allocation3 + $0x40] sm:$0xf]
      %v4884 = vld [vmem:[#allocation3 + $0x48] sm:$0xf]
      %v4885 = vld [vmem:[#allocation3 + $0x4c] sm:$0xf]
      %v4886 = vld [vmem:[#allocation3 + $0x54] sm:$0xf]
      %v4887 = vld [vmem:[#allocation3 + $0x58] sm:$0xf]
      %v4888 = vld [vmem:[#allocation3 + $0x60] sm:$0xf]
      %v4889 = vld [vmem:[#allocation3 + $0x64] sm:$0xf]
      %v4890 = vld [vmem:[#allocation3 + $0x6c] sm:$0xf]
      %v4891 = vld [vmem:[#allocation3 + $0x70] sm:$0xf]
      %v4892 = vld [vmem:[#allocation3 + $0x78] sm:$0xf]
      %v4893 = vld [vmem:[#allocation3 + $0x7c] sm:$0xf]
      %v4894 = vld [vmem:[#allocation3 + $0x84] sm:$0xf]
      %v4895 = vld [vmem:[#allocation3 + $0x88] sm:$0xf]
      %v4896 = vld [vmem:[#allocation3 + $0x90] sm:$0xf]
      %v4897 = vld [vmem:[#allocation3 + $0x94] sm:$0xf]
      %v4898 = vld [vmem:[#allocation3 + $0x9c] sm:$0xf]
      %v4899 = vld [vmem:[#allocation3 + $0xa0] sm:$0xf]
      %v4900 = vld [vmem:[#allocation3 + $0xa8] sm:$0xf]
      %v4901 = vld [vmem:[#allocation3 + $0xac] sm:$0xf]
      %v4902 = vld [vmem:[#allocation3 + $0xb4] sm:$0xf]
      %v4903 = vld [vmem:[#allocation3 + $0xb8] sm:$0xf]
      %v4904 = vld [vmem:[#allocation3 + $0xc0] sm:$0xf]
      %v4905 = vld [vmem:[#allocation3 + $0xc4] sm:$0xf]
      %v4906 = vld [vmem:[#allocation3 + $0xcc] sm:$0xf]
      %v4907 = vld [vmem:[#allocation3 + $0xd0] sm:$0xf]
      %v4944 = vunpack.c.l.b16 %v4872
      %v4945 = vunpack.c.l.b16 %v4873
      %v4946 = vunpack.c.l.b16 %v4874
      %v4947 = vunpack.c.l.b16 %v4875
      %v4948 = vunpack.c.l.b16 %v4876
      %v4949 = vunpack.c.l.b16 %v4877
      %v4950 = vunpack.c.l.b16 %v4878
      %v4951 = vunpack.c.l.b16 %v4879
      %v4952 = vunpack.c.l.b16 %v4880
      %v4953 = vunpack.c.l.b16 %v4881
      %v4954 = vunpack.c.l.b16 %v4882
      %v4955 = vunpack.c.l.b16 %v4883
      %v4956 = vunpack.c.l.b16 %v4884
      %v4957 = vunpack.c.l.b16 %v4885
      %v4958 = vunpack.c.l.b16 %v4886
      %v4959 = vunpack.c.l.b16 %v4887
      %v4960 = vunpack.c.l.b16 %v4888
      %v4961 = vunpack.c.l.b16 %v4889
      %v4962 = vunpack.c.l.b16 %v4890
      %v4963 = vunpack.c.l.b16 %v4891
      %v4964 = vunpack.c.l.b16 %v4892
      %v4965 = vunpack.c.l.b16 %v4893
      %v4966 = vunpack.c.l.b16 %v4894
      %v4967 = vunpack.c.l.b16 %v4895
      %v4968 = vunpack.c.l.b16 %v4896
      %v4969 = vunpack.c.l.b16 %v4897
      %v4970 = vunpack.c.l.b16 %v4898
      %v4971 = vunpack.c.l.b16 %v4899
      %v4972 = vunpack.c.l.b16 %v4900
      %v4973 = vunpack.c.l.b16 %v4901
      %v4974 = vunpack.c.l.b16 %v4902
      %v4975 = vunpack.c.l.b16 %v4903
      %v4976 = vunpack.c.l.b16 %v4904
      %v4977 = vunpack.c.l.b16 %v4905
      %v4978 = vunpack.c.l.b16 %v4906
      %v4979 = vunpack.c.l.b16 %v4907
      %v4980 = vpack.c.b16 %v4945, %v4944
      %v4981 = vpack.c.b16 %v4947, %v4946
      %v4982 = vpack.c.b16 %v4949, %v4948
      %v4983 = vpack.c.b16 %v4951, %v4950
      %v4984 = vpack.c.b16 %v4953, %v4952
      %v4985 = vpack.c.b16 %v4955, %v4954
      %v4986 = vpack.c.b16 %v4957, %v4956
      %v4987 = vpack.c.b16 %v4959, %v4958
      %v4988 = vpack.c.b16 %v4961, %v4960
      %v4989 = vpack.c.b16 %v4963, %v4962
      %v4990 = vpack.c.b16 %v4965, %v4964
      %v4991 = vpack.c.b16 %v4967, %v4966
      %v4992 = vpack.c.b16 %v4969, %v4968
      %v4993 = vpack.c.b16 %v4971, %v4970
      %v4994 = vpack.c.b16 %v4973, %v4972
      %v4995 = vpack.c.b16 %v4975, %v4974
      %v4996 = vpack.c.b16 %v4977, %v4976
      %v4997 = vpack.c.b16 %v4979, %v4978
      %5016 = vst [vmem:[#allocation2] sm:$0xff] %v4980
      %5017 = vst [vmem:[#allocation2 + $0x8] sm:$0xff] %v4981
      %5018 = vst [vmem:[#allocation2 + $0x10] sm:$0xff] %v4982
      %5019 = vst [vmem:[#allocation2 + $0x18] sm:$0xff] %v4983
      %5020 = vst [vmem:[#allocation2 + $0x20] sm:$0xff] %v4984
      %5021 = vst [vmem:[#allocation2 + $0x28] sm:$0xff] %v4985
      %5022 = vst [vmem:[#allocation2 + $0x30] sm:$0xff] %v4986
      %5023 = vst [vmem:[#allocation2 + $0x38] sm:$0xff] %v4987
      %5024 = vst [vmem:[#allocation2 + $0x40] sm:$0xff] %v4988
      %5025 = vst [vmem:[#allocation2 + $0x48] sm:$0xff] %v4989
      %5026 = vst [vmem:[#allocation2 + $0x50] sm:$0xff] %v4990
      %5027 = vst [vmem:[#allocation2 + $0x58] sm:$0xff] %v4991
      %5028 = vst [vmem:[#allocation2 + $0x60] sm:$0xff] %v4992
      %5029 = vst [vmem:[#allocation2 + $0x68] sm:$0xff] %v4993
      %5030 = vst [vmem:[#allocation2 + $0x70] sm:$0xff] %v4994
      %5031 = vst [vmem:[#allocation2 + $0x78] sm:$0xff] %v4995
      %5032 = vst [vmem:[#allocation2 + $0x80] sm:$0xff] %v4996
      %5033 = vst [vmem:[#allocation2 + $0x88] sm:$0xff] %v4997
      %v5034 = vld [vmem:[#allocation3] sm:$0xf]
      %v5035 = vld [vmem:[#allocation3 + $0x4] sm:$0xf]
      %v5036 = vld [vmem:[#allocation3 + $0x8] sm:$0x1]
      %v5037 = vld [vmem:[#allocation3 + $0xc] sm:$0xf]
      %v5038 = vld [vmem:[#allocation3 + $0x10] sm:$0xf]
      %v5039 = vld [vmem:[#allocation3 + $0x14] sm:$0x1]
      %v5040 = vld [vmem:[#allocation3 + $0x18] sm:$0xf]
      %v5041 = vld [vmem:[#allocation3 + $0x1c] sm:$0xf]
      %v5042 = vld [vmem:[#allocation3 + $0x20] sm:$0x1]
      %v5043 = vld [vmem:[#allocation3 + $0x24] sm:$0xf]
      %v5044 = vld [vmem:[#allocation3 + $0x28] sm:$0xf]
      %v5045 = vld [vmem:[#allocation3 + $0x2c] sm:$0x1]
      %v5046 = vld [vmem:[#allocation3 + $0x30] sm:$0xf]
      %v5047 = vld [vmem:[#allocation3 + $0x34] sm:$0xf]
      %v5048 = vld [vmem:[#allocation3 + $0x38] sm:$0x1]
      %v5049 = vld [vmem:[#allocation3 + $0x3c] sm:$0xf]
      %v5050 = vld [vmem:[#allocation3 + $0x40] sm:$0xf]
      %v5051 = vld [vmem:[#allocation3 + $0x44] sm:$0x1]
      %v5052 = vld [vmem:[#allocation3 + $0x48] sm:$0xf]
      %v5053 = vld [vmem:[#allocation3 + $0x4c] sm:$0xf]
      %v5054 = vld [vmem:[#allocation3 + $0x50] sm:$0x1]
      %v5055 = vld [vmem:[#allocation3 + $0x54] sm:$0xf]
      %v5056 = vld [vmem:[#allocation3 + $0x58] sm:$0xf]
      %v5057 = vld [vmem:[#allocation3 + $0x5c] sm:$0x1]
      %v5058 = vld [vmem:[#allocation3 + $0x60] sm:$0xf]
      %v5059 = vld [vmem:[#allocation3 + $0x64] sm:$0xf]
      %v5060 = vld [vmem:[#allocation3 + $0x68] sm:$0x1]
      %v5061 = vld [vmem:[#allocation3 + $0x6c] sm:$0xf]
      %v5062 = vld [vmem:[#allocation3 + $0x70] sm:$0xf]
      %v5063 = vld [vmem:[#allocation3 + $0x74] sm:$0x1]
      %v5064 = vld [vmem:[#allocation3 + $0x78] sm:$0xf]
      %v5065 = vld [vmem:[#allocation3 + $0x7c] sm:$0xf]
      %v5066 = vld [vmem:[#allocation3 + $0x80] sm:$0x1]
      %v5067 = vld [vmem:[#allocation3 + $0x84] sm:$0xf]
      %v5068 = vld [vmem:[#allocation3 + $0x88] sm:$0xf]
      %v5069 = vld [vmem:[#allocation3 + $0x8c] sm:$0x1]
      %v5070 = vld [vmem:[#allocation3 + $0x90] sm:$0xf]
      %v5071 = vld [vmem:[#allocation3 + $0x94] sm:$0xf]
      %v5072 = vld [vmem:[#allocation3 + $0x98] sm:$0x1]
      %v5073 = vld [vmem:[#allocation3 + $0x9c] sm:$0xf]
      %v5074 = vld [vmem:[#allocation3 + $0xa0] sm:$0xf]
      %v5075 = vld [vmem:[#allocation3 + $0xa4] sm:$0x1]
      %v5076 = vld [vmem:[#allocation3 + $0xa8] sm:$0xf]
      %v5077 = vld [vmem:[#allocation3 + $0xac] sm:$0xf]
      %v5078 = vld [vmem:[#allocation3 + $0xb0] sm:$0x1]
      %v5079 = vld [vmem:[#allocation3 + $0xb4] sm:$0xf]
      %v5080 = vld [vmem:[#allocation3 + $0xb8] sm:$0xf]
      %v5081 = vld [vmem:[#allocation3 + $0xbc] sm:$0x1]
      %v5082 = vld [vmem:[#allocation3 + $0xc0] sm:$0xf]
      %v5083 = vld [vmem:[#allocation3 + $0xc4] sm:$0xf]
      %v5084 = vld [vmem:[#allocation3 + $0xc8] sm:$0x1]
      %v5085 = vld [vmem:[#allocation3 + $0xcc] sm:$0xf]
      %v5086 = vld [vmem:[#allocation3 + $0xd0] sm:$0xf]
      %v5087 = vld [vmem:[#allocation3 + $0xd4] sm:$0x1]
      %v5089 = vshrl.u32 %v5034, 16
      %v5091 = vrot.slane %v5089, 4
      %v5092 = vshll.u32 %v5034, 16
      %v5094 = vrot.slane %v5092, 5
      %v5095 = vor.u32 %v5091, %v5094
      %v5096 = vrot.slane %v5095, 4
      %v5098 = vshll.u32 %v5035, 16
      %v5100 = vrot.slane %v5098, 5
      %v5101 = vsel %vm564, %v5096, %v5100
      %v5102 = vshrl.u32 %v5035, 16
      %v5104 = vrot.slane %v5102, 4
      %v5105 = vor.u32 %v5104, %v5100
      %v5106 = vrot.slane %v5105, 4
      %v5108 = vshll.u32 %v5036, 16
      %v5110 = vrot.slane %v5108, 5
      %v5111 = vsel %vm564, %v5106, %v5110
      %v5113 = vshrl.u32 %v5037, 16
      %v5115 = vrot.slane %v5113, 4
      %v5116 = vshll.u32 %v5037, 16
      %v5118 = vrot.slane %v5116, 5
      %v5119 = vor.u32 %v5115, %v5118
      %v5120 = vrot.slane %v5119, 4
      %v5122 = vshll.u32 %v5038, 16
      %v5124 = vrot.slane %v5122, 5
      %v5125 = vsel %vm564, %v5120, %v5124
      %v5126 = vshrl.u32 %v5038, 16
      %v5128 = vrot.slane %v5126, 4
      %v5129 = vor.u32 %v5128, %v5124
      %v5130 = vrot.slane %v5129, 4
      %v5132 = vshll.u32 %v5039, 16
      %v5134 = vrot.slane %v5132, 5
      %v5135 = vsel %vm564, %v5130, %v5134
      %v5137 = vshrl.u32 %v5040, 16
      %v5139 = vrot.slane %v5137, 4
      %v5140 = vshll.u32 %v5040, 16
      %v5142 = vrot.slane %v5140, 5
      %v5143 = vor.u32 %v5139, %v5142
      %v5144 = vrot.slane %v5143, 4
      %v5146 = vshll.u32 %v5041, 16
      %v5148 = vrot.slane %v5146, 5
      %v5149 = vsel %vm564, %v5144, %v5148
      %v5150 = vshrl.u32 %v5041, 16
      %v5152 = vrot.slane %v5150, 4
      %v5153 = vor.u32 %v5152, %v5148
      %v5154 = vrot.slane %v5153, 4
      %v5156 = vshll.u32 %v5042, 16
      %v5158 = vrot.slane %v5156, 5
      %v5159 = vsel %vm564, %v5154, %v5158
      %v5161 = vshrl.u32 %v5043, 16
      %v5163 = vrot.slane %v5161, 4
      %v5164 = vshll.u32 %v5043, 16
      %v5166 = vrot.slane %v5164, 5
      %v5167 = vor.u32 %v5163, %v5166
      %v5168 = vrot.slane %v5167, 4
      %v5170 = vshll.u32 %v5044, 16
      %v5172 = vrot.slane %v5170, 5
      %v5173 = vsel %vm564, %v5168, %v5172
      %v5174 = vshrl.u32 %v5044, 16
      %v5176 = vrot.slane %v5174, 4
      %v5177 = vor.u32 %v5176, %v5172
      %v5178 = vrot.slane %v5177, 4
      %v5180 = vshll.u32 %v5045, 16
      %v5182 = vrot.slane %v5180, 5
      %v5183 = vsel %vm564, %v5178, %v5182
      %v5185 = vshrl.u32 %v5046, 16
      %v5187 = vrot.slane %v5185, 4
      %v5188 = vshll.u32 %v5046, 16
      %v5190 = vrot.slane %v5188, 5
      %v5191 = vor.u32 %v5187, %v5190
      %v5192 = vrot.slane %v5191, 4
      %v5194 = vshll.u32 %v5047, 16
      %v5196 = vrot.slane %v5194, 5
      %v5197 = vsel %vm564, %v5192, %v5196
      %v5198 = vshrl.u32 %v5047, 16
      %v5200 = vrot.slane %v5198, 4
      %v5201 = vor.u32 %v5200, %v5196
      %v5202 = vrot.slane %v5201, 4
      %v5204 = vshll.u32 %v5048, 16
      %v5206 = vrot.slane %v5204, 5
      %v5207 = vsel %vm564, %v5202, %v5206
      %v5209 = vshrl.u32 %v5049, 16
      %v5211 = vrot.slane %v5209, 4
      %v5212 = vshll.u32 %v5049, 16
      %v5214 = vrot.slane %v5212, 5
      %v5215 = vor.u32 %v5211, %v5214
      %v5216 = vrot.slane %v5215, 4
      %v5218 = vshll.u32 %v5050, 16
      %v5220 = vrot.slane %v5218, 5
      %v5221 = vsel %vm564, %v5216, %v5220
      %v5222 = vshrl.u32 %v5050, 16
      %v5224 = vrot.slane %v5222, 4
      %v5225 = vor.u32 %v5224, %v5220
      %v5226 = vrot.slane %v5225, 4
      %v5228 = vshll.u32 %v5051, 16
      %v5230 = vrot.slane %v5228, 5
      %v5231 = vsel %vm564, %v5226, %v5230
      %v5233 = vshrl.u32 %v5052, 16
      %v5235 = vrot.slane %v5233, 4
      %v5236 = vshll.u32 %v5052, 16
      %v5238 = vrot.slane %v5236, 5
      %v5239 = vor.u32 %v5235, %v5238
      %v5240 = vrot.slane %v5239, 4
      %v5242 = vshll.u32 %v5053, 16
      %v5244 = vrot.slane %v5242, 5
      %v5245 = vsel %vm564, %v5240, %v5244
      %v5246 = vshrl.u32 %v5053, 16
      %v5248 = vrot.slane %v5246, 4
      %v5249 = vor.u32 %v5248, %v5244
      %v5250 = vrot.slane %v5249, 4
      %v5252 = vshll.u32 %v5054, 16
      %v5254 = vrot.slane %v5252, 5
      %v5255 = vsel %vm564, %v5250, %v5254
      %v5257 = vshrl.u32 %v5055, 16
      %v5259 = vrot.slane %v5257, 4
      %v5260 = vshll.u32 %v5055, 16
      %v5262 = vrot.slane %v5260, 5
      %v5263 = vor.u32 %v5259, %v5262
      %v5264 = vrot.slane %v5263, 4
      %v5266 = vshll.u32 %v5056, 16
      %v5268 = vrot.slane %v5266, 5
      %v5269 = vsel %vm564, %v5264, %v5268
      %v5270 = vshrl.u32 %v5056, 16
      %v5272 = vrot.slane %v5270, 4
      %v5273 = vor.u32 %v5272, %v5268
      %v5274 = vrot.slane %v5273, 4
      %v5276 = vshll.u32 %v5057, 16
      %v5278 = vrot.slane %v5276, 5
      %v5279 = vsel %vm564, %v5274, %v5278
      %v5281 = vshrl.u32 %v5058, 16
      %v5283 = vrot.slane %v5281, 4
      %v5284 = vshll.u32 %v5058, 16
      %v5286 = vrot.slane %v5284, 5
      %v5287 = vor.u32 %v5283, %v5286
      %v5288 = vrot.slane %v5287, 4
      %v5290 = vshll.u32 %v5059, 16
      %v5292 = vrot.slane %v5290, 5
      %v5293 = vsel %vm564, %v5288, %v5292
      %v5294 = vshrl.u32 %v5059, 16
      %v5296 = vrot.slane %v5294, 4
      %v5297 = vor.u32 %v5296, %v5292
      %v5298 = vrot.slane %v5297, 4
      %v5300 = vshll.u32 %v5060, 16
      %v5302 = vrot.slane %v5300, 5
      %v5303 = vsel %vm564, %v5298, %v5302
      %v5305 = vshrl.u32 %v5061, 16
      %v5307 = vrot.slane %v5305, 4
      %v5308 = vshll.u32 %v5061, 16
      %v5310 = vrot.slane %v5308, 5
      %v5311 = vor.u32 %v5307, %v5310
      %v5312 = vrot.slane %v5311, 4
      %v5314 = vshll.u32 %v5062, 16
      %v5316 = vrot.slane %v5314, 5
      %v5317 = vsel %vm564, %v5312, %v5316
      %v5318 = vshrl.u32 %v5062, 16
      %v5320 = vrot.slane %v5318, 4
      %v5321 = vor.u32 %v5320, %v5316
      %v5322 = vrot.slane %v5321, 4
      %v5324 = vshll.u32 %v5063, 16
      %v5326 = vrot.slane %v5324, 5
      %v5327 = vsel %vm564, %v5322, %v5326
      %v5329 = vshrl.u32 %v5064, 16
      %v5331 = vrot.slane %v5329, 4
      %v5332 = vshll.u32 %v5064, 16
      %v5334 = vrot.slane %v5332, 5
      %v5335 = vor.u32 %v5331, %v5334
      %v5336 = vrot.slane %v5335, 4
      %v5338 = vshll.u32 %v5065, 16
      %v5340 = vrot.slane %v5338, 5
      %v5341 = vsel %vm564, %v5336, %v5340
      %v5342 = vshrl.u32 %v5065, 16
      %v5344 = vrot.slane %v5342, 4
      %v5345 = vor.u32 %v5344, %v5340
      %v5346 = vrot.slane %v5345, 4
      %v5348 = vshll.u32 %v5066, 16
      %v5350 = vrot.slane %v5348, 5
      %v5351 = vsel %vm564, %v5346, %v5350
      %v5353 = vshrl.u32 %v5067, 16
      %v5355 = vrot.slane %v5353, 4
      %v5356 = vshll.u32 %v5067, 16
      %v5358 = vrot.slane %v5356, 5
      %v5359 = vor.u32 %v5355, %v5358
      %v5360 = vrot.slane %v5359, 4
      %v5362 = vshll.u32 %v5068, 16
      %v5364 = vrot.slane %v5362, 5
      %v5365 = vsel %vm564, %v5360, %v5364
      %v5366 = vshrl.u32 %v5068, 16
      %v5368 = vrot.slane %v5366, 4
      %v5369 = vor.u32 %v5368, %v5364
      %v5370 = vrot.slane %v5369, 4
      %v5372 = vshll.u32 %v5069, 16
      %v5374 = vrot.slane %v5372, 5
      %v5375 = vsel %vm564, %v5370, %v5374
      %v5377 = vshrl.u32 %v5070, 16
      %v5379 = vrot.slane %v5377, 4
      %v5380 = vshll.u32 %v5070, 16
      %v5382 = vrot.slane %v5380, 5
      %v5383 = vor.u32 %v5379, %v5382
      %v5384 = vrot.slane %v5383, 4
      %v5386 = vshll.u32 %v5071, 16
      %v5388 = vrot.slane %v5386, 5
      %v5389 = vsel %vm564, %v5384, %v5388
      %v5390 = vshrl.u32 %v5071, 16
      %v5392 = vrot.slane %v5390, 4
      %v5393 = vor.u32 %v5392, %v5388
      %v5394 = vrot.slane %v5393, 4
      %v5396 = vshll.u32 %v5072, 16
      %v5398 = vrot.slane %v5396, 5
      %v5399 = vsel %vm564, %v5394, %v5398
      %v5401 = vshrl.u32 %v5073, 16
      %v5403 = vrot.slane %v5401, 4
      %v5404 = vshll.u32 %v5073, 16
      %v5406 = vrot.slane %v5404, 5
      %v5407 = vor.u32 %v5403, %v5406
      %v5408 = vrot.slane %v5407, 4
      %v5410 = vshll.u32 %v5074, 16
      %v5412 = vrot.slane %v5410, 5
      %v5413 = vsel %vm564, %v5408, %v5412
      %v5414 = vshrl.u32 %v5074, 16
      %v5416 = vrot.slane %v5414, 4
      %v5417 = vor.u32 %v5416, %v5412
      %v5418 = vrot.slane %v5417, 4
      %v5420 = vshll.u32 %v5075, 16
      %v5422 = vrot.slane %v5420, 5
      %v5423 = vsel %vm564, %v5418, %v5422
      %v5425 = vshrl.u32 %v5076, 16
      %v5427 = vrot.slane %v5425, 4
      %v5428 = vshll.u32 %v5076, 16
      %v5430 = vrot.slane %v5428, 5
      %v5431 = vor.u32 %v5427, %v5430
      %v5432 = vrot.slane %v5431, 4
      %v5434 = vshll.u32 %v5077, 16
      %v5436 = vrot.slane %v5434, 5
      %v5437 = vsel %vm564, %v5432, %v5436
      %v5438 = vshrl.u32 %v5077, 16
      %v5440 = vrot.slane %v5438, 4
      %v5441 = vor.u32 %v5440, %v5436
      %v5442 = vrot.slane %v5441, 4
      %v5444 = vshll.u32 %v5078, 16
      %v5446 = vrot.slane %v5444, 5
      %v5447 = vsel %vm564, %v5442, %v5446
      %v5449 = vshrl.u32 %v5079, 16
      %v5451 = vrot.slane %v5449, 4
      %v5452 = vshll.u32 %v5079, 16
      %v5454 = vrot.slane %v5452, 5
      %v5455 = vor.u32 %v5451, %v5454
      %v5456 = vrot.slane %v5455, 4
      %v5458 = vshll.u32 %v5080, 16
      %v5460 = vrot.slane %v5458, 5
      %v5461 = vsel %vm564, %v5456, %v5460
      %v5462 = vshrl.u32 %v5080, 16
      %v5464 = vrot.slane %v5462, 4
      %v5465 = vor.u32 %v5464, %v5460
      %v5466 = vrot.slane %v5465, 4
      %v5468 = vshll.u32 %v5081, 16
      %v5470 = vrot.slane %v5468, 5
      %v5471 = vsel %vm564, %v5466, %v5470
      %v5473 = vshrl.u32 %v5082, 16
      %v5475 = vrot.slane %v5473, 4
      %v5476 = vshll.u32 %v5082, 16
      %v5478 = vrot.slane %v5476, 5
      %v5479 = vor.u32 %v5475, %v5478
      %v5480 = vrot.slane %v5479, 4
      %v5482 = vshll.u32 %v5083, 16
      %v5484 = vrot.slane %v5482, 5
      %v5485 = vsel %vm564, %v5480, %v5484
      %v5486 = vshrl.u32 %v5083, 16
      %v5488 = vrot.slane %v5486, 4
      %v5489 = vor.u32 %v5488, %v5484
      %v5490 = vrot.slane %v5489, 4
      %v5492 = vshll.u32 %v5084, 16
      %v5494 = vrot.slane %v5492, 5
      %v5495 = vsel %vm564, %v5490, %v5494
      %v5497 = vshrl.u32 %v5085, 16
      %v5499 = vrot.slane %v5497, 4
      %v5500 = vshll.u32 %v5085, 16
      %v5502 = vrot.slane %v5500, 5
      %v5503 = vor.u32 %v5499, %v5502
      %v5504 = vrot.slane %v5503, 4
      %v5506 = vshll.u32 %v5086, 16
      %v5508 = vrot.slane %v5506, 5
      %v5509 = vsel %vm564, %v5504, %v5508
      %v5510 = vshrl.u32 %v5086, 16
      %v5512 = vrot.slane %v5510, 4
      %v5513 = vor.u32 %v5512, %v5508
      %v5514 = vrot.slane %v5513, 4
      %v5516 = vshll.u32 %v5087, 16
      %v5518 = vrot.slane %v5516, 5
      %v5519 = vsel %vm564, %v5514, %v5518
      %v5520 = vunpack.c.l.b16 %v5101
      %v5521 = vunpack.c.l.b16 %v5111
      %v5522 = vunpack.c.l.b16 %v5125
      %v5523 = vunpack.c.l.b16 %v5135
      %v5524 = vunpack.c.l.b16 %v5149
      %v5525 = vunpack.c.l.b16 %v5159
      %v5526 = vunpack.c.l.b16 %v5173
      %v5527 = vunpack.c.l.b16 %v5183
      %v5528 = vunpack.c.l.b16 %v5197
      %v5529 = vunpack.c.l.b16 %v5207
      %v5530 = vunpack.c.l.b16 %v5221
      %v5531 = vunpack.c.l.b16 %v5231
      %v5532 = vunpack.c.l.b16 %v5245
      %v5533 = vunpack.c.l.b16 %v5255
      %v5534 = vunpack.c.l.b16 %v5269
      %v5535 = vunpack.c.l.b16 %v5279
      %v5536 = vunpack.c.l.b16 %v5293
      %v5537 = vunpack.c.l.b16 %v5303
      %v5538 = vunpack.c.l.b16 %v5317
      %v5539 = vunpack.c.l.b16 %v5327
      %v5540 = vunpack.c.l.b16 %v5341
      %v5541 = vunpack.c.l.b16 %v5351
      %v5542 = vunpack.c.l.b16 %v5365
      %v5543 = vunpack.c.l.b16 %v5375
      %v5544 = vunpack.c.l.b16 %v5389
      %v5545 = vunpack.c.l.b16 %v5399
      %v5546 = vunpack.c.l.b16 %v5413
      %v5547 = vunpack.c.l.b16 %v5423
      %v5548 = vunpack.c.l.b16 %v5437
      %v5549 = vunpack.c.l.b16 %v5447
      %v5550 = vunpack.c.l.b16 %v5461
      %v5551 = vunpack.c.l.b16 %v5471
      %v5552 = vunpack.c.l.b16 %v5485
      %v5553 = vunpack.c.l.b16 %v5495
      %v5554 = vunpack.c.l.b16 %v5509
      %v5555 = vunpack.c.l.b16 %v5519
      %v5556 = vpack.c.b16 %v5521, %v5520
      %v5557 = vpack.c.b16 %v5523, %v5522
      %v5558 = vpack.c.b16 %v5525, %v5524
      %v5559 = vpack.c.b16 %v5527, %v5526
      %v5560 = vpack.c.b16 %v5529, %v5528
      %v5561 = vpack.c.b16 %v5531, %v5530
      %v5562 = vpack.c.b16 %v5533, %v5532
      %v5563 = vpack.c.b16 %v5535, %v5534
      %v5564 = vpack.c.b16 %v5537, %v5536
      %v5565 = vpack.c.b16 %v5539, %v5538
      %v5566 = vpack.c.b16 %v5541, %v5540
      %v5567 = vpack.c.b16 %v5543, %v5542
      %v5568 = vpack.c.b16 %v5545, %v5544
      %v5569 = vpack.c.b16 %v5547, %v5546
      %v5570 = vpack.c.b16 %v5549, %v5548
      %v5571 = vpack.c.b16 %v5551, %v5550
      %v5572 = vpack.c.b16 %v5553, %v5552
      %v5573 = vpack.c.b16 %v5555, %v5554
      %5592 = vst [vmem:[%s1069] sm:$0xff] %v5556
      %5593 = vst [vmem:[%s1069 + $0x8] sm:$0xff] %v5557
      %5594 = vst [vmem:[%s1069 + $0x10] sm:$0xff] %v5558
      %5595 = vst [vmem:[%s1069 + $0x18] sm:$0xff] %v5559
      %5596 = vst [vmem:[%s1069 + $0x20] sm:$0xff] %v5560
      %5597 = vst [vmem:[%s1069 + $0x28] sm:$0xff] %v5561
      %5598 = vst [vmem:[%s1069 + $0x30] sm:$0xff] %v5562
      %5599 = vst [vmem:[%s1069 + $0x38] sm:$0xff] %v5563
      %5600 = vst [vmem:[%s1069 + $0x40] sm:$0xff] %v5564
      %5601 = vst [vmem:[%s1069 + $0x48] sm:$0xff] %v5565
      %5602 = vst [vmem:[%s1069 + $0x50] sm:$0xff] %v5566
      %5603 = vst [vmem:[%s1069 + $0x58] sm:$0xff] %v5567
      %5604 = vst [vmem:[%s1069 + $0x60] sm:$0xff] %v5568
      %5605 = vst [vmem:[%s1069 + $0x68] sm:$0xff] %v5569
      %5606 = vst [vmem:[%s1069 + $0x70] sm:$0xff] %v5570
      %5607 = vst [vmem:[%s1069 + $0x78] sm:$0xff] %v5571
      %5608 = vst [vmem:[%s1069 + $0x80] sm:$0xff] %v5572
      %5609 = vst [vmem:[%s1069 + $0x88] sm:$0xff] %v5573
      %v5610 = vld [vmem:[#allocation3] sm:$0xe]
      %v5611 = vld [vmem:[#allocation3 + $0x4] sm:$0xf]
      %v5612 = vld [vmem:[#allocation3 + $0x8] sm:$0x1]
      %v5613 = vld [vmem:[#allocation3 + $0xc] sm:$0xe]
      %v5614 = vld [vmem:[#allocation3 + $0x10] sm:$0xf]
      %v5615 = vld [vmem:[#allocation3 + $0x14] sm:$0x1]
      %v5616 = vld [vmem:[#allocation3 + $0x18] sm:$0xe]
      %v5617 = vld [vmem:[#allocation3 + $0x1c] sm:$0xf]
      %v5618 = vld [vmem:[#allocation3 + $0x20] sm:$0x1]
      %v5619 = vld [vmem:[#allocation3 + $0x24] sm:$0xe]
      %v5620 = vld [vmem:[#allocation3 + $0x28] sm:$0xf]
      %v5621 = vld [vmem:[#allocation3 + $0x2c] sm:$0x1]
      %v5622 = vld [vmem:[#allocation3 + $0x30] sm:$0xe]
      %v5623 = vld [vmem:[#allocation3 + $0x34] sm:$0xf]
      %v5624 = vld [vmem:[#allocation3 + $0x38] sm:$0x1]
      %v5625 = vld [vmem:[#allocation3 + $0x3c] sm:$0xe]
      %v5626 = vld [vmem:[#allocation3 + $0x40] sm:$0xf]
      %v5627 = vld [vmem:[#allocation3 + $0x44] sm:$0x1]
      %v5628 = vld [vmem:[#allocation3 + $0x48] sm:$0xe]
      %v5629 = vld [vmem:[#allocation3 + $0x4c] sm:$0xf]
      %v5630 = vld [vmem:[#allocation3 + $0x50] sm:$0x1]
      %v5631 = vld [vmem:[#allocation3 + $0x54] sm:$0xe]
      %v5632 = vld [vmem:[#allocation3 + $0x58] sm:$0xf]
      %v5633 = vld [vmem:[#allocation3 + $0x5c] sm:$0x1]
      %v5634 = vld [vmem:[#allocation3 + $0x60] sm:$0xe]
      %v5635 = vld [vmem:[#allocation3 + $0x64] sm:$0xf]
      %v5636 = vld [vmem:[#allocation3 + $0x68] sm:$0x1]
      %v5637 = vld [vmem:[#allocation3 + $0x6c] sm:$0xe]
      %v5638 = vld [vmem:[#allocation3 + $0x70] sm:$0xf]
      %v5639 = vld [vmem:[#allocation3 + $0x74] sm:$0x1]
      %v5640 = vld [vmem:[#allocation3 + $0x78] sm:$0xe]
      %v5641 = vld [vmem:[#allocation3 + $0x7c] sm:$0xf]
      %v5642 = vld [vmem:[#allocation3 + $0x80] sm:$0x1]
      %v5643 = vld [vmem:[#allocation3 + $0x84] sm:$0xe]
      %v5644 = vld [vmem:[#allocation3 + $0x88] sm:$0xf]
      %v5645 = vld [vmem:[#allocation3 + $0x8c] sm:$0x1]
      %v5646 = vld [vmem:[#allocation3 + $0x90] sm:$0xe]
      %v5647 = vld [vmem:[#allocation3 + $0x94] sm:$0xf]
      %v5648 = vld [vmem:[#allocation3 + $0x98] sm:$0x1]
      %v5649 = vld [vmem:[#allocation3 + $0x9c] sm:$0xe]
      %v5650 = vld [vmem:[#allocation3 + $0xa0] sm:$0xf]
      %v5651 = vld [vmem:[#allocation3 + $0xa4] sm:$0x1]
      %v5652 = vld [vmem:[#allocation3 + $0xa8] sm:$0xe]
      %v5653 = vld [vmem:[#allocation3 + $0xac] sm:$0xf]
      %v5654 = vld [vmem:[#allocation3 + $0xb0] sm:$0x1]
      %v5655 = vld [vmem:[#allocation3 + $0xb4] sm:$0xe]
      %v5656 = vld [vmem:[#allocation3 + $0xb8] sm:$0xf]
      %v5657 = vld [vmem:[#allocation3 + $0xbc] sm:$0x1]
      %v5658 = vld [vmem:[#allocation3 + $0xc0] sm:$0xe]
      %v5659 = vld [vmem:[#allocation3 + $0xc4] sm:$0xf]
      %v5660 = vld [vmem:[#allocation3 + $0xc8] sm:$0x1]
      %v5661 = vld [vmem:[#allocation3 + $0xcc] sm:$0xe]
      %v5662 = vld [vmem:[#allocation3 + $0xd0] sm:$0xf]
      %v5663 = vld [vmem:[#allocation3 + $0xd4] sm:$0x1]
      %v5718 = vrot.slane %v5610, 5
      %v5719 = vrot.slane %v5718, 4
      %v5720 = vrot.slane %v5611, 5
      %v5721 = vsel %vm1198, %v5719, %v5720
      %v5722 = vrot.slane %v5720, 4
      %v5723 = vrot.slane %v5612, 5
      %v5724 = vsel %vm1198, %v5722, %v5723
      %v5725 = vrot.slane %v5613, 5
      %v5726 = vrot.slane %v5725, 4
      %v5727 = vrot.slane %v5614, 5
      %v5728 = vsel %vm1198, %v5726, %v5727
      %v5729 = vrot.slane %v5727, 4
      %v5730 = vrot.slane %v5615, 5
      %v5731 = vsel %vm1198, %v5729, %v5730
      %v5732 = vrot.slane %v5616, 5
      %v5733 = vrot.slane %v5732, 4
      %v5734 = vrot.slane %v5617, 5
      %v5735 = vsel %vm1198, %v5733, %v5734
      %v5736 = vrot.slane %v5734, 4
      %v5737 = vrot.slane %v5618, 5
      %v5738 = vsel %vm1198, %v5736, %v5737
      %v5739 = vrot.slane %v5619, 5
      %v5740 = vrot.slane %v5739, 4
      %v5741 = vrot.slane %v5620, 5
      %v5742 = vsel %vm1198, %v5740, %v5741
      %v5743 = vrot.slane %v5741, 4
      %v5744 = vrot.slane %v5621, 5
      %v5745 = vsel %vm1198, %v5743, %v5744
      %v5746 = vrot.slane %v5622, 5
      %v5747 = vrot.slane %v5746, 4
      %v5748 = vrot.slane %v5623, 5
      %v5749 = vsel %vm1198, %v5747, %v5748
      %v5750 = vrot.slane %v5748, 4
      %v5751 = vrot.slane %v5624, 5
      %v5752 = vsel %vm1198, %v5750, %v5751
      %v5753 = vrot.slane %v5625, 5
      %v5754 = vrot.slane %v5753, 4
      %v5755 = vrot.slane %v5626, 5
      %v5756 = vsel %vm1198, %v5754, %v5755
      %v5757 = vrot.slane %v5755, 4
      %v5758 = vrot.slane %v5627, 5
      %v5759 = vsel %vm1198, %v5757, %v5758
      %v5760 = vrot.slane %v5628, 5
      %v5761 = vrot.slane %v5760, 4
      %v5762 = vrot.slane %v5629, 5
      %v5763 = vsel %vm1198, %v5761, %v5762
      %v5764 = vrot.slane %v5762, 4
      %v5765 = vrot.slane %v5630, 5
      %v5766 = vsel %vm1198, %v5764, %v5765
      %v5767 = vrot.slane %v5631, 5
      %v5768 = vrot.slane %v5767, 4
      %v5769 = vrot.slane %v5632, 5
      %v5770 = vsel %vm1198, %v5768, %v5769
      %v5771 = vrot.slane %v5769, 4
      %v5772 = vrot.slane %v5633, 5
      %v5773 = vsel %vm1198, %v5771, %v5772
      %v5774 = vrot.slane %v5634, 5
      %v5775 = vrot.slane %v5774, 4
      %v5776 = vrot.slane %v5635, 5
      %v5777 = vsel %vm1198, %v5775, %v5776
      %v5778 = vrot.slane %v5776, 4
      %v5779 = vrot.slane %v5636, 5
      %v5780 = vsel %vm1198, %v5778, %v5779
      %v5781 = vrot.slane %v5637, 5
      %v5782 = vrot.slane %v5781, 4
      %v5783 = vrot.slane %v5638, 5
      %v5784 = vsel %vm1198, %v5782, %v5783
      %v5785 = vrot.slane %v5783, 4
      %v5786 = vrot.slane %v5639, 5
      %v5787 = vsel %vm1198, %v5785, %v5786
      %v5788 = vrot.slane %v5640, 5
      %v5789 = vrot.slane %v5788, 4
      %v5790 = vrot.slane %v5641, 5
      %v5791 = vsel %vm1198, %v5789, %v5790
      %v5792 = vrot.slane %v5790, 4
      %v5793 = vrot.slane %v5642, 5
      %v5794 = vsel %vm1198, %v5792, %v5793
      %v5795 = vrot.slane %v5643, 5
      %v5796 = vrot.slane %v5795, 4
      %v5797 = vrot.slane %v5644, 5
      %v5798 = vsel %vm1198, %v5796, %v5797
      %v5799 = vrot.slane %v5797, 4
      %v5800 = vrot.slane %v5645, 5
      %v5801 = vsel %vm1198, %v5799, %v5800
      %v5802 = vrot.slane %v5646, 5
      %v5803 = vrot.slane %v5802, 4
      %v5804 = vrot.slane %v5647, 5
      %v5805 = vsel %vm1198, %v5803, %v5804
      %v5806 = vrot.slane %v5804, 4
      %v5807 = vrot.slane %v5648, 5
      %v5808 = vsel %vm1198, %v5806, %v5807
      %v5809 = vrot.slane %v5649, 5
      %v5810 = vrot.slane %v5809, 4
      %v5811 = vrot.slane %v5650, 5
      %v5812 = vsel %vm1198, %v5810, %v5811
      %v5813 = vrot.slane %v5811, 4
      %v5814 = vrot.slane %v5651, 5
      %v5815 = vsel %vm1198, %v5813, %v5814
      %v5816 = vrot.slane %v5652, 5
      %v5817 = vrot.slane %v5816, 4
      %v5818 = vrot.slane %v5653, 5
      %v5819 = vsel %vm1198, %v5817, %v5818
      %v5820 = vrot.slane %v5818, 4
      %v5821 = vrot.slane %v5654, 5
      %v5822 = vsel %vm1198, %v5820, %v5821
      %v5823 = vrot.slane %v5655, 5
      %v5824 = vrot.slane %v5823, 4
      %v5825 = vrot.slane %v5656, 5
      %v5826 = vsel %vm1198, %v5824, %v5825
      %v5827 = vrot.slane %v5825, 4
      %v5828 = vrot.slane %v5657, 5
      %v5829 = vsel %vm1198, %v5827, %v5828
      %v5830 = vrot.slane %v5658, 5
      %v5831 = vrot.slane %v5830, 4
      %v5832 = vrot.slane %v5659, 5
      %v5833 = vsel %vm1198, %v5831, %v5832
      %v5834 = vrot.slane %v5832, 4
      %v5835 = vrot.slane %v5660, 5
      %v5836 = vsel %vm1198, %v5834, %v5835
      %v5837 = vrot.slane %v5661, 5
      %v5838 = vrot.slane %v5837, 4
      %v5839 = vrot.slane %v5662, 5
      %v5840 = vsel %vm1198, %v5838, %v5839
      %v5841 = vrot.slane %v5839, 4
      %v5842 = vrot.slane %v5663, 5
      %v5843 = vsel %vm1198, %v5841, %v5842
      %v5844 = vunpack.c.l.b16 %v5721
      %v5845 = vunpack.c.l.b16 %v5724
      %v5846 = vunpack.c.l.b16 %v5728
      %v5847 = vunpack.c.l.b16 %v5731
      %v5848 = vunpack.c.l.b16 %v5735
      %v5849 = vunpack.c.l.b16 %v5738
      %v5850 = vunpack.c.l.b16 %v5742
      %v5851 = vunpack.c.l.b16 %v5745
      %v5852 = vunpack.c.l.b16 %v5749
      %v5853 = vunpack.c.l.b16 %v5752
      %v5854 = vunpack.c.l.b16 %v5756
      %v5855 = vunpack.c.l.b16 %v5759
      %v5856 = vunpack.c.l.b16 %v5763
      %v5857 = vunpack.c.l.b16 %v5766
      %v5858 = vunpack.c.l.b16 %v5770
      %v5859 = vunpack.c.l.b16 %v5773
      %v5860 = vunpack.c.l.b16 %v5777
      %v5861 = vunpack.c.l.b16 %v5780
      %v5862 = vunpack.c.l.b16 %v5784
      %v5863 = vunpack.c.l.b16 %v5787
      %v5864 = vunpack.c.l.b16 %v5791
      %v5865 = vunpack.c.l.b16 %v5794
      %v5866 = vunpack.c.l.b16 %v5798
      %v5867 = vunpack.c.l.b16 %v5801
      %v5868 = vunpack.c.l.b16 %v5805
      %v5869 = vunpack.c.l.b16 %v5808
      %v5870 = vunpack.c.l.b16 %v5812
      %v5871 = vunpack.c.l.b16 %v5815
      %v5872 = vunpack.c.l.b16 %v5819
      %v5873 = vunpack.c.l.b16 %v5822
      %v5874 = vunpack.c.l.b16 %v5826
      %v5875 = vunpack.c.l.b16 %v5829
      %v5876 = vunpack.c.l.b16 %v5833
      %v5877 = vunpack.c.l.b16 %v5836
      %v5878 = vunpack.c.l.b16 %v5840
      %v5879 = vunpack.c.l.b16 %v5843
      %v5880 = vpack.c.b16 %v5845, %v5844
      %v5881 = vpack.c.b16 %v5847, %v5846
      %v5882 = vpack.c.b16 %v5849, %v5848
      %v5883 = vpack.c.b16 %v5851, %v5850
      %v5884 = vpack.c.b16 %v5853, %v5852
      %v5885 = vpack.c.b16 %v5855, %v5854
      %v5886 = vpack.c.b16 %v5857, %v5856
      %v5887 = vpack.c.b16 %v5859, %v5858
      %v5888 = vpack.c.b16 %v5861, %v5860
      %v5889 = vpack.c.b16 %v5863, %v5862
      %v5890 = vpack.c.b16 %v5865, %v5864
      %v5891 = vpack.c.b16 %v5867, %v5866
      %v5892 = vpack.c.b16 %v5869, %v5868
      %v5893 = vpack.c.b16 %v5871, %v5870
      %v5894 = vpack.c.b16 %v5873, %v5872
      %v5895 = vpack.c.b16 %v5875, %v5874
      %v5896 = vpack.c.b16 %v5877, %v5876
      %v5897 = vpack.c.b16 %v5879, %v5878
      %5916 = vst [vmem:[%s1397] sm:$0xff] %v5880
      %5917 = vst [vmem:[%s1397 + $0x8] sm:$0xff] %v5881
      %5918 = vst [vmem:[%s1397 + $0x10] sm:$0xff] %v5882
      %5919 = vst [vmem:[%s1397 + $0x18] sm:$0xff] %v5883
      %5920 = vst [vmem:[%s1397 + $0x20] sm:$0xff] %v5884
      %5921 = vst [vmem:[%s1397 + $0x28] sm:$0xff] %v5885
      %5922 = vst [vmem:[%s1397 + $0x30] sm:$0xff] %v5886
      %5923 = vst [vmem:[%s1397 + $0x38] sm:$0xff] %v5887
      %5924 = vst [vmem:[%s1397 + $0x40] sm:$0xff] %v5888
      %5925 = vst [vmem:[%s1397 + $0x48] sm:$0xff] %v5889
      %5926 = vst [vmem:[%s1397 + $0x50] sm:$0xff] %v5890
      %5927 = vst [vmem:[%s1397 + $0x58] sm:$0xff] %v5891
      %5928 = vst [vmem:[%s1397 + $0x60] sm:$0xff] %v5892
      %5929 = vst [vmem:[%s1397 + $0x68] sm:$0xff] %v5893
      %5930 = vst [vmem:[%s1397 + $0x70] sm:$0xff] %v5894
      %5931 = vst [vmem:[%s1397 + $0x78] sm:$0xff] %v5895
      %5932 = vst [vmem:[%s1397 + $0x80] sm:$0xff] %v5896
      %5933 = vst [vmem:[%s1397 + $0x88] sm:$0xff] %v5897
      %v5934 = vld [vmem:[%s4] sm:$0x1]
      %v5935 = vld [vmem:[%s4 + $0x1] sm:$0x1]
      %v5936 = vld [vmem:[#allocation2] sm:$0xff]
      %v5937 = vld [vmem:[#allocation2 + $0x8] sm:$0xff]
      %v5938 = vld [vmem:[#allocation2 + $0x10] sm:$0xff]
      %v5939 = vld [vmem:[#allocation2 + $0x18] sm:$0xff]
      %v5940 = vld [vmem:[#allocation2 + $0x20] sm:$0xff]
      %v5941 = vld [vmem:[#allocation2 + $0x28] sm:$0xff]
      %v5942 = vld [vmem:[#allocation2 + $0x30] sm:$0xff]
      %v5943 = vld [vmem:[#allocation2 + $0x38] sm:$0xff]
      %v5944 = vld [vmem:[#allocation2 + $0x40] sm:$0xff]
      %v5945 = vld [vmem:[#allocation2 + $0x48] sm:$0xff]
      %v5946 = vld [vmem:[#allocation2 + $0x50] sm:$0xff]
      %v5947 = vld [vmem:[#allocation2 + $0x58] sm:$0xff]
      %v5948 = vld [vmem:[#allocation2 + $0x60] sm:$0xff]
      %v5949 = vld [vmem:[#allocation2 + $0x68] sm:$0xff]
      %v5950 = vld [vmem:[#allocation2 + $0x70] sm:$0xff]
      %v5951 = vld [vmem:[#allocation2 + $0x78] sm:$0xff]
      %v5952 = vld [vmem:[%s3] sm:$0xf]
      %v5953 = vld [vmem:[%s3 + $0x4] sm:$0xf]
      %v5954 = vld [vmem:[%s3 + $0x8] sm:$0xf]
      %v5955 = vld [vmem:[%s3 + $0xc] sm:$0xf]
      %v5956 = vld [vmem:[%s3 + $0x10] sm:$0xf]
      %v5957 = vld [vmem:[%s3 + $0x14] sm:$0xf]
      %v5958 = vld [vmem:[%s3 + $0x18] sm:$0xf]
      %v5959 = vld [vmem:[%s3 + $0x1c] sm:$0xf]
      %v5960 = vld [vmem:[%s3 + $0x20] sm:$0xf]
      %v5961 = vld [vmem:[%s3 + $0x24] sm:$0xf]
      %v5962 = vld [vmem:[%s3 + $0x28] sm:$0xf]
      %v5963 = vld [vmem:[%s3 + $0x2c] sm:$0xf]
      %v5964 = vld [vmem:[%s3 + $0x30] sm:$0xf]
      %v5965 = vld [vmem:[%s3 + $0x34] sm:$0xf]
      %v5966 = vld [vmem:[%s3 + $0x38] sm:$0xf]
      %v5967 = vld [vmem:[%s3 + $0x3c] sm:$0xf]
      %v5968 = vld [vmem:[%s1069] sm:$0xff]
      %v5969 = vld [vmem:[%s1069 + $0x8] sm:$0xff]
      %v5970 = vld [vmem:[%s1069 + $0x10] sm:$0xff]
      %v5971 = vld [vmem:[%s1069 + $0x18] sm:$0xff]
      %v5972 = vld [vmem:[%s1069 + $0x20] sm:$0xff]
      %v5973 = vld [vmem:[%s1069 + $0x28] sm:$0xff]
      %v5974 = vld [vmem:[%s1069 + $0x30] sm:$0xff]
      %v5975 = vld [vmem:[%s1069 + $0x38] sm:$0xff]
      %v5976 = vld [vmem:[%s1069 + $0x40] sm:$0xff]
      %v5977 = vld [vmem:[%s1069 + $0x48] sm:$0xff]
      %v5978 = vld [vmem:[%s1069 + $0x50] sm:$0xff]
      %v5979 = vld [vmem:[%s1069 + $0x58] sm:$0xff]
      %v5980 = vld [vmem:[%s1069 + $0x60] sm:$0xff]
      %v5981 = vld [vmem:[%s1069 + $0x68] sm:$0xff]
      %v5982 = vld [vmem:[%s1069 + $0x70] sm:$0xff]
      %v5983 = vld [vmem:[%s1069 + $0x78] sm:$0xff]
      %s5984 = scalar_lea.vmem %s3, 64
      %v5985 = vld [vmem:[%s5984] sm:$0xf]
      %v5986 = vld [vmem:[%s5984 + $0x4] sm:$0xf]
      %v5987 = vld [vmem:[%s5984 + $0x8] sm:$0xf]
      %v5988 = vld [vmem:[%s5984 + $0xc] sm:$0xf]
      %v5989 = vld [vmem:[%s5984 + $0x10] sm:$0xf]
      %v5990 = vld [vmem:[%s5984 + $0x14] sm:$0xf]
      %v5991 = vld [vmem:[%s5984 + $0x18] sm:$0xf]
      %v5992 = vld [vmem:[%s5984 + $0x1c] sm:$0xf]
      %v5993 = vld [vmem:[%s5984 + $0x20] sm:$0xf]
      %v5994 = vld [vmem:[%s5984 + $0x24] sm:$0xf]
      %v5995 = vld [vmem:[%s5984 + $0x28] sm:$0xf]
      %v5996 = vld [vmem:[%s5984 + $0x2c] sm:$0xf]
      %v5997 = vld [vmem:[%s5984 + $0x30] sm:$0xf]
      %v5998 = vld [vmem:[%s5984 + $0x34] sm:$0xf]
      %v5999 = vld [vmem:[%s5984 + $0x38] sm:$0xf]
      %v6000 = vld [vmem:[%s5984 + $0x3c] sm:$0xf]
      %v6017 = vunpack.c.l.b16 %v5985
      %v6018 = vunpack.c.l.b16 %v5986
      %v6019 = vunpack.c.l.b16 %v5987
      %v6020 = vunpack.c.l.b16 %v5988
      %v6021 = vunpack.c.l.b16 %v5989
      %v6022 = vunpack.c.l.b16 %v5990
      %v6023 = vunpack.c.l.b16 %v5991
      %v6024 = vunpack.c.l.b16 %v5992
      %v6025 = vunpack.c.l.b16 %v5993
      %v6026 = vunpack.c.l.b16 %v5994
      %v6027 = vunpack.c.l.b16 %v5995
      %v6028 = vunpack.c.l.b16 %v5996
      %v6029 = vunpack.c.l.b16 %v5997
      %v6030 = vunpack.c.l.b16 %v5998
      %v6031 = vunpack.c.l.b16 %v5999
      %v6032 = vunpack.c.l.b16 %v6000
      %v6033 = vpack.c.b16 %v6018, %v6017
      %v6034 = vpack.c.b16 %v6020, %v6019
      %v6035 = vpack.c.b16 %v6022, %v6021
      %v6036 = vpack.c.b16 %v6024, %v6023
      %v6037 = vpack.c.b16 %v6026, %v6025
      %v6038 = vpack.c.b16 %v6028, %v6027
      %v6039 = vpack.c.b16 %v6030, %v6029
      %v6040 = vpack.c.b16 %v6032, %v6031
      %6049 = vmatprep.subr.bf16.mxu0 0
      %6050 = vmatpush1.bf16.msra.mxu0 %v6033
      %6051 = vmatprep.subr.bf16.mxu0 0
      %6052 = vmatpush1.bf16.msra.mxu0 %v6034
      %6053 = vmatprep.subr.bf16.mxu0 0
      %6054 = vmatpush1.bf16.msra.mxu0 %v6035
      %6055 = vmatprep.subr.bf16.mxu0 0
      %6056 = vmatpush1.bf16.msra.mxu0 %v6036
      %6057 = vmatprep.subr.bf16.mxu0 0
      %6058 = vmatpush1.bf16.msra.mxu0 %v6037
      %6059 = vmatprep.subr.bf16.mxu0 0
      %6060 = vmatpush1.bf16.msra.mxu0 %v6038
      %6061 = vmatprep.subr.bf16.mxu0 0
      %6062 = vmatpush1.bf16.msra.mxu0 %v6039
      %6063 = vmatprep.subr.bf16.mxu0 0
      %6064 = vmatpush1.bf16.msra.mxu0 %v6040
      %6065 = vmatprep.subr.bf16.mxu0 0
      %6066 = vmatpush1.bf16.msra.mxu0 0
      %6067 = vmatprep.subr.bf16.mxu0 0
      %6068 = vmatpush1.bf16.msra.mxu0 0
      %6069 = vmatprep.subr.bf16.mxu0 0
      %6070 = vmatpush1.bf16.msra.mxu0 0
      %6071 = vmatprep.subr.bf16.mxu0 0
      %6072 = vmatpush1.bf16.msra.mxu0 0
      %6073 = vmatprep.subr.bf16.mxu0 0
      %6074 = vmatpush1.bf16.msra.mxu0 0
      %6075 = vmatprep.subr.bf16.mxu0 0
      %6076 = vmatpush1.bf16.msra.mxu0 0
      %6077 = vmatprep.subr.bf16.mxu0 0
      %6078 = vmatpush1.bf16.msra.mxu0 0
      %6079 = vmatprep.subr.bf16.mxu0 0
      %6080 = vmatpush1.bf16.msra.mxu0 0
      %6081 = vmatprep.mubr.bf16.mxu0 0
      %6082 = vmatmul.mubr.bf16.gmra.mrb[0].mxu0 %v5968
      %v6083 = vpop.f32.mrb[0].mxu0
      %v6084 = vadd.f32 0.0, %v6083
      %v6085 = vpop.f32.mrb[0].mxu0
      %v6086 = vpop.f32.mrb[0].mxu0
      %v6087 = vadd.f32 0.0, %v6086
      %v6088 = vpop.f32.mrb[0].mxu0
      %6089 = vmatprep.mubr.bf16.mxu0 0
      %6090 = vmatmul.mubr.bf16.gmra.mrb[0].mxu0 %v5969
      %v6091 = vpop.f32.mrb[0].mxu0
      %v6092 = vadd.f32 0.0, %v6091
      %v6093 = vpop.f32.mrb[0].mxu0
      %v6094 = vpop.f32.mrb[0].mxu0
      %v6095 = vadd.f32 0.0, %v6094
      %v6096 = vpop.f32.mrb[0].mxu0
      %6097 = vmatprep.mubr.bf16.mxu0 0
      %6098 = vmatmul.mubr.bf16.gmra.mrb[0].mxu0 %v5970
      %v6099 = vpop.f32.mrb[0].mxu0
      %v6100 = vadd.f32 0.0, %v6099
      %v6101 = vpop.f32.mrb[0].mxu0
      %v6102 = vpop.f32.mrb[0].mxu0
      %v6103 = vadd.f32 0.0, %v6102
      %v6104 = vpop.f32.mrb[0].mxu0
      %6105 = vmatprep.mubr.bf16.mxu0 0
      %6106 = vmatmul.mubr.bf16.gmra.mrb[0].mxu0 %v5971
      %v6107 = vpop.f32.mrb[0].mxu0
      %v6108 = vadd.f32 0.0, %v6107
      %v6109 = vpop.f32.mrb[0].mxu0
      %v6110 = vpop.f32.mrb[0].mxu0
      %v6111 = vadd.f32 0.0, %v6110
      %v6112 = vpop.f32.mrb[0].mxu0
      %6113 = vmatprep.mubr.bf16.mxu0 0
      %6114 = vmatmul.mubr.bf16.gmra.mrb[0].mxu0 %v5972
      %v6115 = vpop.f32.mrb[0].mxu0
      %v6116 = vadd.f32 0.0, %v6115
      %v6117 = vpop.f32.mrb[0].mxu0
      %v6118 = vpop.f32.mrb[0].mxu0
      %v6119 = vadd.f32 0.0, %v6118
      %v6120 = vpop.f32.mrb[0].mxu0
      %6121 = vmatprep.mubr.bf16.mxu0 0
      %6122 = vmatmul.mubr.bf16.gmra.mrb[0].mxu0 %v5973
      %v6123 = vpop.f32.mrb[0].mxu0
      %v6124 = vadd.f32 0.0, %v6123
      %v6125 = vpop.f32.mrb[0].mxu0
      %v6126 = vpop.f32.mrb[0].mxu0
      %v6127 = vadd.f32 0.0, %v6126
      %v6128 = vpop.f32.mrb[0].mxu0
      %6129 = vmatprep.mubr.bf16.mxu0 0
      %6130 = vmatmul.mubr.bf16.gmra.mrb[0].mxu0 %v5974
      %v6131 = vpop.f32.mrb[0].mxu0
      %v6132 = vadd.f32 0.0, %v6131
      %v6133 = vpop.f32.mrb[0].mxu0
      %v6134 = vpop.f32.mrb[0].mxu0
      %v6135 = vadd.f32 0.0, %v6134
      %v6136 = vpop.f32.mrb[0].mxu0
      %6137 = vmatprep.mubr.bf16.mxu0 0
      %6138 = vmatmul.mubr.bf16.gmra.mrb[0].mxu0 %v5975
      %v6139 = vpop.f32.mrb[0].mxu0
      %v6140 = vadd.f32 0.0, %v6139
      %v6141 = vpop.f32.mrb[0].mxu0
      %v6142 = vpop.f32.mrb[0].mxu0
      %v6143 = vadd.f32 0.0, %v6142
      %v6144 = vpop.f32.mrb[0].mxu0
      %6145 = vmatprep.mubr.bf16.mxu0 0
      %6146 = vmatmul.mubr.bf16.gmra.mrb[0].mxu0 %v5976
      %v6147 = vpop.f32.mrb[0].mxu0
      %v6148 = vadd.f32 0.0, %v6147
      %v6149 = vpop.f32.mrb[0].mxu0
      %v6150 = vpop.f32.mrb[0].mxu0
      %v6151 = vadd.f32 0.0, %v6150
      %v6152 = vpop.f32.mrb[0].mxu0
      %6153 = vmatprep.mubr.bf16.mxu0 0
      %6154 = vmatmul.mubr.bf16.gmra.mrb[0].mxu0 %v5977
      %v6155 = vpop.f32.mrb[0].mxu0
      %v6156 = vadd.f32 0.0, %v6155
      %v6157 = vpop.f32.mrb[0].mxu0
      %v6158 = vpop.f32.mrb[0].mxu0
      %v6159 = vadd.f32 0.0, %v6158
      %v6160 = vpop.f32.mrb[0].mxu0
      %6161 = vmatprep.mubr.bf16.mxu0 0
      %6162 = vmatmul.mubr.bf16.gmra.mrb[0].mxu0 %v5978
      %v6163 = vpop.f32.mrb[0].mxu0
      %v6164 = vadd.f32 0.0, %v6163
      %v6165 = vpop.f32.mrb[0].mxu0
      %v6166 = vpop.f32.mrb[0].mxu0
      %v6167 = vadd.f32 0.0, %v6166
      %v6168 = vpop.f32.mrb[0].mxu0
      %6169 = vmatprep.mubr.bf16.mxu0 0
      %6170 = vmatmul.mubr.bf16.gmra.mrb[0].mxu0 %v5979
      %v6171 = vpop.f32.mrb[0].mxu0
      %v6172 = vadd.f32 0.0, %v6171
      %v6173 = vpop.f32.mrb[0].mxu0
      %v6174 = vpop.f32.mrb[0].mxu0
      %v6175 = vadd.f32 0.0, %v6174
      %v6176 = vpop.f32.mrb[0].mxu0
      %6177 = vmatprep.mubr.bf16.mxu0 0
      %6178 = vmatmul.mubr.bf16.gmra.mrb[0].mxu0 %v5980
      %v6179 = vpop.f32.mrb[0].mxu0
      %v6180 = vadd.f32 0.0, %v6179
      %v6181 = vpop.f32.mrb[0].mxu0
      %v6182 = vpop.f32.mrb[0].mxu0
      %v6183 = vadd.f32 0.0, %v6182
      %v6184 = vpop.f32.mrb[0].mxu0
      %6185 = vmatprep.mubr.bf16.mxu0 0
      %6186 = vmatmul.mubr.bf16.gmra.mrb[0].mxu0 %v5981
      %v6187 = vpop.f32.mrb[0].mxu0
      %v6188 = vadd.f32 0.0, %v6187
      %v6189 = vpop.f32.mrb[0].mxu0
      %v6190 = vpop.f32.mrb[0].mxu0
      %v6191 = vadd.f32 0.0, %v6190
      %v6192 = vpop.f32.mrb[0].mxu0
      %6193 = vmatprep.mubr.bf16.mxu0 0
      %6194 = vmatmul.mubr.bf16.gmra.mrb[0].mxu0 %v5982
      %v6195 = vpop.f32.mrb[0].mxu0
      %v6196 = vadd.f32 0.0, %v6195
      %v6197 = vpop.f32.mrb[0].mxu0
      %v6198 = vpop.f32.mrb[0].mxu0
      %v6199 = vadd.f32 0.0, %v6198
      %v6200 = vpop.f32.mrb[0].mxu0
      %6201 = vmatprep.mubr.bf16.mxu0 0
      %6202 = vmatmul.mubr.bf16.gmra.mrb[0].mxu0 %v5983
      %v6203 = vpop.f32.mrb[0].mxu0
      %v6204 = vadd.f32 0.0, %v6203
      %v6205 = vpop.f32.mrb[0].mxu0
      %v6206 = vpop.f32.mrb[0].mxu0
      %v6207 = vadd.f32 0.0, %v6206
      %v6208 = vpop.f32.mrb[0].mxu0
      %6209 = vdwg.mxu0
      %v6226 = vunpack.c.l.b16 %v5952
      %v6227 = vunpack.c.l.b16 %v5953
      %v6228 = vunpack.c.l.b16 %v5954
      %v6229 = vunpack.c.l.b16 %v5955
      %v6230 = vunpack.c.l.b16 %v5956
      %v6231 = vunpack.c.l.b16 %v5957
      %v6232 = vunpack.c.l.b16 %v5958
      %v6233 = vunpack.c.l.b16 %v5959
      %v6234 = vunpack.c.l.b16 %v5960
      %v6235 = vunpack.c.l.b16 %v5961
      %v6236 = vunpack.c.l.b16 %v5962
      %v6237 = vunpack.c.l.b16 %v5963
      %v6238 = vunpack.c.l.b16 %v5964
      %v6239 = vunpack.c.l.b16 %v5965
      %v6240 = vunpack.c.l.b16 %v5966
      %v6241 = vunpack.c.l.b16 %v5967
      %v6242 = vpack.c.b16 %v6227, %v6226
      %v6243 = vpack.c.b16 %v6229, %v6228
      %v6244 = vpack.c.b16 %v6231, %v6230
      %v6245 = vpack.c.b16 %v6233, %v6232
      %v6246 = vpack.c.b16 %v6235, %v6234
      %v6247 = vpack.c.b16 %v6237, %v6236
      %v6248 = vpack.c.b16 %v6239, %v6238
      %v6249 = vpack.c.b16 %v6241, %v6240
      %6258 = vmatprep.subr.bf16.mxu0 0
      %6259 = vmatpush1.bf16.msra.mxu0 %v6242
      %6260 = vmatprep.subr.bf16.mxu0 0
      %6261 = vmatpush1.bf16.msra.mxu0 %v6243
      %6262 = vmatprep.subr.bf16.mxu0 0
      %6263 = vmatpush1.bf16.msra.mxu0 %v6244
      %6264 = vmatprep.subr.bf16.mxu0 0
      %6265 = vmatpush1.bf16.msra.mxu0 %v6245
      %6266 = vmatprep.subr.bf16.mxu0 0
      %6267 = vmatpush1.bf16.msra.mxu0 %v6246
      %6268 = vmatprep.subr.bf16.mxu0 0
      %6269 = vmatpush1.bf16.msra.mxu0 %v6247
      %6270 = vmatprep.subr.bf16.mxu0 0
      %6271 = vmatpush1.bf16.msra.mxu0 %v6248
      %6272 = vmatprep.subr.bf16.mxu0 0
      %6273 = vmatpush1.bf16.msra.mxu0 %v6249
      %6274 = vmatprep.subr.bf16.mxu0 0
      %6275 = vmatpush1.bf16.msra.mxu0 0
      %6276 = vmatprep.subr.bf16.mxu0 0
      %6277 = vmatpush1.bf16.msra.mxu0 0
      %6278 = vmatprep.subr.bf16.mxu0 0
      %6279 = vmatpush1.bf16.msra.mxu0 0
      %6280 = vmatprep.subr.bf16.mxu0 0
      %6281 = vmatpush1.bf16.msra.mxu0 0
      %6282 = vmatprep.subr.bf16.mxu0 0
      %6283 = vmatpush1.bf16.msra.mxu0 0
      %6284 = vmatprep.subr.bf16.mxu0 0
      %6285 = vmatpush1.bf16.msra.mxu0 0
      %6286 = vmatprep.subr.bf16.mxu0 0
      %6287 = vmatpush1.bf16.msra.mxu0 0
      %6288 = vmatprep.subr.bf16.mxu0 0
      %6289 = vmatpush1.bf16.msra.mxu0 0
      %6290 = vmatprep.mubr.bf16.mxu0 0
      %6291 = vmatmul.mubr.bf16.gmra.mrb[0].mxu0 %v5936
      %v6292 = vpop.f32.mrb[0].mxu0
      %v6293 = vadd.f32 %v6084, %v6292
      %v6294 = vpop.f32.mrb[0].mxu0
      %v6295 = vpop.f32.mrb[0].mxu0
      %v6296 = vadd.f32 %v6087, %v6295
      %v6297 = vpop.f32.mrb[0].mxu0
      %6298 = vmatprep.mubr.bf16.mxu0 0
      %6299 = vmatmul.mubr.bf16.gmra.mrb[0].mxu0 %v5937
      %v6300 = vpop.f32.mrb[0].mxu0
      %v6301 = vadd.f32 %v6092, %v6300
      %v6302 = vpop.f32.mrb[0].mxu0
      %v6303 = vpop.f32.mrb[0].mxu0
      %v6304 = vadd.f32 %v6095, %v6303
      %v6305 = vpop.f32.mrb[0].mxu0
      %6306 = vmatprep.mubr.bf16.mxu0 0
      %6307 = vmatmul.mubr.bf16.gmra.mrb[0].mxu0 %v5938
      %v6308 = vpop.f32.mrb[0].mxu0
      %v6309 = vadd.f32 %v6100, %v6308
      %v6310 = vpop.f32.mrb[0].mxu0
      %v6311 = vpop.f32.mrb[0].mxu0
      %v6312 = vadd.f32 %v6103, %v6311
      %v6313 = vpop.f32.mrb[0].mxu0
      %6314 = vmatprep.mubr.bf16.mxu0 0
      %6315 = vmatmul.mubr.bf16.gmra.mrb[0].mxu0 %v5939
      %v6316 = vpop.f32.mrb[0].mxu0
      %v6317 = vadd.f32 %v6108, %v6316
      %v6318 = vpop.f32.mrb[0].mxu0
      %v6319 = vpop.f32.mrb[0].mxu0
      %v6320 = vadd.f32 %v6111, %v6319
      %v6321 = vpop.f32.mrb[0].mxu0
      %6322 = vmatprep.mubr.bf16.mxu0 0
      %6323 = vmatmul.mubr.bf16.gmra.mrb[0].mxu0 %v5940
      %v6324 = vpop.f32.mrb[0].mxu0
      %v6325 = vadd.f32 %v6116, %v6324
      %v6326 = vpop.f32.mrb[0].mxu0
      %v6327 = vpop.f32.mrb[0].mxu0
      %v6328 = vadd.f32 %v6119, %v6327
      %v6329 = vpop.f32.mrb[0].mxu0
      %6330 = vmatprep.mubr.bf16.mxu0 0
      %6331 = vmatmul.mubr.bf16.gmra.mrb[0].mxu0 %v5941
      %v6332 = vpop.f32.mrb[0].mxu0
      %v6333 = vadd.f32 %v6124, %v6332
      %v6334 = vpop.f32.mrb[0].mxu0
      %v6335 = vpop.f32.mrb[0].mxu0
      %v6336 = vadd.f32 %v6127, %v6335
      %v6337 = vpop.f32.mrb[0].mxu0
      %6338 = vmatprep.mubr.bf16.mxu0 0
      %6339 = vmatmul.mubr.bf16.gmra.mrb[0].mxu0 %v5942
      %v6340 = vpop.f32.mrb[0].mxu0
      %v6341 = vadd.f32 %v6132, %v6340
      %v6342 = vpop.f32.mrb[0].mxu0
      %v6343 = vpop.f32.mrb[0].mxu0
      %v6344 = vadd.f32 %v6135, %v6343
      %v6345 = vpop.f32.mrb[0].mxu0
      %6346 = vmatprep.mubr.bf16.mxu0 0
      %6347 = vmatmul.mubr.bf16.gmra.mrb[0].mxu0 %v5943
      %v6348 = vpop.f32.mrb[0].mxu0
      %v6349 = vadd.f32 %v6140, %v6348
      %v6350 = vpop.f32.mrb[0].mxu0
      %v6351 = vpop.f32.mrb[0].mxu0
      %v6352 = vadd.f32 %v6143, %v6351
      %v6353 = vpop.f32.mrb[0].mxu0
      %6354 = vmatprep.mubr.bf16.mxu0 0
      %6355 = vmatmul.mubr.bf16.gmra.mrb[0].mxu0 %v5944
      %v6356 = vpop.f32.mrb[0].mxu0
      %v6357 = vadd.f32 %v6148, %v6356
      %v6358 = vpop.f32.mrb[0].mxu0
      %v6359 = vpop.f32.mrb[0].mxu0
      %v6360 = vadd.f32 %v6151, %v6359
      %v6361 = vpop.f32.mrb[0].mxu0
      %6362 = vmatprep.mubr.bf16.mxu0 0
      %6363 = vmatmul.mubr.bf16.gmra.mrb[0].mxu0 %v5945
      %v6364 = vpop.f32.mrb[0].mxu0
      %v6365 = vadd.f32 %v6156, %v6364
      %v6366 = vpop.f32.mrb[0].mxu0
      %v6367 = vpop.f32.mrb[0].mxu0
      %v6368 = vadd.f32 %v6159, %v6367
      %v6369 = vpop.f32.mrb[0].mxu0
      %6370 = vmatprep.mubr.bf16.mxu0 0
      %6371 = vmatmul.mubr.bf16.gmra.mrb[0].mxu0 %v5946
      %v6372 = vpop.f32.mrb[0].mxu0
      %v6373 = vadd.f32 %v6164, %v6372
      %v6374 = vpop.f32.mrb[0].mxu0
      %v6375 = vpop.f32.mrb[0].mxu0
      %v6376 = vadd.f32 %v6167, %v6375
      %v6377 = vpop.f32.mrb[0].mxu0
      %6378 = vmatprep.mubr.bf16.mxu0 0
      %6379 = vmatmul.mubr.bf16.gmra.mrb[0].mxu0 %v5947
      %v6380 = vpop.f32.mrb[0].mxu0
      %v6381 = vadd.f32 %v6172, %v6380
      %v6382 = vpop.f32.mrb[0].mxu0
      %v6383 = vpop.f32.mrb[0].mxu0
      %v6384 = vadd.f32 %v6175, %v6383
      %v6385 = vpop.f32.mrb[0].mxu0
      %6386 = vmatprep.mubr.bf16.mxu0 0
      %6387 = vmatmul.mubr.bf16.gmra.mrb[0].mxu0 %v5948
      %v6388 = vpop.f32.mrb[0].mxu0
      %v6389 = vadd.f32 %v6180, %v6388
      %v6390 = vpop.f32.mrb[0].mxu0
      %v6391 = vpop.f32.mrb[0].mxu0
      %v6392 = vadd.f32 %v6183, %v6391
      %v6393 = vpop.f32.mrb[0].mxu0
      %6394 = vmatprep.mubr.bf16.mxu0 0
      %6395 = vmatmul.mubr.bf16.gmra.mrb[0].mxu0 %v5949
      %v6396 = vpop.f32.mrb[0].mxu0
      %v6397 = vadd.f32 %v6188, %v6396
      %v6398 = vpop.f32.mrb[0].mxu0
      %v6399 = vpop.f32.mrb[0].mxu0
      %v6400 = vadd.f32 %v6191, %v6399
      %v6401 = vpop.f32.mrb[0].mxu0
      %6402 = vmatprep.mubr.bf16.mxu0 0
      %6403 = vmatmul.mubr.bf16.gmra.mrb[0].mxu0 %v5950
      %v6404 = vpop.f32.mrb[0].mxu0
      %v6405 = vadd.f32 %v6196, %v6404
      %v6406 = vpop.f32.mrb[0].mxu0
      %v6407 = vpop.f32.mrb[0].mxu0
      %v6408 = vadd.f32 %v6199, %v6407
      %v6409 = vpop.f32.mrb[0].mxu0
      %6410 = vmatprep.mubr.bf16.mxu0 0
      %6411 = vmatmul.mubr.bf16.gmra.mrb[0].mxu0 %v5951
      %v6412 = vpop.f32.mrb[0].mxu0
      %v6413 = vadd.f32 %v6204, %v6412
      %v6414 = vpop.f32.mrb[0].mxu0
      %v6415 = vpop.f32.mrb[0].mxu0
      %v6416 = vadd.f32 %v6207, %v6415
      %v6417 = vpop.f32.mrb[0].mxu0
      %6418 = vdwg.mxu0
      %v6419 = vld [vmem:[%s1397] sm:$0xff]
      %v6420 = vld [vmem:[%s1397 + $0x8] sm:$0xff]
      %v6421 = vld [vmem:[%s1397 + $0x10] sm:$0xff]
      %v6422 = vld [vmem:[%s1397 + $0x18] sm:$0xff]
      %v6423 = vld [vmem:[%s1397 + $0x20] sm:$0xff]
      %v6424 = vld [vmem:[%s1397 + $0x28] sm:$0xff]
      %v6425 = vld [vmem:[%s1397 + $0x30] sm:$0xff]
      %v6426 = vld [vmem:[%s1397 + $0x38] sm:$0xff]
      %v6427 = vld [vmem:[%s1397 + $0x40] sm:$0xff]
      %v6428 = vld [vmem:[%s1397 + $0x48] sm:$0xff]
      %v6429 = vld [vmem:[%s1397 + $0x50] sm:$0xff]
      %v6430 = vld [vmem:[%s1397 + $0x58] sm:$0xff]
      %v6431 = vld [vmem:[%s1397 + $0x60] sm:$0xff]
      %v6432 = vld [vmem:[%s1397 + $0x68] sm:$0xff]
      %v6433 = vld [vmem:[%s1397 + $0x70] sm:$0xff]
      %v6434 = vld [vmem:[%s1397 + $0x78] sm:$0xff]
      %s6435 = scalar_lea.vmem %s3, 128
      %v6436 = vld [vmem:[%s6435] sm:$0xf]
      %v6437 = vld [vmem:[%s6435 + $0x4] sm:$0xf]
      %v6438 = vld [vmem:[%s6435 + $0x8] sm:$0xf]
      %v6439 = vld [vmem:[%s6435 + $0xc] sm:$0xf]
      %v6440 = vld [vmem:[%s6435 + $0x10] sm:$0xf]
      %v6441 = vld [vmem:[%s6435 + $0x14] sm:$0xf]
      %v6442 = vld [vmem:[%s6435 + $0x18] sm:$0xf]
      %v6443 = vld [vmem:[%s6435 + $0x1c] sm:$0xf]
      %v6444 = vld [vmem:[%s6435 + $0x20] sm:$0xf]
      %v6445 = vld [vmem:[%s6435 + $0x24] sm:$0xf]
      %v6446 = vld [vmem:[%s6435 + $0x28] sm:$0xf]
      %v6447 = vld [vmem:[%s6435 + $0x2c] sm:$0xf]
      %v6448 = vld [vmem:[%s6435 + $0x30] sm:$0xf]
      %v6449 = vld [vmem:[%s6435 + $0x34] sm:$0xf]
      %v6450 = vld [vmem:[%s6435 + $0x38] sm:$0xf]
      %v6451 = vld [vmem:[%s6435 + $0x3c] sm:$0xf]
      %v6468 = vunpack.c.l.b16 %v6436
      %v6469 = vunpack.c.l.b16 %v6437
      %v6470 = vunpack.c.l.b16 %v6438
      %v6471 = vunpack.c.l.b16 %v6439
      %v6472 = vunpack.c.l.b16 %v6440
      %v6473 = vunpack.c.l.b16 %v6441
      %v6474 = vunpack.c.l.b16 %v6442
      %v6475 = vunpack.c.l.b16 %v6443
      %v6476 = vunpack.c.l.b16 %v6444
      %v6477 = vunpack.c.l.b16 %v6445
      %v6478 = vunpack.c.l.b16 %v6446
      %v6479 = vunpack.c.l.b16 %v6447
      %v6480 = vunpack.c.l.b16 %v6448
      %v6481 = vunpack.c.l.b16 %v6449
      %v6482 = vunpack.c.l.b16 %v6450
      %v6483 = vunpack.c.l.b16 %v6451
      %v6484 = vpack.c.b16 %v6469, %v6468
      %v6485 = vpack.c.b16 %v6471, %v6470
      %v6486 = vpack.c.b16 %v6473, %v6472
      %v6487 = vpack.c.b16 %v6475, %v6474
      %v6488 = vpack.c.b16 %v6477, %v6476
      %v6489 = vpack.c.b16 %v6479, %v6478
      %v6490 = vpack.c.b16 %v6481, %v6480
      %v6491 = vpack.c.b16 %v6483, %v6482
      %6500 = vmatprep.subr.bf16.mxu0 0
      %6501 = vmatpush1.bf16.msra.mxu0 %v6484
      %6502 = vmatprep.subr.bf16.mxu0 0
      %6503 = vmatpush1.bf16.msra.mxu0 %v6485
      %6504 = vmatprep.subr.bf16.mxu0 0
      %6505 = vmatpush1.bf16.msra.mxu0 %v6486
      %6506 = vmatprep.subr.bf16.mxu0 0
      %6507 = vmatpush1.bf16.msra.mxu0 %v6487
      %6508 = vmatprep.subr.bf16.mxu0 0
      %6509 = vmatpush1.bf16.msra.mxu0 %v6488
      %6510 = vmatprep.subr.bf16.mxu0 0
      %6511 = vmatpush1.bf16.msra.mxu0 %v6489
      %6512 = vmatprep.subr.bf16.mxu0 0
      %6513 = vmatpush1.bf16.msra.mxu0 %v6490
      %6514 = vmatprep.subr.bf16.mxu0 0
      %6515 = vmatpush1.bf16.msra.mxu0 %v6491
      %6516 = vmatprep.subr.bf16.mxu0 0
      %6517 = vmatpush1.bf16.msra.mxu0 0
      %6518 = vmatprep.subr.bf16.mxu0 0
      %6519 = vmatpush1.bf16.msra.mxu0 0
      %6520 = vmatprep.subr.bf16.mxu0 0
      %6521 = vmatpush1.bf16.msra.mxu0 0
      %6522 = vmatprep.subr.bf16.mxu0 0
      %6523 = vmatpush1.bf16.msra.mxu0 0
      %6524 = vmatprep.subr.bf16.mxu0 0
      %6525 = vmatpush1.bf16.msra.mxu0 0
      %6526 = vmatprep.subr.bf16.mxu0 0
      %6527 = vmatpush1.bf16.msra.mxu0 0
      %6528 = vmatprep.subr.bf16.mxu0 0
      %6529 = vmatpush1.bf16.msra.mxu0 0
      %6530 = vmatprep.subr.bf16.mxu0 0
      %6531 = vmatpush1.bf16.msra.mxu0 0
      %6532 = vmatprep.mubr.bf16.mxu0 0
      %6533 = vmatmul.mubr.bf16.gmra.mrb[0].mxu0 %v6419
      %v6534 = vpop.f32.mrb[0].mxu0
      %v6535 = vadd.f32 0.0, %v6534
      %v6536 = vpop.f32.mrb[0].mxu0
      %v6537 = vpop.f32.mrb[0].mxu0
      %v6538 = vadd.f32 0.0, %v6537
      %v6539 = vpop.f32.mrb[0].mxu0
      %6540 = vmatprep.mubr.bf16.mxu0 0
      %6541 = vmatmul.mubr.bf16.gmra.mrb[0].mxu0 %v6420
      %v6542 = vpop.f32.mrb[0].mxu0
      %v6543 = vadd.f32 0.0, %v6542
      %v6544 = vpop.f32.mrb[0].mxu0
      %v6545 = vpop.f32.mrb[0].mxu0
      %v6546 = vadd.f32 0.0, %v6545
      %v6547 = vpop.f32.mrb[0].mxu0
      %6548 = vmatprep.mubr.bf16.mxu0 0
      %6549 = vmatmul.mubr.bf16.gmra.mrb[0].mxu0 %v6421
      %v6550 = vpop.f32.mrb[0].mxu0
      %v6551 = vadd.f32 0.0, %v6550
      %v6552 = vpop.f32.mrb[0].mxu0
      %v6553 = vpop.f32.mrb[0].mxu0
      %v6554 = vadd.f32 0.0, %v6553
      %v6555 = vpop.f32.mrb[0].mxu0
      %6556 = vmatprep.mubr.bf16.mxu0 0
      %6557 = vmatmul.mubr.bf16.gmra.mrb[0].mxu0 %v6422
      %v6558 = vpop.f32.mrb[0].mxu0
      %v6559 = vadd.f32 0.0, %v6558
      %v6560 = vpop.f32.mrb[0].mxu0
      %v6561 = vpop.f32.mrb[0].mxu0
      %v6562 = vadd.f32 0.0, %v6561
      %v6563 = vpop.f32.mrb[0].mxu0
      %6564 = vmatprep.mubr.bf16.mxu0 0
      %6565 = vmatmul.mubr.bf16.gmra.mrb[0].mxu0 %v6423
      %v6566 = vpop.f32.mrb[0].mxu0
      %v6567 = vadd.f32 0.0, %v6566
      %v6568 = vpop.f32.mrb[0].mxu0
      %v6569 = vpop.f32.mrb[0].mxu0
      %v6570 = vadd.f32 0.0, %v6569
      %v6571 = vpop.f32.mrb[0].mxu0
      %6572 = vmatprep.mubr.bf16.mxu0 0
      %6573 = vmatmul.mubr.bf16.gmra.mrb[0].mxu0 %v6424
      %v6574 = vpop.f32.mrb[0].mxu0
      %v6575 = vadd.f32 0.0, %v6574
      %v6576 = vpop.f32.mrb[0].mxu0
      %v6577 = vpop.f32.mrb[0].mxu0
      %v6578 = vadd.f32 0.0, %v6577
      %v6579 = vpop.f32.mrb[0].mxu0
      %6580 = vmatprep.mubr.bf16.mxu0 0
      %6581 = vmatmul.mubr.bf16.gmra.mrb[0].mxu0 %v6425
      %v6582 = vpop.f32.mrb[0].mxu0
      %v6583 = vadd.f32 0.0, %v6582
      %v6584 = vpop.f32.mrb[0].mxu0
      %v6585 = vpop.f32.mrb[0].mxu0
      %v6586 = vadd.f32 0.0, %v6585
      %v6587 = vpop.f32.mrb[0].mxu0
      %6588 = vmatprep.mubr.bf16.mxu0 0
      %6589 = vmatmul.mubr.bf16.gmra.mrb[0].mxu0 %v6426
      %v6590 = vpop.f32.mrb[0].mxu0
      %v6591 = vadd.f32 0.0, %v6590
      %v6592 = vpop.f32.mrb[0].mxu0
      %v6593 = vpop.f32.mrb[0].mxu0
      %v6594 = vadd.f32 0.0, %v6593
      %v6595 = vpop.f32.mrb[0].mxu0
      %6596 = vmatprep.mubr.bf16.mxu0 0
      %6597 = vmatmul.mubr.bf16.gmra.mrb[0].mxu0 %v6427
      %v6598 = vpop.f32.mrb[0].mxu0
      %v6599 = vadd.f32 0.0, %v6598
      %v6600 = vpop.f32.mrb[0].mxu0
      %v6601 = vpop.f32.mrb[0].mxu0
      %v6602 = vadd.f32 0.0, %v6601
      %v6603 = vpop.f32.mrb[0].mxu0
      %6604 = vmatprep.mubr.bf16.mxu0 0
      %6605 = vmatmul.mubr.bf16.gmra.mrb[0].mxu0 %v6428
      %v6606 = vpop.f32.mrb[0].mxu0
      %v6607 = vadd.f32 0.0, %v6606
      %v6608 = vpop.f32.mrb[0].mxu0
      %v6609 = vpop.f32.mrb[0].mxu0
      %v6610 = vadd.f32 0.0, %v6609
      %v6611 = vpop.f32.mrb[0].mxu0
      %6612 = vmatprep.mubr.bf16.mxu0 0
      %6613 = vmatmul.mubr.bf16.gmra.mrb[0].mxu0 %v6429
      %v6614 = vpop.f32.mrb[0].mxu0
      %v6615 = vadd.f32 0.0, %v6614
      %v6616 = vpop.f32.mrb[0].mxu0
      %v6617 = vpop.f32.mrb[0].mxu0
      %v6618 = vadd.f32 0.0, %v6617
      %v6619 = vpop.f32.mrb[0].mxu0
      %6620 = vmatprep.mubr.bf16.mxu0 0
      %6621 = vmatmul.mubr.bf16.gmra.mrb[0].mxu0 %v6430
      %v6622 = vpop.f32.mrb[0].mxu0
      %v6623 = vadd.f32 0.0, %v6622
      %v6624 = vpop.f32.mrb[0].mxu0
      %v6625 = vpop.f32.mrb[0].mxu0
      %v6626 = vadd.f32 0.0, %v6625
      %v6627 = vpop.f32.mrb[0].mxu0
      %6628 = vmatprep.mubr.bf16.mxu0 0
      %6629 = vmatmul.mubr.bf16.gmra.mrb[0].mxu0 %v6431
      %v6630 = vpop.f32.mrb[0].mxu0
      %v6631 = vadd.f32 0.0, %v6630
      %v6632 = vpop.f32.mrb[0].mxu0
      %v6633 = vpop.f32.mrb[0].mxu0
      %v6634 = vadd.f32 0.0, %v6633
      %v6635 = vpop.f32.mrb[0].mxu0
      %6636 = vmatprep.mubr.bf16.mxu0 0
      %6637 = vmatmul.mubr.bf16.gmra.mrb[0].mxu0 %v6432
      %v6638 = vpop.f32.mrb[0].mxu0
      %v6639 = vadd.f32 0.0, %v6638
      %v6640 = vpop.f32.mrb[0].mxu0
      %v6641 = vpop.f32.mrb[0].mxu0
      %v6642 = vadd.f32 0.0, %v6641
      %v6643 = vpop.f32.mrb[0].mxu0
      %6644 = vmatprep.mubr.bf16.mxu0 0
      %6645 = vmatmul.mubr.bf16.gmra.mrb[0].mxu0 %v6433
      %v6646 = vpop.f32.mrb[0].mxu0
      %v6647 = vadd.f32 0.0, %v6646
      %v6648 = vpop.f32.mrb[0].mxu0
      %v6649 = vpop.f32.mrb[0].mxu0
      %v6650 = vadd.f32 0.0, %v6649
      %v6651 = vpop.f32.mrb[0].mxu0
      %6652 = vmatprep.mubr.bf16.mxu0 0
      %6653 = vmatmul.mubr.bf16.gmra.mrb[0].mxu0 %v6434
      %v6654 = vpop.f32.mrb[0].mxu0
      %v6655 = vadd.f32 0.0, %v6654
      %v6656 = vpop.f32.mrb[0].mxu0
      %v6657 = vpop.f32.mrb[0].mxu0
      %v6658 = vadd.f32 0.0, %v6657
      %v6659 = vpop.f32.mrb[0].mxu0
      %6660 = vdwg.mxu0
      %v6661 = vadd.f32 %v6293, %v6535
      %v6662 = vadd.f32 %v6296, %v6538
      %v6663 = vadd.f32 %v6301, %v6543
      %v6664 = vadd.f32 %v6304, %v6546
      %v6665 = vadd.f32 %v6309, %v6551
      %v6666 = vadd.f32 %v6312, %v6554
      %v6667 = vadd.f32 %v6317, %v6559
      %v6668 = vadd.f32 %v6320, %v6562
      %v6669 = vadd.f32 %v6325, %v6567
      %v6670 = vadd.f32 %v6328, %v6570
      %v6671 = vadd.f32 %v6333, %v6575
      %v6672 = vadd.f32 %v6336, %v6578
      %v6673 = vadd.f32 %v6341, %v6583
      %v6674 = vadd.f32 %v6344, %v6586
      %v6675 = vadd.f32 %v6349, %v6591
      %v6676 = vadd.f32 %v6352, %v6594
      %v6677 = vadd.f32 %v6357, %v6599
      %v6678 = vadd.f32 %v6360, %v6602
      %v6679 = vadd.f32 %v6365, %v6607
      %v6680 = vadd.f32 %v6368, %v6610
      %v6681 = vadd.f32 %v6373, %v6615
      %v6682 = vadd.f32 %v6376, %v6618
      %v6683 = vadd.f32 %v6381, %v6623
      %v6684 = vadd.f32 %v6384, %v6626
      %v6685 = vadd.f32 %v6389, %v6631
      %v6686 = vadd.f32 %v6392, %v6634
      %v6687 = vadd.f32 %v6397, %v6639
      %v6688 = vadd.f32 %v6400, %v6642
      %v6689 = vadd.f32 %v6405, %v6647
      %v6690 = vadd.f32 %v6408, %v6650
      %v6691 = vadd.f32 %v6413, %v6655
      %v6692 = vadd.f32 %v6416, %v6658
      %v6693 = vld [vmem:[#allocation2 + $0x8] sm:$0xff]
      %v6694 = vld [vmem:[#allocation2 + $0x10] sm:$0xff]
      %v6695 = vld [vmem:[#allocation2 + $0x18] sm:$0xff]
      %v6696 = vld [vmem:[#allocation2 + $0x20] sm:$0xff]
      %v6697 = vld [vmem:[#allocation2 + $0x28] sm:$0xff]
      %v6698 = vld [vmem:[#allocation2 + $0x30] sm:$0xff]
      %v6699 = vld [vmem:[#allocation2 + $0x38] sm:$0xff]
      %v6700 = vld [vmem:[#allocation2 + $0x40] sm:$0xff]
      %v6701 = vld [vmem:[#allocation2 + $0x48] sm:$0xff]
      %v6702 = vld [vmem:[#allocation2 + $0x50] sm:$0xff]
      %v6703 = vld [vmem:[#allocation2 + $0x58] sm:$0xff]
      %v6704 = vld [vmem:[#allocation2 + $0x60] sm:$0xff]
      %v6705 = vld [vmem:[#allocation2 + $0x68] sm:$0xff]
      %v6706 = vld [vmem:[#allocation2 + $0x70] sm:$0xff]
      %v6707 = vld [vmem:[#allocation2 + $0x78] sm:$0xff]
      %v6708 = vld [vmem:[#allocation2 + $0x80] sm:$0xff]
      %s6709 = scalar_lea.vmem %s3, 192
      %v6710 = vld [vmem:[%s6709] sm:$0xf]
      %v6711 = vld [vmem:[%s6709 + $0x4] sm:$0xf]
      %v6712 = vld [vmem:[%s6709 + $0x8] sm:$0xf]
      %v6713 = vld [vmem:[%s6709 + $0xc] sm:$0xf]
      %v6714 = vld [vmem:[%s6709 + $0x10] sm:$0xf]
      %v6715 = vld [vmem:[%s6709 + $0x14] sm:$0xf]
      %v6716 = vld [vmem:[%s6709 + $0x18] sm:$0xf]
      %v6717 = vld [vmem:[%s6709 + $0x1c] sm:$0xf]
      %v6718 = vld [vmem:[%s6709 + $0x20] sm:$0xf]
      %v6719 = vld [vmem:[%s6709 + $0x24] sm:$0xf]
      %v6720 = vld [vmem:[%s6709 + $0x28] sm:$0xf]
      %v6721 = vld [vmem:[%s6709 + $0x2c] sm:$0xf]
      %v6722 = vld [vmem:[%s6709 + $0x30] sm:$0xf]
      %v6723 = vld [vmem:[%s6709 + $0x34] sm:$0xf]
      %v6724 = vld [vmem:[%s6709 + $0x38] sm:$0xf]
      %v6725 = vld [vmem:[%s6709 + $0x3c] sm:$0xf]
      %v6742 = vunpack.c.l.b16 %v6710
      %v6743 = vunpack.c.l.b16 %v6711
      %v6744 = vunpack.c.l.b16 %v6712
      %v6745 = vunpack.c.l.b16 %v6713
      %v6746 = vunpack.c.l.b16 %v6714
      %v6747 = vunpack.c.l.b16 %v6715
      %v6748 = vunpack.c.l.b16 %v6716
      %v6749 = vunpack.c.l.b16 %v6717
      %v6750 = vunpack.c.l.b16 %v6718
      %v6751 = vunpack.c.l.b16 %v6719
      %v6752 = vunpack.c.l.b16 %v6720
      %v6753 = vunpack.c.l.b16 %v6721
      %v6754 = vunpack.c.l.b16 %v6722
      %v6755 = vunpack.c.l.b16 %v6723
      %v6756 = vunpack.c.l.b16 %v6724
      %v6757 = vunpack.c.l.b16 %v6725
      %v6758 = vpack.c.b16 %v6743, %v6742
      %v6759 = vpack.c.b16 %v6745, %v6744
      %v6760 = vpack.c.b16 %v6747, %v6746
      %v6761 = vpack.c.b16 %v6749, %v6748
      %v6762 = vpack.c.b16 %v6751, %v6750
      %v6763 = vpack.c.b16 %v6753, %v6752
      %v6764 = vpack.c.b16 %v6755, %v6754
      %v6765 = vpack.c.b16 %v6757, %v6756
      %6774 = vmatprep.subr.bf16.mxu0 0
      %6775 = vmatpush1.bf16.msra.mxu0 %v6758
      %6776 = vmatprep.subr.bf16.mxu0 0
      %6777 = vmatpush1.bf16.msra.mxu0 %v6759
      %6778 = vmatprep.subr.bf16.mxu0 0
      %6779 = vmatpush1.bf16.msra.mxu0 %v6760
      %6780 = vmatprep.subr.bf16.mxu0 0
      %6781 = vmatpush1.bf16.msra.mxu0 %v6761
      %6782 = vmatprep.subr.bf16.mxu0 0
      %6783 = vmatpush1.bf16.msra.mxu0 %v6762
      %6784 = vmatprep.subr.bf16.mxu0 0
      %6785 = vmatpush1.bf16.msra.mxu0 %v6763
      %6786 = vmatprep.subr.bf16.mxu0 0
      %6787 = vmatpush1.bf16.msra.mxu0 %v6764
      %6788 = vmatprep.subr.bf16.mxu0 0
      %6789 = vmatpush1.bf16.msra.mxu0 %v6765
      %6790 = vmatprep.subr.bf16.mxu0 0
      %6791 = vmatpush1.bf16.msra.mxu0 0
      %6792 = vmatprep.subr.bf16.mxu0 0
      %6793 = vmatpush1.bf16.msra.mxu0 0
      %6794 = vmatprep.subr.bf16.mxu0 0
      %6795 = vmatpush1.bf16.msra.mxu0 0
      %6796 = vmatprep.subr.bf16.mxu0 0
      %6797 = vmatpush1.bf16.msra.mxu0 0
      %6798 = vmatprep.subr.bf16.mxu0 0
      %6799 = vmatpush1.bf16.msra.mxu0 0
      %6800 = vmatprep.subr.bf16.mxu0 0
      %6801 = vmatpush1.bf16.msra.mxu0 0
      %6802 = vmatprep.subr.bf16.mxu0 0
      %6803 = vmatpush1.bf16.msra.mxu0 0
      %6804 = vmatprep.subr.bf16.mxu0 0
      %6805 = vmatpush1.bf16.msra.mxu0 0
      %6806 = vmatprep.mubr.bf16.mxu0 0
      %6807 = vmatmul.mubr.bf16.gmra.mrb[0].mxu0 %v6693
      %v6808 = vpop.f32.mrb[0].mxu0
      %v6809 = vadd.f32 0.0, %v6808
      %v6810 = vpop.f32.mrb[0].mxu0
      %v6811 = vpop.f32.mrb[0].mxu0
      %v6812 = vadd.f32 0.0, %v6811
      %v6813 = vpop.f32.mrb[0].mxu0
      %6814 = vmatprep.mubr.bf16.mxu0 0
      %6815 = vmatmul.mubr.bf16.gmra.mrb[0].mxu0 %v6694
      %v6816 = vpop.f32.mrb[0].mxu0
      %v6817 = vadd.f32 0.0, %v6816
      %v6818 = vpop.f32.mrb[0].mxu0
      %v6819 = vpop.f32.mrb[0].mxu0
      %v6820 = vadd.f32 0.0, %v6819
      %v6821 = vpop.f32.mrb[0].mxu0
      %6822 = vmatprep.mubr.bf16.mxu0 0
      %6823 = vmatmul.mubr.bf16.gmra.mrb[0].mxu0 %v6695
      %v6824 = vpop.f32.mrb[0].mxu0
      %v6825 = vadd.f32 0.0, %v6824
      %v6826 = vpop.f32.mrb[0].mxu0
      %v6827 = vpop.f32.mrb[0].mxu0
      %v6828 = vadd.f32 0.0, %v6827
      %v6829 = vpop.f32.mrb[0].mxu0
      %6830 = vmatprep.mubr.bf16.mxu0 0
      %6831 = vmatmul.mubr.bf16.gmra.mrb[0].mxu0 %v6696
      %v6832 = vpop.f32.mrb[0].mxu0
      %v6833 = vadd.f32 0.0, %v6832
      %v6834 = vpop.f32.mrb[0].mxu0
      %v6835 = vpop.f32.mrb[0].mxu0
      %v6836 = vadd.f32 0.0, %v6835
      %v6837 = vpop.f32.mrb[0].mxu0
      %6838 = vmatprep.mubr.bf16.mxu0 0
      %6839 = vmatmul.mubr.bf16.gmra.mrb[0].mxu0 %v6697
      %v6840 = vpop.f32.mrb[0].mxu0
      %v6841 = vadd.f32 0.0, %v6840
      %v6842 = vpop.f32.mrb[0].mxu0
      %v6843 = vpop.f32.mrb[0].mxu0
      %v6844 = vadd.f32 0.0, %v6843
      %v6845 = vpop.f32.mrb[0].mxu0
      %6846 = vmatprep.mubr.bf16.mxu0 0
      %6847 = vmatmul.mubr.bf16.gmra.mrb[0].mxu0 %v6698
      %v6848 = vpop.f32.mrb[0].mxu0
      %v6849 = vadd.f32 0.0, %v6848
      %v6850 = vpop.f32.mrb[0].mxu0
      %v6851 = vpop.f32.mrb[0].mxu0
      %v6852 = vadd.f32 0.0, %v6851
      %v6853 = vpop.f32.mrb[0].mxu0
      %6854 = vmatprep.mubr.bf16.mxu0 0
      %6855 = vmatmul.mubr.bf16.gmra.mrb[0].mxu0 %v6699
      %v6856 = vpop.f32.mrb[0].mxu0
      %v6857 = vadd.f32 0.0, %v6856
      %v6858 = vpop.f32.mrb[0].mxu0
      %v6859 = vpop.f32.mrb[0].mxu0
      %v6860 = vadd.f32 0.0, %v6859
      %v6861 = vpop.f32.mrb[0].mxu0
      %6862 = vmatprep.mubr.bf16.mxu0 0
      %6863 = vmatmul.mubr.bf16.gmra.mrb[0].mxu0 %v6700
      %v6864 = vpop.f32.mrb[0].mxu0
      %v6865 = vadd.f32 0.0, %v6864
      %v6866 = vpop.f32.mrb[0].mxu0
      %v6867 = vpop.f32.mrb[0].mxu0
      %v6868 = vadd.f32 0.0, %v6867
      %v6869 = vpop.f32.mrb[0].mxu0
      %6870 = vmatprep.mubr.bf16.mxu0 0
      %6871 = vmatmul.mubr.bf16.gmra.mrb[0].mxu0 %v6701
      %v6872 = vpop.f32.mrb[0].mxu0
      %v6873 = vadd.f32 0.0, %v6872
      %v6874 = vpop.f32.mrb[0].mxu0
      %v6875 = vpop.f32.mrb[0].mxu0
      %v6876 = vadd.f32 0.0, %v6875
      %v6877 = vpop.f32.mrb[0].mxu0
      %6878 = vmatprep.mubr.bf16.mxu0 0
      %6879 = vmatmul.mubr.bf16.gmra.mrb[0].mxu0 %v6702
      %v6880 = vpop.f32.mrb[0].mxu0
      %v6881 = vadd.f32 0.0, %v6880
      %v6882 = vpop.f32.mrb[0].mxu0
      %v6883 = vpop.f32.mrb[0].mxu0
      %v6884 = vadd.f32 0.0, %v6883
      %v6885 = vpop.f32.mrb[0].mxu0
      %6886 = vmatprep.mubr.bf16.mxu0 0
      %6887 = vmatmul.mubr.bf16.gmra.mrb[0].mxu0 %v6703
      %v6888 = vpop.f32.mrb[0].mxu0
      %v6889 = vadd.f32 0.0, %v6888
      %v6890 = vpop.f32.mrb[0].mxu0
      %v6891 = vpop.f32.mrb[0].mxu0
      %v6892 = vadd.f32 0.0, %v6891
      %v6893 = vpop.f32.mrb[0].mxu0
      %6894 = vmatprep.mubr.bf16.mxu0 0
      %6895 = vmatmul.mubr.bf16.gmra.mrb[0].mxu0 %v6704
      %v6896 = vpop.f32.mrb[0].mxu0
      %v6897 = vadd.f32 0.0, %v6896
      %v6898 = vpop.f32.mrb[0].mxu0
      %v6899 = vpop.f32.mrb[0].mxu0
      %v6900 = vadd.f32 0.0, %v6899
      %v6901 = vpop.f32.mrb[0].mxu0
      %6902 = vmatprep.mubr.bf16.mxu0 0
      %6903 = vmatmul.mubr.bf16.gmra.mrb[0].mxu0 %v6705
      %v6904 = vpop.f32.mrb[0].mxu0
      %v6905 = vadd.f32 0.0, %v6904
      %v6906 = vpop.f32.mrb[0].mxu0
      %v6907 = vpop.f32.mrb[0].mxu0
      %v6908 = vadd.f32 0.0, %v6907
      %v6909 = vpop.f32.mrb[0].mxu0
      %6910 = vmatprep.mubr.bf16.mxu0 0
      %6911 = vmatmul.mubr.bf16.gmra.mrb[0].mxu0 %v6706
      %v6912 = vpop.f32.mrb[0].mxu0
      %v6913 = vadd.f32 0.0, %v6912
      %v6914 = vpop.f32.mrb[0].mxu0
      %v6915 = vpop.f32.mrb[0].mxu0
      %v6916 = vadd.f32 0.0, %v6915
      %v6917 = vpop.f32.mrb[0].mxu0
      %6918 = vmatprep.mubr.bf16.mxu0 0
      %6919 = vmatmul.mubr.bf16.gmra.mrb[0].mxu0 %v6707
      %v6920 = vpop.f32.mrb[0].mxu0
      %v6921 = vadd.f32 0.0, %v6920
      %v6922 = vpop.f32.mrb[0].mxu0
      %v6923 = vpop.f32.mrb[0].mxu0
      %v6924 = vadd.f32 0.0, %v6923
      %v6925 = vpop.f32.mrb[0].mxu0
      %6926 = vmatprep.mubr.bf16.mxu0 0
      %6927 = vmatmul.mubr.bf16.gmra.mrb[0].mxu0 %v6708
      %v6928 = vpop.f32.mrb[0].mxu0
      %v6929 = vadd.f32 0.0, %v6928
      %v6930 = vpop.f32.mrb[0].mxu0
      %v6931 = vpop.f32.mrb[0].mxu0
      %v6932 = vadd.f32 0.0, %v6931
      %v6933 = vpop.f32.mrb[0].mxu0
      %6934 = vdwg.mxu0
      %v6935 = vadd.f32 %v6661, %v6809
      %v6936 = vadd.f32 %v6662, %v6812
      %v6937 = vadd.f32 %v6663, %v6817
      %v6938 = vadd.f32 %v6664, %v6820
      %v6939 = vadd.f32 %v6665, %v6825
      %v6940 = vadd.f32 %v6666, %v6828
      %v6941 = vadd.f32 %v6667, %v6833
      %v6942 = vadd.f32 %v6668, %v6836
      %v6943 = vadd.f32 %v6669, %v6841
      %v6944 = vadd.f32 %v6670, %v6844
      %v6945 = vadd.f32 %v6671, %v6849
      %v6946 = vadd.f32 %v6672, %v6852
      %v6947 = vadd.f32 %v6673, %v6857
      %v6948 = vadd.f32 %v6674, %v6860
      %v6949 = vadd.f32 %v6675, %v6865
      %v6950 = vadd.f32 %v6676, %v6868
      %v6951 = vadd.f32 %v6677, %v6873
      %v6952 = vadd.f32 %v6678, %v6876
      %v6953 = vadd.f32 %v6679, %v6881
      %v6954 = vadd.f32 %v6680, %v6884
      %v6955 = vadd.f32 %v6681, %v6889
      %v6956 = vadd.f32 %v6682, %v6892
      %v6957 = vadd.f32 %v6683, %v6897
      %v6958 = vadd.f32 %v6684, %v6900
      %v6959 = vadd.f32 %v6685, %v6905
      %v6960 = vadd.f32 %v6686, %v6908
      %v6961 = vadd.f32 %v6687, %v6913
      %v6962 = vadd.f32 %v6688, %v6916
      %v6963 = vadd.f32 %v6689, %v6921
      %v6964 = vadd.f32 %v6690, %v6924
      %v6965 = vadd.f32 %v6691, %v6929
      %v6966 = vadd.f32 %v6692, %v6932
      %v6967 = vld [vmem:[%s1069 + $0x8] sm:$0xff]
      %v6968 = vld [vmem:[%s1069 + $0x10] sm:$0xff]
      %v6969 = vld [vmem:[%s1069 + $0x18] sm:$0xff]
      %v6970 = vld [vmem:[%s1069 + $0x20] sm:$0xff]
      %v6971 = vld [vmem:[%s1069 + $0x28] sm:$0xff]
      %v6972 = vld [vmem:[%s1069 + $0x30] sm:$0xff]
      %v6973 = vld [vmem:[%s1069 + $0x38] sm:$0xff]
      %v6974 = vld [vmem:[%s1069 + $0x40] sm:$0xff]
      %v6975 = vld [vmem:[%s1069 + $0x48] sm:$0xff]
      %v6976 = vld [vmem:[%s1069 + $0x50] sm:$0xff]
      %v6977 = vld [vmem:[%s1069 + $0x58] sm:$0xff]
      %v6978 = vld [vmem:[%s1069 + $0x60] sm:$0xff]
      %v6979 = vld [vmem:[%s1069 + $0x68] sm:$0xff]
      %v6980 = vld [vmem:[%s1069 + $0x70] sm:$0xff]
      %v6981 = vld [vmem:[%s1069 + $0x78] sm:$0xff]
      %v6982 = vld [vmem:[%s1069 + $0x80] sm:$0xff]
      %s6983 = scalar_lea.vmem %s3, 256
      %v6984 = vld [vmem:[%s6983] sm:$0xf]
      %v6985 = vld [vmem:[%s6983 + $0x4] sm:$0xf]
      %v6986 = vld [vmem:[%s6983 + $0x8] sm:$0xf]
      %v6987 = vld [vmem:[%s6983 + $0xc] sm:$0xf]
      %v6988 = vld [vmem:[%s6983 + $0x10] sm:$0xf]
      %v6989 = vld [vmem:[%s6983 + $0x14] sm:$0xf]
      %v6990 = vld [vmem:[%s6983 + $0x18] sm:$0xf]
      %v6991 = vld [vmem:[%s6983 + $0x1c] sm:$0xf]
      %v6992 = vld [vmem:[%s6983 + $0x20] sm:$0xf]
      %v6993 = vld [vmem:[%s6983 + $0x24] sm:$0xf]
      %v6994 = vld [vmem:[%s6983 + $0x28] sm:$0xf]
      %v6995 = vld [vmem:[%s6983 + $0x2c] sm:$0xf]
      %v6996 = vld [vmem:[%s6983 + $0x30] sm:$0xf]
      %v6997 = vld [vmem:[%s6983 + $0x34] sm:$0xf]
      %v6998 = vld [vmem:[%s6983 + $0x38] sm:$0xf]
      %v6999 = vld [vmem:[%s6983 + $0x3c] sm:$0xf]
      %v7016 = vunpack.c.l.b16 %v6984
      %v7017 = vunpack.c.l.b16 %v6985
      %v7018 = vunpack.c.l.b16 %v6986
      %v7019 = vunpack.c.l.b16 %v6987
      %v7020 = vunpack.c.l.b16 %v6988
      %v7021 = vunpack.c.l.b16 %v6989
      %v7022 = vunpack.c.l.b16 %v6990
      %v7023 = vunpack.c.l.b16 %v6991
      %v7024 = vunpack.c.l.b16 %v6992
      %v7025 = vunpack.c.l.b16 %v6993
      %v7026 = vunpack.c.l.b16 %v6994
      %v7027 = vunpack.c.l.b16 %v6995
      %v7028 = vunpack.c.l.b16 %v6996
      %v7029 = vunpack.c.l.b16 %v6997
      %v7030 = vunpack.c.l.b16 %v6998
      %v7031 = vunpack.c.l.b16 %v6999
      %v7032 = vpack.c.b16 %v7017, %v7016
      %v7033 = vpack.c.b16 %v7019, %v7018
      %v7034 = vpack.c.b16 %v7021, %v7020
      %v7035 = vpack.c.b16 %v7023, %v7022
      %v7036 = vpack.c.b16 %v7025, %v7024
      %v7037 = vpack.c.b16 %v7027, %v7026
      %v7038 = vpack.c.b16 %v7029, %v7028
      %v7039 = vpack.c.b16 %v7031, %v7030
      %7048 = vmatprep.subr.bf16.mxu0 0
      %7049 = vmatpush1.bf16.msra.mxu0 %v7032
      %7050 = vmatprep.subr.bf16.mxu0 0
      %7051 = vmatpush1.bf16.msra.mxu0 %v7033
      %7052 = vmatprep.subr.bf16.mxu0 0
      %7053 = vmatpush1.bf16.msra.mxu0 %v7034
      %7054 = vmatprep.subr.bf16.mxu0 0
      %7055 = vmatpush1.bf16.msra.mxu0 %v7035
      %7056 = vmatprep.subr.bf16.mxu0 0
      %7057 = vmatpush1.bf16.msra.mxu0 %v7036
      %7058 = vmatprep.subr.bf16.mxu0 0
      %7059 = vmatpush1.bf16.msra.mxu0 %v7037
      %7060 = vmatprep.subr.bf16.mxu0 0
      %7061 = vmatpush1.bf16.msra.mxu0 %v7038
      %7062 = vmatprep.subr.bf16.mxu0 0
      %7063 = vmatpush1.bf16.msra.mxu0 %v7039
      %7064 = vmatprep.subr.bf16.mxu0 0
      %7065 = vmatpush1.bf16.msra.mxu0 0
      %7066 = vmatprep.subr.bf16.mxu0 0
      %7067 = vmatpush1.bf16.msra.mxu0 0
      %7068 = vmatprep.subr.bf16.mxu0 0
      %7069 = vmatpush1.bf16.msra.mxu0 0
      %7070 = vmatprep.subr.bf16.mxu0 0
      %7071 = vmatpush1.bf16.msra.mxu0 0
      %7072 = vmatprep.subr.bf16.mxu0 0
      %7073 = vmatpush1.bf16.msra.mxu0 0
      %7074 = vmatprep.subr.bf16.mxu0 0
      %7075 = vmatpush1.bf16.msra.mxu0 0
      %7076 = vmatprep.subr.bf16.mxu0 0
      %7077 = vmatpush1.bf16.msra.mxu0 0
      %7078 = vmatprep.subr.bf16.mxu0 0
      %7079 = vmatpush1.bf16.msra.mxu0 0
      %7080 = vmatprep.mubr.bf16.mxu0 0
      %7081 = vmatmul.mubr.bf16.gmra.mrb[0].mxu0 %v6967
      %v7082 = vpop.f32.mrb[0].mxu0
      %v7083 = vadd.f32 0.0, %v7082
      %v7084 = vpop.f32.mrb[0].mxu0
      %v7085 = vpop.f32.mrb[0].mxu0
      %v7086 = vadd.f32 0.0, %v7085
      %v7087 = vpop.f32.mrb[0].mxu0
      %7088 = vmatprep.mubr.bf16.mxu0 0
      %7089 = vmatmul.mubr.bf16.gmra.mrb[0].mxu0 %v6968
      %v7090 = vpop.f32.mrb[0].mxu0
      %v7091 = vadd.f32 0.0, %v7090
      %v7092 = vpop.f32.mrb[0].mxu0
      %v7093 = vpop.f32.mrb[0].mxu0
      %v7094 = vadd.f32 0.0, %v7093
      %v7095 = vpop.f32.mrb[0].mxu0
      %7096 = vmatprep.mubr.bf16.mxu0 0
      %7097 = vmatmul.mubr.bf16.gmra.mrb[0].mxu0 %v6969
      %v7098 = vpop.f32.mrb[0].mxu0
      %v7099 = vadd.f32 0.0, %v7098
      %v7100 = vpop.f32.mrb[0].mxu0
      %v7101 = vpop.f32.mrb[0].mxu0
      %v7102 = vadd.f32 0.0, %v7101
      %v7103 = vpop.f32.mrb[0].mxu0
      %7104 = vmatprep.mubr.bf16.mxu0 0
      %7105 = vmatmul.mubr.bf16.gmra.mrb[0].mxu0 %v6970
      %v7106 = vpop.f32.mrb[0].mxu0
      %v7107 = vadd.f32 0.0, %v7106
      %v7108 = vpop.f32.mrb[0].mxu0
      %v7109 = vpop.f32.mrb[0].mxu0
      %v7110 = vadd.f32 0.0, %v7109
      %v7111 = vpop.f32.mrb[0].mxu0
      %7112 = vmatprep.mubr.bf16.mxu0 0
      %7113 = vmatmul.mubr.bf16.gmra.mrb[0].mxu0 %v6971
      %v7114 = vpop.f32.mrb[0].mxu0
      %v7115 = vadd.f32 0.0, %v7114
      %v7116 = vpop.f32.mrb[0].mxu0
      %v7117 = vpop.f32.mrb[0].mxu0
      %v7118 = vadd.f32 0.0, %v7117
      %v7119 = vpop.f32.mrb[0].mxu0
      %7120 = vmatprep.mubr.bf16.mxu0 0
      %7121 = vmatmul.mubr.bf16.gmra.mrb[0].mxu0 %v6972
      %v7122 = vpop.f32.mrb[0].mxu0
      %v7123 = vadd.f32 0.0, %v7122
      %v7124 = vpop.f32.mrb[0].mxu0
      %v7125 = vpop.f32.mrb[0].mxu0
      %v7126 = vadd.f32 0.0, %v7125
      %v7127 = vpop.f32.mrb[0].mxu0
      %7128 = vmatprep.mubr.bf16.mxu0 0
      %7129 = vmatmul.mubr.bf16.gmra.mrb[0].mxu0 %v6973
      %v7130 = vpop.f32.mrb[0].mxu0
      %v7131 = vadd.f32 0.0, %v7130
      %v7132 = vpop.f32.mrb[0].mxu0
      %v7133 = vpop.f32.mrb[0].mxu0
      %v7134 = vadd.f32 0.0, %v7133
      %v7135 = vpop.f32.mrb[0].mxu0
      %7136 = vmatprep.mubr.bf16.mxu0 0
      %7137 = vmatmul.mubr.bf16.gmra.mrb[0].mxu0 %v6974
      %v7138 = vpop.f32.mrb[0].mxu0
      %v7139 = vadd.f32 0.0, %v7138
      %v7140 = vpop.f32.mrb[0].mxu0
      %v7141 = vpop.f32.mrb[0].mxu0
      %v7142 = vadd.f32 0.0, %v7141
      %v7143 = vpop.f32.mrb[0].mxu0
      %7144 = vmatprep.mubr.bf16.mxu0 0
      %7145 = vmatmul.mubr.bf16.gmra.mrb[0].mxu0 %v6975
      %v7146 = vpop.f32.mrb[0].mxu0
      %v7147 = vadd.f32 0.0, %v7146
      %v7148 = vpop.f32.mrb[0].mxu0
      %v7149 = vpop.f32.mrb[0].mxu0
      %v7150 = vadd.f32 0.0, %v7149
      %v7151 = vpop.f32.mrb[0].mxu0
      %7152 = vmatprep.mubr.bf16.mxu0 0
      %7153 = vmatmul.mubr.bf16.gmra.mrb[0].mxu0 %v6976
      %v7154 = vpop.f32.mrb[0].mxu0
      %v7155 = vadd.f32 0.0, %v7154
      %v7156 = vpop.f32.mrb[0].mxu0
      %v7157 = vpop.f32.mrb[0].mxu0
      %v7158 = vadd.f32 0.0, %v7157
      %v7159 = vpop.f32.mrb[0].mxu0
      %7160 = vmatprep.mubr.bf16.mxu0 0
      %7161 = vmatmul.mubr.bf16.gmra.mrb[0].mxu0 %v6977
      %v7162 = vpop.f32.mrb[0].mxu0
      %v7163 = vadd.f32 0.0, %v7162
      %v7164 = vpop.f32.mrb[0].mxu0
      %v7165 = vpop.f32.mrb[0].mxu0
      %v7166 = vadd.f32 0.0, %v7165
      %v7167 = vpop.f32.mrb[0].mxu0
      %7168 = vmatprep.mubr.bf16.mxu0 0
      %7169 = vmatmul.mubr.bf16.gmra.mrb[0].mxu0 %v6978
      %v7170 = vpop.f32.mrb[0].mxu0
      %v7171 = vadd.f32 0.0, %v7170
      %v7172 = vpop.f32.mrb[0].mxu0
      %v7173 = vpop.f32.mrb[0].mxu0
      %v7174 = vadd.f32 0.0, %v7173
      %v7175 = vpop.f32.mrb[0].mxu0
      %7176 = vmatprep.mubr.bf16.mxu0 0
      %7177 = vmatmul.mubr.bf16.gmra.mrb[0].mxu0 %v6979
      %v7178 = vpop.f32.mrb[0].mxu0
      %v7179 = vadd.f32 0.0, %v7178
      %v7180 = vpop.f32.mrb[0].mxu0
      %v7181 = vpop.f32.mrb[0].mxu0
      %v7182 = vadd.f32 0.0, %v7181
      %v7183 = vpop.f32.mrb[0].mxu0
      %7184 = vmatprep.mubr.bf16.mxu0 0
      %7185 = vmatmul.mubr.bf16.gmra.mrb[0].mxu0 %v6980
      %v7186 = vpop.f32.mrb[0].mxu0
      %v7187 = vadd.f32 0.0, %v7186
      %v7188 = vpop.f32.mrb[0].mxu0
      %v7189 = vpop.f32.mrb[0].mxu0
      %v7190 = vadd.f32 0.0, %v7189
      %v7191 = vpop.f32.mrb[0].mxu0
      %7192 = vmatprep.mubr.bf16.mxu0 0
      %7193 = vmatmul.mubr.bf16.gmra.mrb[0].mxu0 %v6981
      %v7194 = vpop.f32.mrb[0].mxu0
      %v7195 = vadd.f32 0.0, %v7194
      %v7196 = vpop.f32.mrb[0].mxu0
      %v7197 = vpop.f32.mrb[0].mxu0
      %v7198 = vadd.f32 0.0, %v7197
      %v7199 = vpop.f32.mrb[0].mxu0
      %7200 = vmatprep.mubr.bf16.mxu0 0
      %7201 = vmatmul.mubr.bf16.gmra.mrb[0].mxu0 %v6982
      %v7202 = vpop.f32.mrb[0].mxu0
      %v7203 = vadd.f32 0.0, %v7202
      %v7204 = vpop.f32.mrb[0].mxu0
      %v7205 = vpop.f32.mrb[0].mxu0
      %v7206 = vadd.f32 0.0, %v7205
      %v7207 = vpop.f32.mrb[0].mxu0
      %7208 = vdwg.mxu0
      %v7209 = vadd.f32 %v6935, %v7083
      %v7210 = vadd.f32 %v6936, %v7086
      %v7211 = vadd.f32 %v6937, %v7091
      %v7212 = vadd.f32 %v6938, %v7094
      %v7213 = vadd.f32 %v6939, %v7099
      %v7214 = vadd.f32 %v6940, %v7102
      %v7215 = vadd.f32 %v6941, %v7107
      %v7216 = vadd.f32 %v6942, %v7110
      %v7217 = vadd.f32 %v6943, %v7115
      %v7218 = vadd.f32 %v6944, %v7118
      %v7219 = vadd.f32 %v6945, %v7123
      %v7220 = vadd.f32 %v6946, %v7126
      %v7221 = vadd.f32 %v6947, %v7131
      %v7222 = vadd.f32 %v6948, %v7134
      %v7223 = vadd.f32 %v6949, %v7139
      %v7224 = vadd.f32 %v6950, %v7142
      %v7225 = vadd.f32 %v6951, %v7147
      %v7226 = vadd.f32 %v6952, %v7150
      %v7227 = vadd.f32 %v6953, %v7155
      %v7228 = vadd.f32 %v6954, %v7158
      %v7229 = vadd.f32 %v6955, %v7163
      %v7230 = vadd.f32 %v6956, %v7166
      %v7231 = vadd.f32 %v6957, %v7171
      %v7232 = vadd.f32 %v6958, %v7174
      %v7233 = vadd.f32 %v6959, %v7179
      %v7234 = vadd.f32 %v6960, %v7182
      %v7235 = vadd.f32 %v6961, %v7187
      %v7236 = vadd.f32 %v6962, %v7190
      %v7237 = vadd.f32 %v6963, %v7195
      %v7238 = vadd.f32 %v6964, %v7198
      %v7239 = vadd.f32 %v6965, %v7203
      %v7240 = vadd.f32 %v6966, %v7206
      %v7241 = vld [vmem:[%s1397 + $0x8] sm:$0xff]
      %v7242 = vld [vmem:[%s1397 + $0x10] sm:$0xff]
      %v7243 = vld [vmem:[%s1397 + $0x18] sm:$0xff]
      %v7244 = vld [vmem:[%s1397 + $0x20] sm:$0xff]
      %v7245 = vld [vmem:[%s1397 + $0x28] sm:$0xff]
      %v7246 = vld [vmem:[%s1397 + $0x30] sm:$0xff]
      %v7247 = vld [vmem:[%s1397 + $0x38] sm:$0xff]
      %v7248 = vld [vmem:[%s1397 + $0x40] sm:$0xff]
      %v7249 = vld [vmem:[%s1397 + $0x48] sm:$0xff]
      %v7250 = vld [vmem:[%s1397 + $0x50] sm:$0xff]
      %v7251 = vld [vmem:[%s1397 + $0x58] sm:$0xff]
      %v7252 = vld [vmem:[%s1397 + $0x60] sm:$0xff]
      %v7253 = vld [vmem:[%s1397 + $0x68] sm:$0xff]
      %v7254 = vld [vmem:[%s1397 + $0x70] sm:$0xff]
      %v7255 = vld [vmem:[%s1397 + $0x78] sm:$0xff]
      %v7256 = vld [vmem:[%s1397 + $0x80] sm:$0xff]
      %s7257 = scalar_lea.vmem %s3, 320
      %v7258 = vld [vmem:[%s7257] sm:$0xf]
      %v7259 = vld [vmem:[%s7257 + $0x4] sm:$0xf]
      %v7260 = vld [vmem:[%s7257 + $0x8] sm:$0xf]
      %v7261 = vld [vmem:[%s7257 + $0xc] sm:$0xf]
      %v7262 = vld [vmem:[%s7257 + $0x10] sm:$0xf]
      %v7263 = vld [vmem:[%s7257 + $0x14] sm:$0xf]
      %v7264 = vld [vmem:[%s7257 + $0x18] sm:$0xf]
      %v7265 = vld [vmem:[%s7257 + $0x1c] sm:$0xf]
      %v7266 = vld [vmem:[%s7257 + $0x20] sm:$0xf]
      %v7267 = vld [vmem:[%s7257 + $0x24] sm:$0xf]
      %v7268 = vld [vmem:[%s7257 + $0x28] sm:$0xf]
      %v7269 = vld [vmem:[%s7257 + $0x2c] sm:$0xf]
      %v7270 = vld [vmem:[%s7257 + $0x30] sm:$0xf]
      %v7271 = vld [vmem:[%s7257 + $0x34] sm:$0xf]
      %v7272 = vld [vmem:[%s7257 + $0x38] sm:$0xf]
      %v7273 = vld [vmem:[%s7257 + $0x3c] sm:$0xf]
      %v7290 = vunpack.c.l.b16 %v7258
      %v7291 = vunpack.c.l.b16 %v7259
      %v7292 = vunpack.c.l.b16 %v7260
      %v7293 = vunpack.c.l.b16 %v7261
      %v7294 = vunpack.c.l.b16 %v7262
      %v7295 = vunpack.c.l.b16 %v7263
      %v7296 = vunpack.c.l.b16 %v7264
      %v7297 = vunpack.c.l.b16 %v7265
      %v7298 = vunpack.c.l.b16 %v7266
      %v7299 = vunpack.c.l.b16 %v7267
      %v7300 = vunpack.c.l.b16 %v7268
      %v7301 = vunpack.c.l.b16 %v7269
      %v7302 = vunpack.c.l.b16 %v7270
      %v7303 = vunpack.c.l.b16 %v7271
      %v7304 = vunpack.c.l.b16 %v7272
      %v7305 = vunpack.c.l.b16 %v7273
      %v7306 = vpack.c.b16 %v7291, %v7290
      %v7307 = vpack.c.b16 %v7293, %v7292
      %v7308 = vpack.c.b16 %v7295, %v7294
      %v7309 = vpack.c.b16 %v7297, %v7296
      %v7310 = vpack.c.b16 %v7299, %v7298
      %v7311 = vpack.c.b16 %v7301, %v7300
      %v7312 = vpack.c.b16 %v7303, %v7302
      %v7313 = vpack.c.b16 %v7305, %v7304
      %7322 = vmatprep.subr.bf16.mxu0 0
      %7323 = vmatpush1.bf16.msra.mxu0 %v7306
      %7324 = vmatprep.subr.bf16.mxu0 0
      %7325 = vmatpush1.bf16.msra.mxu0 %v7307
      %7326 = vmatprep.subr.bf16.mxu0 0
      %7327 = vmatpush1.bf16.msra.mxu0 %v7308
      %7328 = vmatprep.subr.bf16.mxu0 0
      %7329 = vmatpush1.bf16.msra.mxu0 %v7309
      %7330 = vmatprep.subr.bf16.mxu0 0
      %7331 = vmatpush1.bf16.msra.mxu0 %v7310
      %7332 = vmatprep.subr.bf16.mxu0 0
      %7333 = vmatpush1.bf16.msra.mxu0 %v7311
      %7334 = vmatprep.subr.bf16.mxu0 0
      %7335 = vmatpush1.bf16.msra.mxu0 %v7312
      %7336 = vmatprep.subr.bf16.mxu0 0
      %7337 = vmatpush1.bf16.msra.mxu0 %v7313
      %7338 = vmatprep.subr.bf16.mxu0 0
      %7339 = vmatpush1.bf16.msra.mxu0 0
      %7340 = vmatprep.subr.bf16.mxu0 0
      %7341 = vmatpush1.bf16.msra.mxu0 0
      %7342 = vmatprep.subr.bf16.mxu0 0
      %7343 = vmatpush1.bf16.msra.mxu0 0
      %7344 = vmatprep.subr.bf16.mxu0 0
      %7345 = vmatpush1.bf16.msra.mxu0 0
      %7346 = vmatprep.subr.bf16.mxu0 0
      %7347 = vmatpush1.bf16.msra.mxu0 0
      %7348 = vmatprep.subr.bf16.mxu0 0
      %7349 = vmatpush1.bf16.msra.mxu0 0
      %7350 = vmatprep.subr.bf16.mxu0 0
      %7351 = vmatpush1.bf16.msra.mxu0 0
      %7352 = vmatprep.subr.bf16.mxu0 0
      %7353 = vmatpush1.bf16.msra.mxu0 0
      %7354 = vmatprep.mubr.bf16.mxu0 0
      %7355 = vmatmul.mubr.bf16.gmra.mrb[0].mxu0 %v7241
      %v7356 = vpop.f32.mrb[0].mxu0
      %v7357 = vadd.f32 0.0, %v7356
      %v7358 = vpop.f32.mrb[0].mxu0
      %v7359 = vpop.f32.mrb[0].mxu0
      %v7360 = vadd.f32 0.0, %v7359
      %v7361 = vpop.f32.mrb[0].mxu0
      %7362 = vmatprep.mubr.bf16.mxu0 0
      %7363 = vmatmul.mubr.bf16.gmra.mrb[0].mxu0 %v7242
      %v7364 = vpop.f32.mrb[0].mxu0
      %v7365 = vadd.f32 0.0, %v7364
      %v7366 = vpop.f32.mrb[0].mxu0
      %v7367 = vpop.f32.mrb[0].mxu0
      %v7368 = vadd.f32 0.0, %v7367
      %v7369 = vpop.f32.mrb[0].mxu0
      %7370 = vmatprep.mubr.bf16.mxu0 0
      %7371 = vmatmul.mubr.bf16.gmra.mrb[0].mxu0 %v7243
      %v7372 = vpop.f32.mrb[0].mxu0
      %v7373 = vadd.f32 0.0, %v7372
      %v7374 = vpop.f32.mrb[0].mxu0
      %v7375 = vpop.f32.mrb[0].mxu0
      %v7376 = vadd.f32 0.0, %v7375
      %v7377 = vpop.f32.mrb[0].mxu0
      %7378 = vmatprep.mubr.bf16.mxu0 0
      %7379 = vmatmul.mubr.bf16.gmra.mrb[0].mxu0 %v7244
      %v7380 = vpop.f32.mrb[0].mxu0
      %v7381 = vadd.f32 0.0, %v7380
      %v7382 = vpop.f32.mrb[0].mxu0
      %v7383 = vpop.f32.mrb[0].mxu0
      %v7384 = vadd.f32 0.0, %v7383
      %v7385 = vpop.f32.mrb[0].mxu0
      %7386 = vmatprep.mubr.bf16.mxu0 0
      %7387 = vmatmul.mubr.bf16.gmra.mrb[0].mxu0 %v7245
      %v7388 = vpop.f32.mrb[0].mxu0
      %v7389 = vadd.f32 0.0, %v7388
      %v7390 = vpop.f32.mrb[0].mxu0
      %v7391 = vpop.f32.mrb[0].mxu0
      %v7392 = vadd.f32 0.0, %v7391
      %v7393 = vpop.f32.mrb[0].mxu0
      %7394 = vmatprep.mubr.bf16.mxu0 0
      %7395 = vmatmul.mubr.bf16.gmra.mrb[0].mxu0 %v7246
      %v7396 = vpop.f32.mrb[0].mxu0
      %v7397 = vadd.f32 0.0, %v7396
      %v7398 = vpop.f32.mrb[0].mxu0
      %v7399 = vpop.f32.mrb[0].mxu0
      %v7400 = vadd.f32 0.0, %v7399
      %v7401 = vpop.f32.mrb[0].mxu0
      %7402 = vmatprep.mubr.bf16.mxu0 0
      %7403 = vmatmul.mubr.bf16.gmra.mrb[0].mxu0 %v7247
      %v7404 = vpop.f32.mrb[0].mxu0
      %v7405 = vadd.f32 0.0, %v7404
      %v7406 = vpop.f32.mrb[0].mxu0
      %v7407 = vpop.f32.mrb[0].mxu0
      %v7408 = vadd.f32 0.0, %v7407
      %v7409 = vpop.f32.mrb[0].mxu0
      %7410 = vmatprep.mubr.bf16.mxu0 0
      %7411 = vmatmul.mubr.bf16.gmra.mrb[0].mxu0 %v7248
      %v7412 = vpop.f32.mrb[0].mxu0
      %v7413 = vadd.f32 0.0, %v7412
      %v7414 = vpop.f32.mrb[0].mxu0
      %v7415 = vpop.f32.mrb[0].mxu0
      %v7416 = vadd.f32 0.0, %v7415
      %v7417 = vpop.f32.mrb[0].mxu0
      %7418 = vmatprep.mubr.bf16.mxu0 0
      %7419 = vmatmul.mubr.bf16.gmra.mrb[0].mxu0 %v7249
      %v7420 = vpop.f32.mrb[0].mxu0
      %v7421 = vadd.f32 0.0, %v7420
      %v7422 = vpop.f32.mrb[0].mxu0
      %v7423 = vpop.f32.mrb[0].mxu0
      %v7424 = vadd.f32 0.0, %v7423
      %v7425 = vpop.f32.mrb[0].mxu0
      %7426 = vmatprep.mubr.bf16.mxu0 0
      %7427 = vmatmul.mubr.bf16.gmra.mrb[0].mxu0 %v7250
      %v7428 = vpop.f32.mrb[0].mxu0
      %v7429 = vadd.f32 0.0, %v7428
      %v7430 = vpop.f32.mrb[0].mxu0
      %v7431 = vpop.f32.mrb[0].mxu0
      %v7432 = vadd.f32 0.0, %v7431
      %v7433 = vpop.f32.mrb[0].mxu0
      %7434 = vmatprep.mubr.bf16.mxu0 0
      %7435 = vmatmul.mubr.bf16.gmra.mrb[0].mxu0 %v7251
      %v7436 = vpop.f32.mrb[0].mxu0
      %v7437 = vadd.f32 0.0, %v7436
      %v7438 = vpop.f32.mrb[0].mxu0
      %v7439 = vpop.f32.mrb[0].mxu0
      %v7440 = vadd.f32 0.0, %v7439
      %v7441 = vpop.f32.mrb[0].mxu0
      %7442 = vmatprep.mubr.bf16.mxu0 0
      %7443 = vmatmul.mubr.bf16.gmra.mrb[0].mxu0 %v7252
      %v7444 = vpop.f32.mrb[0].mxu0
      %v7445 = vadd.f32 0.0, %v7444
      %v7446 = vpop.f32.mrb[0].mxu0
      %v7447 = vpop.f32.mrb[0].mxu0
      %v7448 = vadd.f32 0.0, %v7447
      %v7449 = vpop.f32.mrb[0].mxu0
      %7450 = vmatprep.mubr.bf16.mxu0 0
      %7451 = vmatmul.mubr.bf16.gmra.mrb[0].mxu0 %v7253
      %v7452 = vpop.f32.mrb[0].mxu0
      %v7453 = vadd.f32 0.0, %v7452
      %v7454 = vpop.f32.mrb[0].mxu0
      %v7455 = vpop.f32.mrb[0].mxu0
      %v7456 = vadd.f32 0.0, %v7455
      %v7457 = vpop.f32.mrb[0].mxu0
      %7458 = vmatprep.mubr.bf16.mxu0 0
      %7459 = vmatmul.mubr.bf16.gmra.mrb[0].mxu0 %v7254
      %v7460 = vpop.f32.mrb[0].mxu0
      %v7461 = vadd.f32 0.0, %v7460
      %v7462 = vpop.f32.mrb[0].mxu0
      %v7463 = vpop.f32.mrb[0].mxu0
      %v7464 = vadd.f32 0.0, %v7463
      %v7465 = vpop.f32.mrb[0].mxu0
      %7466 = vmatprep.mubr.bf16.mxu0 0
      %7467 = vmatmul.mubr.bf16.gmra.mrb[0].mxu0 %v7255
      %v7468 = vpop.f32.mrb[0].mxu0
      %v7469 = vadd.f32 0.0, %v7468
      %v7470 = vpop.f32.mrb[0].mxu0
      %v7471 = vpop.f32.mrb[0].mxu0
      %v7472 = vadd.f32 0.0, %v7471
      %v7473 = vpop.f32.mrb[0].mxu0
      %7474 = vmatprep.mubr.bf16.mxu0 0
      %7475 = vmatmul.mubr.bf16.gmra.mrb[0].mxu0 %v7256
      %v7476 = vpop.f32.mrb[0].mxu0
      %v7477 = vadd.f32 0.0, %v7476
      %v7478 = vpop.f32.mrb[0].mxu0
      %v7479 = vpop.f32.mrb[0].mxu0
      %v7480 = vadd.f32 0.0, %v7479
      %v7481 = vpop.f32.mrb[0].mxu0
      %7482 = vdwg.mxu0
      %v7483 = vadd.f32 %v7209, %v7357
      %v7484 = vadd.f32 %v7210, %v7360
      %v7485 = vadd.f32 %v7211, %v7365
      %v7486 = vadd.f32 %v7212, %v7368
      %v7487 = vadd.f32 %v7213, %v7373
      %v7488 = vadd.f32 %v7214, %v7376
      %v7489 = vadd.f32 %v7215, %v7381
      %v7490 = vadd.f32 %v7216, %v7384
      %v7491 = vadd.f32 %v7217, %v7389
      %v7492 = vadd.f32 %v7218, %v7392
      %v7493 = vadd.f32 %v7219, %v7397
      %v7494 = vadd.f32 %v7220, %v7400
      %v7495 = vadd.f32 %v7221, %v7405
      %v7496 = vadd.f32 %v7222, %v7408
      %v7497 = vadd.f32 %v7223, %v7413
      %v7498 = vadd.f32 %v7224, %v7416
      %v7499 = vadd.f32 %v7225, %v7421
      %v7500 = vadd.f32 %v7226, %v7424
      %v7501 = vadd.f32 %v7227, %v7429
      %v7502 = vadd.f32 %v7228, %v7432
      %v7503 = vadd.f32 %v7229, %v7437
      %v7504 = vadd.f32 %v7230, %v7440
      %v7505 = vadd.f32 %v7231, %v7445
      %v7506 = vadd.f32 %v7232, %v7448
      %v7507 = vadd.f32 %v7233, %v7453
      %v7508 = vadd.f32 %v7234, %v7456
      %v7509 = vadd.f32 %v7235, %v7461
      %v7510 = vadd.f32 %v7236, %v7464
      %v7511 = vadd.f32 %v7237, %v7469
      %v7512 = vadd.f32 %v7238, %v7472
      %v7513 = vadd.f32 %v7239, %v7477
      %v7514 = vadd.f32 %v7240, %v7480
      %v7515 = vld [vmem:[#allocation2 + $0x10] sm:$0xff]
      %v7516 = vld [vmem:[#allocation2 + $0x18] sm:$0xff]
      %v7517 = vld [vmem:[#allocation2 + $0x20] sm:$0xff]
      %v7518 = vld [vmem:[#allocation2 + $0x28] sm:$0xff]
      %v7519 = vld [vmem:[#allocation2 + $0x30] sm:$0xff]
      %v7520 = vld [vmem:[#allocation2 + $0x38] sm:$0xff]
      %v7521 = vld [vmem:[#allocation2 + $0x40] sm:$0xff]
      %v7522 = vld [vmem:[#allocation2 + $0x48] sm:$0xff]
      %v7523 = vld [vmem:[#allocation2 + $0x50] sm:$0xff]
      %v7524 = vld [vmem:[#allocation2 + $0x58] sm:$0xff]
      %v7525 = vld [vmem:[#allocation2 + $0x60] sm:$0xff]
      %v7526 = vld [vmem:[#allocation2 + $0x68] sm:$0xff]
      %v7527 = vld [vmem:[#allocation2 + $0x70] sm:$0xff]
      %v7528 = vld [vmem:[#allocation2 + $0x78] sm:$0xff]
      %v7529 = vld [vmem:[#allocation2 + $0x80] sm:$0xff]
      %v7530 = vld [vmem:[#allocation2 + $0x88] sm:$0xff]
      %s7531 = scalar_lea.vmem %s3, 384
      %v7532 = vld [vmem:[%s7531] sm:$0xf]
      %v7533 = vld [vmem:[%s7531 + $0x4] sm:$0xf]
      %v7534 = vld [vmem:[%s7531 + $0x8] sm:$0xf]
      %v7535 = vld [vmem:[%s7531 + $0xc] sm:$0xf]
      %v7536 = vld [vmem:[%s7531 + $0x10] sm:$0xf]
      %v7537 = vld [vmem:[%s7531 + $0x14] sm:$0xf]
      %v7538 = vld [vmem:[%s7531 + $0x18] sm:$0xf]
      %v7539 = vld [vmem:[%s7531 + $0x1c] sm:$0xf]
      %v7540 = vld [vmem:[%s7531 + $0x20] sm:$0xf]
      %v7541 = vld [vmem:[%s7531 + $0x24] sm:$0xf]
      %v7542 = vld [vmem:[%s7531 + $0x28] sm:$0xf]
      %v7543 = vld [vmem:[%s7531 + $0x2c] sm:$0xf]
      %v7544 = vld [vmem:[%s7531 + $0x30] sm:$0xf]
      %v7545 = vld [vmem:[%s7531 + $0x34] sm:$0xf]
      %v7546 = vld [vmem:[%s7531 + $0x38] sm:$0xf]
      %v7547 = vld [vmem:[%s7531 + $0x3c] sm:$0xf]
      %v7564 = vunpack.c.l.b16 %v7532
      %v7565 = vunpack.c.l.b16 %v7533
      %v7566 = vunpack.c.l.b16 %v7534
      %v7567 = vunpack.c.l.b16 %v7535
      %v7568 = vunpack.c.l.b16 %v7536
      %v7569 = vunpack.c.l.b16 %v7537
      %v7570 = vunpack.c.l.b16 %v7538
      %v7571 = vunpack.c.l.b16 %v7539
      %v7572 = vunpack.c.l.b16 %v7540
      %v7573 = vunpack.c.l.b16 %v7541
      %v7574 = vunpack.c.l.b16 %v7542
      %v7575 = vunpack.c.l.b16 %v7543
      %v7576 = vunpack.c.l.b16 %v7544
      %v7577 = vunpack.c.l.b16 %v7545
      %v7578 = vunpack.c.l.b16 %v7546
      %v7579 = vunpack.c.l.b16 %v7547
      %v7580 = vpack.c.b16 %v7565, %v7564
      %v7581 = vpack.c.b16 %v7567, %v7566
      %v7582 = vpack.c.b16 %v7569, %v7568
      %v7583 = vpack.c.b16 %v7571, %v7570
      %v7584 = vpack.c.b16 %v7573, %v7572
      %v7585 = vpack.c.b16 %v7575, %v7574
      %v7586 = vpack.c.b16 %v7577, %v7576
      %v7587 = vpack.c.b16 %v7579, %v7578
      %7596 = vmatprep.subr.bf16.mxu0 0
      %7597 = vmatpush1.bf16.msra.mxu0 %v7580
      %7598 = vmatprep.subr.bf16.mxu0 0
      %7599 = vmatpush1.bf16.msra.mxu0 %v7581
      %7600 = vmatprep.subr.bf16.mxu0 0
      %7601 = vmatpush1.bf16.msra.mxu0 %v7582
      %7602 = vmatprep.subr.bf16.mxu0 0
      %7603 = vmatpush1.bf16.msra.mxu0 %v7583
      %7604 = vmatprep.subr.bf16.mxu0 0
      %7605 = vmatpush1.bf16.msra.mxu0 %v7584
      %7606 = vmatprep.subr.bf16.mxu0 0
      %7607 = vmatpush1.bf16.msra.mxu0 %v7585
      %7608 = vmatprep.subr.bf16.mxu0 0
      %7609 = vmatpush1.bf16.msra.mxu0 %v7586
      %7610 = vmatprep.subr.bf16.mxu0 0
      %7611 = vmatpush1.bf16.msra.mxu0 %v7587
      %7612 = vmatprep.subr.bf16.mxu0 0
      %7613 = vmatpush1.bf16.msra.mxu0 0
      %7614 = vmatprep.subr.bf16.mxu0 0
      %7615 = vmatpush1.bf16.msra.mxu0 0
      %7616 = vmatprep.subr.bf16.mxu0 0
      %7617 = vmatpush1.bf16.msra.mxu0 0
      %7618 = vmatprep.subr.bf16.mxu0 0
      %7619 = vmatpush1.bf16.msra.mxu0 0
      %7620 = vmatprep.subr.bf16.mxu0 0
      %7621 = vmatpush1.bf16.msra.mxu0 0
      %7622 = vmatprep.subr.bf16.mxu0 0
      %7623 = vmatpush1.bf16.msra.mxu0 0
      %7624 = vmatprep.subr.bf16.mxu0 0
      %7625 = vmatpush1.bf16.msra.mxu0 0
      %7626 = vmatprep.subr.bf16.mxu0 0
      %7627 = vmatpush1.bf16.msra.mxu0 0
      %7628 = vmatprep.mubr.bf16.mxu0 0
      %7629 = vmatmul.mubr.bf16.gmra.mrb[0].mxu0 %v7515
      %v7630 = vpop.f32.mrb[0].mxu0
      %v7631 = vadd.f32 0.0, %v7630
      %v7632 = vpop.f32.mrb[0].mxu0
      %v7633 = vpop.f32.mrb[0].mxu0
      %v7634 = vadd.f32 0.0, %v7633
      %v7635 = vpop.f32.mrb[0].mxu0
      %7636 = vmatprep.mubr.bf16.mxu0 0
      %7637 = vmatmul.mubr.bf16.gmra.mrb[0].mxu0 %v7516
      %v7638 = vpop.f32.mrb[0].mxu0
      %v7639 = vadd.f32 0.0, %v7638
      %v7640 = vpop.f32.mrb[0].mxu0
      %v7641 = vpop.f32.mrb[0].mxu0
      %v7642 = vadd.f32 0.0, %v7641
      %v7643 = vpop.f32.mrb[0].mxu0
      %7644 = vmatprep.mubr.bf16.mxu0 0
      %7645 = vmatmul.mubr.bf16.gmra.mrb[0].mxu0 %v7517
      %v7646 = vpop.f32.mrb[0].mxu0
      %v7647 = vadd.f32 0.0, %v7646
      %v7648 = vpop.f32.mrb[0].mxu0
      %v7649 = vpop.f32.mrb[0].mxu0
      %v7650 = vadd.f32 0.0, %v7649
      %v7651 = vpop.f32.mrb[0].mxu0
      %7652 = vmatprep.mubr.bf16.mxu0 0
      %7653 = vmatmul.mubr.bf16.gmra.mrb[0].mxu0 %v7518
      %v7654 = vpop.f32.mrb[0].mxu0
      %v7655 = vadd.f32 0.0, %v7654
      %v7656 = vpop.f32.mrb[0].mxu0
      %v7657 = vpop.f32.mrb[0].mxu0
      %v7658 = vadd.f32 0.0, %v7657
      %v7659 = vpop.f32.mrb[0].mxu0
      %7660 = vmatprep.mubr.bf16.mxu0 0
      %7661 = vmatmul.mubr.bf16.gmra.mrb[0].mxu0 %v7519
      %v7662 = vpop.f32.mrb[0].mxu0
      %v7663 = vadd.f32 0.0, %v7662
      %v7664 = vpop.f32.mrb[0].mxu0
      %v7665 = vpop.f32.mrb[0].mxu0
      %v7666 = vadd.f32 0.0, %v7665
      %v7667 = vpop.f32.mrb[0].mxu0
      %7668 = vmatprep.mubr.bf16.mxu0 0
      %7669 = vmatmul.mubr.bf16.gmra.mrb[0].mxu0 %v7520
      %v7670 = vpop.f32.mrb[0].mxu0
      %v7671 = vadd.f32 0.0, %v7670
      %v7672 = vpop.f32.mrb[0].mxu0
      %v7673 = vpop.f32.mrb[0].mxu0
      %v7674 = vadd.f32 0.0, %v7673
      %v7675 = vpop.f32.mrb[0].mxu0
      %7676 = vmatprep.mubr.bf16.mxu0 0
      %7677 = vmatmul.mubr.bf16.gmra.mrb[0].mxu0 %v7521
      %v7678 = vpop.f32.mrb[0].mxu0
      %v7679 = vadd.f32 0.0, %v7678
      %v7680 = vpop.f32.mrb[0].mxu0
      %v7681 = vpop.f32.mrb[0].mxu0
      %v7682 = vadd.f32 0.0, %v7681
      %v7683 = vpop.f32.mrb[0].mxu0
      %7684 = vmatprep.mubr.bf16.mxu0 0
      %7685 = vmatmul.mubr.bf16.gmra.mrb[0].mxu0 %v7522
      %v7686 = vpop.f32.mrb[0].mxu0
      %v7687 = vadd.f32 0.0, %v7686
      %v7688 = vpop.f32.mrb[0].mxu0
      %v7689 = vpop.f32.mrb[0].mxu0
      %v7690 = vadd.f32 0.0, %v7689
      %v7691 = vpop.f32.mrb[0].mxu0
      %7692 = vmatprep.mubr.bf16.mxu0 0
      %7693 = vmatmul.mubr.bf16.gmra.mrb[0].mxu0 %v7523
      %v7694 = vpop.f32.mrb[0].mxu0
      %v7695 = vadd.f32 0.0, %v7694
      %v7696 = vpop.f32.mrb[0].mxu0
      %v7697 = vpop.f32.mrb[0].mxu0
      %v7698 = vadd.f32 0.0, %v7697
      %v7699 = vpop.f32.mrb[0].mxu0
      %7700 = vmatprep.mubr.bf16.mxu0 0
      %7701 = vmatmul.mubr.bf16.gmra.mrb[0].mxu0 %v7524
      %v7702 = vpop.f32.mrb[0].mxu0
      %v7703 = vadd.f32 0.0, %v7702
      %v7704 = vpop.f32.mrb[0].mxu0
      %v7705 = vpop.f32.mrb[0].mxu0
      %v7706 = vadd.f32 0.0, %v7705
      %v7707 = vpop.f32.mrb[0].mxu0
      %7708 = vmatprep.mubr.bf16.mxu0 0
      %7709 = vmatmul.mubr.bf16.gmra.mrb[0].mxu0 %v7525
      %v7710 = vpop.f32.mrb[0].mxu0
      %v7711 = vadd.f32 0.0, %v7710
      %v7712 = vpop.f32.mrb[0].mxu0
      %v7713 = vpop.f32.mrb[0].mxu0
      %v7714 = vadd.f32 0.0, %v7713
      %v7715 = vpop.f32.mrb[0].mxu0
      %7716 = vmatprep.mubr.bf16.mxu0 0
      %7717 = vmatmul.mubr.bf16.gmra.mrb[0].mxu0 %v7526
      %v7718 = vpop.f32.mrb[0].mxu0
      %v7719 = vadd.f32 0.0, %v7718
      %v7720 = vpop.f32.mrb[0].mxu0
      %v7721 = vpop.f32.mrb[0].mxu0
      %v7722 = vadd.f32 0.0, %v7721
      %v7723 = vpop.f32.mrb[0].mxu0
      %7724 = vmatprep.mubr.bf16.mxu0 0
      %7725 = vmatmul.mubr.bf16.gmra.mrb[0].mxu0 %v7527
      %v7726 = vpop.f32.mrb[0].mxu0
      %v7727 = vadd.f32 0.0, %v7726
      %v7728 = vpop.f32.mrb[0].mxu0
      %v7729 = vpop.f32.mrb[0].mxu0
      %v7730 = vadd.f32 0.0, %v7729
      %v7731 = vpop.f32.mrb[0].mxu0
      %7732 = vmatprep.mubr.bf16.mxu0 0
      %7733 = vmatmul.mubr.bf16.gmra.mrb[0].mxu0 %v7528
      %v7734 = vpop.f32.mrb[0].mxu0
      %v7735 = vadd.f32 0.0, %v7734
      %v7736 = vpop.f32.mrb[0].mxu0
      %v7737 = vpop.f32.mrb[0].mxu0
      %v7738 = vadd.f32 0.0, %v7737
      %v7739 = vpop.f32.mrb[0].mxu0
      %7740 = vmatprep.mubr.bf16.mxu0 0
      %7741 = vmatmul.mubr.bf16.gmra.mrb[0].mxu0 %v7529
      %v7742 = vpop.f32.mrb[0].mxu0
      %v7743 = vadd.f32 0.0, %v7742
      %v7744 = vpop.f32.mrb[0].mxu0
      %v7745 = vpop.f32.mrb[0].mxu0
      %v7746 = vadd.f32 0.0, %v7745
      %v7747 = vpop.f32.mrb[0].mxu0
      %7748 = vmatprep.mubr.bf16.mxu0 0
      %7749 = vmatmul.mubr.bf16.gmra.mrb[0].mxu0 %v7530
      %v7750 = vpop.f32.mrb[0].mxu0
      %v7751 = vadd.f32 0.0, %v7750
      %v7752 = vpop.f32.mrb[0].mxu0
      %v7753 = vpop.f32.mrb[0].mxu0
      %v7754 = vadd.f32 0.0, %v7753
      %v7755 = vpop.f32.mrb[0].mxu0
      %7756 = vdwg.mxu0
      %v7757 = vadd.f32 %v7483, %v7631
      %v7758 = vadd.f32 %v7484, %v7634
      %v7759 = vadd.f32 %v7485, %v7639
      %v7760 = vadd.f32 %v7486, %v7642
      %v7761 = vadd.f32 %v7487, %v7647
      %v7762 = vadd.f32 %v7488, %v7650
      %v7763 = vadd.f32 %v7489, %v7655
      %v7764 = vadd.f32 %v7490, %v7658
      %v7765 = vadd.f32 %v7491, %v7663
      %v7766 = vadd.f32 %v7492, %v7666
      %v7767 = vadd.f32 %v7493, %v7671
      %v7768 = vadd.f32 %v7494, %v7674
      %v7769 = vadd.f32 %v7495, %v7679
      %v7770 = vadd.f32 %v7496, %v7682
      %v7771 = vadd.f32 %v7497, %v7687
      %v7772 = vadd.f32 %v7498, %v7690
      %v7773 = vadd.f32 %v7499, %v7695
      %v7774 = vadd.f32 %v7500, %v7698
      %v7775 = vadd.f32 %v7501, %v7703
      %v7776 = vadd.f32 %v7502, %v7706
      %v7777 = vadd.f32 %v7503, %v7711
      %v7778 = vadd.f32 %v7504, %v7714
      %v7779 = vadd.f32 %v7505, %v7719
      %v7780 = vadd.f32 %v7506, %v7722
      %v7781 = vadd.f32 %v7507, %v7727
      %v7782 = vadd.f32 %v7508, %v7730
      %v7783 = vadd.f32 %v7509, %v7735
      %v7784 = vadd.f32 %v7510, %v7738
      %v7785 = vadd.f32 %v7511, %v7743
      %v7786 = vadd.f32 %v7512, %v7746
      %v7787 = vadd.f32 %v7513, %v7751
      %v7788 = vadd.f32 %v7514, %v7754
      %v7789 = vld [vmem:[%s1069 + $0x10] sm:$0xff]
      %v7790 = vld [vmem:[%s1069 + $0x18] sm:$0xff]
      %v7791 = vld [vmem:[%s1069 + $0x20] sm:$0xff]
      %v7792 = vld [vmem:[%s1069 + $0x28] sm:$0xff]
      %v7793 = vld [vmem:[%s1069 + $0x30] sm:$0xff]
      %v7794 = vld [vmem:[%s1069 + $0x38] sm:$0xff]
      %v7795 = vld [vmem:[%s1069 + $0x40] sm:$0xff]
      %v7796 = vld [vmem:[%s1069 + $0x48] sm:$0xff]
      %v7797 = vld [vmem:[%s1069 + $0x50] sm:$0xff]
      %v7798 = vld [vmem:[%s1069 + $0x58] sm:$0xff]
      %v7799 = vld [vmem:[%s1069 + $0x60] sm:$0xff]
      %v7800 = vld [vmem:[%s1069 + $0x68] sm:$0xff]
      %v7801 = vld [vmem:[%s1069 + $0x70] sm:$0xff]
      %v7802 = vld [vmem:[%s1069 + $0x78] sm:$0xff]
      %v7803 = vld [vmem:[%s1069 + $0x80] sm:$0xff]
      %v7804 = vld [vmem:[%s1069 + $0x88] sm:$0xff]
      %s7805 = scalar_lea.vmem %s3, 448
      %v7806 = vld [vmem:[%s7805] sm:$0xf]
      %v7807 = vld [vmem:[%s7805 + $0x4] sm:$0xf]
      %v7808 = vld [vmem:[%s7805 + $0x8] sm:$0xf]
      %v7809 = vld [vmem:[%s7805 + $0xc] sm:$0xf]
      %v7810 = vld [vmem:[%s7805 + $0x10] sm:$0xf]
      %v7811 = vld [vmem:[%s7805 + $0x14] sm:$0xf]
      %v7812 = vld [vmem:[%s7805 + $0x18] sm:$0xf]
      %v7813 = vld [vmem:[%s7805 + $0x1c] sm:$0xf]
      %v7814 = vld [vmem:[%s7805 + $0x20] sm:$0xf]
      %v7815 = vld [vmem:[%s7805 + $0x24] sm:$0xf]
      %v7816 = vld [vmem:[%s7805 + $0x28] sm:$0xf]
      %v7817 = vld [vmem:[%s7805 + $0x2c] sm:$0xf]
      %v7818 = vld [vmem:[%s7805 + $0x30] sm:$0xf]
      %v7819 = vld [vmem:[%s7805 + $0x34] sm:$0xf]
      %v7820 = vld [vmem:[%s7805 + $0x38] sm:$0xf]
      %v7821 = vld [vmem:[%s7805 + $0x3c] sm:$0xf]
      %v7838 = vunpack.c.l.b16 %v7806
      %v7839 = vunpack.c.l.b16 %v7807
      %v7840 = vunpack.c.l.b16 %v7808
      %v7841 = vunpack.c.l.b16 %v7809
      %v7842 = vunpack.c.l.b16 %v7810
      %v7843 = vunpack.c.l.b16 %v7811
      %v7844 = vunpack.c.l.b16 %v7812
      %v7845 = vunpack.c.l.b16 %v7813
      %v7846 = vunpack.c.l.b16 %v7814
      %v7847 = vunpack.c.l.b16 %v7815
      %v7848 = vunpack.c.l.b16 %v7816
      %v7849 = vunpack.c.l.b16 %v7817
      %v7850 = vunpack.c.l.b16 %v7818
      %v7851 = vunpack.c.l.b16 %v7819
      %v7852 = vunpack.c.l.b16 %v7820
      %v7853 = vunpack.c.l.b16 %v7821
      %v7854 = vpack.c.b16 %v7839, %v7838
      %v7855 = vpack.c.b16 %v7841, %v7840
      %v7856 = vpack.c.b16 %v7843, %v7842
      %v7857 = vpack.c.b16 %v7845, %v7844
      %v7858 = vpack.c.b16 %v7847, %v7846
      %v7859 = vpack.c.b16 %v7849, %v7848
      %v7860 = vpack.c.b16 %v7851, %v7850
      %v7861 = vpack.c.b16 %v7853, %v7852
      %7870 = vmatprep.subr.bf16.mxu0 0
      %7871 = vmatpush1.bf16.msra.mxu0 %v7854
      %7872 = vmatprep.subr.bf16.mxu0 0
      %7873 = vmatpush1.bf16.msra.mxu0 %v7855
      %7874 = vmatprep.subr.bf16.mxu0 0
      %7875 = vmatpush1.bf16.msra.mxu0 %v7856
      %7876 = vmatprep.subr.bf16.mxu0 0
      %7877 = vmatpush1.bf16.msra.mxu0 %v7857
      %7878 = vmatprep.subr.bf16.mxu0 0
      %7879 = vmatpush1.bf16.msra.mxu0 %v7858
      %7880 = vmatprep.subr.bf16.mxu0 0
      %7881 = vmatpush1.bf16.msra.mxu0 %v7859
      %7882 = vmatprep.subr.bf16.mxu0 0
      %7883 = vmatpush1.bf16.msra.mxu0 %v7860
      %7884 = vmatprep.subr.bf16.mxu0 0
      %7885 = vmatpush1.bf16.msra.mxu0 %v7861
      %7886 = vmatprep.subr.bf16.mxu0 0
      %7887 = vmatpush1.bf16.msra.mxu0 0
      %7888 = vmatprep.subr.bf16.mxu0 0
      %7889 = vmatpush1.bf16.msra.mxu0 0
      %7890 = vmatprep.subr.bf16.mxu0 0
      %7891 = vmatpush1.bf16.msra.mxu0 0
      %7892 = vmatprep.subr.bf16.mxu0 0
      %7893 = vmatpush1.bf16.msra.mxu0 0
      %7894 = vmatprep.subr.bf16.mxu0 0
      %7895 = vmatpush1.bf16.msra.mxu0 0
      %7896 = vmatprep.subr.bf16.mxu0 0
      %7897 = vmatpush1.bf16.msra.mxu0 0
      %7898 = vmatprep.subr.bf16.mxu0 0
      %7899 = vmatpush1.bf16.msra.mxu0 0
      %7900 = vmatprep.subr.bf16.mxu0 0
      %7901 = vmatpush1.bf16.msra.mxu0 0
      %7902 = vmatprep.mubr.bf16.mxu0 0
      %7903 = vmatmul.mubr.bf16.gmra.mrb[0].mxu0 %v7789
      %v7904 = vpop.f32.mrb[0].mxu0
      %v7905 = vadd.f32 0.0, %v7904
      %v7906 = vpop.f32.mrb[0].mxu0
      %v7907 = vpop.f32.mrb[0].mxu0
      %v7908 = vadd.f32 0.0, %v7907
      %v7909 = vpop.f32.mrb[0].mxu0
      %7910 = vmatprep.mubr.bf16.mxu0 0
      %7911 = vmatmul.mubr.bf16.gmra.mrb[0].mxu0 %v7790
      %v7912 = vpop.f32.mrb[0].mxu0
      %v7913 = vadd.f32 0.0, %v7912
      %v7914 = vpop.f32.mrb[0].mxu0
      %v7915 = vpop.f32.mrb[0].mxu0
      %v7916 = vadd.f32 0.0, %v7915
      %v7917 = vpop.f32.mrb[0].mxu0
      %7918 = vmatprep.mubr.bf16.mxu0 0
      %7919 = vmatmul.mubr.bf16.gmra.mrb[0].mxu0 %v7791
      %v7920 = vpop.f32.mrb[0].mxu0
      %v7921 = vadd.f32 0.0, %v7920
      %v7922 = vpop.f32.mrb[0].mxu0
      %v7923 = vpop.f32.mrb[0].mxu0
      %v7924 = vadd.f32 0.0, %v7923
      %v7925 = vpop.f32.mrb[0].mxu0
      %7926 = vmatprep.mubr.bf16.mxu0 0
      %7927 = vmatmul.mubr.bf16.gmra.mrb[0].mxu0 %v7792
      %v7928 = vpop.f32.mrb[0].mxu0
      %v7929 = vadd.f32 0.0, %v7928
      %v7930 = vpop.f32.mrb[0].mxu0
      %v7931 = vpop.f32.mrb[0].mxu0
      %v7932 = vadd.f32 0.0, %v7931
      %v7933 = vpop.f32.mrb[0].mxu0
      %7934 = vmatprep.mubr.bf16.mxu0 0
      %7935 = vmatmul.mubr.bf16.gmra.mrb[0].mxu0 %v7793
      %v7936 = vpop.f32.mrb[0].mxu0
      %v7937 = vadd.f32 0.0, %v7936
      %v7938 = vpop.f32.mrb[0].mxu0
      %v7939 = vpop.f32.mrb[0].mxu0
      %v7940 = vadd.f32 0.0, %v7939
      %v7941 = vpop.f32.mrb[0].mxu0
      %7942 = vmatprep.mubr.bf16.mxu0 0
      %7943 = vmatmul.mubr.bf16.gmra.mrb[0].mxu0 %v7794
      %v7944 = vpop.f32.mrb[0].mxu0
      %v7945 = vadd.f32 0.0, %v7944
      %v7946 = vpop.f32.mrb[0].mxu0
      %v7947 = vpop.f32.mrb[0].mxu0
      %v7948 = vadd.f32 0.0, %v7947
      %v7949 = vpop.f32.mrb[0].mxu0
      %7950 = vmatprep.mubr.bf16.mxu0 0
      %7951 = vmatmul.mubr.bf16.gmra.mrb[0].mxu0 %v7795
      %v7952 = vpop.f32.mrb[0].mxu0
      %v7953 = vadd.f32 0.0, %v7952
      %v7954 = vpop.f32.mrb[0].mxu0
      %v7955 = vpop.f32.mrb[0].mxu0
      %v7956 = vadd.f32 0.0, %v7955
      %v7957 = vpop.f32.mrb[0].mxu0
      %7958 = vmatprep.mubr.bf16.mxu0 0
      %7959 = vmatmul.mubr.bf16.gmra.mrb[0].mxu0 %v7796
      %v7960 = vpop.f32.mrb[0].mxu0
      %v7961 = vadd.f32 0.0, %v7960
      %v7962 = vpop.f32.mrb[0].mxu0
      %v7963 = vpop.f32.mrb[0].mxu0
      %v7964 = vadd.f32 0.0, %v7963
      %v7965 = vpop.f32.mrb[0].mxu0
      %7966 = vmatprep.mubr.bf16.mxu0 0
      %7967 = vmatmul.mubr.bf16.gmra.mrb[0].mxu0 %v7797
      %v7968 = vpop.f32.mrb[0].mxu0
      %v7969 = vadd.f32 0.0, %v7968
      %v7970 = vpop.f32.mrb[0].mxu0
      %v7971 = vpop.f32.mrb[0].mxu0
      %v7972 = vadd.f32 0.0, %v7971
      %v7973 = vpop.f32.mrb[0].mxu0
      %7974 = vmatprep.mubr.bf16.mxu0 0
      %7975 = vmatmul.mubr.bf16.gmra.mrb[0].mxu0 %v7798
      %v7976 = vpop.f32.mrb[0].mxu0
      %v7977 = vadd.f32 0.0, %v7976
      %v7978 = vpop.f32.mrb[0].mxu0
      %v7979 = vpop.f32.mrb[0].mxu0
      %v7980 = vadd.f32 0.0, %v7979
      %v7981 = vpop.f32.mrb[0].mxu0
      %7982 = vmatprep.mubr.bf16.mxu0 0
      %7983 = vmatmul.mubr.bf16.gmra.mrb[0].mxu0 %v7799
      %v7984 = vpop.f32.mrb[0].mxu0
      %v7985 = vadd.f32 0.0, %v7984
      %v7986 = vpop.f32.mrb[0].mxu0
      %v7987 = vpop.f32.mrb[0].mxu0
      %v7988 = vadd.f32 0.0, %v7987
      %v7989 = vpop.f32.mrb[0].mxu0
      %7990 = vmatprep.mubr.bf16.mxu0 0
      %7991 = vmatmul.mubr.bf16.gmra.mrb[0].mxu0 %v7800
      %v7992 = vpop.f32.mrb[0].mxu0
      %v7993 = vadd.f32 0.0, %v7992
      %v7994 = vpop.f32.mrb[0].mxu0
      %v7995 = vpop.f32.mrb[0].mxu0
      %v7996 = vadd.f32 0.0, %v7995
      %v7997 = vpop.f32.mrb[0].mxu0
      %7998 = vmatprep.mubr.bf16.mxu0 0
      %7999 = vmatmul.mubr.bf16.gmra.mrb[0].mxu0 %v7801
      %v8000 = vpop.f32.mrb[0].mxu0
      %v8001 = vadd.f32 0.0, %v8000
      %v8002 = vpop.f32.mrb[0].mxu0
      %v8003 = vpop.f32.mrb[0].mxu0
      %v8004 = vadd.f32 0.0, %v8003
      %v8005 = vpop.f32.mrb[0].mxu0
      %8006 = vmatprep.mubr.bf16.mxu0 0
      %8007 = vmatmul.mubr.bf16.gmra.mrb[0].mxu0 %v7802
      %v8008 = vpop.f32.mrb[0].mxu0
      %v8009 = vadd.f32 0.0, %v8008
      %v8010 = vpop.f32.mrb[0].mxu0
      %v8011 = vpop.f32.mrb[0].mxu0
      %v8012 = vadd.f32 0.0, %v8011
      %v8013 = vpop.f32.mrb[0].mxu0
      %8014 = vmatprep.mubr.bf16.mxu0 0
      %8015 = vmatmul.mubr.bf16.gmra.mrb[0].mxu0 %v7803
      %v8016 = vpop.f32.mrb[0].mxu0
      %v8017 = vadd.f32 0.0, %v8016
      %v8018 = vpop.f32.mrb[0].mxu0
      %v8019 = vpop.f32.mrb[0].mxu0
      %v8020 = vadd.f32 0.0, %v8019
      %v8021 = vpop.f32.mrb[0].mxu0
      %8022 = vmatprep.mubr.bf16.mxu0 0
      %8023 = vmatmul.mubr.bf16.gmra.mrb[0].mxu0 %v7804
      %v8024 = vpop.f32.mrb[0].mxu0
      %v8025 = vadd.f32 0.0, %v8024
      %v8026 = vpop.f32.mrb[0].mxu0
      %v8027 = vpop.f32.mrb[0].mxu0
      %v8028 = vadd.f32 0.0, %v8027
      %v8029 = vpop.f32.mrb[0].mxu0
      %8030 = vdwg.mxu0
      %v8031 = vadd.f32 %v7757, %v7905
      %v8032 = vadd.f32 %v7758, %v7908
      %v8033 = vadd.f32 %v7759, %v7913
      %v8034 = vadd.f32 %v7760, %v7916
      %v8035 = vadd.f32 %v7761, %v7921
      %v8036 = vadd.f32 %v7762, %v7924
      %v8037 = vadd.f32 %v7763, %v7929
      %v8038 = vadd.f32 %v7764, %v7932
      %v8039 = vadd.f32 %v7765, %v7937
      %v8040 = vadd.f32 %v7766, %v7940
      %v8041 = vadd.f32 %v7767, %v7945
      %v8042 = vadd.f32 %v7768, %v7948
      %v8043 = vadd.f32 %v7769, %v7953
      %v8044 = vadd.f32 %v7770, %v7956
      %v8045 = vadd.f32 %v7771, %v7961
      %v8046 = vadd.f32 %v7772, %v7964
      %v8047 = vadd.f32 %v7773, %v7969
      %v8048 = vadd.f32 %v7774, %v7972
      %v8049 = vadd.f32 %v7775, %v7977
      %v8050 = vadd.f32 %v7776, %v7980
      %v8051 = vadd.f32 %v7777, %v7985
      %v8052 = vadd.f32 %v7778, %v7988
      %v8053 = vadd.f32 %v7779, %v7993
      %v8054 = vadd.f32 %v7780, %v7996
      %v8055 = vadd.f32 %v7781, %v8001
      %v8056 = vadd.f32 %v7782, %v8004
      %v8057 = vadd.f32 %v7783, %v8009
      %v8058 = vadd.f32 %v7784, %v8012
      %v8059 = vadd.f32 %v7785, %v8017
      %v8060 = vadd.f32 %v7786, %v8020
      %v8061 = vadd.f32 %v7787, %v8025
      %v8062 = vadd.f32 %v7788, %v8028
      %v8063 = vld [vmem:[%s1397 + $0x10] sm:$0xff]
      %v8064 = vld [vmem:[%s1397 + $0x18] sm:$0xff]
      %v8065 = vld [vmem:[%s1397 + $0x20] sm:$0xff]
      %v8066 = vld [vmem:[%s1397 + $0x28] sm:$0xff]
      %v8067 = vld [vmem:[%s1397 + $0x30] sm:$0xff]
      %v8068 = vld [vmem:[%s1397 + $0x38] sm:$0xff]
      %v8069 = vld [vmem:[%s1397 + $0x40] sm:$0xff]
      %v8070 = vld [vmem:[%s1397 + $0x48] sm:$0xff]
      %v8071 = vld [vmem:[%s1397 + $0x50] sm:$0xff]
      %v8072 = vld [vmem:[%s1397 + $0x58] sm:$0xff]
      %v8073 = vld [vmem:[%s1397 + $0x60] sm:$0xff]
      %v8074 = vld [vmem:[%s1397 + $0x68] sm:$0xff]
      %v8075 = vld [vmem:[%s1397 + $0x70] sm:$0xff]
      %v8076 = vld [vmem:[%s1397 + $0x78] sm:$0xff]
      %v8077 = vld [vmem:[%s1397 + $0x80] sm:$0xff]
      %v8078 = vld [vmem:[%s1397 + $0x88] sm:$0xff]
      %s8079 = scalar_lea.vmem %s3, 512
      %v8080 = vld [vmem:[%s8079] sm:$0xf]
      %v8081 = vld [vmem:[%s8079 + $0x4] sm:$0xf]
      %v8082 = vld [vmem:[%s8079 + $0x8] sm:$0xf]
      %v8083 = vld [vmem:[%s8079 + $0xc] sm:$0xf]
      %v8084 = vld [vmem:[%s8079 + $0x10] sm:$0xf]
      %v8085 = vld [vmem:[%s8079 + $0x14] sm:$0xf]
      %v8086 = vld [vmem:[%s8079 + $0x18] sm:$0xf]
      %v8087 = vld [vmem:[%s8079 + $0x1c] sm:$0xf]
      %v8088 = vld [vmem:[%s8079 + $0x20] sm:$0xf]
      %v8089 = vld [vmem:[%s8079 + $0x24] sm:$0xf]
      %v8090 = vld [vmem:[%s8079 + $0x28] sm:$0xf]
      %v8091 = vld [vmem:[%s8079 + $0x2c] sm:$0xf]
      %v8092 = vld [vmem:[%s8079 + $0x30] sm:$0xf]
      %v8093 = vld [vmem:[%s8079 + $0x34] sm:$0xf]
      %v8094 = vld [vmem:[%s8079 + $0x38] sm:$0xf]
      %v8095 = vld [vmem:[%s8079 + $0x3c] sm:$0xf]
      %v8112 = vunpack.c.l.b16 %v8080
      %v8113 = vunpack.c.l.b16 %v8081
      %v8114 = vunpack.c.l.b16 %v8082
      %v8115 = vunpack.c.l.b16 %v8083
      %v8116 = vunpack.c.l.b16 %v8084
      %v8117 = vunpack.c.l.b16 %v8085
      %v8118 = vunpack.c.l.b16 %v8086
      %v8119 = vunpack.c.l.b16 %v8087
      %v8120 = vunpack.c.l.b16 %v8088
      %v8121 = vunpack.c.l.b16 %v8089
      %v8122 = vunpack.c.l.b16 %v8090
      %v8123 = vunpack.c.l.b16 %v8091
      %v8124 = vunpack.c.l.b16 %v8092
      %v8125 = vunpack.c.l.b16 %v8093
      %v8126 = vunpack.c.l.b16 %v8094
      %v8127 = vunpack.c.l.b16 %v8095
      %v8128 = vpack.c.b16 %v8113, %v8112
      %v8129 = vpack.c.b16 %v8115, %v8114
      %v8130 = vpack.c.b16 %v8117, %v8116
      %v8131 = vpack.c.b16 %v8119, %v8118
      %v8132 = vpack.c.b16 %v8121, %v8120
      %v8133 = vpack.c.b16 %v8123, %v8122
      %v8134 = vpack.c.b16 %v8125, %v8124
      %v8135 = vpack.c.b16 %v8127, %v8126
      %8144 = vmatprep.subr.bf16.mxu0 0
      %8145 = vmatpush1.bf16.msra.mxu0 %v8128
      %8146 = vmatprep.subr.bf16.mxu0 0
      %8147 = vmatpush1.bf16.msra.mxu0 %v8129
      %8148 = vmatprep.subr.bf16.mxu0 0
      %8149 = vmatpush1.bf16.msra.mxu0 %v8130
      %8150 = vmatprep.subr.bf16.mxu0 0
      %8151 = vmatpush1.bf16.msra.mxu0 %v8131
      %8152 = vmatprep.subr.bf16.mxu0 0
      %8153 = vmatpush1.bf16.msra.mxu0 %v8132
      %8154 = vmatprep.subr.bf16.mxu0 0
      %8155 = vmatpush1.bf16.msra.mxu0 %v8133
      %8156 = vmatprep.subr.bf16.mxu0 0
      %8157 = vmatpush1.bf16.msra.mxu0 %v8134
      %8158 = vmatprep.subr.bf16.mxu0 0
      %8159 = vmatpush1.bf16.msra.mxu0 %v8135
      %8160 = vmatprep.subr.bf16.mxu0 0
      %8161 = vmatpush1.bf16.msra.mxu0 0
      %8162 = vmatprep.subr.bf16.mxu0 0
      %8163 = vmatpush1.bf16.msra.mxu0 0
      %8164 = vmatprep.subr.bf16.mxu0 0
      %8165 = vmatpush1.bf16.msra.mxu0 0
      %8166 = vmatprep.subr.bf16.mxu0 0
      %8167 = vmatpush1.bf16.msra.mxu0 0
      %8168 = vmatprep.subr.bf16.mxu0 0
      %8169 = vmatpush1.bf16.msra.mxu0 0
      %8170 = vmatprep.subr.bf16.mxu0 0
      %8171 = vmatpush1.bf16.msra.mxu0 0
      %8172 = vmatprep.subr.bf16.mxu0 0
      %8173 = vmatpush1.bf16.msra.mxu0 0
      %8174 = vmatprep.subr.bf16.mxu0 0
      %8175 = vmatpush1.bf16.msra.mxu0 0
      %8176 = vmatprep.mubr.bf16.mxu0 0
      %8177 = vmatmul.mubr.bf16.gmra.mrb[0].mxu0 %v8063
      %v8178 = vpop.f32.mrb[0].mxu0
      %v8179 = vadd.f32 0.0, %v8178
      %v8180 = vpop.f32.mrb[0].mxu0
      %v8181 = vpop.f32.mrb[0].mxu0
      %v8182 = vadd.f32 0.0, %v8181
      %v8183 = vpop.f32.mrb[0].mxu0
      %8184 = vmatprep.mubr.bf16.mxu0 0
      %8185 = vmatmul.mubr.bf16.gmra.mrb[0].mxu0 %v8064
      %v8186 = vpop.f32.mrb[0].mxu0
      %v8187 = vadd.f32 0.0, %v8186
      %v8188 = vpop.f32.mrb[0].mxu0
      %v8189 = vpop.f32.mrb[0].mxu0
      %v8190 = vadd.f32 0.0, %v8189
      %v8191 = vpop.f32.mrb[0].mxu0
      %8192 = vmatprep.mubr.bf16.mxu0 0
      %8193 = vmatmul.mubr.bf16.gmra.mrb[0].mxu0 %v8065
      %v8194 = vpop.f32.mrb[0].mxu0
      %v8195 = vadd.f32 0.0, %v8194
      %v8196 = vpop.f32.mrb[0].mxu0
      %v8197 = vpop.f32.mrb[0].mxu0
      %v8198 = vadd.f32 0.0, %v8197
      %v8199 = vpop.f32.mrb[0].mxu0
      %8200 = vmatprep.mubr.bf16.mxu0 0
      %8201 = vmatmul.mubr.bf16.gmra.mrb[0].mxu0 %v8066
      %v8202 = vpop.f32.mrb[0].mxu0
      %v8203 = vadd.f32 0.0, %v8202
      %v8204 = vpop.f32.mrb[0].mxu0
      %v8205 = vpop.f32.mrb[0].mxu0
      %v8206 = vadd.f32 0.0, %v8205
      %v8207 = vpop.f32.mrb[0].mxu0
      %8208 = vmatprep.mubr.bf16.mxu0 0
      %8209 = vmatmul.mubr.bf16.gmra.mrb[0].mxu0 %v8067
      %v8210 = vpop.f32.mrb[0].mxu0
      %v8211 = vadd.f32 0.0, %v8210
      %v8212 = vpop.f32.mrb[0].mxu0
      %v8213 = vpop.f32.mrb[0].mxu0
      %v8214 = vadd.f32 0.0, %v8213
      %v8215 = vpop.f32.mrb[0].mxu0
      %8216 = vmatprep.mubr.bf16.mxu0 0
      %8217 = vmatmul.mubr.bf16.gmra.mrb[0].mxu0 %v8068
      %v8218 = vpop.f32.mrb[0].mxu0
      %v8219 = vadd.f32 0.0, %v8218
      %v8220 = vpop.f32.mrb[0].mxu0
      %v8221 = vpop.f32.mrb[0].mxu0
      %v8222 = vadd.f32 0.0, %v8221
      %v8223 = vpop.f32.mrb[0].mxu0
      %8224 = vmatprep.mubr.bf16.mxu0 0
      %8225 = vmatmul.mubr.bf16.gmra.mrb[0].mxu0 %v8069
      %v8226 = vpop.f32.mrb[0].mxu0
      %v8227 = vadd.f32 0.0, %v8226
      %v8228 = vpop.f32.mrb[0].mxu0
      %v8229 = vpop.f32.mrb[0].mxu0
      %v8230 = vadd.f32 0.0, %v8229
      %v8231 = vpop.f32.mrb[0].mxu0
      %8232 = vmatprep.mubr.bf16.mxu0 0
      %8233 = vmatmul.mubr.bf16.gmra.mrb[0].mxu0 %v8070
      %v8234 = vpop.f32.mrb[0].mxu0
      %v8235 = vadd.f32 0.0, %v8234
      %v8236 = vpop.f32.mrb[0].mxu0
      %v8237 = vpop.f32.mrb[0].mxu0
      %v8238 = vadd.f32 0.0, %v8237
      %v8239 = vpop.f32.mrb[0].mxu0
      %8240 = vmatprep.mubr.bf16.mxu0 0
      %8241 = vmatmul.mubr.bf16.gmra.mrb[0].mxu0 %v8071
      %v8242 = vpop.f32.mrb[0].mxu0
      %v8243 = vadd.f32 0.0, %v8242
      %v8244 = vpop.f32.mrb[0].mxu0
      %v8245 = vpop.f32.mrb[0].mxu0
      %v8246 = vadd.f32 0.0, %v8245
      %v8247 = vpop.f32.mrb[0].mxu0
      %8248 = vmatprep.mubr.bf16.mxu0 0
      %8249 = vmatmul.mubr.bf16.gmra.mrb[0].mxu0 %v8072
      %v8250 = vpop.f32.mrb[0].mxu0
      %v8251 = vadd.f32 0.0, %v8250
      %v8252 = vpop.f32.mrb[0].mxu0
      %v8253 = vpop.f32.mrb[0].mxu0
      %v8254 = vadd.f32 0.0, %v8253
      %v8255 = vpop.f32.mrb[0].mxu0
      %8256 = vmatprep.mubr.bf16.mxu0 0
      %8257 = vmatmul.mubr.bf16.gmra.mrb[0].mxu0 %v8073
      %v8258 = vpop.f32.mrb[0].mxu0
      %v8259 = vadd.f32 0.0, %v8258
      %v8260 = vpop.f32.mrb[0].mxu0
      %v8261 = vpop.f32.mrb[0].mxu0
      %v8262 = vadd.f32 0.0, %v8261
      %v8263 = vpop.f32.mrb[0].mxu0
      %8264 = vmatprep.mubr.bf16.mxu0 0
      %8265 = vmatmul.mubr.bf16.gmra.mrb[0].mxu0 %v8074
      %v8266 = vpop.f32.mrb[0].mxu0
      %v8267 = vadd.f32 0.0, %v8266
      %v8268 = vpop.f32.mrb[0].mxu0
      %v8269 = vpop.f32.mrb[0].mxu0
      %v8270 = vadd.f32 0.0, %v8269
      %v8271 = vpop.f32.mrb[0].mxu0
      %8272 = vmatprep.mubr.bf16.mxu0 0
      %8273 = vmatmul.mubr.bf16.gmra.mrb[0].mxu0 %v8075
      %v8274 = vpop.f32.mrb[0].mxu0
      %v8275 = vadd.f32 0.0, %v8274
      %v8276 = vpop.f32.mrb[0].mxu0
      %v8277 = vpop.f32.mrb[0].mxu0
      %v8278 = vadd.f32 0.0, %v8277
      %v8279 = vpop.f32.mrb[0].mxu0
      %8280 = vmatprep.mubr.bf16.mxu0 0
      %8281 = vmatmul.mubr.bf16.gmra.mrb[0].mxu0 %v8076
      %v8282 = vpop.f32.mrb[0].mxu0
      %v8283 = vadd.f32 0.0, %v8282
      %v8284 = vpop.f32.mrb[0].mxu0
      %v8285 = vpop.f32.mrb[0].mxu0
      %v8286 = vadd.f32 0.0, %v8285
      %v8287 = vpop.f32.mrb[0].mxu0
      %8288 = vmatprep.mubr.bf16.mxu0 0
      %8289 = vmatmul.mubr.bf16.gmra.mrb[0].mxu0 %v8077
      %v8290 = vpop.f32.mrb[0].mxu0
      %v8291 = vadd.f32 0.0, %v8290
      %v8292 = vpop.f32.mrb[0].mxu0
      %v8293 = vpop.f32.mrb[0].mxu0
      %v8294 = vadd.f32 0.0, %v8293
      %v8295 = vpop.f32.mrb[0].mxu0
      %8296 = vmatprep.mubr.bf16.mxu0 0
      %8297 = vmatmul.mubr.bf16.gmra.mrb[0].mxu0 %v8078
      %v8298 = vpop.f32.mrb[0].mxu0
      %v8299 = vadd.f32 0.0, %v8298
      %v8300 = vpop.f32.mrb[0].mxu0
      %v8301 = vpop.f32.mrb[0].mxu0
      %v8302 = vadd.f32 0.0, %v8301
      %v8303 = vpop.f32.mrb[0].mxu0
      %8304 = vdwg.mxu0
      %v8305 = vadd.f32 %v8031, %v8179
      %v8306 = vadd.f32 %v8032, %v8182
      %v8307 = vadd.f32 %v8033, %v8187
      %v8308 = vadd.f32 %v8034, %v8190
      %v8309 = vadd.f32 %v8035, %v8195
      %v8310 = vadd.f32 %v8036, %v8198
      %v8311 = vadd.f32 %v8037, %v8203
      %v8312 = vadd.f32 %v8038, %v8206
      %v8313 = vadd.f32 %v8039, %v8211
      %v8314 = vadd.f32 %v8040, %v8214
      %v8315 = vadd.f32 %v8041, %v8219
      %v8316 = vadd.f32 %v8042, %v8222
      %v8317 = vadd.f32 %v8043, %v8227
      %v8318 = vadd.f32 %v8044, %v8230
      %v8319 = vadd.f32 %v8045, %v8235
      %v8320 = vadd.f32 %v8046, %v8238
      %v8321 = vadd.f32 %v8047, %v8243
      %v8322 = vadd.f32 %v8048, %v8246
      %v8323 = vadd.f32 %v8049, %v8251
      %v8324 = vadd.f32 %v8050, %v8254
      %v8325 = vadd.f32 %v8051, %v8259
      %v8326 = vadd.f32 %v8052, %v8262
      %v8327 = vadd.f32 %v8053, %v8267
      %v8328 = vadd.f32 %v8054, %v8270
      %v8329 = vadd.f32 %v8055, %v8275
      %v8330 = vadd.f32 %v8056, %v8278
      %v8331 = vadd.f32 %v8057, %v8283
      %v8332 = vadd.f32 %v8058, %v8286
      %v8333 = vadd.f32 %v8059, %v8291
      %v8334 = vadd.f32 %v8060, %v8294
      %v8335 = vadd.f32 %v8061, %v8299
      %v8336 = vadd.f32 %v8062, %v8302
      %v8337 = vlaneseq
      %v8338 = vshrl.u32 %v8337, 7
      %v8339 = vsub.s32 0, %v8338
      %v8340 = vrot.slane %v5934, %v8339
      %v8341 = vmul.f32 %v8305, %v8340
      %v8342 = vmul.f32 %v8306, %v8340
      %v8343 = vmul.f32 %v8307, %v8340
      %v8344 = vmul.f32 %v8308, %v8340
      %v8345 = vmul.f32 %v8309, %v8340
      %v8346 = vmul.f32 %v8310, %v8340
      %v8347 = vmul.f32 %v8311, %v8340
      %v8348 = vmul.f32 %v8312, %v8340
      %v8349 = vmul.f32 %v8313, %v8340
      %v8350 = vmul.f32 %v8314, %v8340
      %v8351 = vmul.f32 %v8315, %v8340
      %v8352 = vmul.f32 %v8316, %v8340
      %v8353 = vmul.f32 %v8317, %v8340
      %v8354 = vmul.f32 %v8318, %v8340
      %v8355 = vmul.f32 %v8319, %v8340
      %v8356 = vmul.f32 %v8320, %v8340
      %v8357 = vmul.f32 %v8321, %v8340
      %v8358 = vmul.f32 %v8322, %v8340
      %v8359 = vmul.f32 %v8323, %v8340
      %v8360 = vmul.f32 %v8324, %v8340
      %v8361 = vmul.f32 %v8325, %v8340
      %v8362 = vmul.f32 %v8326, %v8340
      %v8363 = vmul.f32 %v8327, %v8340
      %v8364 = vmul.f32 %v8328, %v8340
      %v8365 = vmul.f32 %v8329, %v8340
      %v8366 = vmul.f32 %v8330, %v8340
      %v8367 = vmul.f32 %v8331, %v8340
      %v8368 = vmul.f32 %v8332, %v8340
      %v8369 = vmul.f32 %v8333, %v8340
      %v8370 = vmul.f32 %v8334, %v8340
      %v8371 = vmul.f32 %v8335, %v8340
      %v8372 = vmul.f32 %v8336, %v8340
      %v8373 = vlaneseq
      %v8374 = vshrl.u32 %v8373, 7
      %v8375 = vsub.s32 0, %v8374
      %v8376 = vrot.slane %v5935, %v8375
      %v8377 = vadd.f32 %v8341, %v8376
      %v8378 = vadd.f32 %v8342, %v8376
      %v8379 = vadd.f32 %v8343, %v8376
      %v8380 = vadd.f32 %v8344, %v8376
      %v8381 = vadd.f32 %v8345, %v8376
      %v8382 = vadd.f32 %v8346, %v8376
      %v8383 = vadd.f32 %v8347, %v8376
      %v8384 = vadd.f32 %v8348, %v8376
      %v8385 = vadd.f32 %v8349, %v8376
      %v8386 = vadd.f32 %v8350, %v8376
      %v8387 = vadd.f32 %v8351, %v8376
      %v8388 = vadd.f32 %v8352, %v8376
      %v8389 = vadd.f32 %v8353, %v8376
      %v8390 = vadd.f32 %v8354, %v8376
      %v8391 = vadd.f32 %v8355, %v8376
      %v8392 = vadd.f32 %v8356, %v8376
      %v8393 = vadd.f32 %v8357, %v8376
      %v8394 = vadd.f32 %v8358, %v8376
      %v8395 = vadd.f32 %v8359, %v8376
      %v8396 = vadd.f32 %v8360, %v8376
      %v8397 = vadd.f32 %v8361, %v8376
      %v8398 = vadd.f32 %v8362, %v8376
      %v8399 = vadd.f32 %v8363, %v8376
      %v8400 = vadd.f32 %v8364, %v8376
      %v8401 = vadd.f32 %v8365, %v8376
      %v8402 = vadd.f32 %v8366, %v8376
      %v8403 = vadd.f32 %v8367, %v8376
      %v8404 = vadd.f32 %v8368, %v8376
      %v8405 = vadd.f32 %v8369, %v8376
      %v8406 = vadd.f32 %v8370, %v8376
      %v8407 = vadd.f32 %v8371, %v8376
      %v8408 = vadd.f32 %v8372, %v8376
      %s8409 = scalar_lea.vmem %s219, 12
      %v8410 = vld [vmem:[%s8409] sm:$0xf]
      %v8411 = vld [vmem:[%s8409 + $0x4] sm:$0xf]
      %v8412 = vld [vmem:[%s8409 + $0x8] sm:$0x1]
      %v8413 = vld [vmem:[%s8409 + $0xc] sm:$0xf]
      %v8414 = vld [vmem:[%s8409 + $0x10] sm:$0xf]
      %v8415 = vld [vmem:[%s8409 + $0x14] sm:$0x1]
      %v8416 = vld [vmem:[%s8409 + $0x18] sm:$0xf]
      %v8417 = vld [vmem:[%s8409 + $0x1c] sm:$0xf]
      %v8418 = vld [vmem:[%s8409 + $0x20] sm:$0x1]
      %v8419 = vld [vmem:[%s8409 + $0x24] sm:$0xf]
      %v8420 = vld [vmem:[%s8409 + $0x28] sm:$0xf]
      %v8421 = vld [vmem:[%s8409 + $0x2c] sm:$0x1]
      %v8422 = vld [vmem:[%s8409 + $0x30] sm:$0xf]
      %v8423 = vld [vmem:[%s8409 + $0x34] sm:$0xf]
      %v8424 = vld [vmem:[%s8409 + $0x38] sm:$0x1]
      %v8425 = vld [vmem:[%s8409 + $0x3c] sm:$0xf]
      %v8426 = vld [vmem:[%s8409 + $0x40] sm:$0xf]
      %v8427 = vld [vmem:[%s8409 + $0x44] sm:$0x1]
      %v8428 = vld [vmem:[%s8409 + $0x48] sm:$0xf]
      %v8429 = vld [vmem:[%s8409 + $0x4c] sm:$0xf]
      %v8430 = vld [vmem:[%s8409 + $0x50] sm:$0x1]
      %v8431 = vld [vmem:[%s8409 + $0x54] sm:$0xf]
      %v8432 = vld [vmem:[%s8409 + $0x58] sm:$0xf]
      %v8433 = vld [vmem:[%s8409 + $0x5c] sm:$0x1]
      %v8434 = vld [vmem:[%s8409 + $0x60] sm:$0xf]
      %v8435 = vld [vmem:[%s8409 + $0x64] sm:$0xf]
      %v8436 = vld [vmem:[%s8409 + $0x68] sm:$0x1]
      %v8437 = vld [vmem:[%s8409 + $0x6c] sm:$0xf]
      %v8438 = vld [vmem:[%s8409 + $0x70] sm:$0xf]
      %v8439 = vld [vmem:[%s8409 + $0x74] sm:$0x1]
      %v8440 = vld [vmem:[%s8409 + $0x78] sm:$0xf]
      %v8441 = vld [vmem:[%s8409 + $0x7c] sm:$0xf]
      %v8442 = vld [vmem:[%s8409 + $0x80] sm:$0x1]
      %v8443 = vld [vmem:[%s8409 + $0x84] sm:$0xf]
      %v8444 = vld [vmem:[%s8409 + $0x88] sm:$0xf]
      %v8445 = vld [vmem:[%s8409 + $0x8c] sm:$0x1]
      %v8446 = vld [vmem:[%s8409 + $0x90] sm:$0xf]
      %v8447 = vld [vmem:[%s8409 + $0x94] sm:$0xf]
      %v8448 = vld [vmem:[%s8409 + $0x98] sm:$0x1]
      %v8449 = vld [vmem:[%s8409 + $0x9c] sm:$0xf]
      %v8450 = vld [vmem:[%s8409 + $0xa0] sm:$0xf]
      %v8451 = vld [vmem:[%s8409 + $0xa4] sm:$0x1]
      %v8452 = vld [vmem:[%s8409 + $0xa8] sm:$0xf]
      %v8453 = vld [vmem:[%s8409 + $0xac] sm:$0xf]
      %v8454 = vld [vmem:[%s8409 + $0xb0] sm:$0x1]
      %v8455 = vld [vmem:[%s8409 + $0xb4] sm:$0xf]
      %v8456 = vld [vmem:[%s8409 + $0xb8] sm:$0xf]
      %v8457 = vld [vmem:[%s8409 + $0xbc] sm:$0x1]
      %v8459 = vshrl.u32 %v8410, 16
      %v8461 = vrot.slane %v8459, 4
      %v8462 = vshll.u32 %v8410, 16
      %v8464 = vrot.slane %v8462, 5
      %v8465 = vor.u32 %v8461, %v8464
      %v8466 = vrot.slane %v8465, 4
      %v8468 = vshll.u32 %v8411, 16
      %v8470 = vrot.slane %v8468, 5
      %v8471 = vsel %vm564, %v8466, %v8470
      %v8472 = vshrl.u32 %v8411, 16
      %v8474 = vrot.slane %v8472, 4
      %v8475 = vor.u32 %v8474, %v8470
      %v8476 = vrot.slane %v8475, 4
      %v8478 = vshll.u32 %v8412, 16
      %v8480 = vrot.slane %v8478, 5
      %v8481 = vsel %vm564, %v8476, %v8480
      %v8483 = vshrl.u32 %v8413, 16
      %v8485 = vrot.slane %v8483, 4
      %v8486 = vshll.u32 %v8413, 16
      %v8488 = vrot.slane %v8486, 5
      %v8489 = vor.u32 %v8485, %v8488
      %v8490 = vrot.slane %v8489, 4
      %v8492 = vshll.u32 %v8414, 16
      %v8494 = vrot.slane %v8492, 5
      %v8495 = vsel %vm564, %v8490, %v8494
      %v8496 = vshrl.u32 %v8414, 16
      %v8498 = vrot.slane %v8496, 4
      %v8499 = vor.u32 %v8498, %v8494
      %v8500 = vrot.slane %v8499, 4
      %v8502 = vshll.u32 %v8415, 16
      %v8504 = vrot.slane %v8502, 5
      %v8505 = vsel %vm564, %v8500, %v8504
      %v8507 = vshrl.u32 %v8416, 16
      %v8509 = vrot.slane %v8507, 4
      %v8510 = vshll.u32 %v8416, 16
      %v8512 = vrot.slane %v8510, 5
      %v8513 = vor.u32 %v8509, %v8512
      %v8514 = vrot.slane %v8513, 4
      %v8516 = vshll.u32 %v8417, 16
      %v8518 = vrot.slane %v8516, 5
      %v8519 = vsel %vm564, %v8514, %v8518
      %v8520 = vshrl.u32 %v8417, 16
      %v8522 = vrot.slane %v8520, 4
      %v8523 = vor.u32 %v8522, %v8518
      %v8524 = vrot.slane %v8523, 4
      %v8526 = vshll.u32 %v8418, 16
      %v8528 = vrot.slane %v8526, 5
      %v8529 = vsel %vm564, %v8524, %v8528
      %v8531 = vshrl.u32 %v8419, 16
      %v8533 = vrot.slane %v8531, 4
      %v8534 = vshll.u32 %v8419, 16
      %v8536 = vrot.slane %v8534, 5
      %v8537 = vor.u32 %v8533, %v8536
      %v8538 = vrot.slane %v8537, 4
      %v8540 = vshll.u32 %v8420, 16
      %v8542 = vrot.slane %v8540, 5
      %v8543 = vsel %vm564, %v8538, %v8542
      %v8544 = vshrl.u32 %v8420, 16
      %v8546 = vrot.slane %v8544, 4
      %v8547 = vor.u32 %v8546, %v8542
      %v8548 = vrot.slane %v8547, 4
      %v8550 = vshll.u32 %v8421, 16
      %v8552 = vrot.slane %v8550, 5
      %v8553 = vsel %vm564, %v8548, %v8552
      %v8555 = vshrl.u32 %v8422, 16
      %v8557 = vrot.slane %v8555, 4
      %v8558 = vshll.u32 %v8422, 16
      %v8560 = vrot.slane %v8558, 5
      %v8561 = vor.u32 %v8557, %v8560
      %v8562 = vrot.slane %v8561, 4
      %v8564 = vshll.u32 %v8423, 16
      %v8566 = vrot.slane %v8564, 5
      %v8567 = vsel %vm564, %v8562, %v8566
      %v8568 = vshrl.u32 %v8423, 16
      %v8570 = vrot.slane %v8568, 4
      %v8571 = vor.u32 %v8570, %v8566
      %v8572 = vrot.slane %v8571, 4
      %v8574 = vshll.u32 %v8424, 16
      %v8576 = vrot.slane %v8574, 5
      %v8577 = vsel %vm564, %v8572, %v8576
      %v8579 = vshrl.u32 %v8425, 16
      %v8581 = vrot.slane %v8579, 4
      %v8582 = vshll.u32 %v8425, 16
      %v8584 = vrot.slane %v8582, 5
      %v8585 = vor.u32 %v8581, %v8584
      %v8586 = vrot.slane %v8585, 4
      %v8588 = vshll.u32 %v8426, 16
      %v8590 = vrot.slane %v8588, 5
      %v8591 = vsel %vm564, %v8586, %v8590
      %v8592 = vshrl.u32 %v8426, 16
      %v8594 = vrot.slane %v8592, 4
      %v8595 = vor.u32 %v8594, %v8590
      %v8596 = vrot.slane %v8595, 4
      %v8598 = vshll.u32 %v8427, 16
      %v8600 = vrot.slane %v8598, 5
      %v8601 = vsel %vm564, %v8596, %v8600
      %v8603 = vshrl.u32 %v8428, 16
      %v8605 = vrot.slane %v8603, 4
      %v8606 = vshll.u32 %v8428, 16
      %v8608 = vrot.slane %v8606, 5
      %v8609 = vor.u32 %v8605, %v8608
      %v8610 = vrot.slane %v8609, 4
      %v8612 = vshll.u32 %v8429, 16
      %v8614 = vrot.slane %v8612, 5
      %v8615 = vsel %vm564, %v8610, %v8614
      %v8616 = vshrl.u32 %v8429, 16
      %v8618 = vrot.slane %v8616, 4
      %v8619 = vor.u32 %v8618, %v8614
      %v8620 = vrot.slane %v8619, 4
      %v8622 = vshll.u32 %v8430, 16
      %v8624 = vrot.slane %v8622, 5
      %v8625 = vsel %vm564, %v8620, %v8624
      %v8627 = vshrl.u32 %v8431, 16
      %v8629 = vrot.slane %v8627, 4
      %v8630 = vshll.u32 %v8431, 16
      %v8632 = vrot.slane %v8630, 5
      %v8633 = vor.u32 %v8629, %v8632
      %v8634 = vrot.slane %v8633, 4
      %v8636 = vshll.u32 %v8432, 16
      %v8638 = vrot.slane %v8636, 5
      %v8639 = vsel %vm564, %v8634, %v8638
      %v8640 = vshrl.u32 %v8432, 16
      %v8642 = vrot.slane %v8640, 4
      %v8643 = vor.u32 %v8642, %v8638
      %v8644 = vrot.slane %v8643, 4
      %v8646 = vshll.u32 %v8433, 16
      %v8648 = vrot.slane %v8646, 5
      %v8649 = vsel %vm564, %v8644, %v8648
      %v8651 = vshrl.u32 %v8434, 16
      %v8653 = vrot.slane %v8651, 4
      %v8654 = vshll.u32 %v8434, 16
      %v8656 = vrot.slane %v8654, 5
      %v8657 = vor.u32 %v8653, %v8656
      %v8658 = vrot.slane %v8657, 4
      %v8660 = vshll.u32 %v8435, 16
      %v8662 = vrot.slane %v8660, 5
      %v8663 = vsel %vm564, %v8658, %v8662
      %v8664 = vshrl.u32 %v8435, 16
      %v8666 = vrot.slane %v8664, 4
      %v8667 = vor.u32 %v8666, %v8662
      %v8668 = vrot.slane %v8667, 4
      %v8670 = vshll.u32 %v8436, 16
      %v8672 = vrot.slane %v8670, 5
      %v8673 = vsel %vm564, %v8668, %v8672
      %v8675 = vshrl.u32 %v8437, 16
      %v8677 = vrot.slane %v8675, 4
      %v8678 = vshll.u32 %v8437, 16
      %v8680 = vrot.slane %v8678, 5
      %v8681 = vor.u32 %v8677, %v8680
      %v8682 = vrot.slane %v8681, 4
      %v8684 = vshll.u32 %v8438, 16
      %v8686 = vrot.slane %v8684, 5
      %v8687 = vsel %vm564, %v8682, %v8686
      %v8688 = vshrl.u32 %v8438, 16
      %v8690 = vrot.slane %v8688, 4
      %v8691 = vor.u32 %v8690, %v8686
      %v8692 = vrot.slane %v8691, 4
      %v8694 = vshll.u32 %v8439, 16
      %v8696 = vrot.slane %v8694, 5
      %v8697 = vsel %vm564, %v8692, %v8696
      %v8699 = vshrl.u32 %v8440, 16
      %v8701 = vrot.slane %v8699, 4
      %v8702 = vshll.u32 %v8440, 16
      %v8704 = vrot.slane %v8702, 5
      %v8705 = vor.u32 %v8701, %v8704
      %v8706 = vrot.slane %v8705, 4
      %v8708 = vshll.u32 %v8441, 16
      %v8710 = vrot.slane %v8708, 5
      %v8711 = vsel %vm564, %v8706, %v8710
      %v8712 = vshrl.u32 %v8441, 16
      %v8714 = vrot.slane %v8712, 4
      %v8715 = vor.u32 %v8714, %v8710
      %v8716 = vrot.slane %v8715, 4
      %v8718 = vshll.u32 %v8442, 16
      %v8720 = vrot.slane %v8718, 5
      %v8721 = vsel %vm564, %v8716, %v8720
      %v8723 = vshrl.u32 %v8443, 16
      %v8725 = vrot.slane %v8723, 4
      %v8726 = vshll.u32 %v8443, 16
      %v8728 = vrot.slane %v8726, 5
      %v8729 = vor.u32 %v8725, %v8728
      %v8730 = vrot.slane %v8729, 4
      %v8732 = vshll.u32 %v8444, 16
      %v8734 = vrot.slane %v8732, 5
      %v8735 = vsel %vm564, %v8730, %v8734
      %v8736 = vshrl.u32 %v8444, 16
      %v8738 = vrot.slane %v8736, 4
      %v8739 = vor.u32 %v8738, %v8734
      %v8740 = vrot.slane %v8739, 4
      %v8742 = vshll.u32 %v8445, 16
      %v8744 = vrot.slane %v8742, 5
      %v8745 = vsel %vm564, %v8740, %v8744
      %v8747 = vshrl.u32 %v8446, 16
      %v8749 = vrot.slane %v8747, 4
      %v8750 = vshll.u32 %v8446, 16
      %v8752 = vrot.slane %v8750, 5
      %v8753 = vor.u32 %v8749, %v8752
      %v8754 = vrot.slane %v8753, 4
      %v8756 = vshll.u32 %v8447, 16
      %v8758 = vrot.slane %v8756, 5
      %v8759 = vsel %vm564, %v8754, %v8758
      %v8760 = vshrl.u32 %v8447, 16
      %v8762 = vrot.slane %v8760, 4
      %v8763 = vor.u32 %v8762, %v8758
      %v8764 = vrot.slane %v8763, 4
      %v8766 = vshll.u32 %v8448, 16
      %v8768 = vrot.slane %v8766, 5
      %v8769 = vsel %vm564, %v8764, %v8768
      %v8771 = vshrl.u32 %v8449, 16
      %v8773 = vrot.slane %v8771, 4
      %v8774 = vshll.u32 %v8449, 16
      %v8776 = vrot.slane %v8774, 5
      %v8777 = vor.u32 %v8773, %v8776
      %v8778 = vrot.slane %v8777, 4
      %v8780 = vshll.u32 %v8450, 16
      %v8782 = vrot.slane %v8780, 5
      %v8783 = vsel %vm564, %v8778, %v8782
      %v8784 = vshrl.u32 %v8450, 16
      %v8786 = vrot.slane %v8784, 4
      %v8787 = vor.u32 %v8786, %v8782
      %v8788 = vrot.slane %v8787, 4
      %v8790 = vshll.u32 %v8451, 16
      %v8792 = vrot.slane %v8790, 5
      %v8793 = vsel %vm564, %v8788, %v8792
      %v8795 = vshrl.u32 %v8452, 16
      %v8797 = vrot.slane %v8795, 4
      %v8798 = vshll.u32 %v8452, 16
      %v8800 = vrot.slane %v8798, 5
      %v8801 = vor.u32 %v8797, %v8800
      %v8802 = vrot.slane %v8801, 4
      %v8804 = vshll.u32 %v8453, 16
      %v8806 = vrot.slane %v8804, 5
      %v8807 = vsel %vm564, %v8802, %v8806
      %v8808 = vshrl.u32 %v8453, 16
      %v8810 = vrot.slane %v8808, 4
      %v8811 = vor.u32 %v8810, %v8806
      %v8812 = vrot.slane %v8811, 4
      %v8814 = vshll.u32 %v8454, 16
      %v8816 = vrot.slane %v8814, 5
      %v8817 = vsel %vm564, %v8812, %v8816
      %v8819 = vshrl.u32 %v8455, 16
      %v8821 = vrot.slane %v8819, 4
      %v8822 = vshll.u32 %v8455, 16
      %v8824 = vrot.slane %v8822, 5
      %v8825 = vor.u32 %v8821, %v8824
      %v8826 = vrot.slane %v8825, 4
      %v8828 = vshll.u32 %v8456, 16
      %v8830 = vrot.slane %v8828, 5
      %v8831 = vsel %vm564, %v8826, %v8830
      %v8832 = vshrl.u32 %v8456, 16
      %v8834 = vrot.slane %v8832, 4
      %v8835 = vor.u32 %v8834, %v8830
      %v8836 = vrot.slane %v8835, 4
      %v8838 = vshll.u32 %v8457, 16
      %v8840 = vrot.slane %v8838, 5
      %v8841 = vsel %vm564, %v8836, %v8840
      %v8874 = vunpack.c.l.bf16 %v8471
      %v8875 = vunpack.c.l.bf16 %v8481
      %v8876 = vunpack.c.l.bf16 %v8495
      %v8877 = vunpack.c.l.bf16 %v8505
      %v8878 = vunpack.c.l.bf16 %v8519
      %v8879 = vunpack.c.l.bf16 %v8529
      %v8880 = vunpack.c.l.bf16 %v8543
      %v8881 = vunpack.c.l.bf16 %v8553
      %v8882 = vunpack.c.l.bf16 %v8567
      %v8883 = vunpack.c.l.bf16 %v8577
      %v8884 = vunpack.c.l.bf16 %v8591
      %v8885 = vunpack.c.l.bf16 %v8601
      %v8886 = vunpack.c.l.bf16 %v8615
      %v8887 = vunpack.c.l.bf16 %v8625
      %v8888 = vunpack.c.l.bf16 %v8639
      %v8889 = vunpack.c.l.bf16 %v8649
      %v8890 = vunpack.c.l.bf16 %v8663
      %v8891 = vunpack.c.l.bf16 %v8673
      %v8892 = vunpack.c.l.bf16 %v8687
      %v8893 = vunpack.c.l.bf16 %v8697
      %v8894 = vunpack.c.l.bf16 %v8711
      %v8895 = vunpack.c.l.bf16 %v8721
      %v8896 = vunpack.c.l.bf16 %v8735
      %v8897 = vunpack.c.l.bf16 %v8745
      %v8898 = vunpack.c.l.bf16 %v8759
      %v8899 = vunpack.c.l.bf16 %v8769
      %v8900 = vunpack.c.l.bf16 %v8783
      %v8901 = vunpack.c.l.bf16 %v8793
      %v8902 = vunpack.c.l.bf16 %v8807
      %v8903 = vunpack.c.l.bf16 %v8817
      %v8904 = vunpack.c.l.bf16 %v8831
      %v8905 = vunpack.c.l.bf16 %v8841
      %v8906 = vadd.f32 %v8377, %v8874
      %v8907 = vadd.f32 %v8378, %v8875
      %v8908 = vadd.f32 %v8379, %v8876
      %v8909 = vadd.f32 %v8380, %v8877
      %v8910 = vadd.f32 %v8381, %v8878
      %v8911 = vadd.f32 %v8382, %v8879
      %v8912 = vadd.f32 %v8383, %v8880
      %v8913 = vadd.f32 %v8384, %v8881
      %v8914 = vadd.f32 %v8385, %v8882
      %v8915 = vadd.f32 %v8386, %v8883
      %v8916 = vadd.f32 %v8387, %v8884
      %v8917 = vadd.f32 %v8388, %v8885
      %v8918 = vadd.f32 %v8389, %v8886
      %v8919 = vadd.f32 %v8390, %v8887
      %v8920 = vadd.f32 %v8391, %v8888
      %v8921 = vadd.f32 %v8392, %v8889
      %v8922 = vadd.f32 %v8393, %v8890
      %v8923 = vadd.f32 %v8394, %v8891
      %v8924 = vadd.f32 %v8395, %v8892
      %v8925 = vadd.f32 %v8396, %v8893
      %v8926 = vadd.f32 %v8397, %v8894
      %v8927 = vadd.f32 %v8398, %v8895
      %v8928 = vadd.f32 %v8399, %v8896
      %v8929 = vadd.f32 %v8400, %v8897
      %v8930 = vadd.f32 %v8401, %v8898
      %v8931 = vadd.f32 %v8402, %v8899
      %v8932 = vadd.f32 %v8403, %v8900
      %v8933 = vadd.f32 %v8404, %v8901
      %v8934 = vadd.f32 %v8405, %v8902
      %v8935 = vadd.f32 %v8406, %v8903
      %v8936 = vadd.f32 %v8407, %v8904
      %v8937 = vadd.f32 %v8408, %v8905
      %vm8938 = vcmp.gt.f32.partialorder %v8906, 20.0
      %vm8939 = vcmp.gt.f32.partialorder %v8907, 20.0
      %vm8940 = vcmp.gt.f32.partialorder %v8908, 20.0
      %vm8941 = vcmp.gt.f32.partialorder %v8909, 20.0
      %vm8942 = vcmp.gt.f32.partialorder %v8910, 20.0
      %vm8943 = vcmp.gt.f32.partialorder %v8911, 20.0
      %vm8944 = vcmp.gt.f32.partialorder %v8912, 20.0
      %vm8945 = vcmp.gt.f32.partialorder %v8913, 20.0
      %vm8946 = vcmp.gt.f32.partialorder %v8914, 20.0
      %vm8947 = vcmp.gt.f32.partialorder %v8915, 20.0
      %vm8948 = vcmp.gt.f32.partialorder %v8916, 20.0
      %vm8949 = vcmp.gt.f32.partialorder %v8917, 20.0
      %vm8950 = vcmp.gt.f32.partialorder %v8918, 20.0
      %vm8951 = vcmp.gt.f32.partialorder %v8919, 20.0
      %vm8952 = vcmp.gt.f32.partialorder %v8920, 20.0
      %vm8953 = vcmp.gt.f32.partialorder %v8921, 20.0
      %vm8954 = vcmp.gt.f32.partialorder %v8922, 20.0
      %vm8955 = vcmp.gt.f32.partialorder %v8923, 20.0
      %vm8956 = vcmp.gt.f32.partialorder %v8924, 20.0
      %vm8957 = vcmp.gt.f32.partialorder %v8925, 20.0
      %vm8958 = vcmp.gt.f32.partialorder %v8926, 20.0
      %vm8959 = vcmp.gt.f32.partialorder %v8927, 20.0
      %vm8960 = vcmp.gt.f32.partialorder %v8928, 20.0
      %vm8961 = vcmp.gt.f32.partialorder %v8929, 20.0
      %vm8962 = vcmp.gt.f32.partialorder %v8930, 20.0
      %vm8963 = vcmp.gt.f32.partialorder %v8931, 20.0
      %vm8964 = vcmp.gt.f32.partialorder %v8932, 20.0
      %vm8965 = vcmp.gt.f32.partialorder %v8933, 20.0
      %vm8966 = vcmp.gt.f32.partialorder %v8934, 20.0
      %vm8967 = vcmp.gt.f32.partialorder %v8935, 20.0
      %vm8968 = vcmp.gt.f32.partialorder %v8936, 20.0
      %vm8969 = vcmp.gt.f32.partialorder %v8937, 20.0
      %v8970 = vmin.f32 %v8906, 20.0
      %v8971 = vmin.f32 %v8907, 20.0
      %v8972 = vmin.f32 %v8908, 20.0
      %v8973 = vmin.f32 %v8909, 20.0
      %v8974 = vmin.f32 %v8910, 20.0
      %v8975 = vmin.f32 %v8911, 20.0
      %v8976 = vmin.f32 %v8912, 20.0
      %v8977 = vmin.f32 %v8913, 20.0
      %v8978 = vmin.f32 %v8914, 20.0
      %v8979 = vmin.f32 %v8915, 20.0
      %v8980 = vmin.f32 %v8916, 20.0
      %v8981 = vmin.f32 %v8917, 20.0
      %v8982 = vmin.f32 %v8918, 20.0
      %v8983 = vmin.f32 %v8919, 20.0
      %v8984 = vmin.f32 %v8920, 20.0
      %v8985 = vmin.f32 %v8921, 20.0
      %v8986 = vmin.f32 %v8922, 20.0
      %v8987 = vmin.f32 %v8923, 20.0
      %v8988 = vmin.f32 %v8924, 20.0
      %v8989 = vmin.f32 %v8925, 20.0
      %v8990 = vmin.f32 %v8926, 20.0
      %v8991 = vmin.f32 %v8927, 20.0
      %v8992 = vmin.f32 %v8928, 20.0
      %v8993 = vmin.f32 %v8929, 20.0
      %v8994 = vmin.f32 %v8930, 20.0
      %v8995 = vmin.f32 %v8931, 20.0
      %v8996 = vmin.f32 %v8932, 20.0
      %v8997 = vmin.f32 %v8933, 20.0
      %v8998 = vmin.f32 %v8934, 20.0
      %v8999 = vmin.f32 %v8935, 20.0
      %v9000 = vmin.f32 %v8936, 20.0
      %v9001 = vmin.f32 %v8937, 20.0
      %v9002 = vmul.f32 %v8970, 1.442695
      %v9003 = vpow.pop %v9002
      %v9004 = vmul.f32 %v8971, 1.442695
      %v9005 = vpow.pop %v9004
      %v9006 = vmul.f32 %v8972, 1.442695
      %v9007 = vpow.pop %v9006
      %v9008 = vmul.f32 %v8973, 1.442695
      %v9009 = vpow.pop %v9008
      %v9010 = vmul.f32 %v8974, 1.442695
      %v9011 = vpow.pop %v9010
      %v9012 = vmul.f32 %v8975, 1.442695
      %v9013 = vpow.pop %v9012
      %v9014 = vmul.f32 %v8976, 1.442695
      %v9015 = vpow.pop %v9014
      %v9016 = vmul.f32 %v8977, 1.442695
      %v9017 = vpow.pop %v9016
      %v9018 = vmul.f32 %v8978, 1.442695
      %v9019 = vpow.pop %v9018
      %v9020 = vmul.f32 %v8979, 1.442695
      %v9021 = vpow.pop %v9020
      %v9022 = vmul.f32 %v8980, 1.442695
      %v9023 = vpow.pop %v9022
      %v9024 = vmul.f32 %v8981, 1.442695
      %v9025 = vpow.pop %v9024
      %v9026 = vmul.f32 %v8982, 1.442695
      %v9027 = vpow.pop %v9026
      %v9028 = vmul.f32 %v8983, 1.442695
      %v9029 = vpow.pop %v9028
      %v9030 = vmul.f32 %v8984, 1.442695
      %v9031 = vpow.pop %v9030
      %v9032 = vmul.f32 %v8985, 1.442695
      %v9033 = vpow.pop %v9032
      %v9034 = vmul.f32 %v8986, 1.442695
      %v9035 = vpow.pop %v9034
      %v9036 = vmul.f32 %v8987, 1.442695
      %v9037 = vpow.pop %v9036
      %v9038 = vmul.f32 %v8988, 1.442695
      %v9039 = vpow.pop %v9038
      %v9040 = vmul.f32 %v8989, 1.442695
      %v9041 = vpow.pop %v9040
      %v9042 = vmul.f32 %v8990, 1.442695
      %v9043 = vpow.pop %v9042
      %v9044 = vmul.f32 %v8991, 1.442695
      %v9045 = vpow.pop %v9044
      %v9046 = vmul.f32 %v8992, 1.442695
      %v9047 = vpow.pop %v9046
      %v9048 = vmul.f32 %v8993, 1.442695
      %v9049 = vpow.pop %v9048
      %v9050 = vmul.f32 %v8994, 1.442695
      %v9051 = vpow.pop %v9050
      %v9052 = vmul.f32 %v8995, 1.442695
      %v9053 = vpow.pop %v9052
      %v9054 = vmul.f32 %v8996, 1.442695
      %v9055 = vpow.pop %v9054
      %v9056 = vmul.f32 %v8997, 1.442695
      %v9057 = vpow.pop %v9056
      %v9058 = vmul.f32 %v8998, 1.442695
      %v9059 = vpow.pop %v9058
      %v9060 = vmul.f32 %v8999, 1.442695
      %v9061 = vpow.pop %v9060
      %v9062 = vmul.f32 %v9000, 1.442695
      %v9063 = vpow.pop %v9062
      %v9064 = vmul.f32 %v9001, 1.442695
      %v9065 = vpow.pop %v9064
      %v9066 = vadd.f32 %v9003, 1.0
      %v9067 = vlog2.pop %v9066
      %v9068 = vmul.f32 %v9067, 0.6931472
      %v9069 = vmul.f32 -0.5, %v9003
      %v9070 = vadd.f32 %v9069, 1.0
      %v9071 = vmul.f32 %v9070, %v9003
      %v9072 = vand.u32 2147483647, %v9003
      %vm9073 = vcmp.lt.f32.partialorder %v9072, 0.0004427343
      %v9074 = vsel %vm9073, %v9071, %v9068
      %v9075 = vadd.f32 %v9005, 1.0
      %v9076 = vlog2.pop %v9075
      %v9077 = vmul.f32 %v9076, 0.6931472
      %v9078 = vmul.f32 -0.5, %v9005
      %v9079 = vadd.f32 %v9078, 1.0
      %v9080 = vmul.f32 %v9079, %v9005
      %v9081 = vand.u32 2147483647, %v9005
      %vm9082 = vcmp.lt.f32.partialorder %v9081, 0.0004427343
      %v9083 = vsel %vm9082, %v9080, %v9077
      %v9084 = vadd.f32 %v9007, 1.0
      %v9085 = vlog2.pop %v9084
      %v9086 = vmul.f32 %v9085, 0.6931472
      %v9087 = vmul.f32 -0.5, %v9007
      %v9088 = vadd.f32 %v9087, 1.0
      %v9089 = vmul.f32 %v9088, %v9007
      %v9090 = vand.u32 2147483647, %v9007
      %vm9091 = vcmp.lt.f32.partialorder %v9090, 0.0004427343
      %v9092 = vsel %vm9091, %v9089, %v9086
      %v9093 = vadd.f32 %v9009, 1.0
      %v9094 = vlog2.pop %v9093
      %v9095 = vmul.f32 %v9094, 0.6931472
      %v9096 = vmul.f32 -0.5, %v9009
      %v9097 = vadd.f32 %v9096, 1.0
      %v9098 = vmul.f32 %v9097, %v9009
      %v9099 = vand.u32 2147483647, %v9009
      %vm9100 = vcmp.lt.f32.partialorder %v9099, 0.0004427343
      %v9101 = vsel %vm9100, %v9098, %v9095
      %v9102 = vadd.f32 %v9011, 1.0
      %v9103 = vlog2.pop %v9102
      %v9104 = vmul.f32 %v9103, 0.6931472
      %v9105 = vmul.f32 -0.5, %v9011
      %v9106 = vadd.f32 %v9105, 1.0
      %v9107 = vmul.f32 %v9106, %v9011
      %v9108 = vand.u32 2147483647, %v9011
      %vm9109 = vcmp.lt.f32.partialorder %v9108, 0.0004427343
      %v9110 = vsel %vm9109, %v9107, %v9104
      %v9111 = vadd.f32 %v9013, 1.0
      %v9112 = vlog2.pop %v9111
      %v9113 = vmul.f32 %v9112, 0.6931472
      %v9114 = vmul.f32 -0.5, %v9013
      %v9115 = vadd.f32 %v9114, 1.0
      %v9116 = vmul.f32 %v9115, %v9013
      %v9117 = vand.u32 2147483647, %v9013
      %vm9118 = vcmp.lt.f32.partialorder %v9117, 0.0004427343
      %v9119 = vsel %vm9118, %v9116, %v9113
      %v9120 = vadd.f32 %v9015, 1.0
      %v9121 = vlog2.pop %v9120
      %v9122 = vmul.f32 %v9121, 0.6931472
      %v9123 = vmul.f32 -0.5, %v9015
      %v9124 = vadd.f32 %v9123, 1.0
      %v9125 = vmul.f32 %v9124, %v9015
      %v9126 = vand.u32 2147483647, %v9015
      %vm9127 = vcmp.lt.f32.partialorder %v9126, 0.0004427343
      %v9128 = vsel %vm9127, %v9125, %v9122
      %v9129 = vadd.f32 %v9017, 1.0
      %v9130 = vlog2.pop %v9129
      %v9131 = vmul.f32 %v9130, 0.6931472
      %v9132 = vmul.f32 -0.5, %v9017
      %v9133 = vadd.f32 %v9132, 1.0
      %v9134 = vmul.f32 %v9133, %v9017
      %v9135 = vand.u32 2147483647, %v9017
      %vm9136 = vcmp.lt.f32.partialorder %v9135, 0.0004427343
      %v9137 = vsel %vm9136, %v9134, %v9131
      %v9138 = vadd.f32 %v9019, 1.0
      %v9139 = vlog2.pop %v9138
      %v9140 = vmul.f32 %v9139, 0.6931472
      %v9141 = vmul.f32 -0.5, %v9019
      %v9142 = vadd.f32 %v9141, 1.0
      %v9143 = vmul.f32 %v9142, %v9019
      %v9144 = vand.u32 2147483647, %v9019
      %vm9145 = vcmp.lt.f32.partialorder %v9144, 0.0004427343
      %v9146 = vsel %vm9145, %v9143, %v9140
      %v9147 = vadd.f32 %v9021, 1.0
      %v9148 = vlog2.pop %v9147
      %v9149 = vmul.f32 %v9148, 0.6931472
      %v9150 = vmul.f32 -0.5, %v9021
      %v9151 = vadd.f32 %v9150, 1.0
      %v9152 = vmul.f32 %v9151, %v9021
      %v9153 = vand.u32 2147483647, %v9021
      %vm9154 = vcmp.lt.f32.partialorder %v9153, 0.0004427343
      %v9155 = vsel %vm9154, %v9152, %v9149
      %v9156 = vadd.f32 %v9023, 1.0
      %v9157 = vlog2.pop %v9156
      %v9158 = vmul.f32 %v9157, 0.6931472
      %v9159 = vmul.f32 -0.5, %v9023
      %v9160 = vadd.f32 %v9159, 1.0
      %v9161 = vmul.f32 %v9160, %v9023
      %v9162 = vand.u32 2147483647, %v9023
      %vm9163 = vcmp.lt.f32.partialorder %v9162, 0.0004427343
      %v9164 = vsel %vm9163, %v9161, %v9158
      %v9165 = vadd.f32 %v9025, 1.0
      %v9166 = vlog2.pop %v9165
      %v9167 = vmul.f32 %v9166, 0.6931472
      %v9168 = vmul.f32 -0.5, %v9025
      %v9169 = vadd.f32 %v9168, 1.0
      %v9170 = vmul.f32 %v9169, %v9025
      %v9171 = vand.u32 2147483647, %v9025
      %vm9172 = vcmp.lt.f32.partialorder %v9171, 0.0004427343
      %v9173 = vsel %vm9172, %v9170, %v9167
      %v9174 = vadd.f32 %v9027, 1.0
      %v9175 = vlog2.pop %v9174
      %v9176 = vmul.f32 %v9175, 0.6931472
      %v9177 = vmul.f32 -0.5, %v9027
      %v9178 = vadd.f32 %v9177, 1.0
      %v9179 = vmul.f32 %v9178, %v9027
      %v9180 = vand.u32 2147483647, %v9027
      %vm9181 = vcmp.lt.f32.partialorder %v9180, 0.0004427343
      %v9182 = vsel %vm9181, %v9179, %v9176
      %v9183 = vadd.f32 %v9029, 1.0
      %v9184 = vlog2.pop %v9183
      %v9185 = vmul.f32 %v9184, 0.6931472
      %v9186 = vmul.f32 -0.5, %v9029
      %v9187 = vadd.f32 %v9186, 1.0
      %v9188 = vmul.f32 %v9187, %v9029
      %v9189 = vand.u32 2147483647, %v9029
      %vm9190 = vcmp.lt.f32.partialorder %v9189, 0.0004427343
      %v9191 = vsel %vm9190, %v9188, %v9185
      %v9192 = vadd.f32 %v9031, 1.0
      %v9193 = vlog2.pop %v9192
      %v9194 = vmul.f32 %v9193, 0.6931472
      %v9195 = vmul.f32 -0.5, %v9031
      %v9196 = vadd.f32 %v9195, 1.0
      %v9197 = vmul.f32 %v9196, %v9031
      %v9198 = vand.u32 2147483647, %v9031
      %vm9199 = vcmp.lt.f32.partialorder %v9198, 0.0004427343
      %v9200 = vsel %vm9199, %v9197, %v9194
      %v9201 = vadd.f32 %v9033, 1.0
      %v9202 = vlog2.pop %v9201
      %v9203 = vmul.f32 %v9202, 0.6931472
      %v9204 = vmul.f32 -0.5, %v9033
      %v9205 = vadd.f32 %v9204, 1.0
      %v9206 = vmul.f32 %v9205, %v9033
      %v9207 = vand.u32 2147483647, %v9033
      %vm9208 = vcmp.lt.f32.partialorder %v9207, 0.0004427343
      %v9209 = vsel %vm9208, %v9206, %v9203
      %v9210 = vadd.f32 %v9035, 1.0
      %v9211 = vlog2.pop %v9210
      %v9212 = vmul.f32 %v9211, 0.6931472
      %v9213 = vmul.f32 -0.5, %v9035
      %v9214 = vadd.f32 %v9213, 1.0
      %v9215 = vmul.f32 %v9214, %v9035
      %v9216 = vand.u32 2147483647, %v9035
      %vm9217 = vcmp.lt.f32.partialorder %v9216, 0.0004427343
      %v9218 = vsel %vm9217, %v9215, %v9212
      %v9219 = vadd.f32 %v9037, 1.0
      %v9220 = vlog2.pop %v9219
      %v9221 = vmul.f32 %v9220, 0.6931472
      %v9222 = vmul.f32 -0.5, %v9037
      %v9223 = vadd.f32 %v9222, 1.0
      %v9224 = vmul.f32 %v9223, %v9037
      %v9225 = vand.u32 2147483647, %v9037
      %vm9226 = vcmp.lt.f32.partialorder %v9225, 0.0004427343
      %v9227 = vsel %vm9226, %v9224, %v9221
      %v9228 = vadd.f32 %v9039, 1.0
      %v9229 = vlog2.pop %v9228
      %v9230 = vmul.f32 %v9229, 0.6931472
      %v9231 = vmul.f32 -0.5, %v9039
      %v9232 = vadd.f32 %v9231, 1.0
      %v9233 = vmul.f32 %v9232, %v9039
      %v9234 = vand.u32 2147483647, %v9039
      %vm9235 = vcmp.lt.f32.partialorder %v9234, 0.0004427343
      %v9236 = vsel %vm9235, %v9233, %v9230
      %v9237 = vadd.f32 %v9041, 1.0
      %v9238 = vlog2.pop %v9237
      %v9239 = vmul.f32 %v9238, 0.6931472
      %v9240 = vmul.f32 -0.5, %v9041
      %v9241 = vadd.f32 %v9240, 1.0
      %v9242 = vmul.f32 %v9241, %v9041
      %v9243 = vand.u32 2147483647, %v9041
      %vm9244 = vcmp.lt.f32.partialorder %v9243, 0.0004427343
      %v9245 = vsel %vm9244, %v9242, %v9239
      %v9246 = vadd.f32 %v9043, 1.0
      %v9247 = vlog2.pop %v9246
      %v9248 = vmul.f32 %v9247, 0.6931472
      %v9249 = vmul.f32 -0.5, %v9043
      %v9250 = vadd.f32 %v9249, 1.0
      %v9251 = vmul.f32 %v9250, %v9043
      %v9252 = vand.u32 2147483647, %v9043
      %vm9253 = vcmp.lt.f32.partialorder %v9252, 0.0004427343
      %v9254 = vsel %vm9253, %v9251, %v9248
      %v9255 = vadd.f32 %v9045, 1.0
      %v9256 = vlog2.pop %v9255
      %v9257 = vmul.f32 %v9256, 0.6931472
      %v9258 = vmul.f32 -0.5, %v9045
      %v9259 = vadd.f32 %v9258, 1.0
      %v9260 = vmul.f32 %v9259, %v9045
      %v9261 = vand.u32 2147483647, %v9045
      %vm9262 = vcmp.lt.f32.partialorder %v9261, 0.0004427343
      %v9263 = vsel %vm9262, %v9260, %v9257
      %v9264 = vadd.f32 %v9047, 1.0
      %v9265 = vlog2.pop %v9264
      %v9266 = vmul.f32 %v9265, 0.6931472
      %v9267 = vmul.f32 -0.5, %v9047
      %v9268 = vadd.f32 %v9267, 1.0
      %v9269 = vmul.f32 %v9268, %v9047
      %v9270 = vand.u32 2147483647, %v9047
      %vm9271 = vcmp.lt.f32.partialorder %v9270, 0.0004427343
      %v9272 = vsel %vm9271, %v9269, %v9266
      %v9273 = vadd.f32 %v9049, 1.0
      %v9274 = vlog2.pop %v9273
      %v9275 = vmul.f32 %v9274, 0.6931472
      %v9276 = vmul.f32 -0.5, %v9049
      %v9277 = vadd.f32 %v9276, 1.0
      %v9278 = vmul.f32 %v9277, %v9049
      %v9279 = vand.u32 2147483647, %v9049
      %vm9280 = vcmp.lt.f32.partialorder %v9279, 0.0004427343
      %v9281 = vsel %vm9280, %v9278, %v9275
      %v9282 = vadd.f32 %v9051, 1.0
      %v9283 = vlog2.pop %v9282
      %v9284 = vmul.f32 %v9283, 0.6931472
      %v9285 = vmul.f32 -0.5, %v9051
      %v9286 = vadd.f32 %v9285, 1.0
      %v9287 = vmul.f32 %v9286, %v9051
      %v9288 = vand.u32 2147483647, %v9051
      %vm9289 = vcmp.lt.f32.partialorder %v9288, 0.0004427343
      %v9290 = vsel %vm9289, %v9287, %v9284
      %v9291 = vadd.f32 %v9053, 1.0
      %v9292 = vlog2.pop %v9291
      %v9293 = vmul.f32 %v9292, 0.6931472
      %v9294 = vmul.f32 -0.5, %v9053
      %v9295 = vadd.f32 %v9294, 1.0
      %v9296 = vmul.f32 %v9295, %v9053
      %v9297 = vand.u32 2147483647, %v9053
      %vm9298 = vcmp.lt.f32.partialorder %v9297, 0.0004427343
      %v9299 = vsel %vm9298, %v9296, %v9293
      %v9300 = vadd.f32 %v9055, 1.0
      %v9301 = vlog2.pop %v9300
      %v9302 = vmul.f32 %v9301, 0.6931472
      %v9303 = vmul.f32 -0.5, %v9055
      %v9304 = vadd.f32 %v9303, 1.0
      %v9305 = vmul.f32 %v9304, %v9055
      %v9306 = vand.u32 2147483647, %v9055
      %vm9307 = vcmp.lt.f32.partialorder %v9306, 0.0004427343
      %v9308 = vsel %vm9307, %v9305, %v9302
      %v9309 = vadd.f32 %v9057, 1.0
      %v9310 = vlog2.pop %v9309
      %v9311 = vmul.f32 %v9310, 0.6931472
      %v9312 = vmul.f32 -0.5, %v9057
      %v9313 = vadd.f32 %v9312, 1.0
      %v9314 = vmul.f32 %v9313, %v9057
      %v9315 = vand.u32 2147483647, %v9057
      %vm9316 = vcmp.lt.f32.partialorder %v9315, 0.0004427343
      %v9317 = vsel %vm9316, %v9314, %v9311
      %v9318 = vadd.f32 %v9059, 1.0
      %v9319 = vlog2.pop %v9318
      %v9320 = vmul.f32 %v9319, 0.6931472
      %v9321 = vmul.f32 -0.5, %v9059
      %v9322 = vadd.f32 %v9321, 1.0
      %v9323 = vmul.f32 %v9322, %v9059
      %v9324 = vand.u32 2147483647, %v9059
      %vm9325 = vcmp.lt.f32.partialorder %v9324, 0.0004427343
      %v9326 = vsel %vm9325, %v9323, %v9320
      %v9327 = vadd.f32 %v9061, 1.0
      %v9328 = vlog2.pop %v9327
      %v9329 = vmul.f32 %v9328, 0.6931472
      %v9330 = vmul.f32 -0.5, %v9061
      %v9331 = vadd.f32 %v9330, 1.0
      %v9332 = vmul.f32 %v9331, %v9061
      %v9333 = vand.u32 2147483647, %v9061
      %vm9334 = vcmp.lt.f32.partialorder %v9333, 0.0004427343
      %v9335 = vsel %vm9334, %v9332, %v9329
      %v9336 = vadd.f32 %v9063, 1.0
      %v9337 = vlog2.pop %v9336
      %v9338 = vmul.f32 %v9337, 0.6931472
      %v9339 = vmul.f32 -0.5, %v9063
      %v9340 = vadd.f32 %v9339, 1.0
      %v9341 = vmul.f32 %v9340, %v9063
      %v9342 = vand.u32 2147483647, %v9063
      %vm9343 = vcmp.lt.f32.partialorder %v9342, 0.0004427343
      %v9344 = vsel %vm9343, %v9341, %v9338
      %v9345 = vadd.f32 %v9065, 1.0
      %v9346 = vlog2.pop %v9345
      %v9347 = vmul.f32 %v9346, 0.6931472
      %v9348 = vmul.f32 -0.5, %v9065
      %v9349 = vadd.f32 %v9348, 1.0
      %v9350 = vmul.f32 %v9349, %v9065
      %v9351 = vand.u32 2147483647, %v9065
      %vm9352 = vcmp.lt.f32.partialorder %v9351, 0.0004427343
      %v9353 = vsel %vm9352, %v9350, %v9347
      %v9354 = vsel %vm8938, %v8906, %v9074
      %v9355 = vsel %vm8939, %v8907, %v9083
      %v9356 = vsel %vm8940, %v8908, %v9092
      %v9357 = vsel %vm8941, %v8909, %v9101
      %v9358 = vsel %vm8942, %v8910, %v9110
      %v9359 = vsel %vm8943, %v8911, %v9119
      %v9360 = vsel %vm8944, %v8912, %v9128
      %v9361 = vsel %vm8945, %v8913, %v9137
      %v9362 = vsel %vm8946, %v8914, %v9146
      %v9363 = vsel %vm8947, %v8915, %v9155
      %v9364 = vsel %vm8948, %v8916, %v9164
      %v9365 = vsel %vm8949, %v8917, %v9173
      %v9366 = vsel %vm8950, %v8918, %v9182
      %v9367 = vsel %vm8951, %v8919, %v9191
      %v9368 = vsel %vm8952, %v8920, %v9200
      %v9369 = vsel %vm8953, %v8921, %v9209
      %v9370 = vsel %vm8954, %v8922, %v9218
      %v9371 = vsel %vm8955, %v8923, %v9227
      %v9372 = vsel %vm8956, %v8924, %v9236
      %v9373 = vsel %vm8957, %v8925, %v9245
      %v9374 = vsel %vm8958, %v8926, %v9254
      %v9375 = vsel %vm8959, %v8927, %v9263
      %v9376 = vsel %vm8960, %v8928, %v9272
      %v9377 = vsel %vm8961, %v8929, %v9281
      %v9378 = vsel %vm8962, %v8930, %v9290
      %v9379 = vsel %vm8963, %v8931, %v9299
      %v9380 = vsel %vm8964, %v8932, %v9308
      %v9381 = vsel %vm8965, %v8933, %v9317
      %v9382 = vsel %vm8966, %v8934, %v9326
      %v9383 = vsel %vm8967, %v8935, %v9335
      %v9384 = vsel %vm8968, %v8936, %v9344
      %v9385 = vsel %vm8969, %v8937, %v9353
      %v9386 = vpack.c.bf16 %v9355, %v9354
      %v9387 = vpack.c.bf16 %v9357, %v9356
      %v9388 = vpack.c.bf16 %v9359, %v9358
      %v9389 = vpack.c.bf16 %v9361, %v9360
      %v9390 = vpack.c.bf16 %v9363, %v9362
      %v9391 = vpack.c.bf16 %v9365, %v9364
      %v9392 = vpack.c.bf16 %v9367, %v9366
      %v9393 = vpack.c.bf16 %v9369, %v9368
      %v9394 = vpack.c.bf16 %v9371, %v9370
      %v9395 = vpack.c.bf16 %v9373, %v9372
      %v9396 = vpack.c.bf16 %v9375, %v9374
      %v9397 = vpack.c.bf16 %v9377, %v9376
      %v9398 = vpack.c.bf16 %v9379, %v9378
      %v9399 = vpack.c.bf16 %v9381, %v9380
      %v9400 = vpack.c.bf16 %v9383, %v9382
      %v9401 = vpack.c.bf16 %v9385, %v9384
      %v9418 = vunpack.c.l.b16 %v9386
      %v9419 = vunpack.c.h.b16 %v9386
      %v9420 = vunpack.c.l.b16 %v9387
      %v9421 = vunpack.c.h.b16 %v9387
      %v9422 = vunpack.c.l.b16 %v9388
      %v9423 = vunpack.c.h.b16 %v9388
      %v9424 = vunpack.c.l.b16 %v9389
      %v9425 = vunpack.c.h.b16 %v9389
      %v9426 = vunpack.c.l.b16 %v9390
      %v9427 = vunpack.c.h.b16 %v9390
      %v9428 = vunpack.c.l.b16 %v9391
      %v9429 = vunpack.c.h.b16 %v9391
      %v9430 = vunpack.c.l.b16 %v9392
      %v9431 = vunpack.c.h.b16 %v9392
      %v9432 = vunpack.c.l.b16 %v9393
      %v9433 = vunpack.c.h.b16 %v9393
      %v9434 = vunpack.c.l.b16 %v9394
      %v9435 = vunpack.c.h.b16 %v9394
      %v9436 = vunpack.c.l.b16 %v9395
      %v9437 = vunpack.c.h.b16 %v9395
      %v9438 = vunpack.c.l.b16 %v9396
      %v9439 = vunpack.c.h.b16 %v9396
      %v9440 = vunpack.c.l.b16 %v9397
      %v9441 = vunpack.c.h.b16 %v9397
      %v9442 = vunpack.c.l.b16 %v9398
      %v9443 = vunpack.c.h.b16 %v9398
      %v9444 = vunpack.c.l.b16 %v9399
      %v9445 = vunpack.c.h.b16 %v9399
      %v9446 = vunpack.c.l.b16 %v9400
      %v9447 = vunpack.c.h.b16 %v9400
      %v9448 = vunpack.c.l.b16 %v9401
      %v9449 = vunpack.c.h.b16 %v9401
      %v9450 = vpack.c.b16 %v9418, %v9418
      %v9451 = vpack.c.b16 %v9419, %v9419
      %v9452 = vpack.c.b16 %v9420, %v9420
      %v9453 = vpack.c.b16 %v9421, %v9421
      %v9454 = vpack.c.b16 %v9422, %v9422
      %v9455 = vpack.c.b16 %v9423, %v9423
      %v9456 = vpack.c.b16 %v9424, %v9424
      %v9457 = vpack.c.b16 %v9425, %v9425
      %v9458 = vpack.c.b16 %v9426, %v9426
      %v9459 = vpack.c.b16 %v9427, %v9427
      %v9460 = vpack.c.b16 %v9428, %v9428
      %v9461 = vpack.c.b16 %v9429, %v9429
      %v9462 = vpack.c.b16 %v9430, %v9430
      %v9463 = vpack.c.b16 %v9431, %v9431
      %v9464 = vpack.c.b16 %v9432, %v9432
      %v9465 = vpack.c.b16 %v9433, %v9433
      %v9466 = vpack.c.b16 %v9434, %v9434
      %v9467 = vpack.c.b16 %v9435, %v9435
      %v9468 = vpack.c.b16 %v9436, %v9436
      %v9469 = vpack.c.b16 %v9437, %v9437
      %v9470 = vpack.c.b16 %v9438, %v9438
      %v9471 = vpack.c.b16 %v9439, %v9439
      %v9472 = vpack.c.b16 %v9440, %v9440
      %v9473 = vpack.c.b16 %v9441, %v9441
      %v9474 = vpack.c.b16 %v9442, %v9442
      %v9475 = vpack.c.b16 %v9443, %v9443
      %v9476 = vpack.c.b16 %v9444, %v9444
      %v9477 = vpack.c.b16 %v9445, %v9445
      %v9478 = vpack.c.b16 %v9446, %v9446
      %v9479 = vpack.c.b16 %v9447, %v9447
      %v9480 = vpack.c.b16 %v9448, %v9448
      %v9481 = vpack.c.b16 %v9449, %v9449
      %9514 = vst [vmem:[%s224] sm:$0xf] %v9450
      %9515 = vst [vmem:[%s224 + $0x4] sm:$0xf] %v9451
      %9516 = vst [vmem:[%s224 + $0x8] sm:$0xf] %v9452
      %9517 = vst [vmem:[%s224 + $0xc] sm:$0xf] %v9453
      %9518 = vst [vmem:[%s224 + $0x10] sm:$0xf] %v9454
      %9519 = vst [vmem:[%s224 + $0x14] sm:$0xf] %v9455
      %9520 = vst [vmem:[%s224 + $0x18] sm:$0xf] %v9456
      %9521 = vst [vmem:[%s224 + $0x1c] sm:$0xf] %v9457
      %9522 = vst [vmem:[%s224 + $0x20] sm:$0xf] %v9458
      %9523 = vst [vmem:[%s224 + $0x24] sm:$0xf] %v9459
      %9524 = vst [vmem:[%s224 + $0x28] sm:$0xf] %v9460
      %9525 = vst [vmem:[%s224 + $0x2c] sm:$0xf] %v9461
      %9526 = vst [vmem:[%s224 + $0x30] sm:$0xf] %v9462
      %9527 = vst [vmem:[%s224 + $0x34] sm:$0xf] %v9463
      %9528 = vst [vmem:[%s224 + $0x38] sm:$0xf] %v9464
      %9529 = vst [vmem:[%s224 + $0x3c] sm:$0xf] %v9465
      %9530 = vst [vmem:[%s224 + $0x40] sm:$0xf] %v9466
      %9531 = vst [vmem:[%s224 + $0x44] sm:$0xf] %v9467
      %9532 = vst [vmem:[%s224 + $0x48] sm:$0xf] %v9468
      %9533 = vst [vmem:[%s224 + $0x4c] sm:$0xf] %v9469
      %9534 = vst [vmem:[%s224 + $0x50] sm:$0xf] %v9470
      %9535 = vst [vmem:[%s224 + $0x54] sm:$0xf] %v9471
      %9536 = vst [vmem:[%s224 + $0x58] sm:$0xf] %v9472
      %9537 = vst [vmem:[%s224 + $0x5c] sm:$0xf] %v9473
      %9538 = vst [vmem:[%s224 + $0x60] sm:$0xf] %v9474
      %9539 = vst [vmem:[%s224 + $0x64] sm:$0xf] %v9475
      %9540 = vst [vmem:[%s224 + $0x68] sm:$0xf] %v9476
      %9541 = vst [vmem:[%s224 + $0x6c] sm:$0xf] %v9477
      %9542 = vst [vmem:[%s224 + $0x70] sm:$0xf] %v9478
      %9543 = vst [vmem:[%s224 + $0x74] sm:$0xf] %v9479
      %9544 = vst [vmem:[%s224 + $0x78] sm:$0xf] %v9480
      %9545 = vst [vmem:[%s224 + $0x7c] sm:$0xf] %v9481
      %p9546 = scmp.lt.s32.totalorder %s16, 1
      %s9547 = scalar_select %p9546, %s16, 1
      %s9548 = smul.addr %s9547, 32
      %s9549 = smul.addr %s9548, 4
      %s9550 = scalar_lea.vmem %s5, %s9549
      // Predicated region
      $region41: #{basic_block_forward.1} parent=39 // pred_check
        %p9551 = pneg %p144
      $region42: #{basic_block_forward.1} parent=39 // pred_check_branch
        %9553 = sbr.rel (%p9551) target = $region44
      $region43: #{basic_block_forward.1} parent=39 // pred_region
        _
      $region44: #{basic_block_forward.1} parent=39 // pred_fallthru
        _
    $region40: #{basic_block_forward.1} parent=5 // pred_fallthru
      _
    %p9554 = scmp.le.s32.totalorder 2, %s11
    // Predicated region
    $region45: #{basic_block_forward.1} parent=5 // pred_check
      %p9555 = pneg %p9554
    $region46: #{basic_block_forward.1} parent=5 // pred_check_branch
      %9557 = sbr.rel (%p9555) target = $region48
    $region47: #{basic_block_forward.1} parent=5 // pred_region
      %s9558 = ssub.s32 %s11, 2
      // Predicated region
      $region49: #{basic_block_forward.1} parent=47 // pred_check
        %p9559 = pneg %p150
      $region50: #{basic_block_forward.1} parent=47 // pred_check_branch
        %9561 = sbr.rel (%p9559) target = $region52
      $region51: #{basic_block_forward.1} parent=47 // pred_region
        %p9562 = scmp.lt.s32.totalorder %s17, 1
        %s9563 = scalar_select %p9562, %s17, 1
        %s9564 = smul.addr %s9563, 32
        %s9565 = smul.addr %s9564, 4
        %s9566 = scalar_lea.vmem %s5, %s9565
      $region52: #{basic_block_forward.1} parent=47 // pred_fallthru
        _
    $region48: #{basic_block_forward.1} parent=5 // pred_fallthru
      _
  $region6: #{basic_block_forward.1} parent=0 // loop_footer
    %s15 = sadd.s32 1, %s11
  $region7: #{basic_block_forward.1} parent=0 // loop_footer_branch
    %10 = sbr.rel target = $region3
  $region8: #{basic_block_forward.1} parent=0 // loop_exit
    _

</llo_original>
